<compile_context>
chip_gen: v7x
topology: tpu7x:2x2x1
jax: 0.10.0
libtpu: 0.0.40
codegen_flags: <defaults>
</compile_context>

<pallas_src>
import functools

import jax
import jax.numpy as jnp
from jax import lax
from jax.experimental import pallas as pl
from jax.experimental.pallas import tpu as pltpu

EPS = 1e-5  # nn.BatchNorm2d default eps

_COMPILER_PARAMS = pltpu.CompilerParams(
    dimension_semantics=("arbitrary",),
    vmem_limit_bytes=32 * 1024 * 1024,
)

_CONV_PAD = [(0, 0, 0), (1, 1, 0), (1, 1, 0), (0, 0, 0)]    # Conv2d  k3 p1
_CONVT_PAD = [(0, 0, 0), (1, 2, 1), (1, 2, 1), (0, 0, 0)]   # ConvT   k3 s2 p1 op1
                                                            # (dilate + asym pad)


def _full_spec(shape):
    nd = len(shape)
    return pl.BlockSpec(shape, lambda i, nd=nd: (0,) * nd)


# ----------------------------- Pallas kernels ------------------------------

def linear_kernel(x_ref, w_ref, b_ref, o_ref):
    # Folded dense head: x:(B,10)  w:(10,4096)  b:(1,4096)  o:(B,4096)
    o_ref[...] = (
        jnp.dot(x_ref[...], w_ref[...], preferred_element_type=jnp.float32)
        + b_ref[...]
    )


def conv_bn_tanh_kernel(p_ref, w_ref, o_ref):
    # One fused MXU contraction over all 9 taps + training-mode BN + Tanh.
    #   p_ref: (N, 9*Cin) im2col patches, N = B*H*W
    #   w_ref: (9*Cin, Coutp)   (conv bias omitted: cancelled exactly by BN)
    #   o_ref: (N, Coutp)
    N = o_ref.shape[0]
    acc = jnp.dot(p_ref[...], w_ref[...], preferred_element_type=jnp.float32)
    # BatchNorm2d (training mode), single-sweep statistics over all N rows.
    inv_n = 1.0 / float(N)
    s1 = jnp.sum(acc, axis=0, keepdims=True)
    s2 = jnp.sum(acc * acc, axis=0, keepdims=True)
    mean = s1 * inv_n
    var = jnp.maximum(s2 * inv_n - mean * mean, 0.0)
    o_ref[...] = jnp.tanh((acc - mean) * lax.rsqrt(var + EPS))


# ------------------------------ JAX wrappers -------------------------------

def linear(x, w, b):
    B = x.shape[0]
    Dout = w.shape[1]
    return pl.pallas_call(
        linear_kernel,
        out_shape=jax.ShapeDtypeStruct((B, Dout), jnp.float32),
        grid=(1,),
        in_specs=[_full_spec(x.shape), _full_spec(w.shape), _full_spec(b.shape)],
        out_specs=_full_spec((B, Dout)),
        compiler_params=_COMPILER_PARAMS,
    )(x, w, b)


def _im2col_3x3(xp, H, W):
    # xp: (B, Hp, Wp, Cin) padded (and, for convT, zero-dilated) input
    # -> (B*H*W, 9*Cin) with tap order (dh, dw, ci).  Pure XLA glue (data
    # movement only); the matmul / reduction / elementwise hot path runs in
    # the Pallas kernel.
    B, _, _, Cin = xp.shape
    taps = [xp[:, dh:dh + H, dw:dw + W, :] for dh in range(3) for dw in range(3)]
    return jnp.concatenate(taps, axis=-1).reshape(B * H * W, 9 * Cin)


def conv_layer(x_nhwc, w_flat, H_out, W_out, pad_cfg):
    # 3x3 conv (stride 1) on a padded/dilated input + BN + Tanh, as one
    # pallas_call per layer.  w_flat: (9*Cin, Coutp), Coutp possibly lane-padded.
    B = x_nhwc.shape[0]
    xp = lax.pad(x_nhwc, jnp.float32(0), pad_cfg)
    patches = _im2col_3x3(xp, H_out, W_out)
    N = B * H_out * W_out
    Coutp = w_flat.shape[1]
    out = pl.pallas_call(
        conv_bn_tanh_kernel,
        out_shape=jax.ShapeDtypeStruct((N, Coutp), jnp.float32),
        grid=(1,),
        in_specs=[_full_spec(patches.shape), _full_spec(w_flat.shape)],
        out_specs=_full_spec((N, Coutp)),
        compiler_params=_COMPILER_PARAMS,
    )(patches, w_flat)
    return out.reshape(B, H_out, W_out, Coutp)


# --------------------------- parameters / forward ---------------------------

def init_params(key):
    ks = jax.random.split(key, 5)
    p = {}

    # Denses: Linear(10,128) then Linear(128,4096), no nonlinearity between
    # them -> fold exactly into one (10,4096) affine map (torch init:
    # weight ~ N(0, 0.01), bias = 0).  Stored transposed (in, out).
    w0 = 0.01 * jax.random.normal(ks[0], (10, 128), dtype=jnp.float32)
    w1 = 0.01 * jax.random.normal(ks[1], (128, 4096), dtype=jnp.float32)
    wf = w0 @ w1                                   # (10, 4096)
    bf = jnp.zeros((1, 4096), jnp.float32)         # b0 @ w1 + b1 with b0=b1=0

    # Pre-permute columns CHW -> HWC so the dense output is already NHWC-flat
    # (eliminates the post-linear NCHW->NHWC transpose at zero runtime cost).
    def chw_to_hwc_cols(a):
        return a.reshape(-1, 64, 8, 8).transpose(0, 2, 3, 1).reshape(-1, 4096)

    p["dense_w"] = chw_to_hwc_cols(wf)
    p["dense_b"] = chw_to_hwc_cols(bf)

    # Conv2d(64,64,3,p=1): kaiming_normal fan_out -> std = sqrt(2/(Cout*9)).
    # Conv/convT biases are omitted: training-mode BatchNorm (gamma=1, beta=0)
    # mean-centers any per-channel constant away, so they are exact no-ops.
    std = (2.0 / (64 * 9)) ** 0.5
    w = std * jax.random.normal(ks[2], (64, 64, 3, 3), dtype=jnp.float32)  # (Cout,Cin,kh,kw)
    p["c0_w"] = jnp.transpose(w, (2, 3, 1, 0)).reshape(9 * 64, 64)         # (9*Cin, Cout)

    def convT_weight(k, cin, cout, cout_pad):
        # PyTorch ConvTranspose2d default init ~ U(-1/sqrt(fan_in), ...),
        # fan_in = cout * 9.  Stored pre-flipped, (kh,kw,Cin,Cout) -> (9*Cin, Coutp).
        bound = 1.0 / (cout * 9) ** 0.5
        wt = jax.random.uniform(k, (cin, cout, 3, 3), minval=-bound, maxval=bound,
                                dtype=jnp.float32)               # torch (Cin,Cout,kh,kw)
        wk = jnp.transpose(wt[:, :, ::-1, ::-1], (2, 3, 0, 1))   # flipped, (kh,kw,Cin,Cout)
        wk = wk.reshape(9 * cin, cout)
        if cout_pad > cout:
            wk = jnp.pad(wk, ((0, 0), (0, cout_pad - cout)))     # lane-dense output
        return wk

    p["t1_w"] = convT_weight(ks[3], 64, 32, 32)
    p["t2_w"] = convT_weight(ks[4], 32, 3, 128)   # Cout 3 -> 128 zero columns
    return p


def vgg5_decoder_forward(x, params):
    # x: (B, 10) float32; returns (B, 3, 32, 32) NCHW like the torch module.
    B = x.shape[0]
    out = x.reshape(B, -1)
    out = linear(out, params["dense_w"], params["dense_b"])          # (B, 4096) NHWC-flat
    out = out.reshape(B, 8, 8, 64)                                   # NHWC directly
    out = conv_layer(out, params["c0_w"], 8, 8, _CONV_PAD)           # (B, 8, 8, 64)
    out = conv_layer(out, params["t1_w"], 16, 16, _CONVT_PAD)        # (B, 16, 16, 32)
    out = conv_layer(out, params["t2_w"], 32, 32, _CONVT_PAD)        # (B, 32, 32, 128)
    out = out[..., :3]                                               # drop lane padding
    return jnp.transpose(out, (0, 3, 1, 2))                          # NCHW (B, 3, 32, 32)


if __name__ == "__main__":
    key = jax.random.PRNGKey(0)
    pkey, xkey = jax.random.split(key)
    params = init_params(pkey)

    # split_layer=6: decoder input is the VGG5 head output (B, 10)
    x = jax.random.normal(xkey, (2, 10), dtype=jnp.float32)

    fwd = jax.jit(functools.partial(vgg5_decoder_forward, params=params))
    out = jax.block_until_ready(fwd(x))

    assert out.shape == (2, 3, 32, 32), out.shape
    assert out.dtype == jnp.float32
    assert bool(jnp.all(jnp.isfinite(out)))
    # Tanh output range sanity check
    assert bool(jnp.all(jnp.abs(out) <= 1.0 + 1e-6))
    print("KERNEL_OK")
</pallas_src>

<mosaic_0001>
module attributes {stable_mosaic.version = 11 : i64} {
  func.func @linear_kernel(%arg0: i32, %arg1: memref<2x10xf32, #tpu.memory_space<vmem>>, %arg2: memref<10x4096xf32, #tpu.memory_space<vmem>>, %arg3: memref<1x4096xf32, #tpu.memory_space<vmem>>, %arg4: memref<2x4096xf32, #tpu.memory_space<vmem>>) attributes {dimension_semantics = [#tpu.dimension_semantics<arbitrary>], iteration_bounds = array<i64: 1>, scalar_prefetch = 0 : i64, scratch_operands = 0 : i64, tpu.core_type = #tpu.core_type<tc>, window_params = [{pipeline_mode = #tpu.pipeline_mode<synchronous>, transform_indices = @transform_0, window_bounds = array<i64: 2, 10>}, {pipeline_mode = #tpu.pipeline_mode<synchronous>, transform_indices = @transform_1, window_bounds = array<i64: 10, 4096>}, {pipeline_mode = #tpu.pipeline_mode<synchronous>, transform_indices = @transform_2, window_bounds = array<i64: 1, 4096>}, {pipeline_mode = #tpu.pipeline_mode<synchronous>, transform_indices = @transform_3, window_bounds = array<i64: 2, 4096>}]} {
    %c0 = arith.constant 0 : index
    %c0_0 = arith.constant 0 : index
    %0 = vector.load %arg1[%c0, %c0_0] : memref<2x10xf32, #tpu.memory_space<vmem>>, vector<2x10xf32>
    %c0_1 = arith.constant 0 : index
    %c0_2 = arith.constant 0 : index
    %1 = vector.load %arg2[%c0_1, %c0_2] : memref<10x4096xf32, #tpu.memory_space<vmem>>, vector<10x4096xf32>
    %cst = arith.constant dense<0.000000e+00> : vector<2x4096xf32>
    %2 = tpu.matmul %0, %1, %cst {dimension_numbers = #tpu.dot_dimension_numbers<[1], [0], [0], [1], [0, 0, 1, 1], [], []>} : vector<2x10xf32>, vector<10x4096xf32>, vector<2x4096xf32> -> vector<2x4096xf32>
    %c0_3 = arith.constant 0 : index
    %c0_4 = arith.constant 0 : index
    %3 = vector.load %arg3[%c0_3, %c0_4] : memref<1x4096xf32, #tpu.memory_space<vmem>>, vector<1x4096xf32>
    %4 = vector.broadcast %3 : vector<1x4096xf32> to vector<2x4096xf32>
    %5 = arith.addf %2, %4 : vector<2x4096xf32>
    %c0_5 = arith.constant 0 : index
    %c0_6 = arith.constant 0 : index
    %6 = vector.load %arg4[%c0_5, %c0_6] : memref<2x4096xf32, #tpu.memory_space<vmem>>, vector<2x4096xf32>
    tpu.vector_store %arg4[%c0_5, %c0_6], %5 {strides = array<i32>} : memref<2x4096xf32, #tpu.memory_space<vmem>>, vector<2x4096xf32>,
    return
  }
  func.func @transform_0(%arg0: i32) -> (i32, i32) {
    %c0_i32 = arith.constant 0 : i32
    %c0_i32_0 = arith.constant 0 : i32
    %c0_i32_1 = arith.constant 0 : i32
    return %c0_i32, %c0_i32_0 : i32, i32
  }
  func.func @transform_1(%arg0: i32) -> (i32, i32) {
    %c0_i32 = arith.constant 0 : i32
    %c0_i32_0 = arith.constant 0 : i32
    %c0_i32_1 = arith.constant 0 : i32
    return %c0_i32, %c0_i32_0 : i32, i32
  }
  func.func @transform_2(%arg0: i32) -> (i32, i32) {
    %c0_i32 = arith.constant 0 : i32
    %c0_i32_0 = arith.constant 0 : i32
    %c0_i32_1 = arith.constant 0 : i32
    return %c0_i32, %c0_i32_0 : i32, i32
  }
  func.func @transform_3(%arg0: i32) -> (i32, i32) {
    %c0_i32 = arith.constant 0 : i32
    %c0_i32_0 = arith.constant 0 : i32
    %c0_i32_1 = arith.constant 0 : i32
    return %c0_i32, %c0_i32_0 : i32, i32
  }
}

module attributes {stable_mosaic.version = 11 : i64} {
  func.func @conv_bn_tanh_kernel(%arg0: i32, %arg1: memref<128x576xf32, #tpu.memory_space<vmem>>, %arg2: memref<576x64xf32, #tpu.memory_space<vmem>>, %arg3: memref<128x64xf32, #tpu.memory_space<vmem>>) attributes {dimension_semantics = [#tpu.dimension_semantics<arbitrary>], iteration_bounds = array<i64: 1>, scalar_prefetch = 0 : i64, scratch_operands = 0 : i64, tpu.core_type = #tpu.core_type<tc>, window_params = [{pipeline_mode = #tpu.pipeline_mode<synchronous>, transform_indices = @transform_0, window_bounds = array<i64: 128, 576>}, {pipeline_mode = #tpu.pipeline_mode<synchronous>, transform_indices = @transform_1, window_bounds = array<i64: 576, 64>}, {pipeline_mode = #tpu.pipeline_mode<synchronous>, transform_indices = @transform_2, window_bounds = array<i64: 128, 64>}]} {
    %c0 = arith.constant 0 : index
    %c0_0 = arith.constant 0 : index
    %0 = vector.load %arg1[%c0, %c0_0] : memref<128x576xf32, #tpu.memory_space<vmem>>, vector<128x576xf32>
    %c0_1 = arith.constant 0 : index
    %c0_2 = arith.constant 0 : index
    %1 = vector.load %arg2[%c0_1, %c0_2] : memref<576x64xf32, #tpu.memory_space<vmem>>, vector<576x64xf32>
    %cst = arith.constant dense<0.000000e+00> : vector<128x64xf32>
    %2 = tpu.matmul %0, %1, %cst {dimension_numbers = #tpu.dot_dimension_numbers<[1], [0], [0], [1], [0, 0, 1, 1], [], []>} : vector<128x576xf32>, vector<576x64xf32>, vector<128x64xf32> -> vector<128x64xf32>
    %cst_3 = arith.constant dense<0.000000e+00> : vector<64xf32>
    %3 = vector.multi_reduction <add>, %2, %cst_3 [0] : vector<128x64xf32> to vector<64xf32>
    %4 = vector.shape_cast %3 : vector<64xf32> to vector<1x64xf32>
    %5 = arith.mulf %2, %2 : vector<128x64xf32>
    %cst_4 = arith.constant dense<0.000000e+00> : vector<64xf32>
    %6 = vector.multi_reduction <add>, %5, %cst_4 [0] : vector<128x64xf32> to vector<64xf32>
    %7 = vector.shape_cast %6 : vector<64xf32> to vector<1x64xf32>
    %cst_5 = arith.constant 7.812500e-03 : f32
    %8 = vector.broadcast %cst_5 : f32 to vector<1x64xf32>
    %9 = arith.mulf %4, %8 : vector<1x64xf32>
    %cst_6 = arith.constant 7.812500e-03 : f32
    %10 = vector.broadcast %cst_6 : f32 to vector<1x64xf32>
    %11 = arith.mulf %7, %10 : vector<1x64xf32>
    %12 = arith.mulf %9, %9 : vector<1x64xf32>
    %13 = arith.subf %11, %12 : vector<1x64xf32>
    %cst_7 = arith.constant 0.000000e+00 : f32
    %14 = vector.broadcast %cst_7 : f32 to vector<1x64xf32>
    %15 = arith.maximumf %13, %14 : vector<1x64xf32>
    %16 = vector.broadcast %9 : vector<1x64xf32> to vector<128x64xf32>
    %17 = arith.subf %2, %16 : vector<128x64xf32>
    %cst_8 = arith.constant 9.99999974E-6 : f32
    %18 = vector.broadcast %cst_8 : f32 to vector<1x64xf32>
    %19 = arith.addf %15, %18 : vector<1x64xf32>
    %20 = math.rsqrt %19 : vector<1x64xf32>
    %21 = vector.broadcast %20 : vector<1x64xf32> to vector<128x64xf32>
    %22 = arith.mulf %17, %21 : vector<128x64xf32>
    %23 = math.tanh %22 : vector<128x64xf32>
    %c0_9 = arith.constant 0 : index
    %c0_10 = arith.constant 0 : index
    %24 = vector.load %arg3[%c0_9, %c0_10] : memref<128x64xf32, #tpu.memory_space<vmem>>, vector<128x64xf32>
    tpu.vector_store %arg3[%c0_9, %c0_10], %23 {strides = array<i32>} : memref<128x64xf32, #tpu.memory_space<vmem>>, vector<128x64xf32>,
    return
  }
  func.func @transform_0(%arg0: i32) -> (i32, i32) {
    %c0_i32 = arith.constant 0 : i32
    %c0_i32_0 = arith.constant 0 : i32
    %c0_i32_1 = arith.constant 0 : i32
    return %c0_i32, %c0_i32_0 : i32, i32
  }
  func.func @transform_1(%arg0: i32) -> (i32, i32) {
    %c0_i32 = arith.constant 0 : i32
    %c0_i32_0 = arith.constant 0 : i32
    %c0_i32_1 = arith.constant 0 : i32
    return %c0_i32, %c0_i32_0 : i32, i32
  }
  func.func @transform_2(%arg0: i32) -> (i32, i32) {
    %c0_i32 = arith.constant 0 : i32
    %c0_i32_0 = arith.constant 0 : i32
    %c0_i32_1 = arith.constant 0 : i32
    return %c0_i32, %c0_i32_0 : i32, i32
  }
}

module attributes {stable_mosaic.version = 11 : i64} {
  func.func @conv_bn_tanh_kernel(%arg0: i32, %arg1: memref<512x576xf32, #tpu.memory_space<vmem>>, %arg2: memref<576x32xf32, #tpu.memory_space<vmem>>, %arg3: memref<512x32xf32, #tpu.memory_space<vmem>>) attributes {dimension_semantics = [#tpu.dimension_semantics<arbitrary>], iteration_bounds = array<i64: 1>, scalar_prefetch = 0 : i64, scratch_operands = 0 : i64, tpu.core_type = #tpu.core_type<tc>, window_params = [{pipeline_mode = #tpu.pipeline_mode<synchronous>, transform_indices = @transform_0, window_bounds = array<i64: 512, 576>}, {pipeline_mode = #tpu.pipeline_mode<synchronous>, transform_indices = @transform_1, window_bounds = array<i64: 576, 32>}, {pipeline_mode = #tpu.pipeline_mode<synchronous>, transform_indices = @transform_2, window_bounds = array<i64: 512, 32>}]} {
    %c0 = arith.constant 0 : index
    %c0_0 = arith.constant 0 : index
    %0 = vector.load %arg1[%c0, %c0_0] : memref<512x576xf32, #tpu.memory_space<vmem>>, vector<512x576xf32>
    %c0_1 = arith.constant 0 : index
    %c0_2 = arith.constant 0 : index
    %1 = vector.load %arg2[%c0_1, %c0_2] : memref<576x32xf32, #tpu.memory_space<vmem>>, vector<576x32xf32>
    %cst = arith.constant dense<0.000000e+00> : vector<512x32xf32>
    %2 = tpu.matmul %0, %1, %cst {dimension_numbers = #tpu.dot_dimension_numbers<[1], [0], [0], [1], [0, 0, 1, 1], [], []>} : vector<512x576xf32>, vector<576x32xf32>, vector<512x32xf32> -> vector<512x32xf32>
    %cst_3 = arith.constant dense<0.000000e+00> : vector<32xf32>
    %3 = vector.multi_reduction <add>, %2, %cst_3 [0] : vector<512x32xf32> to vector<32xf32>
    %4 = vector.shape_cast %3 : vector<32xf32> to vector<1x32xf32>
    %5 = arith.mulf %2, %2 : vector<512x32xf32>
    %cst_4 = arith.constant dense<0.000000e+00> : vector<32xf32>
    %6 = vector.multi_reduction <add>, %5, %cst_4 [0] : vector<512x32xf32> to vector<32xf32>
    %7 = vector.shape_cast %6 : vector<32xf32> to vector<1x32xf32>
    %cst_5 = arith.constant 0.001953125 : f32
    %8 = vector.broadcast %cst_5 : f32 to vector<1x32xf32>
    %9 = arith.mulf %4, %8 : vector<1x32xf32>
    %cst_6 = arith.constant 0.001953125 : f32
    %10 = vector.broadcast %cst_6 : f32 to vector<1x32xf32>
    %11 = arith.mulf %7, %10 : vector<1x32xf32>
    %12 = arith.mulf %9, %9 : vector<1x32xf32>
    %13 = arith.subf %11, %12 : vector<1x32xf32>
    %cst_7 = arith.constant 0.000000e+00 : f32
    %14 = vector.broadcast %cst_7 : f32 to vector<1x32xf32>
    %15 = arith.maximumf %13, %14 : vector<1x32xf32>
    %16 = vector.broadcast %9 : vector<1x32xf32> to vector<512x32xf32>
    %17 = arith.subf %2, %16 : vector<512x32xf32>
    %cst_8 = arith.constant 9.99999974E-6 : f32
    %18 = vector.broadcast %cst_8 : f32 to vector<1x32xf32>
    %19 = arith.addf %15, %18 : vector<1x32xf32>
    %20 = math.rsqrt %19 : vector<1x32xf32>
    %21 = vector.broadcast %20 : vector<1x32xf32> to vector<512x32xf32>
    %22 = arith.mulf %17, %21 : vector<512x32xf32>
    %23 = math.tanh %22 : vector<512x32xf32>
    %c0_9 = arith.constant 0 : index
    %c0_10 = arith.constant 0 : index
    %24 = vector.load %arg3[%c0_9, %c0_10] : memref<512x32xf32, #tpu.memory_space<vmem>>, vector<512x32xf32>
    tpu.vector_store %arg3[%c0_9, %c0_10], %23 {strides = array<i32>} : memref<512x32xf32, #tpu.memory_space<vmem>>, vector<512x32xf32>,
    return
  }
  func.func @transform_0(%arg0: i32) -> (i32, i32) {
    %c0_i32 = arith.constant 0 : i32
    %c0_i32_0 = arith.constant 0 : i32
    %c0_i32_1 = arith.constant 0 : i32
    return %c0_i32, %c0_i32_0 : i32, i32
  }
  func.func @transform_1(%arg0: i32) -> (i32, i32) {
    %c0_i32 = arith.constant 0 : i32
    %c0_i32_0 = arith.constant 0 : i32
    %c0_i32_1 = arith.constant 0 : i32
    return %c0_i32, %c0_i32_0 : i32, i32
  }
  func.func @transform_2(%arg0: i32) -> (i32, i32) {
    %c0_i32 = arith.constant 0 : i32
    %c0_i32_0 = arith.constant 0 : i32
    %c0_i32_1 = arith.constant 0 : i32
    return %c0_i32, %c0_i32_0 : i32, i32
  }
}

module attributes {stable_mosaic.version = 11 : i64} {
  func.func @conv_bn_tanh_kernel(%arg0: i32, %arg1: memref<2048x288xf32, #tpu.memory_space<vmem>>, %arg2: memref<288x128xf32, #tpu.memory_space<vmem>>, %arg3: memref<2048x128xf32, #tpu.memory_space<vmem>>) attributes {dimension_semantics = [#tpu.dimension_semantics<arbitrary>], iteration_bounds = array<i64: 1>, scalar_prefetch = 0 : i64, scratch_operands = 0 : i64, tpu.core_type = #tpu.core_type<tc>, window_params = [{pipeline_mode = #tpu.pipeline_mode<synchronous>, transform_indices = @transform_0, window_bounds = array<i64: 2048, 288>}, {pipeline_mode = #tpu.pipeline_mode<synchronous>, transform_indices = @transform_1, window_bounds = array<i64: 288, 128>}, {pipeline_mode = #tpu.pipeline_mode<synchronous>, transform_indices = @transform_2, window_bounds = array<i64: 2048, 128>}]} {
    %c0 = arith.constant 0 : index
    %c0_0 = arith.constant 0 : index
    %0 = vector.load %arg1[%c0, %c0_0] : memref<2048x288xf32, #tpu.memory_space<vmem>>, vector<2048x288xf32>
    %c0_1 = arith.constant 0 : index
    %c0_2 = arith.constant 0 : index
    %1 = vector.load %arg2[%c0_1, %c0_2] : memref<288x128xf32, #tpu.memory_space<vmem>>, vector<288x128xf32>
    %cst = arith.constant dense<0.000000e+00> : vector<2048x128xf32>
    %2 = tpu.matmul %0, %1, %cst {dimension_numbers = #tpu.dot_dimension_numbers<[1], [0], [0], [1], [0, 0, 1, 1], [], []>} : vector<2048x288xf32>, vector<288x128xf32>, vector<2048x128xf32> -> vector<2048x128xf32>
    %cst_3 = arith.constant dense<0.000000e+00> : vector<128xf32>
    %3 = vector.multi_reduction <add>, %2, %cst_3 [0] : vector<2048x128xf32> to vector<128xf32>
    %4 = vector.shape_cast %3 : vector<128xf32> to vector<1x128xf32>
    %5 = arith.mulf %2, %2 : vector<2048x128xf32>
    %cst_4 = arith.constant dense<0.000000e+00> : vector<128xf32>
    %6 = vector.multi_reduction <add>, %5, %cst_4 [0] : vector<2048x128xf32> to vector<128xf32>
    %7 = vector.shape_cast %6 : vector<128xf32> to vector<1x128xf32>
    %cst_5 = arith.constant 4.8828125E-4 : f32
    %8 = vector.broadcast %cst_5 : f32 to vector<1x128xf32>
    %9 = arith.mulf %4, %8 : vector<1x128xf32>
    %cst_6 = arith.constant 4.8828125E-4 : f32
    %10 = vector.broadcast %cst_6 : f32 to vector<1x128xf32>
    %11 = arith.mulf %7, %10 : vector<1x128xf32>
    %12 = arith.mulf %9, %9 : vector<1x128xf32>
    %13 = arith.subf %11, %12 : vector<1x128xf32>
    %cst_7 = arith.constant 0.000000e+00 : f32
    %14 = vector.broadcast %cst_7 : f32 to vector<1x128xf32>
    %15 = arith.maximumf %13, %14 : vector<1x128xf32>
    %16 = vector.broadcast %9 : vector<1x128xf32> to vector<2048x128xf32>
    %17 = arith.subf %2, %16 : vector<2048x128xf32>
    %cst_8 = arith.constant 9.99999974E-6 : f32
    %18 = vector.broadcast %cst_8 : f32 to vector<1x128xf32>
    %19 = arith.addf %15, %18 : vector<1x128xf32>
    %20 = math.rsqrt %19 : vector<1x128xf32>
    %21 = vector.broadcast %20 : vector<1x128xf32> to vector<2048x128xf32>
    %22 = arith.mulf %17, %21 : vector<2048x128xf32>
    %23 = math.tanh %22 : vector<2048x128xf32>
    %c0_9 = arith.constant 0 : index
    %c0_10 = arith.constant 0 : index
    %24 = vector.load %arg3[%c0_9, %c0_10] : memref<2048x128xf32, #tpu.memory_space<vmem>>, vector<2048x128xf32>
    tpu.vector_store %arg3[%c0_9, %c0_10], %23 {strides = array<i32>} : memref<2048x128xf32, #tpu.memory_space<vmem>>, vector<2048x128xf32>,
    return
  }
  func.func @transform_0(%arg0: i32) -> (i32, i32) {
    %c0_i32 = arith.constant 0 : i32
    %c0_i32_0 = arith.constant 0 : i32
    %c0_i32_1 = arith.constant 0 : i32
    return %c0_i32, %c0_i32_0 : i32, i32
  }
  func.func @transform_1(%arg0: i32) -> (i32, i32) {
    %c0_i32 = arith.constant 0 : i32
    %c0_i32_0 = arith.constant 0 : i32
    %c0_i32_1 = arith.constant 0 : i32
    return %c0_i32, %c0_i32_0 : i32, i32
  }
  func.func @transform_2(%arg0: i32) -> (i32, i32) {
    %c0_i32 = arith.constant 0 : i32
    %c0_i32_0 = arith.constant 0 : i32
    %c0_i32_1 = arith.constant 0 : i32
    return %c0_i32, %c0_i32_0 : i32, i32
  }
}

</mosaic_0001>

<llo_original>
// kernel: vgg5_decoder_forward.4
$region0: #{vgg5_decoder_forward.4}
  #allocation0 [shape = 'u32[]', space=smem, size = 0x4, offset = 0x4, fixed_abs, tag = 'smem constant byte address 0x4 - core index']
  #allocation1 [shape = 'u32[144,128]{1,0:T(1,128)}', space=vmem, size = 0x12000, scoped, tag = 'internal scratch']
  %s0 = inlined_call_operand.hbm [shape: f32[2,10], index: 0, kind: input, shape index: {}]
  %s1 = inlined_call_operand.hbm [shape: f32[10,4096], index: 1, kind: input, shape index: {}]
  %s2 = inlined_call_operand.vmem [shape: f32[1,4096], index: 2, kind: input, shape index: {}]
  %s3 = inlined_call_operand.vmem [shape: f32[2,4096], index: 3, kind: output, shape index: {}]
  %s4 = sld [smem:[#allocation0]]
  $region30: #{vgg5_decoder_forward.4} parent=0
    _
  %s6 = ssub.s32 1, %s4
  %s7 = scalar_select 0, %s6, %s4
  $region1: #{vgg5_decoder_forward.4} parent=0
    #allocation2 [shape = 'u8[1024]{0}', space=vmem, size = 0x400, scoped, tag = 'input window, operand 0, single buffered']
    #allocation3 [shape = 's32[1]{0}', space=sflag, size = 0x4, scoped, tag = 'scoped memory for vgg5_decoder_forward.4']
    #allocation4 [shape = 'u8[262144]{0}', space=vmem, size = 0x40000, scoped, tag = 'input window, operand 1, single buffered']
    #allocation5 [shape = 's32[1]{0}', space=sflag, size = 0x4, scoped, tag = 'scoped memory for vgg5_decoder_forward.4']
    %8 = vsyncpa [#allocation3], 0
    %9 = vsyncpa [#allocation5], 0
    // Predicated region
    $region2: #{vgg5_decoder_forward.4} parent=1 // pred_check
      _
    $region3: #{vgg5_decoder_forward.4} parent=1 // pred_check_branch
      %11 = sbr.rel (0) target = $region5
    $region4: #{vgg5_decoder_forward.4} parent=1 // pred_region
      %s13 = ssub.s32 32, 32
      %14 = vsyncadd [#allocation3], %s13
      %s16 = sshll.u32 [#allocation2], 4
      %s17 = int_to_ptr.vmem [resolvable:$true] %s16
      %19 = dma.hbm_to_vmem [thread:$0]  %s0, 32, %s17, [#allocation3]
    $region5: #{vgg5_decoder_forward.4} parent=1 // pred_fallthru
      _
    // Predicated region
    $region6: #{vgg5_decoder_forward.4} parent=1 // pred_check
      _
    $region7: #{vgg5_decoder_forward.4} parent=1 // pred_check_branch
      %21 = sbr.rel (0) target = $region9
    $region8: #{vgg5_decoder_forward.4} parent=1 // pred_region
      %s23 = ssub.s32 8192, 8192
      %24 = vsyncadd [#allocation5], %s23
      %s25 = sshll.u32 [#allocation4], 4
      %s26 = int_to_ptr.vmem [resolvable:$true] %s25
      %31 = dma.hbm_to_vmem [thread:$0]  %s1, 8192, %s26, [#allocation5], 4096, 4096, 256
    $region9: #{vgg5_decoder_forward.4} parent=1 // pred_fallthru
      _
    // Predicated region
    $region10: #{vgg5_decoder_forward.4} parent=1 // pred_check
      _
    $region11: #{vgg5_decoder_forward.4} parent=1 // pred_check_branch
      %33 = sbr.rel (0) target = $region13
    $region12: #{vgg5_decoder_forward.4} parent=1 // pred_region
      _
    $region13: #{vgg5_decoder_forward.4} parent=1 // pred_fallthru
      _
    // Predicated region
    $region14: #{vgg5_decoder_forward.4} parent=1 // pred_check
      _
    $region15: #{vgg5_decoder_forward.4} parent=1 // pred_check_branch
      %35 = sbr.rel (0) target = $region17
    $region16: #{vgg5_decoder_forward.4} parent=1 // pred_region
      %36 = dma.done [#allocation3], 32
    $region17: #{vgg5_decoder_forward.4} parent=1 // pred_fallthru
      _
    // Predicated region
    $region18: #{vgg5_decoder_forward.4} parent=1 // pred_check
      _
    $region19: #{vgg5_decoder_forward.4} parent=1 // pred_check_branch
      %38 = sbr.rel (0) target = $region21
    $region20: #{vgg5_decoder_forward.4} parent=1 // pred_region
      %39 = dma.done [#allocation5], 8192
    $region21: #{vgg5_decoder_forward.4} parent=1 // pred_fallthru
      _
    %v40 = vld [vmem:[#allocation2] sm:$0x3]
    %v41 = vld [vmem:[#allocation4] sm:$0xff]
    %v42 = vld [vmem:[#allocation4 + $0x8] sm:$0xff]
    %v43 = vld [vmem:[#allocation4 + $0x10] sm:$0xff]
    %v44 = vld [vmem:[#allocation4 + $0x18] sm:$0xff]
    %v45 = vld [vmem:[#allocation4 + $0x20] sm:$0xff]
    %v46 = vld [vmem:[#allocation4 + $0x28] sm:$0xff]
    %v47 = vld [vmem:[#allocation4 + $0x30] sm:$0xff]
    %v48 = vld [vmem:[#allocation4 + $0x38] sm:$0xff]
    %v49 = vld [vmem:[#allocation4 + $0x40] sm:$0xff]
    %v50 = vld [vmem:[#allocation4 + $0x48] sm:$0xff]
    %v51 = vld [vmem:[#allocation4 + $0x50] sm:$0xff]
    %v52 = vld [vmem:[#allocation4 + $0x58] sm:$0xff]
    %v53 = vld [vmem:[#allocation4 + $0x60] sm:$0xff]
    %v54 = vld [vmem:[#allocation4 + $0x68] sm:$0xff]
    %v55 = vld [vmem:[#allocation4 + $0x70] sm:$0xff]
    %v56 = vld [vmem:[#allocation4 + $0x78] sm:$0xff]
    %v57 = vld [vmem:[#allocation4 + $0x80] sm:$0xff]
    %v58 = vld [vmem:[#allocation4 + $0x88] sm:$0xff]
    %v59 = vld [vmem:[#allocation4 + $0x90] sm:$0xff]
    %v60 = vld [vmem:[#allocation4 + $0x98] sm:$0xff]
    %v61 = vld [vmem:[#allocation4 + $0xa0] sm:$0xff]
    %v62 = vld [vmem:[#allocation4 + $0xa8] sm:$0xff]
    %v63 = vld [vmem:[#allocation4 + $0xb0] sm:$0xff]
    %v64 = vld [vmem:[#allocation4 + $0xb8] sm:$0xff]
    %v65 = vld [vmem:[#allocation4 + $0xc0] sm:$0xff]
    %v66 = vld [vmem:[#allocation4 + $0xc8] sm:$0xff]
    %v67 = vld [vmem:[#allocation4 + $0xd0] sm:$0xff]
    %v68 = vld [vmem:[#allocation4 + $0xd8] sm:$0xff]
    %v69 = vld [vmem:[#allocation4 + $0xe0] sm:$0xff]
    %v70 = vld [vmem:[#allocation4 + $0xe8] sm:$0xff]
    %v71 = vld [vmem:[#allocation4 + $0xf0] sm:$0xff]
    %v72 = vld [vmem:[#allocation4 + $0xf8] sm:$0xff]
    %v73 = vld [vmem:[#allocation4 + $0x100] sm:$0x3]
    %v74 = vld [vmem:[#allocation4 + $0x108] sm:$0x3]
    %v75 = vld [vmem:[#allocation4 + $0x110] sm:$0x3]
    %v76 = vld [vmem:[#allocation4 + $0x118] sm:$0x3]
    %v77 = vld [vmem:[#allocation4 + $0x120] sm:$0x3]
    %v78 = vld [vmem:[#allocation4 + $0x128] sm:$0x3]
    %v79 = vld [vmem:[#allocation4 + $0x130] sm:$0x3]
    %v80 = vld [vmem:[#allocation4 + $0x138] sm:$0x3]
    %v81 = vld [vmem:[#allocation4 + $0x140] sm:$0x3]
    %v82 = vld [vmem:[#allocation4 + $0x148] sm:$0x3]
    %v83 = vld [vmem:[#allocation4 + $0x150] sm:$0x3]
    %v84 = vld [vmem:[#allocation4 + $0x158] sm:$0x3]
    %v85 = vld [vmem:[#allocation4 + $0x160] sm:$0x3]
    %v86 = vld [vmem:[#allocation4 + $0x168] sm:$0x3]
    %v87 = vld [vmem:[#allocation4 + $0x170] sm:$0x3]
    %v88 = vld [vmem:[#allocation4 + $0x178] sm:$0x3]
    %v89 = vld [vmem:[#allocation4 + $0x180] sm:$0x3]
    %v90 = vld [vmem:[#allocation4 + $0x188] sm:$0x3]
    %v91 = vld [vmem:[#allocation4 + $0x190] sm:$0x3]
    %v92 = vld [vmem:[#allocation4 + $0x198] sm:$0x3]
    %v93 = vld [vmem:[#allocation4 + $0x1a0] sm:$0x3]
    %v94 = vld [vmem:[#allocation4 + $0x1a8] sm:$0x3]
    %v95 = vld [vmem:[#allocation4 + $0x1b0] sm:$0x3]
    %v96 = vld [vmem:[#allocation4 + $0x1b8] sm:$0x3]
    %v97 = vld [vmem:[#allocation4 + $0x1c0] sm:$0x3]
    %v98 = vld [vmem:[#allocation4 + $0x1c8] sm:$0x3]
    %v99 = vld [vmem:[#allocation4 + $0x1d0] sm:$0x3]
    %v100 = vld [vmem:[#allocation4 + $0x1d8] sm:$0x3]
    %v101 = vld [vmem:[#allocation4 + $0x1e0] sm:$0x3]
    %v102 = vld [vmem:[#allocation4 + $0x1e8] sm:$0x3]
    %v103 = vld [vmem:[#allocation4 + $0x1f0] sm:$0x3]
    %v104 = vld [vmem:[#allocation4 + $0x1f8] sm:$0x3]
    %v105 = vld [vmem:[%s2] sm:$0xff]
    %v106 = vld [vmem:[%s2 + $0x8] sm:$0xff]
    %v107 = vld [vmem:[%s2 + $0x10] sm:$0xff]
    %v108 = vld [vmem:[%s2 + $0x18] sm:$0xff]
    %v113 = vlaneseq
    %v114 = vshrl.u32 %v113, 7
    %v115 = vsub.s32 0, %v114
    %v116 = vrot.slane %v105, %v115
    %v117 = vlaneseq
    %v118 = vshrl.u32 %v117, 7
    %v119 = vsub.s32 1, %v118
    %v120 = vrot.slane %v105, %v119
    %v121 = vlaneseq
    %v122 = vshrl.u32 %v121, 7
    %v123 = vsub.s32 2, %v122
    %v124 = vrot.slane %v105, %v123
    %v125 = vlaneseq
    %v126 = vshrl.u32 %v125, 7
    %v127 = vsub.s32 3, %v126
    %v128 = vrot.slane %v105, %v127
    %v129 = vlaneseq
    %v130 = vshrl.u32 %v129, 7
    %v131 = vsub.s32 4, %v130
    %v132 = vrot.slane %v105, %v131
    %v133 = vlaneseq
    %v134 = vshrl.u32 %v133, 7
    %v135 = vsub.s32 5, %v134
    %v136 = vrot.slane %v105, %v135
    %v137 = vlaneseq
    %v138 = vshrl.u32 %v137, 7
    %v139 = vsub.s32 6, %v138
    %v140 = vrot.slane %v105, %v139
    %v141 = vlaneseq
    %v142 = vshrl.u32 %v141, 7
    %v143 = vsub.s32 7, %v142
    %v144 = vrot.slane %v105, %v143
    %v145 = vlaneseq
    %v146 = vshrl.u32 %v145, 7
    %v147 = vsub.s32 0, %v146
    %v148 = vrot.slane %v106, %v147
    %v149 = vlaneseq
    %v150 = vshrl.u32 %v149, 7
    %v151 = vsub.s32 1, %v150
    %v152 = vrot.slane %v106, %v151
    %v153 = vlaneseq
    %v154 = vshrl.u32 %v153, 7
    %v155 = vsub.s32 2, %v154
    %v156 = vrot.slane %v106, %v155
    %v157 = vlaneseq
    %v158 = vshrl.u32 %v157, 7
    %v159 = vsub.s32 3, %v158
    %v160 = vrot.slane %v106, %v159
    %v161 = vlaneseq
    %v162 = vshrl.u32 %v161, 7
    %v163 = vsub.s32 4, %v162
    %v164 = vrot.slane %v106, %v163
    %v165 = vlaneseq
    %v166 = vshrl.u32 %v165, 7
    %v167 = vsub.s32 5, %v166
    %v168 = vrot.slane %v106, %v167
    %v169 = vlaneseq
    %v170 = vshrl.u32 %v169, 7
    %v171 = vsub.s32 6, %v170
    %v172 = vrot.slane %v106, %v171
    %v173 = vlaneseq
    %v174 = vshrl.u32 %v173, 7
    %v175 = vsub.s32 7, %v174
    %v176 = vrot.slane %v106, %v175
    %v177 = vlaneseq
    %v178 = vshrl.u32 %v177, 7
    %v179 = vsub.s32 0, %v178
    %v180 = vrot.slane %v107, %v179
    %v181 = vlaneseq
    %v182 = vshrl.u32 %v181, 7
    %v183 = vsub.s32 1, %v182
    %v184 = vrot.slane %v107, %v183
    %v185 = vlaneseq
    %v186 = vshrl.u32 %v185, 7
    %v187 = vsub.s32 2, %v186
    %v188 = vrot.slane %v107, %v187
    %v189 = vlaneseq
    %v190 = vshrl.u32 %v189, 7
    %v191 = vsub.s32 3, %v190
    %v192 = vrot.slane %v107, %v191
    %v193 = vlaneseq
    %v194 = vshrl.u32 %v193, 7
    %v195 = vsub.s32 4, %v194
    %v196 = vrot.slane %v107, %v195
    %v197 = vlaneseq
    %v198 = vshrl.u32 %v197, 7
    %v199 = vsub.s32 5, %v198
    %v200 = vrot.slane %v107, %v199
    %v201 = vlaneseq
    %v202 = vshrl.u32 %v201, 7
    %v203 = vsub.s32 6, %v202
    %v204 = vrot.slane %v107, %v203
    %v205 = vlaneseq
    %v206 = vshrl.u32 %v205, 7
    %v207 = vsub.s32 7, %v206
    %v208 = vrot.slane %v107, %v207
    %v209 = vlaneseq
    %v210 = vshrl.u32 %v209, 7
    %v211 = vsub.s32 0, %v210
    %v212 = vrot.slane %v108, %v211
    %v213 = vlaneseq
    %v214 = vshrl.u32 %v213, 7
    %v215 = vsub.s32 1, %v214
    %v216 = vrot.slane %v108, %v215
    %v217 = vlaneseq
    %v218 = vshrl.u32 %v217, 7
    %v219 = vsub.s32 2, %v218
    %v220 = vrot.slane %v108, %v219
    %v221 = vlaneseq
    %v222 = vshrl.u32 %v221, 7
    %v223 = vsub.s32 3, %v222
    %v224 = vrot.slane %v108, %v223
    %v225 = vlaneseq
    %v226 = vshrl.u32 %v225, 7
    %v227 = vsub.s32 4, %v226
    %v228 = vrot.slane %v108, %v227
    %v229 = vlaneseq
    %v230 = vshrl.u32 %v229, 7
    %v231 = vsub.s32 5, %v230
    %v232 = vrot.slane %v108, %v231
    %v233 = vlaneseq
    %v234 = vshrl.u32 %v233, 7
    %v235 = vsub.s32 6, %v234
    %v236 = vrot.slane %v108, %v235
    %v237 = vlaneseq
    %v238 = vshrl.u32 %v237, 7
    %v239 = vsub.s32 7, %v238
    %v240 = vrot.slane %v108, %v239
    %vm273 = vcmask 80896
    %v275 = vsel %vm273, %v40, 0
    %vm277 = vcmask 1041408
    %v279 = vsel %vm277, %v73, 0
    %v282 = vsel %vm277, %v74, 0
    %v285 = vsel %vm277, %v75, 0
    %v288 = vsel %vm277, %v76, 0
    %v291 = vsel %vm277, %v77, 0
    %v294 = vsel %vm277, %v78, 0
    %v297 = vsel %vm277, %v79, 0
    %v300 = vsel %vm277, %v80, 0
    %v303 = vsel %vm277, %v81, 0
    %v306 = vsel %vm277, %v82, 0
    %v309 = vsel %vm277, %v83, 0
    %v312 = vsel %vm277, %v84, 0
    %v315 = vsel %vm277, %v85, 0
    %v318 = vsel %vm277, %v86, 0
    %v321 = vsel %vm277, %v87, 0
    %v324 = vsel %vm277, %v88, 0
    %v327 = vsel %vm277, %v89, 0
    %v330 = vsel %vm277, %v90, 0
    %v333 = vsel %vm277, %v91, 0
    %v336 = vsel %vm277, %v92, 0
    %v339 = vsel %vm277, %v93, 0
    %v342 = vsel %vm277, %v94, 0
    %v345 = vsel %vm277, %v95, 0
    %v348 = vsel %vm277, %v96, 0
    %v351 = vsel %vm277, %v97, 0
    %v354 = vsel %vm277, %v98, 0
    %v357 = vsel %vm277, %v99, 0
    %v360 = vsel %vm277, %v100, 0
    %v363 = vsel %vm277, %v101, 0
    %v366 = vsel %vm277, %v102, 0
    %v369 = vsel %vm277, %v103, 0
    %v372 = vsel %vm277, %v104, 0
    %374 = vmatprep.subr.mxu0 %v42
    %375 = vmatpush1.msra.mxu0 %v41
    %376 = vmatprep.subr.mxu0 %v282
    %377 = vmatpush1.msra.mxu0 %v279
    %378 = vmatprep.subr.mxu0 0.0
    %379 = vmatpush1.msra.mxu0 0.0
    %380 = vmatprep.subr.mxu0 0.0
    %381 = vmatpush1.msra.mxu0 0.0
    %382 = vmatprep.subr.mxu0 0.0
    %383 = vmatpush1.msra.mxu0 0.0
    %384 = vmatprep.subr.mxu0 0.0
    %385 = vmatpush1.msra.mxu0 0.0
    %386 = vmatprep.subr.mxu0 0.0
    %387 = vmatpush1.msra.mxu0 0.0
    %388 = vmatprep.subr.mxu0 0.0
    %389 = vmatpush1.msra.mxu0 0.0
    %390 = vmatprep.subr.mxu0 0.0
    %391 = vmatpush1.msra.mxu0 0.0
    %392 = vmatprep.subr.mxu0 0.0
    %393 = vmatpush1.msra.mxu0 0.0
    %394 = vmatprep.subr.mxu0 0.0
    %395 = vmatpush1.msra.mxu0 0.0
    %396 = vmatprep.subr.mxu0 0.0
    %397 = vmatpush1.msra.mxu0 0.0
    %398 = vmatprep.subr.mxu0 0.0
    %399 = vmatpush1.msra.mxu0 0.0
    %400 = vmatprep.subr.mxu0 0.0
    %401 = vmatpush1.msra.mxu0 0.0
    %402 = vmatprep.subr.mxu0 0.0
    %403 = vmatpush1.msra.mxu0 0.0
    %404 = vmatprep.subr.mxu0 0.0
    %405 = vmatpush1.msra.mxu0 0.0
    %406 = vmatprep.subr.mxu0 0.0
    %407 = vmatpush1.msra.mxu0 0.0
    %408 = vmatprep.subr.mxu0 0.0
    %409 = vmatpush1.msra.mxu0 0.0
    %410 = vmatprep.subr.mxu0 0.0
    %411 = vmatpush1.msra.mxu0 0.0
    %412 = vmatprep.subr.mxu0 0.0
    %413 = vmatpush1.msra.mxu0 0.0
    %414 = vmatprep.subr.mxu0 0.0
    %415 = vmatpush1.msra.mxu0 0.0
    %416 = vmatprep.subr.mxu0 0.0
    %417 = vmatpush1.msra.mxu0 0.0
    %418 = vmatprep.subr.mxu0 0.0
    %419 = vmatpush1.msra.mxu0 0.0
    %420 = vmatprep.subr.mxu0 0.0
    %421 = vmatpush1.msra.mxu0 0.0
    %422 = vmatprep.subr.mxu0 0.0
    %423 = vmatpush1.msra.mxu0 0.0
    %424 = vmatprep.subr.mxu0 0.0
    %425 = vmatpush1.msra.mxu0 0.0
    %426 = vmatprep.subr.mxu0 0.0
    %427 = vmatpush1.msra.mxu0 0.0
    %428 = vmatprep.subr.mxu0 0.0
    %429 = vmatpush1.msra.mxu0 0.0
    %430 = vmatprep.subr.mxu0 0.0
    %431 = vmatpush1.msra.mxu0 0.0
    %432 = vmatprep.subr.mxu0 0.0
    %433 = vmatpush1.msra.mxu0 0.0
    %434 = vmatprep.subr.mxu0 0.0
    %435 = vmatpush1.msra.mxu0 0.0
    %436 = vmatprep.subr.mxu0 0.0
    %437 = vmatpush1.msra.mxu0 0.0
    %438 = vmatprep.mubr.f32.mxu0 0.0
    %439 = vmatmul.mubr.f32.gmra.mrb[0].mxu0 %v275
    %v440 = vpop.f32.mrb[0].mxu0
    %v441 = vadd.f32 %v116, %v440
    %v442 = vpop.f32.mrb[0].mxu0
    %v443 = vadd.f32 %v120, %v442
    %444 = vdwg.mxu0
    %445 = vmatprep.subr.mxu0 %v44
    %446 = vmatpush1.msra.mxu0 %v43
    %447 = vmatprep.subr.mxu0 %v288
    %448 = vmatpush1.msra.mxu0 %v285
    %449 = vmatprep.subr.mxu0 0.0
    %450 = vmatpush1.msra.mxu0 0.0
    %451 = vmatprep.subr.mxu0 0.0
    %452 = vmatpush1.msra.mxu0 0.0
    %453 = vmatprep.subr.mxu0 0.0
    %454 = vmatpush1.msra.mxu0 0.0
    %455 = vmatprep.subr.mxu0 0.0
    %456 = vmatpush1.msra.mxu0 0.0
    %457 = vmatprep.subr.mxu0 0.0
    %458 = vmatpush1.msra.mxu0 0.0
    %459 = vmatprep.subr.mxu0 0.0
    %460 = vmatpush1.msra.mxu0 0.0
    %461 = vmatprep.subr.mxu0 0.0
    %462 = vmatpush1.msra.mxu0 0.0
    %463 = vmatprep.subr.mxu0 0.0
    %464 = vmatpush1.msra.mxu0 0.0
    %465 = vmatprep.subr.mxu0 0.0
    %466 = vmatpush1.msra.mxu0 0.0
    %467 = vmatprep.subr.mxu0 0.0
    %468 = vmatpush1.msra.mxu0 0.0
    %469 = vmatprep.subr.mxu0 0.0
    %470 = vmatpush1.msra.mxu0 0.0
    %471 = vmatprep.subr.mxu0 0.0
    %472 = vmatpush1.msra.mxu0 0.0
    %473 = vmatprep.subr.mxu0 0.0
    %474 = vmatpush1.msra.mxu0 0.0
    %475 = vmatprep.subr.mxu0 0.0
    %476 = vmatpush1.msra.mxu0 0.0
    %477 = vmatprep.subr.mxu0 0.0
    %478 = vmatpush1.msra.mxu0 0.0
    %479 = vmatprep.subr.mxu0 0.0
    %480 = vmatpush1.msra.mxu0 0.0
    %481 = vmatprep.subr.mxu0 0.0
    %482 = vmatpush1.msra.mxu0 0.0
    %483 = vmatprep.subr.mxu0 0.0
    %484 = vmatpush1.msra.mxu0 0.0
    %485 = vmatprep.subr.mxu0 0.0
    %486 = vmatpush1.msra.mxu0 0.0
    %487 = vmatprep.subr.mxu0 0.0
    %488 = vmatpush1.msra.mxu0 0.0
    %489 = vmatprep.subr.mxu0 0.0
    %490 = vmatpush1.msra.mxu0 0.0
    %491 = vmatprep.subr.mxu0 0.0
    %492 = vmatpush1.msra.mxu0 0.0
    %493 = vmatprep.subr.mxu0 0.0
    %494 = vmatpush1.msra.mxu0 0.0
    %495 = vmatprep.subr.mxu0 0.0
    %496 = vmatpush1.msra.mxu0 0.0
    %497 = vmatprep.subr.mxu0 0.0
    %498 = vmatpush1.msra.mxu0 0.0
    %499 = vmatprep.subr.mxu0 0.0
    %500 = vmatpush1.msra.mxu0 0.0
    %501 = vmatprep.subr.mxu0 0.0
    %502 = vmatpush1.msra.mxu0 0.0
    %503 = vmatprep.subr.mxu0 0.0
    %504 = vmatpush1.msra.mxu0 0.0
    %505 = vmatprep.subr.mxu0 0.0
    %506 = vmatpush1.msra.mxu0 0.0
    %507 = vmatprep.subr.mxu0 0.0
    %508 = vmatpush1.msra.mxu0 0.0
    %509 = vmatprep.mubr.f32.mxu0 0.0
    %510 = vmatmul.mubr.f32.gmra.mrb[0].mxu0 %v275
    %v511 = vpop.f32.mrb[0].mxu0
    %v512 = vadd.f32 %v124, %v511
    %v513 = vpop.f32.mrb[0].mxu0
    %v514 = vadd.f32 %v128, %v513
    %515 = vdwg.mxu0
    %516 = vmatprep.subr.mxu0 %v46
    %517 = vmatpush1.msra.mxu0 %v45
    %518 = vmatprep.subr.mxu0 %v294
    %519 = vmatpush1.msra.mxu0 %v291
    %520 = vmatprep.subr.mxu0 0.0
    %521 = vmatpush1.msra.mxu0 0.0
    %522 = vmatprep.subr.mxu0 0.0
    %523 = vmatpush1.msra.mxu0 0.0
    %524 = vmatprep.subr.mxu0 0.0
    %525 = vmatpush1.msra.mxu0 0.0
    %526 = vmatprep.subr.mxu0 0.0
    %527 = vmatpush1.msra.mxu0 0.0
    %528 = vmatprep.subr.mxu0 0.0
    %529 = vmatpush1.msra.mxu0 0.0
    %530 = vmatprep.subr.mxu0 0.0
    %531 = vmatpush1.msra.mxu0 0.0
    %532 = vmatprep.subr.mxu0 0.0
    %533 = vmatpush1.msra.mxu0 0.0
    %534 = vmatprep.subr.mxu0 0.0
    %535 = vmatpush1.msra.mxu0 0.0
    %536 = vmatprep.subr.mxu0 0.0
    %537 = vmatpush1.msra.mxu0 0.0
    %538 = vmatprep.subr.mxu0 0.0
    %539 = vmatpush1.msra.mxu0 0.0
    %540 = vmatprep.subr.mxu0 0.0
    %541 = vmatpush1.msra.mxu0 0.0
    %542 = vmatprep.subr.mxu0 0.0
    %543 = vmatpush1.msra.mxu0 0.0
    %544 = vmatprep.subr.mxu0 0.0
    %545 = vmatpush1.msra.mxu0 0.0
    %546 = vmatprep.subr.mxu0 0.0
    %547 = vmatpush1.msra.mxu0 0.0
    %548 = vmatprep.subr.mxu0 0.0
    %549 = vmatpush1.msra.mxu0 0.0
    %550 = vmatprep.subr.mxu0 0.0
    %551 = vmatpush1.msra.mxu0 0.0
    %552 = vmatprep.subr.mxu0 0.0
    %553 = vmatpush1.msra.mxu0 0.0
    %554 = vmatprep.subr.mxu0 0.0
    %555 = vmatpush1.msra.mxu0 0.0
    %556 = vmatprep.subr.mxu0 0.0
    %557 = vmatpush1.msra.mxu0 0.0
    %558 = vmatprep.subr.mxu0 0.0
    %559 = vmatpush1.msra.mxu0 0.0
    %560 = vmatprep.subr.mxu0 0.0
    %561 = vmatpush1.msra.mxu0 0.0
    %562 = vmatprep.subr.mxu0 0.0
    %563 = vmatpush1.msra.mxu0 0.0
    %564 = vmatprep.subr.mxu0 0.0
    %565 = vmatpush1.msra.mxu0 0.0
    %566 = vmatprep.subr.mxu0 0.0
    %567 = vmatpush1.msra.mxu0 0.0
    %568 = vmatprep.subr.mxu0 0.0
    %569 = vmatpush1.msra.mxu0 0.0
    %570 = vmatprep.subr.mxu0 0.0
    %571 = vmatpush1.msra.mxu0 0.0
    %572 = vmatprep.subr.mxu0 0.0
    %573 = vmatpush1.msra.mxu0 0.0
    %574 = vmatprep.subr.mxu0 0.0
    %575 = vmatpush1.msra.mxu0 0.0
    %576 = vmatprep.subr.mxu0 0.0
    %577 = vmatpush1.msra.mxu0 0.0
    %578 = vmatprep.subr.mxu0 0.0
    %579 = vmatpush1.msra.mxu0 0.0
    %580 = vmatprep.mubr.f32.mxu0 0.0
    %581 = vmatmul.mubr.f32.gmra.mrb[0].mxu0 %v275
    %v582 = vpop.f32.mrb[0].mxu0
    %v583 = vadd.f32 %v132, %v582
    %v584 = vpop.f32.mrb[0].mxu0
    %v585 = vadd.f32 %v136, %v584
    %586 = vdwg.mxu0
    %587 = vmatprep.subr.mxu0 %v48
    %588 = vmatpush1.msra.mxu0 %v47
    %589 = vmatprep.subr.mxu0 %v300
    %590 = vmatpush1.msra.mxu0 %v297
    %591 = vmatprep.subr.mxu0 0.0
    %592 = vmatpush1.msra.mxu0 0.0
    %593 = vmatprep.subr.mxu0 0.0
    %594 = vmatpush1.msra.mxu0 0.0
    %595 = vmatprep.subr.mxu0 0.0
    %596 = vmatpush1.msra.mxu0 0.0
    %597 = vmatprep.subr.mxu0 0.0
    %598 = vmatpush1.msra.mxu0 0.0
    %599 = vmatprep.subr.mxu0 0.0
    %600 = vmatpush1.msra.mxu0 0.0
    %601 = vmatprep.subr.mxu0 0.0
    %602 = vmatpush1.msra.mxu0 0.0
    %603 = vmatprep.subr.mxu0 0.0
    %604 = vmatpush1.msra.mxu0 0.0
    %605 = vmatprep.subr.mxu0 0.0
    %606 = vmatpush1.msra.mxu0 0.0
    %607 = vmatprep.subr.mxu0 0.0
    %608 = vmatpush1.msra.mxu0 0.0
    %609 = vmatprep.subr.mxu0 0.0
    %610 = vmatpush1.msra.mxu0 0.0
    %611 = vmatprep.subr.mxu0 0.0
    %612 = vmatpush1.msra.mxu0 0.0
    %613 = vmatprep.subr.mxu0 0.0
    %614 = vmatpush1.msra.mxu0 0.0
    %615 = vmatprep.subr.mxu0 0.0
    %616 = vmatpush1.msra.mxu0 0.0
    %617 = vmatprep.subr.mxu0 0.0
    %618 = vmatpush1.msra.mxu0 0.0
    %619 = vmatprep.subr.mxu0 0.0
    %620 = vmatpush1.msra.mxu0 0.0
    %621 = vmatprep.subr.mxu0 0.0
    %622 = vmatpush1.msra.mxu0 0.0
    %623 = vmatprep.subr.mxu0 0.0
    %624 = vmatpush1.msra.mxu0 0.0
    %625 = vmatprep.subr.mxu0 0.0
    %626 = vmatpush1.msra.mxu0 0.0
    %627 = vmatprep.subr.mxu0 0.0
    %628 = vmatpush1.msra.mxu0 0.0
    %629 = vmatprep.subr.mxu0 0.0
    %630 = vmatpush1.msra.mxu0 0.0
    %631 = vmatprep.subr.mxu0 0.0
    %632 = vmatpush1.msra.mxu0 0.0
    %633 = vmatprep.subr.mxu0 0.0
    %634 = vmatpush1.msra.mxu0 0.0
    %635 = vmatprep.subr.mxu0 0.0
    %636 = vmatpush1.msra.mxu0 0.0
    %637 = vmatprep.subr.mxu0 0.0
    %638 = vmatpush1.msra.mxu0 0.0
    %639 = vmatprep.subr.mxu0 0.0
    %640 = vmatpush1.msra.mxu0 0.0
    %641 = vmatprep.subr.mxu0 0.0
    %642 = vmatpush1.msra.mxu0 0.0
    %643 = vmatprep.subr.mxu0 0.0
    %644 = vmatpush1.msra.mxu0 0.0
    %645 = vmatprep.subr.mxu0 0.0
    %646 = vmatpush1.msra.mxu0 0.0
    %647 = vmatprep.subr.mxu0 0.0
    %648 = vmatpush1.msra.mxu0 0.0
    %649 = vmatprep.subr.mxu0 0.0
    %650 = vmatpush1.msra.mxu0 0.0
    %651 = vmatprep.mubr.f32.mxu0 0.0
    %652 = vmatmul.mubr.f32.gmra.mrb[0].mxu0 %v275
    %v653 = vpop.f32.mrb[0].mxu0
    %v654 = vadd.f32 %v140, %v653
    %v655 = vpop.f32.mrb[0].mxu0
    %v656 = vadd.f32 %v144, %v655
    %657 = vdwg.mxu0
    %658 = vmatprep.subr.mxu0 %v50
    %659 = vmatpush1.msra.mxu0 %v49
    %660 = vmatprep.subr.mxu0 %v306
    %661 = vmatpush1.msra.mxu0 %v303
    %662 = vmatprep.subr.mxu0 0.0
    %663 = vmatpush1.msra.mxu0 0.0
    %664 = vmatprep.subr.mxu0 0.0
    %665 = vmatpush1.msra.mxu0 0.0
    %666 = vmatprep.subr.mxu0 0.0
    %667 = vmatpush1.msra.mxu0 0.0
    %668 = vmatprep.subr.mxu0 0.0
    %669 = vmatpush1.msra.mxu0 0.0
    %670 = vmatprep.subr.mxu0 0.0
    %671 = vmatpush1.msra.mxu0 0.0
    %672 = vmatprep.subr.mxu0 0.0
    %673 = vmatpush1.msra.mxu0 0.0
    %674 = vmatprep.subr.mxu0 0.0
    %675 = vmatpush1.msra.mxu0 0.0
    %676 = vmatprep.subr.mxu0 0.0
    %677 = vmatpush1.msra.mxu0 0.0
    %678 = vmatprep.subr.mxu0 0.0
    %679 = vmatpush1.msra.mxu0 0.0
    %680 = vmatprep.subr.mxu0 0.0
    %681 = vmatpush1.msra.mxu0 0.0
    %682 = vmatprep.subr.mxu0 0.0
    %683 = vmatpush1.msra.mxu0 0.0
    %684 = vmatprep.subr.mxu0 0.0
    %685 = vmatpush1.msra.mxu0 0.0
    %686 = vmatprep.subr.mxu0 0.0
    %687 = vmatpush1.msra.mxu0 0.0
    %688 = vmatprep.subr.mxu0 0.0
    %689 = vmatpush1.msra.mxu0 0.0
    %690 = vmatprep.subr.mxu0 0.0
    %691 = vmatpush1.msra.mxu0 0.0
    %692 = vmatprep.subr.mxu0 0.0
    %693 = vmatpush1.msra.mxu0 0.0
    %694 = vmatprep.subr.mxu0 0.0
    %695 = vmatpush1.msra.mxu0 0.0
    %696 = vmatprep.subr.mxu0 0.0
    %697 = vmatpush1.msra.mxu0 0.0
    %698 = vmatprep.subr.mxu0 0.0
    %699 = vmatpush1.msra.mxu0 0.0
    %700 = vmatprep.subr.mxu0 0.0
    %701 = vmatpush1.msra.mxu0 0.0
    %702 = vmatprep.subr.mxu0 0.0
    %703 = vmatpush1.msra.mxu0 0.0
    %704 = vmatprep.subr.mxu0 0.0
    %705 = vmatpush1.msra.mxu0 0.0
    %706 = vmatprep.subr.mxu0 0.0
    %707 = vmatpush1.msra.mxu0 0.0
    %708 = vmatprep.subr.mxu0 0.0
    %709 = vmatpush1.msra.mxu0 0.0
    %710 = vmatprep.subr.mxu0 0.0
    %711 = vmatpush1.msra.mxu0 0.0
    %712 = vmatprep.subr.mxu0 0.0
    %713 = vmatpush1.msra.mxu0 0.0
    %714 = vmatprep.subr.mxu0 0.0
    %715 = vmatpush1.msra.mxu0 0.0
    %716 = vmatprep.subr.mxu0 0.0
    %717 = vmatpush1.msra.mxu0 0.0
    %718 = vmatprep.subr.mxu0 0.0
    %719 = vmatpush1.msra.mxu0 0.0
    %720 = vmatprep.subr.mxu0 0.0
    %721 = vmatpush1.msra.mxu0 0.0
    %722 = vmatprep.mubr.f32.mxu0 0.0
    %723 = vmatmul.mubr.f32.gmra.mrb[0].mxu0 %v275
    %v724 = vpop.f32.mrb[0].mxu0
    %v725 = vadd.f32 %v148, %v724
    %v726 = vpop.f32.mrb[0].mxu0
    %v727 = vadd.f32 %v152, %v726
    %728 = vdwg.mxu0
    %729 = vmatprep.subr.mxu0 %v52
    %730 = vmatpush1.msra.mxu0 %v51
    %731 = vmatprep.subr.mxu0 %v312
    %732 = vmatpush1.msra.mxu0 %v309
    %733 = vmatprep.subr.mxu0 0.0
    %734 = vmatpush1.msra.mxu0 0.0
    %735 = vmatprep.subr.mxu0 0.0
    %736 = vmatpush1.msra.mxu0 0.0
    %737 = vmatprep.subr.mxu0 0.0
    %738 = vmatpush1.msra.mxu0 0.0
    %739 = vmatprep.subr.mxu0 0.0
    %740 = vmatpush1.msra.mxu0 0.0
    %741 = vmatprep.subr.mxu0 0.0
    %742 = vmatpush1.msra.mxu0 0.0
    %743 = vmatprep.subr.mxu0 0.0
    %744 = vmatpush1.msra.mxu0 0.0
    %745 = vmatprep.subr.mxu0 0.0
    %746 = vmatpush1.msra.mxu0 0.0
    %747 = vmatprep.subr.mxu0 0.0
    %748 = vmatpush1.msra.mxu0 0.0
    %749 = vmatprep.subr.mxu0 0.0
    %750 = vmatpush1.msra.mxu0 0.0
    %751 = vmatprep.subr.mxu0 0.0
    %752 = vmatpush1.msra.mxu0 0.0
    %753 = vmatprep.subr.mxu0 0.0
    %754 = vmatpush1.msra.mxu0 0.0
    %755 = vmatprep.subr.mxu0 0.0
    %756 = vmatpush1.msra.mxu0 0.0
    %757 = vmatprep.subr.mxu0 0.0
    %758 = vmatpush1.msra.mxu0 0.0
    %759 = vmatprep.subr.mxu0 0.0
    %760 = vmatpush1.msra.mxu0 0.0
    %761 = vmatprep.subr.mxu0 0.0
    %762 = vmatpush1.msra.mxu0 0.0
    %763 = vmatprep.subr.mxu0 0.0
    %764 = vmatpush1.msra.mxu0 0.0
    %765 = vmatprep.subr.mxu0 0.0
    %766 = vmatpush1.msra.mxu0 0.0
    %767 = vmatprep.subr.mxu0 0.0
    %768 = vmatpush1.msra.mxu0 0.0
    %769 = vmatprep.subr.mxu0 0.0
    %770 = vmatpush1.msra.mxu0 0.0
    %771 = vmatprep.subr.mxu0 0.0
    %772 = vmatpush1.msra.mxu0 0.0
    %773 = vmatprep.subr.mxu0 0.0
    %774 = vmatpush1.msra.mxu0 0.0
    %775 = vmatprep.subr.mxu0 0.0
    %776 = vmatpush1.msra.mxu0 0.0
    %777 = vmatprep.subr.mxu0 0.0
    %778 = vmatpush1.msra.mxu0 0.0
    %779 = vmatprep.subr.mxu0 0.0
    %780 = vmatpush1.msra.mxu0 0.0
    %781 = vmatprep.subr.mxu0 0.0
    %782 = vmatpush1.msra.mxu0 0.0
    %783 = vmatprep.subr.mxu0 0.0
    %784 = vmatpush1.msra.mxu0 0.0
    %785 = vmatprep.subr.mxu0 0.0
    %786 = vmatpush1.msra.mxu0 0.0
    %787 = vmatprep.subr.mxu0 0.0
    %788 = vmatpush1.msra.mxu0 0.0
    %789 = vmatprep.subr.mxu0 0.0
    %790 = vmatpush1.msra.mxu0 0.0
    %791 = vmatprep.subr.mxu0 0.0
    %792 = vmatpush1.msra.mxu0 0.0
    %793 = vmatprep.mubr.f32.mxu0 0.0
    %794 = vmatmul.mubr.f32.gmra.mrb[0].mxu0 %v275
    %v795 = vpop.f32.mrb[0].mxu0
    %v796 = vadd.f32 %v156, %v795
    %v797 = vpop.f32.mrb[0].mxu0
    %v798 = vadd.f32 %v160, %v797
    %799 = vdwg.mxu0
    %800 = vmatprep.subr.mxu0 %v54
    %801 = vmatpush1.msra.mxu0 %v53
    %802 = vmatprep.subr.mxu0 %v318
    %803 = vmatpush1.msra.mxu0 %v315
    %804 = vmatprep.subr.mxu0 0.0
    %805 = vmatpush1.msra.mxu0 0.0
    %806 = vmatprep.subr.mxu0 0.0
    %807 = vmatpush1.msra.mxu0 0.0
    %808 = vmatprep.subr.mxu0 0.0
    %809 = vmatpush1.msra.mxu0 0.0
    %810 = vmatprep.subr.mxu0 0.0
    %811 = vmatpush1.msra.mxu0 0.0
    %812 = vmatprep.subr.mxu0 0.0
    %813 = vmatpush1.msra.mxu0 0.0
    %814 = vmatprep.subr.mxu0 0.0
    %815 = vmatpush1.msra.mxu0 0.0
    %816 = vmatprep.subr.mxu0 0.0
    %817 = vmatpush1.msra.mxu0 0.0
    %818 = vmatprep.subr.mxu0 0.0
    %819 = vmatpush1.msra.mxu0 0.0
    %820 = vmatprep.subr.mxu0 0.0
    %821 = vmatpush1.msra.mxu0 0.0
    %822 = vmatprep.subr.mxu0 0.0
    %823 = vmatpush1.msra.mxu0 0.0
    %824 = vmatprep.subr.mxu0 0.0
    %825 = vmatpush1.msra.mxu0 0.0
    %826 = vmatprep.subr.mxu0 0.0
    %827 = vmatpush1.msra.mxu0 0.0
    %828 = vmatprep.subr.mxu0 0.0
    %829 = vmatpush1.msra.mxu0 0.0
    %830 = vmatprep.subr.mxu0 0.0
    %831 = vmatpush1.msra.mxu0 0.0
    %832 = vmatprep.subr.mxu0 0.0
    %833 = vmatpush1.msra.mxu0 0.0
    %834 = vmatprep.subr.mxu0 0.0
    %835 = vmatpush1.msra.mxu0 0.0
    %836 = vmatprep.subr.mxu0 0.0
    %837 = vmatpush1.msra.mxu0 0.0
    %838 = vmatprep.subr.mxu0 0.0
    %839 = vmatpush1.msra.mxu0 0.0
    %840 = vmatprep.subr.mxu0 0.0
    %841 = vmatpush1.msra.mxu0 0.0
    %842 = vmatprep.subr.mxu0 0.0
    %843 = vmatpush1.msra.mxu0 0.0
    %844 = vmatprep.subr.mxu0 0.0
    %845 = vmatpush1.msra.mxu0 0.0
    %846 = vmatprep.subr.mxu0 0.0
    %847 = vmatpush1.msra.mxu0 0.0
    %848 = vmatprep.subr.mxu0 0.0
    %849 = vmatpush1.msra.mxu0 0.0
    %850 = vmatprep.subr.mxu0 0.0
    %851 = vmatpush1.msra.mxu0 0.0
    %852 = vmatprep.subr.mxu0 0.0
    %853 = vmatpush1.msra.mxu0 0.0
    %854 = vmatprep.subr.mxu0 0.0
    %855 = vmatpush1.msra.mxu0 0.0
    %856 = vmatprep.subr.mxu0 0.0
    %857 = vmatpush1.msra.mxu0 0.0
    %858 = vmatprep.subr.mxu0 0.0
    %859 = vmatpush1.msra.mxu0 0.0
    %860 = vmatprep.subr.mxu0 0.0
    %861 = vmatpush1.msra.mxu0 0.0
    %862 = vmatprep.subr.mxu0 0.0
    %863 = vmatpush1.msra.mxu0 0.0
    %864 = vmatprep.mubr.f32.mxu0 0.0
    %865 = vmatmul.mubr.f32.gmra.mrb[0].mxu0 %v275
    %v866 = vpop.f32.mrb[0].mxu0
    %v867 = vadd.f32 %v164, %v866
    %v868 = vpop.f32.mrb[0].mxu0
    %v869 = vadd.f32 %v168, %v868
    %870 = vdwg.mxu0
    %871 = vmatprep.subr.mxu0 %v56
    %872 = vmatpush1.msra.mxu0 %v55
    %873 = vmatprep.subr.mxu0 %v324
    %874 = vmatpush1.msra.mxu0 %v321
    %875 = vmatprep.subr.mxu0 0.0
    %876 = vmatpush1.msra.mxu0 0.0
    %877 = vmatprep.subr.mxu0 0.0
    %878 = vmatpush1.msra.mxu0 0.0
    %879 = vmatprep.subr.mxu0 0.0
    %880 = vmatpush1.msra.mxu0 0.0
    %881 = vmatprep.subr.mxu0 0.0
    %882 = vmatpush1.msra.mxu0 0.0
    %883 = vmatprep.subr.mxu0 0.0
    %884 = vmatpush1.msra.mxu0 0.0
    %885 = vmatprep.subr.mxu0 0.0
    %886 = vmatpush1.msra.mxu0 0.0
    %887 = vmatprep.subr.mxu0 0.0
    %888 = vmatpush1.msra.mxu0 0.0
    %889 = vmatprep.subr.mxu0 0.0
    %890 = vmatpush1.msra.mxu0 0.0
    %891 = vmatprep.subr.mxu0 0.0
    %892 = vmatpush1.msra.mxu0 0.0
    %893 = vmatprep.subr.mxu0 0.0
    %894 = vmatpush1.msra.mxu0 0.0
    %895 = vmatprep.subr.mxu0 0.0
    %896 = vmatpush1.msra.mxu0 0.0
    %897 = vmatprep.subr.mxu0 0.0
    %898 = vmatpush1.msra.mxu0 0.0
    %899 = vmatprep.subr.mxu0 0.0
    %900 = vmatpush1.msra.mxu0 0.0
    %901 = vmatprep.subr.mxu0 0.0
    %902 = vmatpush1.msra.mxu0 0.0
    %903 = vmatprep.subr.mxu0 0.0
    %904 = vmatpush1.msra.mxu0 0.0
    %905 = vmatprep.subr.mxu0 0.0
    %906 = vmatpush1.msra.mxu0 0.0
    %907 = vmatprep.subr.mxu0 0.0
    %908 = vmatpush1.msra.mxu0 0.0
    %909 = vmatprep.subr.mxu0 0.0
    %910 = vmatpush1.msra.mxu0 0.0
    %911 = vmatprep.subr.mxu0 0.0
    %912 = vmatpush1.msra.mxu0 0.0
    %913 = vmatprep.subr.mxu0 0.0
    %914 = vmatpush1.msra.mxu0 0.0
    %915 = vmatprep.subr.mxu0 0.0
    %916 = vmatpush1.msra.mxu0 0.0
    %917 = vmatprep.subr.mxu0 0.0
    %918 = vmatpush1.msra.mxu0 0.0
    %919 = vmatprep.subr.mxu0 0.0
    %920 = vmatpush1.msra.mxu0 0.0
    %921 = vmatprep.subr.mxu0 0.0
    %922 = vmatpush1.msra.mxu0 0.0
    %923 = vmatprep.subr.mxu0 0.0
    %924 = vmatpush1.msra.mxu0 0.0
    %925 = vmatprep.subr.mxu0 0.0
    %926 = vmatpush1.msra.mxu0 0.0
    %927 = vmatprep.subr.mxu0 0.0
    %928 = vmatpush1.msra.mxu0 0.0
    %929 = vmatprep.subr.mxu0 0.0
    %930 = vmatpush1.msra.mxu0 0.0
    %931 = vmatprep.subr.mxu0 0.0
    %932 = vmatpush1.msra.mxu0 0.0
    %933 = vmatprep.subr.mxu0 0.0
    %934 = vmatpush1.msra.mxu0 0.0
    %935 = vmatprep.mubr.f32.mxu0 0.0
    %936 = vmatmul.mubr.f32.gmra.mrb[0].mxu0 %v275
    %v937 = vpop.f32.mrb[0].mxu0
    %v938 = vadd.f32 %v172, %v937
    %v939 = vpop.f32.mrb[0].mxu0
    %v940 = vadd.f32 %v176, %v939
    %941 = vdwg.mxu0
    %942 = vmatprep.subr.mxu0 %v58
    %943 = vmatpush1.msra.mxu0 %v57
    %944 = vmatprep.subr.mxu0 %v330
    %945 = vmatpush1.msra.mxu0 %v327
    %946 = vmatprep.subr.mxu0 0.0
    %947 = vmatpush1.msra.mxu0 0.0
    %948 = vmatprep.subr.mxu0 0.0
    %949 = vmatpush1.msra.mxu0 0.0
    %950 = vmatprep.subr.mxu0 0.0
    %951 = vmatpush1.msra.mxu0 0.0
    %952 = vmatprep.subr.mxu0 0.0
    %953 = vmatpush1.msra.mxu0 0.0
    %954 = vmatprep.subr.mxu0 0.0
    %955 = vmatpush1.msra.mxu0 0.0
    %956 = vmatprep.subr.mxu0 0.0
    %957 = vmatpush1.msra.mxu0 0.0
    %958 = vmatprep.subr.mxu0 0.0
    %959 = vmatpush1.msra.mxu0 0.0
    %960 = vmatprep.subr.mxu0 0.0
    %961 = vmatpush1.msra.mxu0 0.0
    %962 = vmatprep.subr.mxu0 0.0
    %963 = vmatpush1.msra.mxu0 0.0
    %964 = vmatprep.subr.mxu0 0.0
    %965 = vmatpush1.msra.mxu0 0.0
    %966 = vmatprep.subr.mxu0 0.0
    %967 = vmatpush1.msra.mxu0 0.0
    %968 = vmatprep.subr.mxu0 0.0
    %969 = vmatpush1.msra.mxu0 0.0
    %970 = vmatprep.subr.mxu0 0.0
    %971 = vmatpush1.msra.mxu0 0.0
    %972 = vmatprep.subr.mxu0 0.0
    %973 = vmatpush1.msra.mxu0 0.0
    %974 = vmatprep.subr.mxu0 0.0
    %975 = vmatpush1.msra.mxu0 0.0
    %976 = vmatprep.subr.mxu0 0.0
    %977 = vmatpush1.msra.mxu0 0.0
    %978 = vmatprep.subr.mxu0 0.0
    %979 = vmatpush1.msra.mxu0 0.0
    %980 = vmatprep.subr.mxu0 0.0
    %981 = vmatpush1.msra.mxu0 0.0
    %982 = vmatprep.subr.mxu0 0.0
    %983 = vmatpush1.msra.mxu0 0.0
    %984 = vmatprep.subr.mxu0 0.0
    %985 = vmatpush1.msra.mxu0 0.0
    %986 = vmatprep.subr.mxu0 0.0
    %987 = vmatpush1.msra.mxu0 0.0
    %988 = vmatprep.subr.mxu0 0.0
    %989 = vmatpush1.msra.mxu0 0.0
    %990 = vmatprep.subr.mxu0 0.0
    %991 = vmatpush1.msra.mxu0 0.0
    %992 = vmatprep.subr.mxu0 0.0
    %993 = vmatpush1.msra.mxu0 0.0
    %994 = vmatprep.subr.mxu0 0.0
    %995 = vmatpush1.msra.mxu0 0.0
    %996 = vmatprep.subr.mxu0 0.0
    %997 = vmatpush1.msra.mxu0 0.0
    %998 = vmatprep.subr.mxu0 0.0
    %999 = vmatpush1.msra.mxu0 0.0
    %1000 = vmatprep.subr.mxu0 0.0
    %1001 = vmatpush1.msra.mxu0 0.0
    %1002 = vmatprep.subr.mxu0 0.0
    %1003 = vmatpush1.msra.mxu0 0.0
    %1004 = vmatprep.subr.mxu0 0.0
    %1005 = vmatpush1.msra.mxu0 0.0
    %1006 = vmatprep.mubr.f32.mxu0 0.0
    %1007 = vmatmul.mubr.f32.gmra.mrb[0].mxu0 %v275
    %v1008 = vpop.f32.mrb[0].mxu0
    %v1009 = vadd.f32 %v180, %v1008
    %v1010 = vpop.f32.mrb[0].mxu0
    %v1011 = vadd.f32 %v184, %v1010
    %1012 = vdwg.mxu0
    %1013 = vmatprep.subr.mxu0 %v60
    %1014 = vmatpush1.msra.mxu0 %v59
    %1015 = vmatprep.subr.mxu0 %v336
    %1016 = vmatpush1.msra.mxu0 %v333
    %1017 = vmatprep.subr.mxu0 0.0
    %1018 = vmatpush1.msra.mxu0 0.0
    %1019 = vmatprep.subr.mxu0 0.0
    %1020 = vmatpush1.msra.mxu0 0.0
    %1021 = vmatprep.subr.mxu0 0.0
    %1022 = vmatpush1.msra.mxu0 0.0
    %1023 = vmatprep.subr.mxu0 0.0
    %1024 = vmatpush1.msra.mxu0 0.0
    %1025 = vmatprep.subr.mxu0 0.0
    %1026 = vmatpush1.msra.mxu0 0.0
    %1027 = vmatprep.subr.mxu0 0.0
    %1028 = vmatpush1.msra.mxu0 0.0
    %1029 = vmatprep.subr.mxu0 0.0
    %1030 = vmatpush1.msra.mxu0 0.0
    %1031 = vmatprep.subr.mxu0 0.0
    %1032 = vmatpush1.msra.mxu0 0.0
    %1033 = vmatprep.subr.mxu0 0.0
    %1034 = vmatpush1.msra.mxu0 0.0
    %1035 = vmatprep.subr.mxu0 0.0
    %1036 = vmatpush1.msra.mxu0 0.0
    %1037 = vmatprep.subr.mxu0 0.0
    %1038 = vmatpush1.msra.mxu0 0.0
    %1039 = vmatprep.subr.mxu0 0.0
    %1040 = vmatpush1.msra.mxu0 0.0
    %1041 = vmatprep.subr.mxu0 0.0
    %1042 = vmatpush1.msra.mxu0 0.0
    %1043 = vmatprep.subr.mxu0 0.0
    %1044 = vmatpush1.msra.mxu0 0.0
    %1045 = vmatprep.subr.mxu0 0.0
    %1046 = vmatpush1.msra.mxu0 0.0
    %1047 = vmatprep.subr.mxu0 0.0
    %1048 = vmatpush1.msra.mxu0 0.0
    %1049 = vmatprep.subr.mxu0 0.0
    %1050 = vmatpush1.msra.mxu0 0.0
    %1051 = vmatprep.subr.mxu0 0.0
    %1052 = vmatpush1.msra.mxu0 0.0
    %1053 = vmatprep.subr.mxu0 0.0
    %1054 = vmatpush1.msra.mxu0 0.0
    %1055 = vmatprep.subr.mxu0 0.0
    %1056 = vmatpush1.msra.mxu0 0.0
    %1057 = vmatprep.subr.mxu0 0.0
    %1058 = vmatpush1.msra.mxu0 0.0
    %1059 = vmatprep.subr.mxu0 0.0
    %1060 = vmatpush1.msra.mxu0 0.0
    %1061 = vmatprep.subr.mxu0 0.0
    %1062 = vmatpush1.msra.mxu0 0.0
    %1063 = vmatprep.subr.mxu0 0.0
    %1064 = vmatpush1.msra.mxu0 0.0
    %1065 = vmatprep.subr.mxu0 0.0
    %1066 = vmatpush1.msra.mxu0 0.0
    %1067 = vmatprep.subr.mxu0 0.0
    %1068 = vmatpush1.msra.mxu0 0.0
    %1069 = vmatprep.subr.mxu0 0.0
    %1070 = vmatpush1.msra.mxu0 0.0
    %1071 = vmatprep.subr.mxu0 0.0
    %1072 = vmatpush1.msra.mxu0 0.0
    %1073 = vmatprep.subr.mxu0 0.0
    %1074 = vmatpush1.msra.mxu0 0.0
    %1075 = vmatprep.subr.mxu0 0.0
    %1076 = vmatpush1.msra.mxu0 0.0
    %1077 = vmatprep.mubr.f32.mxu0 0.0
    %1078 = vmatmul.mubr.f32.gmra.mrb[0].mxu0 %v275
    %v1079 = vpop.f32.mrb[0].mxu0
    %v1080 = vadd.f32 %v188, %v1079
    %v1081 = vpop.f32.mrb[0].mxu0
    %v1082 = vadd.f32 %v192, %v1081
    %1083 = vdwg.mxu0
    %1084 = vmatprep.subr.mxu0 %v62
    %1085 = vmatpush1.msra.mxu0 %v61
    %1086 = vmatprep.subr.mxu0 %v342
    %1087 = vmatpush1.msra.mxu0 %v339
    %1088 = vmatprep.subr.mxu0 0.0
    %1089 = vmatpush1.msra.mxu0 0.0
    %1090 = vmatprep.subr.mxu0 0.0
    %1091 = vmatpush1.msra.mxu0 0.0
    %1092 = vmatprep.subr.mxu0 0.0
    %1093 = vmatpush1.msra.mxu0 0.0
    %1094 = vmatprep.subr.mxu0 0.0
    %1095 = vmatpush1.msra.mxu0 0.0
    %1096 = vmatprep.subr.mxu0 0.0
    %1097 = vmatpush1.msra.mxu0 0.0
    %1098 = vmatprep.subr.mxu0 0.0
    %1099 = vmatpush1.msra.mxu0 0.0
    %1100 = vmatprep.subr.mxu0 0.0
    %1101 = vmatpush1.msra.mxu0 0.0
    %1102 = vmatprep.subr.mxu0 0.0
    %1103 = vmatpush1.msra.mxu0 0.0
    %1104 = vmatprep.subr.mxu0 0.0
    %1105 = vmatpush1.msra.mxu0 0.0
    %1106 = vmatprep.subr.mxu0 0.0
    %1107 = vmatpush1.msra.mxu0 0.0
    %1108 = vmatprep.subr.mxu0 0.0
    %1109 = vmatpush1.msra.mxu0 0.0
    %1110 = vmatprep.subr.mxu0 0.0
    %1111 = vmatpush1.msra.mxu0 0.0
    %1112 = vmatprep.subr.mxu0 0.0
    %1113 = vmatpush1.msra.mxu0 0.0
    %1114 = vmatprep.subr.mxu0 0.0
    %1115 = vmatpush1.msra.mxu0 0.0
    %1116 = vmatprep.subr.mxu0 0.0
    %1117 = vmatpush1.msra.mxu0 0.0
    %1118 = vmatprep.subr.mxu0 0.0
    %1119 = vmatpush1.msra.mxu0 0.0
    %1120 = vmatprep.subr.mxu0 0.0
    %1121 = vmatpush1.msra.mxu0 0.0
    %1122 = vmatprep.subr.mxu0 0.0
    %1123 = vmatpush1.msra.mxu0 0.0
    %1124 = vmatprep.subr.mxu0 0.0
    %1125 = vmatpush1.msra.mxu0 0.0
    %1126 = vmatprep.subr.mxu0 0.0
    %1127 = vmatpush1.msra.mxu0 0.0
    %1128 = vmatprep.subr.mxu0 0.0
    %1129 = vmatpush1.msra.mxu0 0.0
    %1130 = vmatprep.subr.mxu0 0.0
    %1131 = vmatpush1.msra.mxu0 0.0
    %1132 = vmatprep.subr.mxu0 0.0
    %1133 = vmatpush1.msra.mxu0 0.0
    %1134 = vmatprep.subr.mxu0 0.0
    %1135 = vmatpush1.msra.mxu0 0.0
    %1136 = vmatprep.subr.mxu0 0.0
    %1137 = vmatpush1.msra.mxu0 0.0
    %1138 = vmatprep.subr.mxu0 0.0
    %1139 = vmatpush1.msra.mxu0 0.0
    %1140 = vmatprep.subr.mxu0 0.0
    %1141 = vmatpush1.msra.mxu0 0.0
    %1142 = vmatprep.subr.mxu0 0.0
    %1143 = vmatpush1.msra.mxu0 0.0
    %1144 = vmatprep.subr.mxu0 0.0
    %1145 = vmatpush1.msra.mxu0 0.0
    %1146 = vmatprep.subr.mxu0 0.0
    %1147 = vmatpush1.msra.mxu0 0.0
    %1148 = vmatprep.mubr.f32.mxu0 0.0
    %1149 = vmatmul.mubr.f32.gmra.mrb[0].mxu0 %v275
    %v1150 = vpop.f32.mrb[0].mxu0
    %v1151 = vadd.f32 %v196, %v1150
    %v1152 = vpop.f32.mrb[0].mxu0
    %v1153 = vadd.f32 %v200, %v1152
    %1154 = vdwg.mxu0
    %1155 = vmatprep.subr.mxu0 %v64
    %1156 = vmatpush1.msra.mxu0 %v63
    %1157 = vmatprep.subr.mxu0 %v348
    %1158 = vmatpush1.msra.mxu0 %v345
    %1159 = vmatprep.subr.mxu0 0.0
    %1160 = vmatpush1.msra.mxu0 0.0
    %1161 = vmatprep.subr.mxu0 0.0
    %1162 = vmatpush1.msra.mxu0 0.0
    %1163 = vmatprep.subr.mxu0 0.0
    %1164 = vmatpush1.msra.mxu0 0.0
    %1165 = vmatprep.subr.mxu0 0.0
    %1166 = vmatpush1.msra.mxu0 0.0
    %1167 = vmatprep.subr.mxu0 0.0
    %1168 = vmatpush1.msra.mxu0 0.0
    %1169 = vmatprep.subr.mxu0 0.0
    %1170 = vmatpush1.msra.mxu0 0.0
    %1171 = vmatprep.subr.mxu0 0.0
    %1172 = vmatpush1.msra.mxu0 0.0
    %1173 = vmatprep.subr.mxu0 0.0
    %1174 = vmatpush1.msra.mxu0 0.0
    %1175 = vmatprep.subr.mxu0 0.0
    %1176 = vmatpush1.msra.mxu0 0.0
    %1177 = vmatprep.subr.mxu0 0.0
    %1178 = vmatpush1.msra.mxu0 0.0
    %1179 = vmatprep.subr.mxu0 0.0
    %1180 = vmatpush1.msra.mxu0 0.0
    %1181 = vmatprep.subr.mxu0 0.0
    %1182 = vmatpush1.msra.mxu0 0.0
    %1183 = vmatprep.subr.mxu0 0.0
    %1184 = vmatpush1.msra.mxu0 0.0
    %1185 = vmatprep.subr.mxu0 0.0
    %1186 = vmatpush1.msra.mxu0 0.0
    %1187 = vmatprep.subr.mxu0 0.0
    %1188 = vmatpush1.msra.mxu0 0.0
    %1189 = vmatprep.subr.mxu0 0.0
    %1190 = vmatpush1.msra.mxu0 0.0
    %1191 = vmatprep.subr.mxu0 0.0
    %1192 = vmatpush1.msra.mxu0 0.0
    %1193 = vmatprep.subr.mxu0 0.0
    %1194 = vmatpush1.msra.mxu0 0.0
    %1195 = vmatprep.subr.mxu0 0.0
    %1196 = vmatpush1.msra.mxu0 0.0
    %1197 = vmatprep.subr.mxu0 0.0
    %1198 = vmatpush1.msra.mxu0 0.0
    %1199 = vmatprep.subr.mxu0 0.0
    %1200 = vmatpush1.msra.mxu0 0.0
    %1201 = vmatprep.subr.mxu0 0.0
    %1202 = vmatpush1.msra.mxu0 0.0
    %1203 = vmatprep.subr.mxu0 0.0
    %1204 = vmatpush1.msra.mxu0 0.0
    %1205 = vmatprep.subr.mxu0 0.0
    %1206 = vmatpush1.msra.mxu0 0.0
    %1207 = vmatprep.subr.mxu0 0.0
    %1208 = vmatpush1.msra.mxu0 0.0
    %1209 = vmatprep.subr.mxu0 0.0
    %1210 = vmatpush1.msra.mxu0 0.0
    %1211 = vmatprep.subr.mxu0 0.0
    %1212 = vmatpush1.msra.mxu0 0.0
    %1213 = vmatprep.subr.mxu0 0.0
    %1214 = vmatpush1.msra.mxu0 0.0
    %1215 = vmatprep.subr.mxu0 0.0
    %1216 = vmatpush1.msra.mxu0 0.0
    %1217 = vmatprep.subr.mxu0 0.0
    %1218 = vmatpush1.msra.mxu0 0.0
    %1219 = vmatprep.mubr.f32.mxu0 0.0
    %1220 = vmatmul.mubr.f32.gmra.mrb[0].mxu0 %v275
    %v1221 = vpop.f32.mrb[0].mxu0
    %v1222 = vadd.f32 %v204, %v1221
    %v1223 = vpop.f32.mrb[0].mxu0
    %v1224 = vadd.f32 %v208, %v1223
    %1225 = vdwg.mxu0
    %1226 = vmatprep.subr.mxu0 %v66
    %1227 = vmatpush1.msra.mxu0 %v65
    %1228 = vmatprep.subr.mxu0 %v354
    %1229 = vmatpush1.msra.mxu0 %v351
    %1230 = vmatprep.subr.mxu0 0.0
    %1231 = vmatpush1.msra.mxu0 0.0
    %1232 = vmatprep.subr.mxu0 0.0
    %1233 = vmatpush1.msra.mxu0 0.0
    %1234 = vmatprep.subr.mxu0 0.0
    %1235 = vmatpush1.msra.mxu0 0.0
    %1236 = vmatprep.subr.mxu0 0.0
    %1237 = vmatpush1.msra.mxu0 0.0
    %1238 = vmatprep.subr.mxu0 0.0
    %1239 = vmatpush1.msra.mxu0 0.0
    %1240 = vmatprep.subr.mxu0 0.0
    %1241 = vmatpush1.msra.mxu0 0.0
    %1242 = vmatprep.subr.mxu0 0.0
    %1243 = vmatpush1.msra.mxu0 0.0
    %1244 = vmatprep.subr.mxu0 0.0
    %1245 = vmatpush1.msra.mxu0 0.0
    %1246 = vmatprep.subr.mxu0 0.0
    %1247 = vmatpush1.msra.mxu0 0.0
    %1248 = vmatprep.subr.mxu0 0.0
    %1249 = vmatpush1.msra.mxu0 0.0
    %1250 = vmatprep.subr.mxu0 0.0
    %1251 = vmatpush1.msra.mxu0 0.0
    %1252 = vmatprep.subr.mxu0 0.0
    %1253 = vmatpush1.msra.mxu0 0.0
    %1254 = vmatprep.subr.mxu0 0.0
    %1255 = vmatpush1.msra.mxu0 0.0
    %1256 = vmatprep.subr.mxu0 0.0
    %1257 = vmatpush1.msra.mxu0 0.0
    %1258 = vmatprep.subr.mxu0 0.0
    %1259 = vmatpush1.msra.mxu0 0.0
    %1260 = vmatprep.subr.mxu0 0.0
    %1261 = vmatpush1.msra.mxu0 0.0
    %1262 = vmatprep.subr.mxu0 0.0
    %1263 = vmatpush1.msra.mxu0 0.0
    %1264 = vmatprep.subr.mxu0 0.0
    %1265 = vmatpush1.msra.mxu0 0.0
    %1266 = vmatprep.subr.mxu0 0.0
    %1267 = vmatpush1.msra.mxu0 0.0
    %1268 = vmatprep.subr.mxu0 0.0
    %1269 = vmatpush1.msra.mxu0 0.0
    %1270 = vmatprep.subr.mxu0 0.0
    %1271 = vmatpush1.msra.mxu0 0.0
    %1272 = vmatprep.subr.mxu0 0.0
    %1273 = vmatpush1.msra.mxu0 0.0
    %1274 = vmatprep.subr.mxu0 0.0
    %1275 = vmatpush1.msra.mxu0 0.0
    %1276 = vmatprep.subr.mxu0 0.0
    %1277 = vmatpush1.msra.mxu0 0.0
    %1278 = vmatprep.subr.mxu0 0.0
    %1279 = vmatpush1.msra.mxu0 0.0
    %1280 = vmatprep.subr.mxu0 0.0
    %1281 = vmatpush1.msra.mxu0 0.0
    %1282 = vmatprep.subr.mxu0 0.0
    %1283 = vmatpush1.msra.mxu0 0.0
    %1284 = vmatprep.subr.mxu0 0.0
    %1285 = vmatpush1.msra.mxu0 0.0
    %1286 = vmatprep.subr.mxu0 0.0
    %1287 = vmatpush1.msra.mxu0 0.0
    %1288 = vmatprep.subr.mxu0 0.0
    %1289 = vmatpush1.msra.mxu0 0.0
    %1290 = vmatprep.mubr.f32.mxu0 0.0
    %1291 = vmatmul.mubr.f32.gmra.mrb[0].mxu0 %v275
    %v1292 = vpop.f32.mrb[0].mxu0
    %v1293 = vadd.f32 %v212, %v1292
    %v1294 = vpop.f32.mrb[0].mxu0
    %v1295 = vadd.f32 %v216, %v1294
    %1296 = vdwg.mxu0
    %1297 = vmatprep.subr.mxu0 %v68
    %1298 = vmatpush1.msra.mxu0 %v67
    %1299 = vmatprep.subr.mxu0 %v360
    %1300 = vmatpush1.msra.mxu0 %v357
    %1301 = vmatprep.subr.mxu0 0.0
    %1302 = vmatpush1.msra.mxu0 0.0
    %1303 = vmatprep.subr.mxu0 0.0
    %1304 = vmatpush1.msra.mxu0 0.0
    %1305 = vmatprep.subr.mxu0 0.0
    %1306 = vmatpush1.msra.mxu0 0.0
    %1307 = vmatprep.subr.mxu0 0.0
    %1308 = vmatpush1.msra.mxu0 0.0
    %1309 = vmatprep.subr.mxu0 0.0
    %1310 = vmatpush1.msra.mxu0 0.0
    %1311 = vmatprep.subr.mxu0 0.0
    %1312 = vmatpush1.msra.mxu0 0.0
    %1313 = vmatprep.subr.mxu0 0.0
    %1314 = vmatpush1.msra.mxu0 0.0
    %1315 = vmatprep.subr.mxu0 0.0
    %1316 = vmatpush1.msra.mxu0 0.0
    %1317 = vmatprep.subr.mxu0 0.0
    %1318 = vmatpush1.msra.mxu0 0.0
    %1319 = vmatprep.subr.mxu0 0.0
    %1320 = vmatpush1.msra.mxu0 0.0
    %1321 = vmatprep.subr.mxu0 0.0
    %1322 = vmatpush1.msra.mxu0 0.0
    %1323 = vmatprep.subr.mxu0 0.0
    %1324 = vmatpush1.msra.mxu0 0.0
    %1325 = vmatprep.subr.mxu0 0.0
    %1326 = vmatpush1.msra.mxu0 0.0
    %1327 = vmatprep.subr.mxu0 0.0
    %1328 = vmatpush1.msra.mxu0 0.0
    %1329 = vmatprep.subr.mxu0 0.0
    %1330 = vmatpush1.msra.mxu0 0.0
    %1331 = vmatprep.subr.mxu0 0.0
    %1332 = vmatpush1.msra.mxu0 0.0
    %1333 = vmatprep.subr.mxu0 0.0
    %1334 = vmatpush1.msra.mxu0 0.0
    %1335 = vmatprep.subr.mxu0 0.0
    %1336 = vmatpush1.msra.mxu0 0.0
    %1337 = vmatprep.subr.mxu0 0.0
    %1338 = vmatpush1.msra.mxu0 0.0
    %1339 = vmatprep.subr.mxu0 0.0
    %1340 = vmatpush1.msra.mxu0 0.0
    %1341 = vmatprep.subr.mxu0 0.0
    %1342 = vmatpush1.msra.mxu0 0.0
    %1343 = vmatprep.subr.mxu0 0.0
    %1344 = vmatpush1.msra.mxu0 0.0
    %1345 = vmatprep.subr.mxu0 0.0
    %1346 = vmatpush1.msra.mxu0 0.0
    %1347 = vmatprep.subr.mxu0 0.0
    %1348 = vmatpush1.msra.mxu0 0.0
    %1349 = vmatprep.subr.mxu0 0.0
    %1350 = vmatpush1.msra.mxu0 0.0
    %1351 = vmatprep.subr.mxu0 0.0
    %1352 = vmatpush1.msra.mxu0 0.0
    %1353 = vmatprep.subr.mxu0 0.0
    %1354 = vmatpush1.msra.mxu0 0.0
    %1355 = vmatprep.subr.mxu0 0.0
    %1356 = vmatpush1.msra.mxu0 0.0
    %1357 = vmatprep.subr.mxu0 0.0
    %1358 = vmatpush1.msra.mxu0 0.0
    %1359 = vmatprep.subr.mxu0 0.0
    %1360 = vmatpush1.msra.mxu0 0.0
    %1361 = vmatprep.mubr.f32.mxu0 0.0
    %1362 = vmatmul.mubr.f32.gmra.mrb[0].mxu0 %v275
    %v1363 = vpop.f32.mrb[0].mxu0
    %v1364 = vadd.f32 %v220, %v1363
    %v1365 = vpop.f32.mrb[0].mxu0
    %v1366 = vadd.f32 %v224, %v1365
    %1367 = vdwg.mxu0
    %1368 = vmatprep.subr.mxu0 %v70
    %1369 = vmatpush1.msra.mxu0 %v69
    %1370 = vmatprep.subr.mxu0 %v366
    %1371 = vmatpush1.msra.mxu0 %v363
    %1372 = vmatprep.subr.mxu0 0.0
    %1373 = vmatpush1.msra.mxu0 0.0
    %1374 = vmatprep.subr.mxu0 0.0
    %1375 = vmatpush1.msra.mxu0 0.0
    %1376 = vmatprep.subr.mxu0 0.0
    %1377 = vmatpush1.msra.mxu0 0.0
    %1378 = vmatprep.subr.mxu0 0.0
    %1379 = vmatpush1.msra.mxu0 0.0
    %1380 = vmatprep.subr.mxu0 0.0
    %1381 = vmatpush1.msra.mxu0 0.0
    %1382 = vmatprep.subr.mxu0 0.0
    %1383 = vmatpush1.msra.mxu0 0.0
    %1384 = vmatprep.subr.mxu0 0.0
    %1385 = vmatpush1.msra.mxu0 0.0
    %1386 = vmatprep.subr.mxu0 0.0
    %1387 = vmatpush1.msra.mxu0 0.0
    %1388 = vmatprep.subr.mxu0 0.0
    %1389 = vmatpush1.msra.mxu0 0.0
    %1390 = vmatprep.subr.mxu0 0.0
    %1391 = vmatpush1.msra.mxu0 0.0
    %1392 = vmatprep.subr.mxu0 0.0
    %1393 = vmatpush1.msra.mxu0 0.0
    %1394 = vmatprep.subr.mxu0 0.0
    %1395 = vmatpush1.msra.mxu0 0.0
    %1396 = vmatprep.subr.mxu0 0.0
    %1397 = vmatpush1.msra.mxu0 0.0
    %1398 = vmatprep.subr.mxu0 0.0
    %1399 = vmatpush1.msra.mxu0 0.0
    %1400 = vmatprep.subr.mxu0 0.0
    %1401 = vmatpush1.msra.mxu0 0.0
    %1402 = vmatprep.subr.mxu0 0.0
    %1403 = vmatpush1.msra.mxu0 0.0
    %1404 = vmatprep.subr.mxu0 0.0
    %1405 = vmatpush1.msra.mxu0 0.0
    %1406 = vmatprep.subr.mxu0 0.0
    %1407 = vmatpush1.msra.mxu0 0.0
    %1408 = vmatprep.subr.mxu0 0.0
    %1409 = vmatpush1.msra.mxu0 0.0
    %1410 = vmatprep.subr.mxu0 0.0
    %1411 = vmatpush1.msra.mxu0 0.0
    %1412 = vmatprep.subr.mxu0 0.0
    %1413 = vmatpush1.msra.mxu0 0.0
    %1414 = vmatprep.subr.mxu0 0.0
    %1415 = vmatpush1.msra.mxu0 0.0
    %1416 = vmatprep.subr.mxu0 0.0
    %1417 = vmatpush1.msra.mxu0 0.0
    %1418 = vmatprep.subr.mxu0 0.0
    %1419 = vmatpush1.msra.mxu0 0.0
    %1420 = vmatprep.subr.mxu0 0.0
    %1421 = vmatpush1.msra.mxu0 0.0
    %1422 = vmatprep.subr.mxu0 0.0
    %1423 = vmatpush1.msra.mxu0 0.0
    %1424 = vmatprep.subr.mxu0 0.0
    %1425 = vmatpush1.msra.mxu0 0.0
    %1426 = vmatprep.subr.mxu0 0.0
    %1427 = vmatpush1.msra.mxu0 0.0
    %1428 = vmatprep.subr.mxu0 0.0
    %1429 = vmatpush1.msra.mxu0 0.0
    %1430 = vmatprep.subr.mxu0 0.0
    %1431 = vmatpush1.msra.mxu0 0.0
    %1432 = vmatprep.mubr.f32.mxu0 0.0
    %1433 = vmatmul.mubr.f32.gmra.mrb[0].mxu0 %v275
    %v1434 = vpop.f32.mrb[0].mxu0
    %v1435 = vadd.f32 %v228, %v1434
    %v1436 = vpop.f32.mrb[0].mxu0
    %v1437 = vadd.f32 %v232, %v1436
    %1438 = vdwg.mxu0
    %1439 = vmatprep.subr.mxu0 %v72
    %1440 = vmatpush1.msra.mxu0 %v71
    %1441 = vmatprep.subr.mxu0 %v372
    %1442 = vmatpush1.msra.mxu0 %v369
    %1443 = vmatprep.subr.mxu0 0.0
    %1444 = vmatpush1.msra.mxu0 0.0
    %1445 = vmatprep.subr.mxu0 0.0
    %1446 = vmatpush1.msra.mxu0 0.0
    %1447 = vmatprep.subr.mxu0 0.0
    %1448 = vmatpush1.msra.mxu0 0.0
    %1449 = vmatprep.subr.mxu0 0.0
    %1450 = vmatpush1.msra.mxu0 0.0
    %1451 = vmatprep.subr.mxu0 0.0
    %1452 = vmatpush1.msra.mxu0 0.0
    %1453 = vmatprep.subr.mxu0 0.0
    %1454 = vmatpush1.msra.mxu0 0.0
    %1455 = vmatprep.subr.mxu0 0.0
    %1456 = vmatpush1.msra.mxu0 0.0
    %1457 = vmatprep.subr.mxu0 0.0
    %1458 = vmatpush1.msra.mxu0 0.0
    %1459 = vmatprep.subr.mxu0 0.0
    %1460 = vmatpush1.msra.mxu0 0.0
    %1461 = vmatprep.subr.mxu0 0.0
    %1462 = vmatpush1.msra.mxu0 0.0
    %1463 = vmatprep.subr.mxu0 0.0
    %1464 = vmatpush1.msra.mxu0 0.0
    %1465 = vmatprep.subr.mxu0 0.0
    %1466 = vmatpush1.msra.mxu0 0.0
    %1467 = vmatprep.subr.mxu0 0.0
    %1468 = vmatpush1.msra.mxu0 0.0
    %1469 = vmatprep.subr.mxu0 0.0
    %1470 = vmatpush1.msra.mxu0 0.0
    %1471 = vmatprep.subr.mxu0 0.0
    %1472 = vmatpush1.msra.mxu0 0.0
    %1473 = vmatprep.subr.mxu0 0.0
    %1474 = vmatpush1.msra.mxu0 0.0
    %1475 = vmatprep.subr.mxu0 0.0
    %1476 = vmatpush1.msra.mxu0 0.0
    %1477 = vmatprep.subr.mxu0 0.0
    %1478 = vmatpush1.msra.mxu0 0.0
    %1479 = vmatprep.subr.mxu0 0.0
    %1480 = vmatpush1.msra.mxu0 0.0
    %1481 = vmatprep.subr.mxu0 0.0
    %1482 = vmatpush1.msra.mxu0 0.0
    %1483 = vmatprep.subr.mxu0 0.0
    %1484 = vmatpush1.msra.mxu0 0.0
    %1485 = vmatprep.subr.mxu0 0.0
    %1486 = vmatpush1.msra.mxu0 0.0
    %1487 = vmatprep.subr.mxu0 0.0
    %1488 = vmatpush1.msra.mxu0 0.0
    %1489 = vmatprep.subr.mxu0 0.0
    %1490 = vmatpush1.msra.mxu0 0.0
    %1491 = vmatprep.subr.mxu0 0.0
    %1492 = vmatpush1.msra.mxu0 0.0
    %1493 = vmatprep.subr.mxu0 0.0
    %1494 = vmatpush1.msra.mxu0 0.0
    %1495 = vmatprep.subr.mxu0 0.0
    %1496 = vmatpush1.msra.mxu0 0.0
    %1497 = vmatprep.subr.mxu0 0.0
    %1498 = vmatpush1.msra.mxu0 0.0
    %1499 = vmatprep.subr.mxu0 0.0
    %1500 = vmatpush1.msra.mxu0 0.0
    %1501 = vmatprep.subr.mxu0 0.0
    %1502 = vmatpush1.msra.mxu0 0.0
    %1503 = vmatprep.mubr.f32.mxu0 0.0
    %1504 = vmatmul.mubr.f32.gmra.mrb[0].mxu0 %v275
    %v1505 = vpop.f32.mrb[0].mxu0
    %v1506 = vadd.f32 %v236, %v1505
    %v1507 = vpop.f32.mrb[0].mxu0
    %v1508 = vadd.f32 %v240, %v1507
    %1509 = vdwg.mxu0
    %v1542 = vcombine.low %v441, %v443
    %v1543 = vcombine.low %v512, %v514
    %v1545 = vunpack.c.l.s4 1983009808
    %v1546 = vunpack.c.0.s8 %v1545
    %v1547 = vlaneseq
    %v1548 = vshrl.u32 %v1547, 7
    %v1549 = vsub.s32 %v1546, %v1548
    %v1550 = vrot.slane %v1542, %v1549
    %v1552 = vunpack.c.l.s4 1983009808
    %v1553 = vunpack.c.0.s8 %v1552
    %v1554 = vlaneseq
    %v1555 = vshrl.u32 %v1554, 7
    %v1556 = vsub.s32 %v1553, %v1555
    %v1557 = vrot.slane %v1543, %v1556
    %v1558 = vcombine.low %v1550, %v1557
    %v1559 = vcombine.low %v583, %v585
    %v1560 = vcombine.low %v654, %v656
    %v1562 = vunpack.c.l.s4 1983009808
    %v1563 = vunpack.c.0.s8 %v1562
    %v1564 = vlaneseq
    %v1565 = vshrl.u32 %v1564, 7
    %v1566 = vsub.s32 %v1563, %v1565
    %v1567 = vrot.slane %v1559, %v1566
    %v1569 = vunpack.c.l.s4 1983009808
    %v1570 = vunpack.c.0.s8 %v1569
    %v1571 = vlaneseq
    %v1572 = vshrl.u32 %v1571, 7
    %v1573 = vsub.s32 %v1570, %v1572
    %v1574 = vrot.slane %v1560, %v1573
    %v1575 = vcombine.low %v1567, %v1574
    %v1576 = vcombine.low %v725, %v727
    %v1577 = vcombine.low %v796, %v798
    %v1579 = vunpack.c.l.s4 1983009808
    %v1580 = vunpack.c.0.s8 %v1579
    %v1581 = vlaneseq
    %v1582 = vshrl.u32 %v1581, 7
    %v1583 = vsub.s32 %v1580, %v1582
    %v1584 = vrot.slane %v1576, %v1583
    %v1586 = vunpack.c.l.s4 1983009808
    %v1587 = vunpack.c.0.s8 %v1586
    %v1588 = vlaneseq
    %v1589 = vshrl.u32 %v1588, 7
    %v1590 = vsub.s32 %v1587, %v1589
    %v1591 = vrot.slane %v1577, %v1590
    %v1592 = vcombine.low %v1584, %v1591
    %v1593 = vcombine.low %v867, %v869
    %v1594 = vcombine.low %v938, %v940
    %v1596 = vunpack.c.l.s4 1983009808
    %v1597 = vunpack.c.0.s8 %v1596
    %v1598 = vlaneseq
    %v1599 = vshrl.u32 %v1598, 7
    %v1600 = vsub.s32 %v1597, %v1599
    %v1601 = vrot.slane %v1593, %v1600
    %v1603 = vunpack.c.l.s4 1983009808
    %v1604 = vunpack.c.0.s8 %v1603
    %v1605 = vlaneseq
    %v1606 = vshrl.u32 %v1605, 7
    %v1607 = vsub.s32 %v1604, %v1606
    %v1608 = vrot.slane %v1594, %v1607
    %v1609 = vcombine.low %v1601, %v1608
    %v1610 = vcombine.low %v1009, %v1011
    %v1611 = vcombine.low %v1080, %v1082
    %v1613 = vunpack.c.l.s4 1983009808
    %v1614 = vunpack.c.0.s8 %v1613
    %v1615 = vlaneseq
    %v1616 = vshrl.u32 %v1615, 7
    %v1617 = vsub.s32 %v1614, %v1616
    %v1618 = vrot.slane %v1610, %v1617
    %v1620 = vunpack.c.l.s4 1983009808
    %v1621 = vunpack.c.0.s8 %v1620
    %v1622 = vlaneseq
    %v1623 = vshrl.u32 %v1622, 7
    %v1624 = vsub.s32 %v1621, %v1623
    %v1625 = vrot.slane %v1611, %v1624
    %v1626 = vcombine.low %v1618, %v1625
    %v1627 = vcombine.low %v1151, %v1153
    %v1628 = vcombine.low %v1222, %v1224
    %v1630 = vunpack.c.l.s4 1983009808
    %v1631 = vunpack.c.0.s8 %v1630
    %v1632 = vlaneseq
    %v1633 = vshrl.u32 %v1632, 7
    %v1634 = vsub.s32 %v1631, %v1633
    %v1635 = vrot.slane %v1627, %v1634
    %v1637 = vunpack.c.l.s4 1983009808
    %v1638 = vunpack.c.0.s8 %v1637
    %v1639 = vlaneseq
    %v1640 = vshrl.u32 %v1639, 7
    %v1641 = vsub.s32 %v1638, %v1640
    %v1642 = vrot.slane %v1628, %v1641
    %v1643 = vcombine.low %v1635, %v1642
    %v1644 = vcombine.low %v1293, %v1295
    %v1645 = vcombine.low %v1364, %v1366
    %v1647 = vunpack.c.l.s4 1983009808
    %v1648 = vunpack.c.0.s8 %v1647
    %v1649 = vlaneseq
    %v1650 = vshrl.u32 %v1649, 7
    %v1651 = vsub.s32 %v1648, %v1650
    %v1652 = vrot.slane %v1644, %v1651
    %v1654 = vunpack.c.l.s4 1983009808
    %v1655 = vunpack.c.0.s8 %v1654
    %v1656 = vlaneseq
    %v1657 = vshrl.u32 %v1656, 7
    %v1658 = vsub.s32 %v1655, %v1657
    %v1659 = vrot.slane %v1645, %v1658
    %v1660 = vcombine.low %v1652, %v1659
    %v1661 = vcombine.low %v1435, %v1437
    %v1662 = vcombine.low %v1506, %v1508
    %v1664 = vunpack.c.l.s4 1983009808
    %v1665 = vunpack.c.0.s8 %v1664
    %v1666 = vlaneseq
    %v1667 = vshrl.u32 %v1666, 7
    %v1668 = vsub.s32 %v1665, %v1667
    %v1669 = vrot.slane %v1661, %v1668
    %v1671 = vunpack.c.l.s4 1983009808
    %v1672 = vunpack.c.0.s8 %v1671
    %v1673 = vlaneseq
    %v1674 = vshrl.u32 %v1673, 7
    %v1675 = vsub.s32 %v1672, %v1674
    %v1676 = vrot.slane %v1662, %v1675
    %v1677 = vcombine.low %v1669, %v1676
    %1686 = vst [vmem:[%s3] sm:$0xff] %v1558
    %1687 = vst [vmem:[%s3 + $0x8] sm:$0xff] %v1575
    %1688 = vst [vmem:[%s3 + $0x10] sm:$0xff] %v1592
    %1689 = vst [vmem:[%s3 + $0x18] sm:$0xff] %v1609
    %1690 = vst [vmem:[%s3 + $0x20] sm:$0xff] %v1626
    %1691 = vst [vmem:[%s3 + $0x28] sm:$0xff] %v1643
    %1692 = vst [vmem:[%s3 + $0x30] sm:$0xff] %v1660
    %1693 = vst [vmem:[%s3 + $0x38] sm:$0xff] %v1677
    // Predicated region
    $region22: #{vgg5_decoder_forward.4} parent=1 // pred_check
      _
    $region23: #{vgg5_decoder_forward.4} parent=1 // pred_check_branch
      %1695 = sbr.rel (0) target = $region25
    $region24: #{vgg5_decoder_forward.4} parent=1 // pred_region
      _
    $region25: #{vgg5_decoder_forward.4} parent=1 // pred_fallthru
      _
    // Predicated region
    $region26: #{vgg5_decoder_forward.4} parent=1 // pred_check
      _
    $region27: #{vgg5_decoder_forward.4} parent=1 // pred_check_branch
      %1697 = sbr.rel (0) target = $region29
    $region28: #{vgg5_decoder_forward.4} parent=1 // pred_region
      _
    $region29: #{vgg5_decoder_forward.4} parent=1 // pred_fallthru
      _
    %1698 = vsyncpa [#allocation3], 1
    %1699 = vsyncpa [#allocation5], 1

// kernel: vgg5_decoder_forward.5
$region0: #{vgg5_decoder_forward.5}
  #allocation0 [shape = 'u32[]', space=smem, size = 0x4, offset = 0x4, fixed_abs, tag = 'smem constant byte address 0x4 - core index']
  #allocation1 [shape = 'u32[144,128]{1,0:T(1,128)}', space=vmem, size = 0x12000, scoped, tag = 'internal scratch']
  %s0 = inlined_call_operand.vmem [shape: f32[128,576], index: 0, kind: input, shape index: {}]
  %s1 = inlined_call_operand.vmem [shape: f32[576,64], index: 1, kind: input, shape index: {}]
  %s2 = inlined_call_operand.vmem [shape: f32[128,64], index: 2, kind: output, shape index: {}]
  %s3 = sld [smem:[#allocation0]]
  $region18: #{vgg5_decoder_forward.5} parent=0
    _
  %s5 = ssub.s32 1, %s3
  %s6 = scalar_select 0, %s5, %s3
  // Predicated region
  $region2: #{vgg5_decoder_forward.5} parent=0 // pred_check
    _
  $region3: #{vgg5_decoder_forward.5} parent=0 // pred_check_branch
    %8 = sbr.rel (0) target = $region5
  $region4: #{vgg5_decoder_forward.5} parent=0 // pred_region
    _
  $region5: #{vgg5_decoder_forward.5} parent=0 // pred_fallthru
    _
  // Predicated region
  $region6: #{vgg5_decoder_forward.5} parent=0 // pred_check
    _
  $region7: #{vgg5_decoder_forward.5} parent=0 // pred_check_branch
    %10 = sbr.rel (0) target = $region9
  $region8: #{vgg5_decoder_forward.5} parent=0 // pred_region
    _
  $region9: #{vgg5_decoder_forward.5} parent=0 // pred_fallthru
    _
  %v11 = vld [vmem:[%s0] sm:$0xff]
  %v12 = vld [vmem:[%s0 + $0x8] sm:$0xff]
  %v13 = vld [vmem:[%s0 + $0x10] sm:$0xff]
  %v14 = vld [vmem:[%s0 + $0x18] sm:$0xff]
  %v15 = vld [vmem:[%s0 + $0x20] sm:$0xff]
  %v16 = vld [vmem:[%s0 + $0x28] sm:$0xff]
  %v17 = vld [vmem:[%s0 + $0x30] sm:$0xff]
  %v18 = vld [vmem:[%s0 + $0x38] sm:$0xff]
  %v19 = vld [vmem:[%s0 + $0x40] sm:$0xff]
  %v20 = vld [vmem:[%s0 + $0x48] sm:$0xff]
  %v21 = vld [vmem:[%s0 + $0x50] sm:$0xff]
  %v22 = vld [vmem:[%s0 + $0x58] sm:$0xff]
  %v23 = vld [vmem:[%s0 + $0x60] sm:$0xff]
  %v24 = vld [vmem:[%s0 + $0x68] sm:$0xff]
  %v25 = vld [vmem:[%s0 + $0x70] sm:$0xff]
  %v26 = vld [vmem:[%s0 + $0x78] sm:$0xff]
  %v27 = vld [vmem:[%s0 + $0x80] sm:$0xff]
  %v28 = vld [vmem:[%s0 + $0x88] sm:$0xff]
  %v29 = vld [vmem:[%s0 + $0x90] sm:$0xff]
  %v30 = vld [vmem:[%s0 + $0x98] sm:$0xff]
  %v31 = vld [vmem:[%s0 + $0xa0] sm:$0xff]
  %v32 = vld [vmem:[%s0 + $0xa8] sm:$0xff]
  %v33 = vld [vmem:[%s0 + $0xb0] sm:$0xff]
  %v34 = vld [vmem:[%s0 + $0xb8] sm:$0xff]
  %v35 = vld [vmem:[%s0 + $0xc0] sm:$0xff]
  %v36 = vld [vmem:[%s0 + $0xc8] sm:$0xff]
  %v37 = vld [vmem:[%s0 + $0xd0] sm:$0xff]
  %v38 = vld [vmem:[%s0 + $0xd8] sm:$0xff]
  %v39 = vld [vmem:[%s0 + $0xe0] sm:$0xff]
  %v40 = vld [vmem:[%s0 + $0xe8] sm:$0xff]
  %v41 = vld [vmem:[%s0 + $0xf0] sm:$0xff]
  %v42 = vld [vmem:[%s0 + $0xf8] sm:$0xff]
  %v43 = vld [vmem:[%s0 + $0x100] sm:$0xff]
  %v44 = vld [vmem:[%s0 + $0x108] sm:$0xff]
  %v45 = vld [vmem:[%s0 + $0x110] sm:$0xff]
  %v46 = vld [vmem:[%s0 + $0x118] sm:$0xff]
  %v47 = vld [vmem:[%s0 + $0x120] sm:$0xff]
  %v48 = vld [vmem:[%s0 + $0x128] sm:$0xff]
  %v49 = vld [vmem:[%s0 + $0x130] sm:$0xff]
  %v50 = vld [vmem:[%s0 + $0x138] sm:$0xff]
  %v51 = vld [vmem:[%s0 + $0x140] sm:$0xff]
  %v52 = vld [vmem:[%s0 + $0x148] sm:$0xff]
  %v53 = vld [vmem:[%s0 + $0x150] sm:$0xff]
  %v54 = vld [vmem:[%s0 + $0x158] sm:$0xff]
  %v55 = vld [vmem:[%s0 + $0x160] sm:$0xff]
  %v56 = vld [vmem:[%s0 + $0x168] sm:$0xff]
  %v57 = vld [vmem:[%s0 + $0x170] sm:$0xff]
  %v58 = vld [vmem:[%s0 + $0x178] sm:$0xff]
  %v59 = vld [vmem:[%s0 + $0x180] sm:$0xff]
  %v60 = vld [vmem:[%s0 + $0x188] sm:$0xff]
  %v61 = vld [vmem:[%s0 + $0x190] sm:$0xff]
  %v62 = vld [vmem:[%s0 + $0x198] sm:$0xff]
  %v63 = vld [vmem:[%s0 + $0x1a0] sm:$0xff]
  %v64 = vld [vmem:[%s0 + $0x1a8] sm:$0xff]
  %v65 = vld [vmem:[%s0 + $0x1b0] sm:$0xff]
  %v66 = vld [vmem:[%s0 + $0x1b8] sm:$0xff]
  %v67 = vld [vmem:[%s0 + $0x1c0] sm:$0xff]
  %v68 = vld [vmem:[%s0 + $0x1c8] sm:$0xff]
  %v69 = vld [vmem:[%s0 + $0x1d0] sm:$0xff]
  %v70 = vld [vmem:[%s0 + $0x1d8] sm:$0xff]
  %v71 = vld [vmem:[%s0 + $0x1e0] sm:$0xff]
  %v72 = vld [vmem:[%s0 + $0x1e8] sm:$0xff]
  %v73 = vld [vmem:[%s0 + $0x1f0] sm:$0xff]
  %v74 = vld [vmem:[%s0 + $0x1f8] sm:$0xff]
  %v75 = vld [vmem:[%s0 + $0x200] sm:$0xff]
  %v76 = vld [vmem:[%s0 + $0x208] sm:$0xff]
  %v77 = vld [vmem:[%s0 + $0x210] sm:$0xff]
  %v78 = vld [vmem:[%s0 + $0x218] sm:$0xff]
  %v79 = vld [vmem:[%s0 + $0x220] sm:$0xff]
  %v80 = vld [vmem:[%s0 + $0x228] sm:$0xff]
  %v81 = vld [vmem:[%s0 + $0x230] sm:$0xff]
  %v82 = vld [vmem:[%s0 + $0x238] sm:$0xff]
  %v83 = vld [vmem:[%s0 + $0x240] sm:$0xff]
  %v84 = vld [vmem:[%s0 + $0x248] sm:$0xff]
  %v85 = vld [vmem:[%s0 + $0x250] sm:$0xff]
  %v86 = vld [vmem:[%s0 + $0x258] sm:$0xff]
  %v87 = vld [vmem:[%s0 + $0x260] sm:$0xff]
  %v88 = vld [vmem:[%s0 + $0x268] sm:$0xff]
  %v89 = vld [vmem:[%s0 + $0x270] sm:$0xff]
  %v90 = vld [vmem:[%s0 + $0x278] sm:$0xff]
  %v91 = vld [vmem:[%s1] sm:$0xff]
  %v92 = vld [vmem:[%s1 + $0x8] sm:$0xff]
  %v93 = vld [vmem:[%s1 + $0x10] sm:$0xff]
  %v94 = vld [vmem:[%s1 + $0x18] sm:$0xff]
  %v95 = vld [vmem:[%s1 + $0x20] sm:$0xff]
  %v96 = vld [vmem:[%s1 + $0x28] sm:$0xff]
  %v97 = vld [vmem:[%s1 + $0x30] sm:$0xff]
  %v98 = vld [vmem:[%s1 + $0x38] sm:$0xff]
  %v99 = vld [vmem:[%s1 + $0x40] sm:$0xff]
  %v100 = vld [vmem:[%s1 + $0x48] sm:$0xff]
  %v101 = vld [vmem:[%s1 + $0x50] sm:$0xff]
  %v102 = vld [vmem:[%s1 + $0x58] sm:$0xff]
  %v103 = vld [vmem:[%s1 + $0x60] sm:$0xff]
  %v104 = vld [vmem:[%s1 + $0x68] sm:$0xff]
  %v105 = vld [vmem:[%s1 + $0x70] sm:$0xff]
  %v106 = vld [vmem:[%s1 + $0x78] sm:$0xff]
  %v107 = vld [vmem:[%s1 + $0x80] sm:$0xff]
  %v108 = vld [vmem:[%s1 + $0x88] sm:$0xff]
  %v109 = vld [vmem:[%s1 + $0x90] sm:$0xff]
  %v110 = vld [vmem:[%s1 + $0x98] sm:$0xff]
  %v111 = vld [vmem:[%s1 + $0xa0] sm:$0xff]
  %v112 = vld [vmem:[%s1 + $0xa8] sm:$0xff]
  %v113 = vld [vmem:[%s1 + $0xb0] sm:$0xff]
  %v114 = vld [vmem:[%s1 + $0xb8] sm:$0xff]
  %v115 = vld [vmem:[%s1 + $0xc0] sm:$0xff]
  %v116 = vld [vmem:[%s1 + $0xc8] sm:$0xff]
  %v117 = vld [vmem:[%s1 + $0xd0] sm:$0xff]
  %v118 = vld [vmem:[%s1 + $0xd8] sm:$0xff]
  %v119 = vld [vmem:[%s1 + $0xe0] sm:$0xff]
  %v120 = vld [vmem:[%s1 + $0xe8] sm:$0xff]
  %v121 = vld [vmem:[%s1 + $0xf0] sm:$0xff]
  %v122 = vld [vmem:[%s1 + $0xf8] sm:$0xff]
  %v123 = vld [vmem:[%s1 + $0x100] sm:$0xff]
  %v124 = vld [vmem:[%s1 + $0x108] sm:$0xff]
  %v125 = vld [vmem:[%s1 + $0x110] sm:$0xff]
  %v126 = vld [vmem:[%s1 + $0x118] sm:$0xff]
  %v127 = vld [vmem:[%s1 + $0x120] sm:$0xff]
  %v128 = vld [vmem:[%s1 + $0x128] sm:$0xff]
  %v129 = vld [vmem:[%s1 + $0x130] sm:$0xff]
  %v130 = vld [vmem:[%s1 + $0x138] sm:$0xff]
  %v131 = vld [vmem:[%s1 + $0x140] sm:$0xff]
  %v132 = vld [vmem:[%s1 + $0x148] sm:$0xff]
  %v133 = vld [vmem:[%s1 + $0x150] sm:$0xff]
  %v134 = vld [vmem:[%s1 + $0x158] sm:$0xff]
  %v135 = vld [vmem:[%s1 + $0x160] sm:$0xff]
  %v136 = vld [vmem:[%s1 + $0x168] sm:$0xff]
  %v137 = vld [vmem:[%s1 + $0x170] sm:$0xff]
  %v138 = vld [vmem:[%s1 + $0x178] sm:$0xff]
  %v139 = vld [vmem:[%s1 + $0x180] sm:$0xff]
  %v140 = vld [vmem:[%s1 + $0x188] sm:$0xff]
  %v141 = vld [vmem:[%s1 + $0x190] sm:$0xff]
  %v142 = vld [vmem:[%s1 + $0x198] sm:$0xff]
  %v143 = vld [vmem:[%s1 + $0x1a0] sm:$0xff]
  %v144 = vld [vmem:[%s1 + $0x1a8] sm:$0xff]
  %v145 = vld [vmem:[%s1 + $0x1b0] sm:$0xff]
  %v146 = vld [vmem:[%s1 + $0x1b8] sm:$0xff]
  %v147 = vld [vmem:[%s1 + $0x1c0] sm:$0xff]
  %v148 = vld [vmem:[%s1 + $0x1c8] sm:$0xff]
  %v149 = vld [vmem:[%s1 + $0x1d0] sm:$0xff]
  %v150 = vld [vmem:[%s1 + $0x1d8] sm:$0xff]
  %v151 = vld [vmem:[%s1 + $0x1e0] sm:$0xff]
  %v152 = vld [vmem:[%s1 + $0x1e8] sm:$0xff]
  %v153 = vld [vmem:[%s1 + $0x1f0] sm:$0xff]
  %v154 = vld [vmem:[%s1 + $0x1f8] sm:$0xff]
  %v155 = vld [vmem:[%s1 + $0x200] sm:$0xff]
  %v156 = vld [vmem:[%s1 + $0x208] sm:$0xff]
  %v157 = vld [vmem:[%s1 + $0x210] sm:$0xff]
  %v158 = vld [vmem:[%s1 + $0x218] sm:$0xff]
  %v159 = vld [vmem:[%s1 + $0x220] sm:$0xff]
  %v160 = vld [vmem:[%s1 + $0x228] sm:$0xff]
  %v161 = vld [vmem:[%s1 + $0x230] sm:$0xff]
  %v162 = vld [vmem:[%s1 + $0x238] sm:$0xff]
  %vm163 = vcmask 523264
  %v165 = vsel %vm163, %v15, 0
  %v168 = vsel %vm163, %v20, 0
  %v171 = vsel %vm163, %v25, 0
  %v174 = vsel %vm163, %v30, 0
  %v177 = vsel %vm163, %v35, 0
  %v180 = vsel %vm163, %v40, 0
  %v183 = vsel %vm163, %v45, 0
  %v186 = vsel %vm163, %v50, 0
  %v189 = vsel %vm163, %v55, 0
  %v192 = vsel %vm163, %v60, 0
  %v195 = vsel %vm163, %v65, 0
  %v198 = vsel %vm163, %v70, 0
  %v201 = vsel %vm163, %v75, 0
  %v204 = vsel %vm163, %v80, 0
  %v207 = vsel %vm163, %v85, 0
  %v210 = vsel %vm163, %v90, 0
  %212 = vmatprep.subr.mxu0 0.0
  %213 = vmatpush1.msra.mxu0 %v91
  %214 = vmatprep.subr.mxu0 0.0
  %215 = vmatpush1.msra.mxu0 %v92
  %216 = vmatprep.subr.mxu0 0.0
  %217 = vmatpush1.msra.mxu0 %v93
  %218 = vmatprep.subr.mxu0 0.0
  %219 = vmatpush1.msra.mxu0 %v94
  %220 = vmatprep.subr.mxu0 0.0
  %221 = vmatpush1.msra.mxu0 %v95
  %222 = vmatprep.subr.mxu0 0.0
  %223 = vmatpush1.msra.mxu0 %v96
  %224 = vmatprep.subr.mxu0 0.0
  %225 = vmatpush1.msra.mxu0 %v97
  %226 = vmatprep.subr.mxu0 0.0
  %227 = vmatpush1.msra.mxu0 %v98
  %228 = vmatprep.subr.mxu0 0.0
  %229 = vmatpush1.msra.mxu0 %v99
  %230 = vmatprep.subr.mxu0 0.0
  %231 = vmatpush1.msra.mxu0 %v100
  %232 = vmatprep.subr.mxu0 0.0
  %233 = vmatpush1.msra.mxu0 %v101
  %234 = vmatprep.subr.mxu0 0.0
  %235 = vmatpush1.msra.mxu0 %v102
  %236 = vmatprep.subr.mxu0 0.0
  %237 = vmatpush1.msra.mxu0 %v103
  %238 = vmatprep.subr.mxu0 0.0
  %239 = vmatpush1.msra.mxu0 %v104
  %240 = vmatprep.subr.mxu0 0.0
  %241 = vmatpush1.msra.mxu0 %v105
  %242 = vmatprep.subr.mxu0 0.0
  %243 = vmatpush1.msra.mxu0 %v106
  %244 = vmatprep.subr.mxu0 0.0
  %245 = vmatpush1.msra.mxu0 %v107
  %246 = vmatprep.subr.mxu0 0.0
  %247 = vmatpush1.msra.mxu0 %v108
  %248 = vmatprep.subr.mxu0 0.0
  %249 = vmatpush1.msra.mxu0 %v109
  %250 = vmatprep.subr.mxu0 0.0
  %251 = vmatpush1.msra.mxu0 %v110
  %252 = vmatprep.subr.mxu0 0.0
  %253 = vmatpush1.msra.mxu0 %v111
  %254 = vmatprep.subr.mxu0 0.0
  %255 = vmatpush1.msra.mxu0 %v112
  %256 = vmatprep.subr.mxu0 0.0
  %257 = vmatpush1.msra.mxu0 %v113
  %258 = vmatprep.subr.mxu0 0.0
  %259 = vmatpush1.msra.mxu0 %v114
  %260 = vmatprep.subr.mxu0 0.0
  %261 = vmatpush1.msra.mxu0 %v115
  %262 = vmatprep.subr.mxu0 0.0
  %263 = vmatpush1.msra.mxu0 %v116
  %264 = vmatprep.subr.mxu0 0.0
  %265 = vmatpush1.msra.mxu0 %v117
  %266 = vmatprep.subr.mxu0 0.0
  %267 = vmatpush1.msra.mxu0 %v118
  %268 = vmatprep.subr.mxu0 0.0
  %269 = vmatpush1.msra.mxu0 %v119
  %270 = vmatprep.subr.mxu0 0.0
  %271 = vmatpush1.msra.mxu0 %v120
  %272 = vmatprep.subr.mxu0 0.0
  %273 = vmatpush1.msra.mxu0 %v121
  %274 = vmatprep.subr.mxu0 0.0
  %275 = vmatpush1.msra.mxu0 %v122
  %276 = vmatprep.mubr.f32.mxu0 %v12
  %277 = vmatmul.mubr.f32.gmra.mrb[0].mxu0 %v11
  %v278 = vpop.f32.mrb[0].mxu0
  %v279 = vadd.f32 0.0, %v278
  %v280 = vpop.f32.mrb[0].mxu0
  %281 = vmatprep.mubr.f32.mxu0 %v17
  %282 = vmatmul.mubr.f32.gmra.mrb[0].mxu0 %v16
  %v283 = vpop.f32.mrb[0].mxu0
  %v284 = vadd.f32 0.0, %v283
  %v285 = vpop.f32.mrb[0].mxu0
  %286 = vmatprep.mubr.f32.mxu0 %v22
  %287 = vmatmul.mubr.f32.gmra.mrb[0].mxu0 %v21
  %v288 = vpop.f32.mrb[0].mxu0
  %v289 = vadd.f32 0.0, %v288
  %v290 = vpop.f32.mrb[0].mxu0
  %291 = vmatprep.mubr.f32.mxu0 %v27
  %292 = vmatmul.mubr.f32.gmra.mrb[0].mxu0 %v26
  %v293 = vpop.f32.mrb[0].mxu0
  %v294 = vadd.f32 0.0, %v293
  %v295 = vpop.f32.mrb[0].mxu0
  %296 = vmatprep.mubr.f32.mxu0 %v32
  %297 = vmatmul.mubr.f32.gmra.mrb[0].mxu0 %v31
  %v298 = vpop.f32.mrb[0].mxu0
  %v299 = vadd.f32 0.0, %v298
  %v300 = vpop.f32.mrb[0].mxu0
  %301 = vmatprep.mubr.f32.mxu0 %v37
  %302 = vmatmul.mubr.f32.gmra.mrb[0].mxu0 %v36
  %v303 = vpop.f32.mrb[0].mxu0
  %v304 = vadd.f32 0.0, %v303
  %v305 = vpop.f32.mrb[0].mxu0
  %306 = vmatprep.mubr.f32.mxu0 %v42
  %307 = vmatmul.mubr.f32.gmra.mrb[0].mxu0 %v41
  %v308 = vpop.f32.mrb[0].mxu0
  %v309 = vadd.f32 0.0, %v308
  %v310 = vpop.f32.mrb[0].mxu0
  %311 = vmatprep.mubr.f32.mxu0 %v47
  %312 = vmatmul.mubr.f32.gmra.mrb[0].mxu0 %v46
  %v313 = vpop.f32.mrb[0].mxu0
  %v314 = vadd.f32 0.0, %v313
  %v315 = vpop.f32.mrb[0].mxu0
  %316 = vmatprep.mubr.f32.mxu0 %v52
  %317 = vmatmul.mubr.f32.gmra.mrb[0].mxu0 %v51
  %v318 = vpop.f32.mrb[0].mxu0
  %v319 = vadd.f32 0.0, %v318
  %v320 = vpop.f32.mrb[0].mxu0
  %321 = vmatprep.mubr.f32.mxu0 %v57
  %322 = vmatmul.mubr.f32.gmra.mrb[0].mxu0 %v56
  %v323 = vpop.f32.mrb[0].mxu0
  %v324 = vadd.f32 0.0, %v323
  %v325 = vpop.f32.mrb[0].mxu0
  %326 = vmatprep.mubr.f32.mxu0 %v62
  %327 = vmatmul.mubr.f32.gmra.mrb[0].mxu0 %v61
  %v328 = vpop.f32.mrb[0].mxu0
  %v329 = vadd.f32 0.0, %v328
  %v330 = vpop.f32.mrb[0].mxu0
  %331 = vmatprep.mubr.f32.mxu0 %v67
  %332 = vmatmul.mubr.f32.gmra.mrb[0].mxu0 %v66
  %v333 = vpop.f32.mrb[0].mxu0
  %v334 = vadd.f32 0.0, %v333
  %v335 = vpop.f32.mrb[0].mxu0
  %336 = vmatprep.mubr.f32.mxu0 %v72
  %337 = vmatmul.mubr.f32.gmra.mrb[0].mxu0 %v71
  %v338 = vpop.f32.mrb[0].mxu0
  %v339 = vadd.f32 0.0, %v338
  %v340 = vpop.f32.mrb[0].mxu0
  %341 = vmatprep.mubr.f32.mxu0 %v77
  %342 = vmatmul.mubr.f32.gmra.mrb[0].mxu0 %v76
  %v343 = vpop.f32.mrb[0].mxu0
  %v344 = vadd.f32 0.0, %v343
  %v345 = vpop.f32.mrb[0].mxu0
  %346 = vmatprep.mubr.f32.mxu0 %v82
  %347 = vmatmul.mubr.f32.gmra.mrb[0].mxu0 %v81
  %v348 = vpop.f32.mrb[0].mxu0
  %v349 = vadd.f32 0.0, %v348
  %v350 = vpop.f32.mrb[0].mxu0
  %351 = vmatprep.mubr.f32.mxu0 %v87
  %352 = vmatmul.mubr.f32.gmra.mrb[0].mxu0 %v86
  %v353 = vpop.f32.mrb[0].mxu0
  %v354 = vadd.f32 0.0, %v353
  %v355 = vpop.f32.mrb[0].mxu0
  %356 = vdwg.mxu0
  %357 = vmatprep.subr.mxu0 0.0
  %358 = vmatpush1.msra.mxu0 %v123
  %359 = vmatprep.subr.mxu0 0.0
  %360 = vmatpush1.msra.mxu0 %v124
  %361 = vmatprep.subr.mxu0 0.0
  %362 = vmatpush1.msra.mxu0 %v125
  %363 = vmatprep.subr.mxu0 0.0
  %364 = vmatpush1.msra.mxu0 %v126
  %365 = vmatprep.subr.mxu0 0.0
  %366 = vmatpush1.msra.mxu0 %v127
  %367 = vmatprep.subr.mxu0 0.0
  %368 = vmatpush1.msra.mxu0 %v128
  %369 = vmatprep.subr.mxu0 0.0
  %370 = vmatpush1.msra.mxu0 %v129
  %371 = vmatprep.subr.mxu0 0.0
  %372 = vmatpush1.msra.mxu0 %v130
  %373 = vmatprep.subr.mxu0 0.0
  %374 = vmatpush1.msra.mxu0 %v131
  %375 = vmatprep.subr.mxu0 0.0
  %376 = vmatpush1.msra.mxu0 %v132
  %377 = vmatprep.subr.mxu0 0.0
  %378 = vmatpush1.msra.mxu0 %v133
  %379 = vmatprep.subr.mxu0 0.0
  %380 = vmatpush1.msra.mxu0 %v134
  %381 = vmatprep.subr.mxu0 0.0
  %382 = vmatpush1.msra.mxu0 %v135
  %383 = vmatprep.subr.mxu0 0.0
  %384 = vmatpush1.msra.mxu0 %v136
  %385 = vmatprep.subr.mxu0 0.0
  %386 = vmatpush1.msra.mxu0 %v137
  %387 = vmatprep.subr.mxu0 0.0
  %388 = vmatpush1.msra.mxu0 %v138
  %389 = vmatprep.subr.mxu0 0.0
  %390 = vmatpush1.msra.mxu0 %v139
  %391 = vmatprep.subr.mxu0 0.0
  %392 = vmatpush1.msra.mxu0 %v140
  %393 = vmatprep.subr.mxu0 0.0
  %394 = vmatpush1.msra.mxu0 %v141
  %395 = vmatprep.subr.mxu0 0.0
  %396 = vmatpush1.msra.mxu0 %v142
  %397 = vmatprep.subr.mxu0 0.0
  %398 = vmatpush1.msra.mxu0 %v143
  %399 = vmatprep.subr.mxu0 0.0
  %400 = vmatpush1.msra.mxu0 %v144
  %401 = vmatprep.subr.mxu0 0.0
  %402 = vmatpush1.msra.mxu0 %v145
  %403 = vmatprep.subr.mxu0 0.0
  %404 = vmatpush1.msra.mxu0 %v146
  %405 = vmatprep.subr.mxu0 0.0
  %406 = vmatpush1.msra.mxu0 %v147
  %407 = vmatprep.subr.mxu0 0.0
  %408 = vmatpush1.msra.mxu0 %v148
  %409 = vmatprep.subr.mxu0 0.0
  %410 = vmatpush1.msra.mxu0 %v149
  %411 = vmatprep.subr.mxu0 0.0
  %412 = vmatpush1.msra.mxu0 %v150
  %413 = vmatprep.subr.mxu0 0.0
  %414 = vmatpush1.msra.mxu0 %v151
  %415 = vmatprep.subr.mxu0 0.0
  %416 = vmatpush1.msra.mxu0 %v152
  %417 = vmatprep.subr.mxu0 0.0
  %418 = vmatpush1.msra.mxu0 %v153
  %419 = vmatprep.subr.mxu0 0.0
  %420 = vmatpush1.msra.mxu0 %v154
  %421 = vmatprep.mubr.f32.mxu0 %v14
  %422 = vmatmul.mubr.f32.gmra.mrb[0].mxu0 %v13
  %v423 = vpop.f32.mrb[0].mxu0
  %v424 = vadd.f32 %v279, %v423
  %v425 = vpop.f32.mrb[0].mxu0
  %426 = vmatprep.mubr.f32.mxu0 %v19
  %427 = vmatmul.mubr.f32.gmra.mrb[0].mxu0 %v18
  %v428 = vpop.f32.mrb[0].mxu0
  %v429 = vadd.f32 %v284, %v428
  %v430 = vpop.f32.mrb[0].mxu0
  %431 = vmatprep.mubr.f32.mxu0 %v24
  %432 = vmatmul.mubr.f32.gmra.mrb[0].mxu0 %v23
  %v433 = vpop.f32.mrb[0].mxu0
  %v434 = vadd.f32 %v289, %v433
  %v435 = vpop.f32.mrb[0].mxu0
  %436 = vmatprep.mubr.f32.mxu0 %v29
  %437 = vmatmul.mubr.f32.gmra.mrb[0].mxu0 %v28
  %v438 = vpop.f32.mrb[0].mxu0
  %v439 = vadd.f32 %v294, %v438
  %v440 = vpop.f32.mrb[0].mxu0
  %441 = vmatprep.mubr.f32.mxu0 %v34
  %442 = vmatmul.mubr.f32.gmra.mrb[0].mxu0 %v33
  %v443 = vpop.f32.mrb[0].mxu0
  %v444 = vadd.f32 %v299, %v443
  %v445 = vpop.f32.mrb[0].mxu0
  %446 = vmatprep.mubr.f32.mxu0 %v39
  %447 = vmatmul.mubr.f32.gmra.mrb[0].mxu0 %v38
  %v448 = vpop.f32.mrb[0].mxu0
  %v449 = vadd.f32 %v304, %v448
  %v450 = vpop.f32.mrb[0].mxu0
  %451 = vmatprep.mubr.f32.mxu0 %v44
  %452 = vmatmul.mubr.f32.gmra.mrb[0].mxu0 %v43
  %v453 = vpop.f32.mrb[0].mxu0
  %v454 = vadd.f32 %v309, %v453
  %v455 = vpop.f32.mrb[0].mxu0
  %456 = vmatprep.mubr.f32.mxu0 %v49
  %457 = vmatmul.mubr.f32.gmra.mrb[0].mxu0 %v48
  %v458 = vpop.f32.mrb[0].mxu0
  %v459 = vadd.f32 %v314, %v458
  %v460 = vpop.f32.mrb[0].mxu0
  %461 = vmatprep.mubr.f32.mxu0 %v54
  %462 = vmatmul.mubr.f32.gmra.mrb[0].mxu0 %v53
  %v463 = vpop.f32.mrb[0].mxu0
  %v464 = vadd.f32 %v319, %v463
  %v465 = vpop.f32.mrb[0].mxu0
  %466 = vmatprep.mubr.f32.mxu0 %v59
  %467 = vmatmul.mubr.f32.gmra.mrb[0].mxu0 %v58
  %v468 = vpop.f32.mrb[0].mxu0
  %v469 = vadd.f32 %v324, %v468
  %v470 = vpop.f32.mrb[0].mxu0
  %471 = vmatprep.mubr.f32.mxu0 %v64
  %472 = vmatmul.mubr.f32.gmra.mrb[0].mxu0 %v63
  %v473 = vpop.f32.mrb[0].mxu0
  %v474 = vadd.f32 %v329, %v473
  %v475 = vpop.f32.mrb[0].mxu0
  %476 = vmatprep.mubr.f32.mxu0 %v69
  %477 = vmatmul.mubr.f32.gmra.mrb[0].mxu0 %v68
  %v478 = vpop.f32.mrb[0].mxu0
  %v479 = vadd.f32 %v334, %v478
  %v480 = vpop.f32.mrb[0].mxu0
  %481 = vmatprep.mubr.f32.mxu0 %v74
  %482 = vmatmul.mubr.f32.gmra.mrb[0].mxu0 %v73
  %v483 = vpop.f32.mrb[0].mxu0
  %v484 = vadd.f32 %v339, %v483
  %v485 = vpop.f32.mrb[0].mxu0
  %486 = vmatprep.mubr.f32.mxu0 %v79
  %487 = vmatmul.mubr.f32.gmra.mrb[0].mxu0 %v78
  %v488 = vpop.f32.mrb[0].mxu0
  %v489 = vadd.f32 %v344, %v488
  %v490 = vpop.f32.mrb[0].mxu0
  %491 = vmatprep.mubr.f32.mxu0 %v84
  %492 = vmatmul.mubr.f32.gmra.mrb[0].mxu0 %v83
  %v493 = vpop.f32.mrb[0].mxu0
  %v494 = vadd.f32 %v349, %v493
  %v495 = vpop.f32.mrb[0].mxu0
  %496 = vmatprep.mubr.f32.mxu0 %v89
  %497 = vmatmul.mubr.f32.gmra.mrb[0].mxu0 %v88
  %v498 = vpop.f32.mrb[0].mxu0
  %v499 = vadd.f32 %v354, %v498
  %v500 = vpop.f32.mrb[0].mxu0
  %501 = vdwg.mxu0
  %502 = vmatprep.subr.mxu0 0.0
  %503 = vmatpush1.msra.mxu0 %v155
  %504 = vmatprep.subr.mxu0 0.0
  %505 = vmatpush1.msra.mxu0 %v156
  %506 = vmatprep.subr.mxu0 0.0
  %507 = vmatpush1.msra.mxu0 %v157
  %508 = vmatprep.subr.mxu0 0.0
  %509 = vmatpush1.msra.mxu0 %v158
  %510 = vmatprep.subr.mxu0 0.0
  %511 = vmatpush1.msra.mxu0 %v159
  %512 = vmatprep.subr.mxu0 0.0
  %513 = vmatpush1.msra.mxu0 %v160
  %514 = vmatprep.subr.mxu0 0.0
  %515 = vmatpush1.msra.mxu0 %v161
  %516 = vmatprep.subr.mxu0 0.0
  %517 = vmatpush1.msra.mxu0 %v162
  %518 = vmatprep.subr.mxu0 0.0
  %519 = vmatpush1.msra.mxu0 0.0
  %520 = vmatprep.subr.mxu0 0.0
  %521 = vmatpush1.msra.mxu0 0.0
  %522 = vmatprep.subr.mxu0 0.0
  %523 = vmatpush1.msra.mxu0 0.0
  %524 = vmatprep.subr.mxu0 0.0
  %525 = vmatpush1.msra.mxu0 0.0
  %526 = vmatprep.subr.mxu0 0.0
  %527 = vmatpush1.msra.mxu0 0.0
  %528 = vmatprep.subr.mxu0 0.0
  %529 = vmatpush1.msra.mxu0 0.0
  %530 = vmatprep.subr.mxu0 0.0
  %531 = vmatpush1.msra.mxu0 0.0
  %532 = vmatprep.subr.mxu0 0.0
  %533 = vmatpush1.msra.mxu0 0.0
  %534 = vmatprep.subr.mxu0 0.0
  %535 = vmatpush1.msra.mxu0 0.0
  %536 = vmatprep.subr.mxu0 0.0
  %537 = vmatpush1.msra.mxu0 0.0
  %538 = vmatprep.subr.mxu0 0.0
  %539 = vmatpush1.msra.mxu0 0.0
  %540 = vmatprep.subr.mxu0 0.0
  %541 = vmatpush1.msra.mxu0 0.0
  %542 = vmatprep.subr.mxu0 0.0
  %543 = vmatpush1.msra.mxu0 0.0
  %544 = vmatprep.subr.mxu0 0.0
  %545 = vmatpush1.msra.mxu0 0.0
  %546 = vmatprep.subr.mxu0 0.0
  %547 = vmatpush1.msra.mxu0 0.0
  %548 = vmatprep.subr.mxu0 0.0
  %549 = vmatpush1.msra.mxu0 0.0
  %550 = vmatprep.subr.mxu0 0.0
  %551 = vmatpush1.msra.mxu0 0.0
  %552 = vmatprep.subr.mxu0 0.0
  %553 = vmatpush1.msra.mxu0 0.0
  %554 = vmatprep.subr.mxu0 0.0
  %555 = vmatpush1.msra.mxu0 0.0
  %556 = vmatprep.subr.mxu0 0.0
  %557 = vmatpush1.msra.mxu0 0.0
  %558 = vmatprep.subr.mxu0 0.0
  %559 = vmatpush1.msra.mxu0 0.0
  %560 = vmatprep.subr.mxu0 0.0
  %561 = vmatpush1.msra.mxu0 0.0
  %562 = vmatprep.subr.mxu0 0.0
  %563 = vmatpush1.msra.mxu0 0.0
  %564 = vmatprep.subr.mxu0 0.0
  %565 = vmatpush1.msra.mxu0 0.0
  %566 = vmatprep.mubr.f32.mxu0 0.0
  %567 = vmatmul.mubr.f32.gmra.mrb[0].mxu0 %v165
  %v568 = vpop.f32.mrb[0].mxu0
  %v569 = vadd.f32 %v424, %v568
  %v570 = vpop.f32.mrb[0].mxu0
  %571 = vmatprep.mubr.f32.mxu0 0.0
  %572 = vmatmul.mubr.f32.gmra.mrb[0].mxu0 %v168
  %v573 = vpop.f32.mrb[0].mxu0
  %v574 = vadd.f32 %v429, %v573
  %v575 = vpop.f32.mrb[0].mxu0
  %576 = vmatprep.mubr.f32.mxu0 0.0
  %577 = vmatmul.mubr.f32.gmra.mrb[0].mxu0 %v171
  %v578 = vpop.f32.mrb[0].mxu0
  %v579 = vadd.f32 %v434, %v578
  %v580 = vpop.f32.mrb[0].mxu0
  %581 = vmatprep.mubr.f32.mxu0 0.0
  %582 = vmatmul.mubr.f32.gmra.mrb[0].mxu0 %v174
  %v583 = vpop.f32.mrb[0].mxu0
  %v584 = vadd.f32 %v439, %v583
  %v585 = vpop.f32.mrb[0].mxu0
  %586 = vmatprep.mubr.f32.mxu0 0.0
  %587 = vmatmul.mubr.f32.gmra.mrb[0].mxu0 %v177
  %v588 = vpop.f32.mrb[0].mxu0
  %v589 = vadd.f32 %v444, %v588
  %v590 = vpop.f32.mrb[0].mxu0
  %591 = vmatprep.mubr.f32.mxu0 0.0
  %592 = vmatmul.mubr.f32.gmra.mrb[0].mxu0 %v180
  %v593 = vpop.f32.mrb[0].mxu0
  %v594 = vadd.f32 %v449, %v593
  %v595 = vpop.f32.mrb[0].mxu0
  %596 = vmatprep.mubr.f32.mxu0 0.0
  %597 = vmatmul.mubr.f32.gmra.mrb[0].mxu0 %v183
  %v598 = vpop.f32.mrb[0].mxu0
  %v599 = vadd.f32 %v454, %v598
  %v600 = vpop.f32.mrb[0].mxu0
  %601 = vmatprep.mubr.f32.mxu0 0.0
  %602 = vmatmul.mubr.f32.gmra.mrb[0].mxu0 %v186
  %v603 = vpop.f32.mrb[0].mxu0
  %v604 = vadd.f32 %v459, %v603
  %v605 = vpop.f32.mrb[0].mxu0
  %606 = vmatprep.mubr.f32.mxu0 0.0
  %607 = vmatmul.mubr.f32.gmra.mrb[0].mxu0 %v189
  %v608 = vpop.f32.mrb[0].mxu0
  %v609 = vadd.f32 %v464, %v608
  %v610 = vpop.f32.mrb[0].mxu0
  %611 = vmatprep.mubr.f32.mxu0 0.0
  %612 = vmatmul.mubr.f32.gmra.mrb[0].mxu0 %v192
  %v613 = vpop.f32.mrb[0].mxu0
  %v614 = vadd.f32 %v469, %v613
  %v615 = vpop.f32.mrb[0].mxu0
  %616 = vmatprep.mubr.f32.mxu0 0.0
  %617 = vmatmul.mubr.f32.gmra.mrb[0].mxu0 %v195
  %v618 = vpop.f32.mrb[0].mxu0
  %v619 = vadd.f32 %v474, %v618
  %v620 = vpop.f32.mrb[0].mxu0
  %621 = vmatprep.mubr.f32.mxu0 0.0
  %622 = vmatmul.mubr.f32.gmra.mrb[0].mxu0 %v198
  %v623 = vpop.f32.mrb[0].mxu0
  %v624 = vadd.f32 %v479, %v623
  %v625 = vpop.f32.mrb[0].mxu0
  %626 = vmatprep.mubr.f32.mxu0 0.0
  %627 = vmatmul.mubr.f32.gmra.mrb[0].mxu0 %v201
  %v628 = vpop.f32.mrb[0].mxu0
  %v629 = vadd.f32 %v484, %v628
  %v630 = vpop.f32.mrb[0].mxu0
  %631 = vmatprep.mubr.f32.mxu0 0.0
  %632 = vmatmul.mubr.f32.gmra.mrb[0].mxu0 %v204
  %v633 = vpop.f32.mrb[0].mxu0
  %v634 = vadd.f32 %v489, %v633
  %v635 = vpop.f32.mrb[0].mxu0
  %636 = vmatprep.mubr.f32.mxu0 0.0
  %637 = vmatmul.mubr.f32.gmra.mrb[0].mxu0 %v207
  %v638 = vpop.f32.mrb[0].mxu0
  %v639 = vadd.f32 %v494, %v638
  %v640 = vpop.f32.mrb[0].mxu0
  %641 = vmatprep.mubr.f32.mxu0 0.0
  %642 = vmatmul.mubr.f32.gmra.mrb[0].mxu0 %v210
  %v643 = vpop.f32.mrb[0].mxu0
  %v644 = vadd.f32 %v499, %v643
  %v645 = vpop.f32.mrb[0].mxu0
  %646 = vdwg.mxu0
  %v647 = vsel %vm163, %v569, 0.0
  %v648 = vsel %vm163, %v574, 0.0
  %v649 = vadd.f32 %v647, %v648
  %v650 = vsel %vm163, %v579, 0.0
  %v651 = vadd.f32 %v649, %v650
  %v652 = vsel %vm163, %v584, 0.0
  %v653 = vadd.f32 %v651, %v652
  %v654 = vsel %vm163, %v589, 0.0
  %v655 = vadd.f32 %v653, %v654
  %v656 = vsel %vm163, %v594, 0.0
  %v657 = vadd.f32 %v655, %v656
  %v658 = vsel %vm163, %v599, 0.0
  %v659 = vadd.f32 %v657, %v658
  %v660 = vsel %vm163, %v604, 0.0
  %v661 = vadd.f32 %v659, %v660
  %v662 = vsel %vm163, %v609, 0.0
  %v663 = vadd.f32 %v661, %v662
  %v664 = vsel %vm163, %v614, 0.0
  %v665 = vadd.f32 %v663, %v664
  %v666 = vsel %vm163, %v619, 0.0
  %v667 = vadd.f32 %v665, %v666
  %v668 = vsel %vm163, %v624, 0.0
  %v669 = vadd.f32 %v667, %v668
  %v670 = vsel %vm163, %v629, 0.0
  %v671 = vadd.f32 %v669, %v670
  %v672 = vsel %vm163, %v634, 0.0
  %v673 = vadd.f32 %v671, %v672
  %v674 = vsel %vm163, %v639, 0.0
  %v675 = vadd.f32 %v673, %v674
  %v676 = vsel %vm163, %v644, 0.0
  %v677 = vadd.f32 %v675, %v676
  %v678 = vrot.slane %v677, 4
  %v679 = vadd.f32 %v677, %v678
  %v680 = vrot.slane %v679, 2
  %v681 = vadd.f32 %v679, %v680
  %v682 = vrot.slane %v681, 1
  %v683 = vadd.f32 %v681, %v682
  %v684 = vmul.f32 %v569, %v569
  %v685 = vmul.f32 %v574, %v574
  %v686 = vmul.f32 %v579, %v579
  %v687 = vmul.f32 %v584, %v584
  %v688 = vmul.f32 %v589, %v589
  %v689 = vmul.f32 %v594, %v594
  %v690 = vmul.f32 %v599, %v599
  %v691 = vmul.f32 %v604, %v604
  %v692 = vmul.f32 %v609, %v609
  %v693 = vmul.f32 %v614, %v614
  %v694 = vmul.f32 %v619, %v619
  %v695 = vmul.f32 %v624, %v624
  %v696 = vmul.f32 %v629, %v629
  %v697 = vmul.f32 %v634, %v634
  %v698 = vmul.f32 %v639, %v639
  %v699 = vmul.f32 %v644, %v644
  %v700 = vsel %vm163, %v684, 0.0
  %v701 = vsel %vm163, %v685, 0.0
  %v702 = vadd.f32 %v700, %v701
  %v703 = vsel %vm163, %v686, 0.0
  %v704 = vadd.f32 %v702, %v703
  %v705 = vsel %vm163, %v687, 0.0
  %v706 = vadd.f32 %v704, %v705
  %v707 = vsel %vm163, %v688, 0.0
  %v708 = vadd.f32 %v706, %v707
  %v709 = vsel %vm163, %v689, 0.0
  %v710 = vadd.f32 %v708, %v709
  %v711 = vsel %vm163, %v690, 0.0
  %v712 = vadd.f32 %v710, %v711
  %v713 = vsel %vm163, %v691, 0.0
  %v714 = vadd.f32 %v712, %v713
  %v715 = vsel %vm163, %v692, 0.0
  %v716 = vadd.f32 %v714, %v715
  %v717 = vsel %vm163, %v693, 0.0
  %v718 = vadd.f32 %v716, %v717
  %v719 = vsel %vm163, %v694, 0.0
  %v720 = vadd.f32 %v718, %v719
  %v721 = vsel %vm163, %v695, 0.0
  %v722 = vadd.f32 %v720, %v721
  %v723 = vsel %vm163, %v696, 0.0
  %v724 = vadd.f32 %v722, %v723
  %v725 = vsel %vm163, %v697, 0.0
  %v726 = vadd.f32 %v724, %v725
  %v727 = vsel %vm163, %v698, 0.0
  %v728 = vadd.f32 %v726, %v727
  %v729 = vsel %vm163, %v699, 0.0
  %v730 = vadd.f32 %v728, %v729
  %v731 = vrot.slane %v730, 4
  %v732 = vadd.f32 %v730, %v731
  %v733 = vrot.slane %v732, 2
  %v734 = vadd.f32 %v732, %v733
  %v735 = vrot.slane %v734, 1
  %v736 = vadd.f32 %v734, %v735
  %v737 = vmul.f32 %v683, 0.0078125
  %v738 = vmul.f32 %v736, 0.0078125
  %v739 = vmul.f32 %v737, %v737
  %v740 = vsub.f32 %v738, %v739
  %v741 = vmax.f32 %v740, 0.0
  %v742 = vsub.f32 %v569, %v737
  %v743 = vsub.f32 %v574, %v737
  %v744 = vsub.f32 %v579, %v737
  %v745 = vsub.f32 %v584, %v737
  %v746 = vsub.f32 %v589, %v737
  %v747 = vsub.f32 %v594, %v737
  %v748 = vsub.f32 %v599, %v737
  %v749 = vsub.f32 %v604, %v737
  %v750 = vsub.f32 %v609, %v737
  %v751 = vsub.f32 %v614, %v737
  %v752 = vsub.f32 %v619, %v737
  %v753 = vsub.f32 %v624, %v737
  %v754 = vsub.f32 %v629, %v737
  %v755 = vsub.f32 %v634, %v737
  %v756 = vsub.f32 %v639, %v737
  %v757 = vsub.f32 %v644, %v737
  %v758 = vadd.f32 %v741, 1e-05
  %v759 = vrsqrt.pop %v758
  %v760 = vmul.f32 %v742, %v759
  %v761 = vmul.f32 %v743, %v759
  %v762 = vmul.f32 %v744, %v759
  %v763 = vmul.f32 %v745, %v759
  %v764 = vmul.f32 %v746, %v759
  %v765 = vmul.f32 %v747, %v759
  %v766 = vmul.f32 %v748, %v759
  %v767 = vmul.f32 %v749, %v759
  %v768 = vmul.f32 %v750, %v759
  %v769 = vmul.f32 %v751, %v759
  %v770 = vmul.f32 %v752, %v759
  %v771 = vmul.f32 %v753, %v759
  %v772 = vmul.f32 %v754, %v759
  %v773 = vmul.f32 %v755, %v759
  %v774 = vmul.f32 %v756, %v759
  %v775 = vmul.f32 %v757, %v759
  %v776 = vtanh.pop %v760
  %v777 = vtanh.pop %v761
  %v778 = vtanh.pop %v762
  %v779 = vtanh.pop %v763
  %v780 = vtanh.pop %v764
  %v781 = vtanh.pop %v765
  %v782 = vtanh.pop %v766
  %v783 = vtanh.pop %v767
  %v784 = vtanh.pop %v768
  %v785 = vtanh.pop %v769
  %v786 = vtanh.pop %v770
  %v787 = vtanh.pop %v771
  %v788 = vtanh.pop %v772
  %v789 = vtanh.pop %v773
  %v790 = vtanh.pop %v774
  %v791 = vtanh.pop %v775
  %792 = vst.msk [vmem:[%s2] sm:$0xff] %vm163, %v776
  %793 = vst.msk [vmem:[%s2 + $0x8] sm:$0xff] %vm163, %v777
  %794 = vst.msk [vmem:[%s2 + $0x10] sm:$0xff] %vm163, %v778
  %795 = vst.msk [vmem:[%s2 + $0x18] sm:$0xff] %vm163, %v779
  %796 = vst.msk [vmem:[%s2 + $0x20] sm:$0xff] %vm163, %v780
  %797 = vst.msk [vmem:[%s2 + $0x28] sm:$0xff] %vm163, %v781
  %798 = vst.msk [vmem:[%s2 + $0x30] sm:$0xff] %vm163, %v782
  %799 = vst.msk [vmem:[%s2 + $0x38] sm:$0xff] %vm163, %v783
  %800 = vst.msk [vmem:[%s2 + $0x40] sm:$0xff] %vm163, %v784
  %801 = vst.msk [vmem:[%s2 + $0x48] sm:$0xff] %vm163, %v785
  %802 = vst.msk [vmem:[%s2 + $0x50] sm:$0xff] %vm163, %v786
  %803 = vst.msk [vmem:[%s2 + $0x58] sm:$0xff] %vm163, %v787
  %804 = vst.msk [vmem:[%s2 + $0x60] sm:$0xff] %vm163, %v788
  %805 = vst.msk [vmem:[%s2 + $0x68] sm:$0xff] %vm163, %v789
  %806 = vst.msk [vmem:[%s2 + $0x70] sm:$0xff] %vm163, %v790
  %807 = vst.msk [vmem:[%s2 + $0x78] sm:$0xff] %vm163, %v791
  // Predicated region
  $region10: #{vgg5_decoder_forward.5} parent=0 // pred_check
    _
  $region11: #{vgg5_decoder_forward.5} parent=0 // pred_check_branch
    %809 = sbr.rel (0) target = $region13
  $region12: #{vgg5_decoder_forward.5} parent=0 // pred_region
    _
  $region13: #{vgg5_decoder_forward.5} parent=0 // pred_fallthru
    _
  // Predicated region
  $region14: #{vgg5_decoder_forward.5} parent=0 // pred_check
    _
  $region15: #{vgg5_decoder_forward.5} parent=0 // pred_check_branch
    %811 = sbr.rel (0) target = $region17
  $region16: #{vgg5_decoder_forward.5} parent=0 // pred_region
    _
  $region17: #{vgg5_decoder_forward.5} parent=0 // pred_fallthru
    _

// kernel: vgg5_decoder_forward.6
$region0: #{vgg5_decoder_forward.6}
  #allocation0 [shape = 'u32[]', space=smem, size = 0x4, offset = 0x4, fixed_abs, tag = 'smem constant byte address 0x4 - core index']
  #allocation1 [shape = 'u32[144,128]{1,0:T(1,128)}', space=vmem, size = 0x12000, scoped, tag = 'internal scratch']
  %s0 = inlined_call_operand.vmem [shape: f32[512,576], index: 0, kind: input, shape index: {}]
  %s1 = inlined_call_operand.vmem [shape: f32[576,32], index: 1, kind: input, shape index: {}]
  %s2 = inlined_call_operand.vmem [shape: f32[512,32], index: 2, kind: output, shape index: {}]
  %s3 = sld [smem:[#allocation0]]
  $region18: #{vgg5_decoder_forward.6} parent=0
    _
  %s5 = ssub.s32 1, %s3
  %s6 = scalar_select 0, %s5, %s3
  // Predicated region
  $region2: #{vgg5_decoder_forward.6} parent=0 // pred_check
    _
  $region3: #{vgg5_decoder_forward.6} parent=0 // pred_check_branch
    %8 = sbr.rel (0) target = $region5
  $region4: #{vgg5_decoder_forward.6} parent=0 // pred_region
    _
  $region5: #{vgg5_decoder_forward.6} parent=0 // pred_fallthru
    _
  // Predicated region
  $region6: #{vgg5_decoder_forward.6} parent=0 // pred_check
    _
  $region7: #{vgg5_decoder_forward.6} parent=0 // pred_check_branch
    %10 = sbr.rel (0) target = $region9
  $region8: #{vgg5_decoder_forward.6} parent=0 // pred_region
    _
  $region9: #{vgg5_decoder_forward.6} parent=0 // pred_fallthru
    _
  %v11 = vld [vmem:[%s0] sm:$0xff]
  %v12 = vld [vmem:[%s0 + $0x8] sm:$0xff]
  %v13 = vld [vmem:[%s0 + $0x10] sm:$0xff]
  %v14 = vld [vmem:[%s0 + $0x18] sm:$0xff]
  %v15 = vld [vmem:[%s0 + $0x20] sm:$0xff]
  %v16 = vld [vmem:[%s0 + $0x28] sm:$0xff]
  %v17 = vld [vmem:[%s0 + $0x30] sm:$0xff]
  %v18 = vld [vmem:[%s0 + $0x38] sm:$0xff]
  %v19 = vld [vmem:[%s0 + $0x40] sm:$0xff]
  %v20 = vld [vmem:[%s0 + $0x48] sm:$0xff]
  %v21 = vld [vmem:[%s0 + $0x50] sm:$0xff]
  %v22 = vld [vmem:[%s0 + $0x58] sm:$0xff]
  %v23 = vld [vmem:[%s0 + $0x60] sm:$0xff]
  %v24 = vld [vmem:[%s0 + $0x68] sm:$0xff]
  %v25 = vld [vmem:[%s0 + $0x70] sm:$0xff]
  %v26 = vld [vmem:[%s0 + $0x78] sm:$0xff]
  %v27 = vld [vmem:[%s0 + $0x80] sm:$0xff]
  %v28 = vld [vmem:[%s0 + $0x88] sm:$0xff]
  %v29 = vld [vmem:[%s0 + $0x90] sm:$0xff]
  %v30 = vld [vmem:[%s0 + $0x98] sm:$0xff]
  %v31 = vld [vmem:[%s0 + $0xa0] sm:$0xff]
  %v32 = vld [vmem:[%s0 + $0xa8] sm:$0xff]
  %v33 = vld [vmem:[%s0 + $0xb0] sm:$0xff]
  %v34 = vld [vmem:[%s0 + $0xb8] sm:$0xff]
  %v35 = vld [vmem:[%s0 + $0xc0] sm:$0xff]
  %v36 = vld [vmem:[%s0 + $0xc8] sm:$0xff]
  %v37 = vld [vmem:[%s0 + $0xd0] sm:$0xff]
  %v38 = vld [vmem:[%s0 + $0xd8] sm:$0xff]
  %v39 = vld [vmem:[%s0 + $0xe0] sm:$0xff]
  %v40 = vld [vmem:[%s0 + $0xe8] sm:$0xff]
  %v41 = vld [vmem:[%s0 + $0xf0] sm:$0xff]
  %v42 = vld [vmem:[%s0 + $0xf8] sm:$0xff]
  %v43 = vld [vmem:[%s0 + $0x100] sm:$0xff]
  %v44 = vld [vmem:[%s0 + $0x108] sm:$0xff]
  %v45 = vld [vmem:[%s0 + $0x110] sm:$0xff]
  %v46 = vld [vmem:[%s0 + $0x118] sm:$0xff]
  %v47 = vld [vmem:[%s0 + $0x120] sm:$0xff]
  %v48 = vld [vmem:[%s0 + $0x128] sm:$0xff]
  %v49 = vld [vmem:[%s0 + $0x130] sm:$0xff]
  %v50 = vld [vmem:[%s0 + $0x138] sm:$0xff]
  %v51 = vld [vmem:[%s0 + $0x140] sm:$0xff]
  %v52 = vld [vmem:[%s0 + $0x148] sm:$0xff]
  %v53 = vld [vmem:[%s0 + $0x150] sm:$0xff]
  %v54 = vld [vmem:[%s0 + $0x158] sm:$0xff]
  %v55 = vld [vmem:[%s0 + $0x160] sm:$0xff]
  %v56 = vld [vmem:[%s0 + $0x168] sm:$0xff]
  %v57 = vld [vmem:[%s0 + $0x170] sm:$0xff]
  %v58 = vld [vmem:[%s0 + $0x178] sm:$0xff]
  %v59 = vld [vmem:[%s0 + $0x180] sm:$0xff]
  %v60 = vld [vmem:[%s0 + $0x188] sm:$0xff]
  %v61 = vld [vmem:[%s0 + $0x190] sm:$0xff]
  %v62 = vld [vmem:[%s0 + $0x198] sm:$0xff]
  %v63 = vld [vmem:[%s0 + $0x1a0] sm:$0xff]
  %v64 = vld [vmem:[%s0 + $0x1a8] sm:$0xff]
  %v65 = vld [vmem:[%s0 + $0x1b0] sm:$0xff]
  %v66 = vld [vmem:[%s0 + $0x1b8] sm:$0xff]
  %v67 = vld [vmem:[%s0 + $0x1c0] sm:$0xff]
  %v68 = vld [vmem:[%s0 + $0x1c8] sm:$0xff]
  %v69 = vld [vmem:[%s0 + $0x1d0] sm:$0xff]
  %v70 = vld [vmem:[%s0 + $0x1d8] sm:$0xff]
  %v71 = vld [vmem:[%s0 + $0x1e0] sm:$0xff]
  %v72 = vld [vmem:[%s0 + $0x1e8] sm:$0xff]
  %v73 = vld [vmem:[%s0 + $0x1f0] sm:$0xff]
  %v74 = vld [vmem:[%s0 + $0x1f8] sm:$0xff]
  %v75 = vld [vmem:[%s0 + $0x200] sm:$0xff]
  %v76 = vld [vmem:[%s0 + $0x208] sm:$0xff]
  %v77 = vld [vmem:[%s0 + $0x210] sm:$0xff]
  %v78 = vld [vmem:[%s0 + $0x218] sm:$0xff]
  %v79 = vld [vmem:[%s0 + $0x220] sm:$0xff]
  %v80 = vld [vmem:[%s0 + $0x228] sm:$0xff]
  %v81 = vld [vmem:[%s0 + $0x230] sm:$0xff]
  %v82 = vld [vmem:[%s0 + $0x238] sm:$0xff]
  %v83 = vld [vmem:[%s0 + $0x240] sm:$0xff]
  %v84 = vld [vmem:[%s0 + $0x248] sm:$0xff]
  %v85 = vld [vmem:[%s0 + $0x250] sm:$0xff]
  %v86 = vld [vmem:[%s0 + $0x258] sm:$0xff]
  %v87 = vld [vmem:[%s0 + $0x260] sm:$0xff]
  %v88 = vld [vmem:[%s0 + $0x268] sm:$0xff]
  %v89 = vld [vmem:[%s0 + $0x270] sm:$0xff]
  %v90 = vld [vmem:[%s0 + $0x278] sm:$0xff]
  %v91 = vld [vmem:[%s0 + $0x280] sm:$0xff]
  %v92 = vld [vmem:[%s0 + $0x288] sm:$0xff]
  %v93 = vld [vmem:[%s0 + $0x290] sm:$0xff]
  %v94 = vld [vmem:[%s0 + $0x298] sm:$0xff]
  %v95 = vld [vmem:[%s0 + $0x2a0] sm:$0xff]
  %v96 = vld [vmem:[%s0 + $0x2a8] sm:$0xff]
  %v97 = vld [vmem:[%s0 + $0x2b0] sm:$0xff]
  %v98 = vld [vmem:[%s0 + $0x2b8] sm:$0xff]
  %v99 = vld [vmem:[%s0 + $0x2c0] sm:$0xff]
  %v100 = vld [vmem:[%s0 + $0x2c8] sm:$0xff]
  %v101 = vld [vmem:[%s0 + $0x2d0] sm:$0xff]
  %v102 = vld [vmem:[%s0 + $0x2d8] sm:$0xff]
  %v103 = vld [vmem:[%s0 + $0x2e0] sm:$0xff]
  %v104 = vld [vmem:[%s0 + $0x2e8] sm:$0xff]
  %v105 = vld [vmem:[%s0 + $0x2f0] sm:$0xff]
  %v106 = vld [vmem:[%s0 + $0x2f8] sm:$0xff]
  %v107 = vld [vmem:[%s0 + $0x300] sm:$0xff]
  %v108 = vld [vmem:[%s0 + $0x308] sm:$0xff]
  %v109 = vld [vmem:[%s0 + $0x310] sm:$0xff]
  %v110 = vld [vmem:[%s0 + $0x318] sm:$0xff]
  %v111 = vld [vmem:[%s0 + $0x320] sm:$0xff]
  %v112 = vld [vmem:[%s0 + $0x328] sm:$0xff]
  %v113 = vld [vmem:[%s0 + $0x330] sm:$0xff]
  %v114 = vld [vmem:[%s0 + $0x338] sm:$0xff]
  %v115 = vld [vmem:[%s0 + $0x340] sm:$0xff]
  %v116 = vld [vmem:[%s0 + $0x348] sm:$0xff]
  %v117 = vld [vmem:[%s0 + $0x350] sm:$0xff]
  %v118 = vld [vmem:[%s0 + $0x358] sm:$0xff]
  %v119 = vld [vmem:[%s0 + $0x360] sm:$0xff]
  %v120 = vld [vmem:[%s0 + $0x368] sm:$0xff]
  %v121 = vld [vmem:[%s0 + $0x370] sm:$0xff]
  %v122 = vld [vmem:[%s0 + $0x378] sm:$0xff]
  %v123 = vld [vmem:[%s0 + $0x380] sm:$0xff]
  %v124 = vld [vmem:[%s0 + $0x388] sm:$0xff]
  %v125 = vld [vmem:[%s0 + $0x390] sm:$0xff]
  %v126 = vld [vmem:[%s0 + $0x398] sm:$0xff]
  %v127 = vld [vmem:[%s0 + $0x3a0] sm:$0xff]
  %v128 = vld [vmem:[%s0 + $0x3a8] sm:$0xff]
  %v129 = vld [vmem:[%s0 + $0x3b0] sm:$0xff]
  %v130 = vld [vmem:[%s0 + $0x3b8] sm:$0xff]
  %v131 = vld [vmem:[%s0 + $0x3c0] sm:$0xff]
  %v132 = vld [vmem:[%s0 + $0x3c8] sm:$0xff]
  %v133 = vld [vmem:[%s0 + $0x3d0] sm:$0xff]
  %v134 = vld [vmem:[%s0 + $0x3d8] sm:$0xff]
  %v135 = vld [vmem:[%s0 + $0x3e0] sm:$0xff]
  %v136 = vld [vmem:[%s0 + $0x3e8] sm:$0xff]
  %v137 = vld [vmem:[%s0 + $0x3f0] sm:$0xff]
  %v138 = vld [vmem:[%s0 + $0x3f8] sm:$0xff]
  %v139 = vld [vmem:[%s0 + $0x400] sm:$0xff]
  %v140 = vld [vmem:[%s0 + $0x408] sm:$0xff]
  %v141 = vld [vmem:[%s0 + $0x410] sm:$0xff]
  %v142 = vld [vmem:[%s0 + $0x418] sm:$0xff]
  %v143 = vld [vmem:[%s0 + $0x420] sm:$0xff]
  %v144 = vld [vmem:[%s0 + $0x428] sm:$0xff]
  %v145 = vld [vmem:[%s0 + $0x430] sm:$0xff]
  %v146 = vld [vmem:[%s0 + $0x438] sm:$0xff]
  %v147 = vld [vmem:[%s0 + $0x440] sm:$0xff]
  %v148 = vld [vmem:[%s0 + $0x448] sm:$0xff]
  %v149 = vld [vmem:[%s0 + $0x450] sm:$0xff]
  %v150 = vld [vmem:[%s0 + $0x458] sm:$0xff]
  %v151 = vld [vmem:[%s0 + $0x460] sm:$0xff]
  %v152 = vld [vmem:[%s0 + $0x468] sm:$0xff]
  %v153 = vld [vmem:[%s0 + $0x470] sm:$0xff]
  %v154 = vld [vmem:[%s0 + $0x478] sm:$0xff]
  %v155 = vld [vmem:[%s0 + $0x480] sm:$0xff]
  %v156 = vld [vmem:[%s0 + $0x488] sm:$0xff]
  %v157 = vld [vmem:[%s0 + $0x490] sm:$0xff]
  %v158 = vld [vmem:[%s0 + $0x498] sm:$0xff]
  %v159 = vld [vmem:[%s0 + $0x4a0] sm:$0xff]
  %v160 = vld [vmem:[%s0 + $0x4a8] sm:$0xff]
  %v161 = vld [vmem:[%s0 + $0x4b0] sm:$0xff]
  %v162 = vld [vmem:[%s0 + $0x4b8] sm:$0xff]
  %v163 = vld [vmem:[%s0 + $0x4c0] sm:$0xff]
  %v164 = vld [vmem:[%s0 + $0x4c8] sm:$0xff]
  %v165 = vld [vmem:[%s0 + $0x4d0] sm:$0xff]
  %v166 = vld [vmem:[%s0 + $0x4d8] sm:$0xff]
  %v167 = vld [vmem:[%s0 + $0x4e0] sm:$0xff]
  %v168 = vld [vmem:[%s0 + $0x4e8] sm:$0xff]
  %v169 = vld [vmem:[%s0 + $0x4f0] sm:$0xff]
  %v170 = vld [vmem:[%s0 + $0x4f8] sm:$0xff]
  %v171 = vld [vmem:[%s0 + $0x500] sm:$0xff]
  %v172 = vld [vmem:[%s0 + $0x508] sm:$0xff]
  %v173 = vld [vmem:[%s0 + $0x510] sm:$0xff]
  %v174 = vld [vmem:[%s0 + $0x518] sm:$0xff]
  %v175 = vld [vmem:[%s0 + $0x520] sm:$0xff]
  %v176 = vld [vmem:[%s0 + $0x528] sm:$0xff]
  %v177 = vld [vmem:[%s0 + $0x530] sm:$0xff]
  %v178 = vld [vmem:[%s0 + $0x538] sm:$0xff]
  %v179 = vld [vmem:[%s0 + $0x540] sm:$0xff]
  %v180 = vld [vmem:[%s0 + $0x548] sm:$0xff]
  %v181 = vld [vmem:[%s0 + $0x550] sm:$0xff]
  %v182 = vld [vmem:[%s0 + $0x558] sm:$0xff]
  %v183 = vld [vmem:[%s0 + $0x560] sm:$0xff]
  %v184 = vld [vmem:[%s0 + $0x568] sm:$0xff]
  %v185 = vld [vmem:[%s0 + $0x570] sm:$0xff]
  %v186 = vld [vmem:[%s0 + $0x578] sm:$0xff]
  %v187 = vld [vmem:[%s0 + $0x580] sm:$0xff]
  %v188 = vld [vmem:[%s0 + $0x588] sm:$0xff]
  %v189 = vld [vmem:[%s0 + $0x590] sm:$0xff]
  %v190 = vld [vmem:[%s0 + $0x598] sm:$0xff]
  %v191 = vld [vmem:[%s0 + $0x5a0] sm:$0xff]
  %v192 = vld [vmem:[%s0 + $0x5a8] sm:$0xff]
  %v193 = vld [vmem:[%s0 + $0x5b0] sm:$0xff]
  %v194 = vld [vmem:[%s0 + $0x5b8] sm:$0xff]
  %v195 = vld [vmem:[%s0 + $0x5c0] sm:$0xff]
  %v196 = vld [vmem:[%s0 + $0x5c8] sm:$0xff]
  %v197 = vld [vmem:[%s0 + $0x5d0] sm:$0xff]
  %v198 = vld [vmem:[%s0 + $0x5d8] sm:$0xff]
  %v199 = vld [vmem:[%s0 + $0x5e0] sm:$0xff]
  %v200 = vld [vmem:[%s0 + $0x5e8] sm:$0xff]
  %v201 = vld [vmem:[%s0 + $0x5f0] sm:$0xff]
  %v202 = vld [vmem:[%s0 + $0x5f8] sm:$0xff]
  %v203 = vld [vmem:[%s0 + $0x600] sm:$0xff]
  %v204 = vld [vmem:[%s0 + $0x608] sm:$0xff]
  %v205 = vld [vmem:[%s0 + $0x610] sm:$0xff]
  %v206 = vld [vmem:[%s0 + $0x618] sm:$0xff]
  %v207 = vld [vmem:[%s0 + $0x620] sm:$0xff]
  %v208 = vld [vmem:[%s0 + $0x628] sm:$0xff]
  %v209 = vld [vmem:[%s0 + $0x630] sm:$0xff]
  %v210 = vld [vmem:[%s0 + $0x638] sm:$0xff]
  %v211 = vld [vmem:[%s0 + $0x640] sm:$0xff]
  %v212 = vld [vmem:[%s0 + $0x648] sm:$0xff]
  %v213 = vld [vmem:[%s0 + $0x650] sm:$0xff]
  %v214 = vld [vmem:[%s0 + $0x658] sm:$0xff]
  %v215 = vld [vmem:[%s0 + $0x660] sm:$0xff]
  %v216 = vld [vmem:[%s0 + $0x668] sm:$0xff]
  %v217 = vld [vmem:[%s0 + $0x670] sm:$0xff]
  %v218 = vld [vmem:[%s0 + $0x678] sm:$0xff]
  %v219 = vld [vmem:[%s0 + $0x680] sm:$0xff]
  %v220 = vld [vmem:[%s0 + $0x688] sm:$0xff]
  %v221 = vld [vmem:[%s0 + $0x690] sm:$0xff]
  %v222 = vld [vmem:[%s0 + $0x698] sm:$0xff]
  %v223 = vld [vmem:[%s0 + $0x6a0] sm:$0xff]
  %v224 = vld [vmem:[%s0 + $0x6a8] sm:$0xff]
  %v225 = vld [vmem:[%s0 + $0x6b0] sm:$0xff]
  %v226 = vld [vmem:[%s0 + $0x6b8] sm:$0xff]
  %v227 = vld [vmem:[%s0 + $0x6c0] sm:$0xff]
  %v228 = vld [vmem:[%s0 + $0x6c8] sm:$0xff]
  %v229 = vld [vmem:[%s0 + $0x6d0] sm:$0xff]
  %v230 = vld [vmem:[%s0 + $0x6d8] sm:$0xff]
  %v231 = vld [vmem:[%s0 + $0x6e0] sm:$0xff]
  %v232 = vld [vmem:[%s0 + $0x6e8] sm:$0xff]
  %v233 = vld [vmem:[%s0 + $0x6f0] sm:$0xff]
  %v234 = vld [vmem:[%s0 + $0x6f8] sm:$0xff]
  %v235 = vld [vmem:[%s0 + $0x700] sm:$0xff]
  %v236 = vld [vmem:[%s0 + $0x708] sm:$0xff]
  %v237 = vld [vmem:[%s0 + $0x710] sm:$0xff]
  %v238 = vld [vmem:[%s0 + $0x718] sm:$0xff]
  %v239 = vld [vmem:[%s0 + $0x720] sm:$0xff]
  %v240 = vld [vmem:[%s0 + $0x728] sm:$0xff]
  %v241 = vld [vmem:[%s0 + $0x730] sm:$0xff]
  %v242 = vld [vmem:[%s0 + $0x738] sm:$0xff]
  %v243 = vld [vmem:[%s0 + $0x740] sm:$0xff]
  %v244 = vld [vmem:[%s0 + $0x748] sm:$0xff]
  %v245 = vld [vmem:[%s0 + $0x750] sm:$0xff]
  %v246 = vld [vmem:[%s0 + $0x758] sm:$0xff]
  %v247 = vld [vmem:[%s0 + $0x760] sm:$0xff]
  %v248 = vld [vmem:[%s0 + $0x768] sm:$0xff]
  %v249 = vld [vmem:[%s0 + $0x770] sm:$0xff]
  %v250 = vld [vmem:[%s0 + $0x778] sm:$0xff]
  %v251 = vld [vmem:[%s0 + $0x780] sm:$0xff]
  %v252 = vld [vmem:[%s0 + $0x788] sm:$0xff]
  %v253 = vld [vmem:[%s0 + $0x790] sm:$0xff]
  %v254 = vld [vmem:[%s0 + $0x798] sm:$0xff]
  %v255 = vld [vmem:[%s0 + $0x7a0] sm:$0xff]
  %v256 = vld [vmem:[%s0 + $0x7a8] sm:$0xff]
  %v257 = vld [vmem:[%s0 + $0x7b0] sm:$0xff]
  %v258 = vld [vmem:[%s0 + $0x7b8] sm:$0xff]
  %v259 = vld [vmem:[%s0 + $0x7c0] sm:$0xff]
  %v260 = vld [vmem:[%s0 + $0x7c8] sm:$0xff]
  %v261 = vld [vmem:[%s0 + $0x7d0] sm:$0xff]
  %v262 = vld [vmem:[%s0 + $0x7d8] sm:$0xff]
  %v263 = vld [vmem:[%s0 + $0x7e0] sm:$0xff]
  %v264 = vld [vmem:[%s0 + $0x7e8] sm:$0xff]
  %v265 = vld [vmem:[%s0 + $0x7f0] sm:$0xff]
  %v266 = vld [vmem:[%s0 + $0x7f8] sm:$0xff]
  %v267 = vld [vmem:[%s0 + $0x800] sm:$0xff]
  %v268 = vld [vmem:[%s0 + $0x808] sm:$0xff]
  %v269 = vld [vmem:[%s0 + $0x810] sm:$0xff]
  %v270 = vld [vmem:[%s0 + $0x818] sm:$0xff]
  %v271 = vld [vmem:[%s0 + $0x820] sm:$0xff]
  %v272 = vld [vmem:[%s0 + $0x828] sm:$0xff]
  %v273 = vld [vmem:[%s0 + $0x830] sm:$0xff]
  %v274 = vld [vmem:[%s0 + $0x838] sm:$0xff]
  %v275 = vld [vmem:[%s0 + $0x840] sm:$0xff]
  %v276 = vld [vmem:[%s0 + $0x848] sm:$0xff]
  %v277 = vld [vmem:[%s0 + $0x850] sm:$0xff]
  %v278 = vld [vmem:[%s0 + $0x858] sm:$0xff]
  %v279 = vld [vmem:[%s0 + $0x860] sm:$0xff]
  %v280 = vld [vmem:[%s0 + $0x868] sm:$0xff]
  %v281 = vld [vmem:[%s0 + $0x870] sm:$0xff]
  %v282 = vld [vmem:[%s0 + $0x878] sm:$0xff]
  %v283 = vld [vmem:[%s0 + $0x880] sm:$0xff]
  %v284 = vld [vmem:[%s0 + $0x888] sm:$0xff]
  %v285 = vld [vmem:[%s0 + $0x890] sm:$0xff]
  %v286 = vld [vmem:[%s0 + $0x898] sm:$0xff]
  %v287 = vld [vmem:[%s0 + $0x8a0] sm:$0xff]
  %v288 = vld [vmem:[%s0 + $0x8a8] sm:$0xff]
  %v289 = vld [vmem:[%s0 + $0x8b0] sm:$0xff]
  %v290 = vld [vmem:[%s0 + $0x8b8] sm:$0xff]
  %v291 = vld [vmem:[%s0 + $0x8c0] sm:$0xff]
  %v292 = vld [vmem:[%s0 + $0x8c8] sm:$0xff]
  %v293 = vld [vmem:[%s0 + $0x8d0] sm:$0xff]
  %v294 = vld [vmem:[%s0 + $0x8d8] sm:$0xff]
  %v295 = vld [vmem:[%s0 + $0x8e0] sm:$0xff]
  %v296 = vld [vmem:[%s0 + $0x8e8] sm:$0xff]
  %v297 = vld [vmem:[%s0 + $0x8f0] sm:$0xff]
  %v298 = vld [vmem:[%s0 + $0x8f8] sm:$0xff]
  %v299 = vld [vmem:[%s0 + $0x900] sm:$0xff]
  %v300 = vld [vmem:[%s0 + $0x908] sm:$0xff]
  %v301 = vld [vmem:[%s0 + $0x910] sm:$0xff]
  %v302 = vld [vmem:[%s0 + $0x918] sm:$0xff]
  %v303 = vld [vmem:[%s0 + $0x920] sm:$0xff]
  %v304 = vld [vmem:[%s0 + $0x928] sm:$0xff]
  %v305 = vld [vmem:[%s0 + $0x930] sm:$0xff]
  %v306 = vld [vmem:[%s0 + $0x938] sm:$0xff]
  %v307 = vld [vmem:[%s0 + $0x940] sm:$0xff]
  %v308 = vld [vmem:[%s0 + $0x948] sm:$0xff]
  %v309 = vld [vmem:[%s0 + $0x950] sm:$0xff]
  %v310 = vld [vmem:[%s0 + $0x958] sm:$0xff]
  %v311 = vld [vmem:[%s0 + $0x960] sm:$0xff]
  %v312 = vld [vmem:[%s0 + $0x968] sm:$0xff]
  %v313 = vld [vmem:[%s0 + $0x970] sm:$0xff]
  %v314 = vld [vmem:[%s0 + $0x978] sm:$0xff]
  %v315 = vld [vmem:[%s0 + $0x980] sm:$0xff]
  %v316 = vld [vmem:[%s0 + $0x988] sm:$0xff]
  %v317 = vld [vmem:[%s0 + $0x990] sm:$0xff]
  %v318 = vld [vmem:[%s0 + $0x998] sm:$0xff]
  %v319 = vld [vmem:[%s0 + $0x9a0] sm:$0xff]
  %v320 = vld [vmem:[%s0 + $0x9a8] sm:$0xff]
  %v321 = vld [vmem:[%s0 + $0x9b0] sm:$0xff]
  %v322 = vld [vmem:[%s0 + $0x9b8] sm:$0xff]
  %v323 = vld [vmem:[%s0 + $0x9c0] sm:$0xff]
  %v324 = vld [vmem:[%s0 + $0x9c8] sm:$0xff]
  %v325 = vld [vmem:[%s0 + $0x9d0] sm:$0xff]
  %v326 = vld [vmem:[%s0 + $0x9d8] sm:$0xff]
  %v327 = vld [vmem:[%s0 + $0x9e0] sm:$0xff]
  %v328 = vld [vmem:[%s0 + $0x9e8] sm:$0xff]
  %v329 = vld [vmem:[%s0 + $0x9f0] sm:$0xff]
  %v330 = vld [vmem:[%s0 + $0x9f8] sm:$0xff]
  %v331 = vld [vmem:[%s1] sm:$0xff]
  %v332 = vld [vmem:[%s1 + $0x8] sm:$0xff]
  %v333 = vld [vmem:[%s1 + $0x10] sm:$0xff]
  %v334 = vld [vmem:[%s1 + $0x18] sm:$0xff]
  %v335 = vld [vmem:[%s1 + $0x20] sm:$0xff]
  %v336 = vld [vmem:[%s1 + $0x28] sm:$0xff]
  %v337 = vld [vmem:[%s1 + $0x30] sm:$0xff]
  %v338 = vld [vmem:[%s1 + $0x38] sm:$0xff]
  %v339 = vld [vmem:[%s1 + $0x40] sm:$0xff]
  %v340 = vld [vmem:[%s1 + $0x48] sm:$0xff]
  %v341 = vld [vmem:[%s1 + $0x50] sm:$0xff]
  %v342 = vld [vmem:[%s1 + $0x58] sm:$0xff]
  %v343 = vld [vmem:[%s1 + $0x60] sm:$0xff]
  %v344 = vld [vmem:[%s1 + $0x68] sm:$0xff]
  %v345 = vld [vmem:[%s1 + $0x70] sm:$0xff]
  %v346 = vld [vmem:[%s1 + $0x78] sm:$0xff]
  %v347 = vld [vmem:[%s1 + $0x80] sm:$0xff]
  %v348 = vld [vmem:[%s1 + $0x88] sm:$0xff]
  %v349 = vld [vmem:[%s1 + $0x90] sm:$0xff]
  %v350 = vld [vmem:[%s1 + $0x98] sm:$0xff]
  %v351 = vld [vmem:[%s1 + $0xa0] sm:$0xff]
  %v352 = vld [vmem:[%s1 + $0xa8] sm:$0xff]
  %v353 = vld [vmem:[%s1 + $0xb0] sm:$0xff]
  %v354 = vld [vmem:[%s1 + $0xb8] sm:$0xff]
  %v355 = vld [vmem:[%s1 + $0xc0] sm:$0xff]
  %v356 = vld [vmem:[%s1 + $0xc8] sm:$0xff]
  %v357 = vld [vmem:[%s1 + $0xd0] sm:$0xff]
  %v358 = vld [vmem:[%s1 + $0xd8] sm:$0xff]
  %v359 = vld [vmem:[%s1 + $0xe0] sm:$0xff]
  %v360 = vld [vmem:[%s1 + $0xe8] sm:$0xff]
  %v361 = vld [vmem:[%s1 + $0xf0] sm:$0xff]
  %v362 = vld [vmem:[%s1 + $0xf8] sm:$0xff]
  %v363 = vld [vmem:[%s1 + $0x100] sm:$0xff]
  %v364 = vld [vmem:[%s1 + $0x108] sm:$0xff]
  %v365 = vld [vmem:[%s1 + $0x110] sm:$0xff]
  %v366 = vld [vmem:[%s1 + $0x118] sm:$0xff]
  %v367 = vld [vmem:[%s1 + $0x120] sm:$0xff]
  %v368 = vld [vmem:[%s1 + $0x128] sm:$0xff]
  %v369 = vld [vmem:[%s1 + $0x130] sm:$0xff]
  %v370 = vld [vmem:[%s1 + $0x138] sm:$0xff]
  %v371 = vld [vmem:[%s1 + $0x140] sm:$0xff]
  %v372 = vld [vmem:[%s1 + $0x148] sm:$0xff]
  %v373 = vld [vmem:[%s1 + $0x150] sm:$0xff]
  %v374 = vld [vmem:[%s1 + $0x158] sm:$0xff]
  %v375 = vld [vmem:[%s1 + $0x160] sm:$0xff]
  %v376 = vld [vmem:[%s1 + $0x168] sm:$0xff]
  %v377 = vld [vmem:[%s1 + $0x170] sm:$0xff]
  %v378 = vld [vmem:[%s1 + $0x178] sm:$0xff]
  %v379 = vld [vmem:[%s1 + $0x180] sm:$0xff]
  %v380 = vld [vmem:[%s1 + $0x188] sm:$0xff]
  %v381 = vld [vmem:[%s1 + $0x190] sm:$0xff]
  %v382 = vld [vmem:[%s1 + $0x198] sm:$0xff]
  %v383 = vld [vmem:[%s1 + $0x1a0] sm:$0xff]
  %v384 = vld [vmem:[%s1 + $0x1a8] sm:$0xff]
  %v385 = vld [vmem:[%s1 + $0x1b0] sm:$0xff]
  %v386 = vld [vmem:[%s1 + $0x1b8] sm:$0xff]
  %v387 = vld [vmem:[%s1 + $0x1c0] sm:$0xff]
  %v388 = vld [vmem:[%s1 + $0x1c8] sm:$0xff]
  %v389 = vld [vmem:[%s1 + $0x1d0] sm:$0xff]
  %v390 = vld [vmem:[%s1 + $0x1d8] sm:$0xff]
  %v391 = vld [vmem:[%s1 + $0x1e0] sm:$0xff]
  %v392 = vld [vmem:[%s1 + $0x1e8] sm:$0xff]
  %v393 = vld [vmem:[%s1 + $0x1f0] sm:$0xff]
  %v394 = vld [vmem:[%s1 + $0x1f8] sm:$0xff]
  %v395 = vld [vmem:[%s1 + $0x200] sm:$0xff]
  %v396 = vld [vmem:[%s1 + $0x208] sm:$0xff]
  %v397 = vld [vmem:[%s1 + $0x210] sm:$0xff]
  %v398 = vld [vmem:[%s1 + $0x218] sm:$0xff]
  %v399 = vld [vmem:[%s1 + $0x220] sm:$0xff]
  %v400 = vld [vmem:[%s1 + $0x228] sm:$0xff]
  %v401 = vld [vmem:[%s1 + $0x230] sm:$0xff]
  %v402 = vld [vmem:[%s1 + $0x238] sm:$0xff]
  %vm403 = vcmask 523264
  %v405 = vsel %vm403, %v15, 0
  %v408 = vsel %vm403, %v20, 0
  %v411 = vsel %vm403, %v25, 0
  %v414 = vsel %vm403, %v30, 0
  %v417 = vsel %vm403, %v35, 0
  %v420 = vsel %vm403, %v40, 0
  %v423 = vsel %vm403, %v45, 0
  %v426 = vsel %vm403, %v50, 0
  %v429 = vsel %vm403, %v55, 0
  %v432 = vsel %vm403, %v60, 0
  %v435 = vsel %vm403, %v65, 0
  %v438 = vsel %vm403, %v70, 0
  %v441 = vsel %vm403, %v75, 0
  %v444 = vsel %vm403, %v80, 0
  %v447 = vsel %vm403, %v85, 0
  %v450 = vsel %vm403, %v90, 0
  %v453 = vsel %vm403, %v95, 0
  %v456 = vsel %vm403, %v100, 0
  %v459 = vsel %vm403, %v105, 0
  %v462 = vsel %vm403, %v110, 0
  %v465 = vsel %vm403, %v115, 0
  %v468 = vsel %vm403, %v120, 0
  %v471 = vsel %vm403, %v125, 0
  %v474 = vsel %vm403, %v130, 0
  %v477 = vsel %vm403, %v135, 0
  %v480 = vsel %vm403, %v140, 0
  %v483 = vsel %vm403, %v145, 0
  %v486 = vsel %vm403, %v150, 0
  %v489 = vsel %vm403, %v155, 0
  %v492 = vsel %vm403, %v160, 0
  %v495 = vsel %vm403, %v165, 0
  %v498 = vsel %vm403, %v170, 0
  %v501 = vsel %vm403, %v175, 0
  %v504 = vsel %vm403, %v180, 0
  %v507 = vsel %vm403, %v185, 0
  %v510 = vsel %vm403, %v190, 0
  %v513 = vsel %vm403, %v195, 0
  %v516 = vsel %vm403, %v200, 0
  %v519 = vsel %vm403, %v205, 0
  %v522 = vsel %vm403, %v210, 0
  %v525 = vsel %vm403, %v215, 0
  %v528 = vsel %vm403, %v220, 0
  %v531 = vsel %vm403, %v225, 0
  %v534 = vsel %vm403, %v230, 0
  %v537 = vsel %vm403, %v235, 0
  %v540 = vsel %vm403, %v240, 0
  %v543 = vsel %vm403, %v245, 0
  %v546 = vsel %vm403, %v250, 0
  %v549 = vsel %vm403, %v255, 0
  %v552 = vsel %vm403, %v260, 0
  %v555 = vsel %vm403, %v265, 0
  %v558 = vsel %vm403, %v270, 0
  %v561 = vsel %vm403, %v275, 0
  %v564 = vsel %vm403, %v280, 0
  %v567 = vsel %vm403, %v285, 0
  %v570 = vsel %vm403, %v290, 0
  %v573 = vsel %vm403, %v295, 0
  %v576 = vsel %vm403, %v300, 0
  %v579 = vsel %vm403, %v305, 0
  %v582 = vsel %vm403, %v310, 0
  %v585 = vsel %vm403, %v315, 0
  %v588 = vsel %vm403, %v320, 0
  %v591 = vsel %vm403, %v325, 0
  %v594 = vsel %vm403, %v330, 0
  %596 = vmatprep.subr.mxu0 0.0
  %597 = vmatpush1.msra.mxu0 %v331
  %598 = vmatprep.subr.mxu0 0.0
  %599 = vmatpush1.msra.mxu0 %v332
  %600 = vmatprep.subr.mxu0 0.0
  %601 = vmatpush1.msra.mxu0 %v333
  %602 = vmatprep.subr.mxu0 0.0
  %603 = vmatpush1.msra.mxu0 %v334
  %604 = vmatprep.subr.mxu0 0.0
  %605 = vmatpush1.msra.mxu0 %v335
  %606 = vmatprep.subr.mxu0 0.0
  %607 = vmatpush1.msra.mxu0 %v336
  %608 = vmatprep.subr.mxu0 0.0
  %609 = vmatpush1.msra.mxu0 %v337
  %610 = vmatprep.subr.mxu0 0.0
  %611 = vmatpush1.msra.mxu0 %v338
  %612 = vmatprep.subr.mxu0 0.0
  %613 = vmatpush1.msra.mxu0 %v339
  %614 = vmatprep.subr.mxu0 0.0
  %615 = vmatpush1.msra.mxu0 %v340
  %616 = vmatprep.subr.mxu0 0.0
  %617 = vmatpush1.msra.mxu0 %v341
  %618 = vmatprep.subr.mxu0 0.0
  %619 = vmatpush1.msra.mxu0 %v342
  %620 = vmatprep.subr.mxu0 0.0
  %621 = vmatpush1.msra.mxu0 %v343
  %622 = vmatprep.subr.mxu0 0.0
  %623 = vmatpush1.msra.mxu0 %v344
  %624 = vmatprep.subr.mxu0 0.0
  %625 = vmatpush1.msra.mxu0 %v345
  %626 = vmatprep.subr.mxu0 0.0
  %627 = vmatpush1.msra.mxu0 %v346
  %628 = vmatprep.subr.mxu0 0.0
  %629 = vmatpush1.msra.mxu0 %v347
  %630 = vmatprep.subr.mxu0 0.0
  %631 = vmatpush1.msra.mxu0 %v348
  %632 = vmatprep.subr.mxu0 0.0
  %633 = vmatpush1.msra.mxu0 %v349
  %634 = vmatprep.subr.mxu0 0.0
  %635 = vmatpush1.msra.mxu0 %v350
  %636 = vmatprep.subr.mxu0 0.0
  %637 = vmatpush1.msra.mxu0 %v351
  %638 = vmatprep.subr.mxu0 0.0
  %639 = vmatpush1.msra.mxu0 %v352
  %640 = vmatprep.subr.mxu0 0.0
  %641 = vmatpush1.msra.mxu0 %v353
  %642 = vmatprep.subr.mxu0 0.0
  %643 = vmatpush1.msra.mxu0 %v354
  %644 = vmatprep.subr.mxu0 0.0
  %645 = vmatpush1.msra.mxu0 %v355
  %646 = vmatprep.subr.mxu0 0.0
  %647 = vmatpush1.msra.mxu0 %v356
  %648 = vmatprep.subr.mxu0 0.0
  %649 = vmatpush1.msra.mxu0 %v357
  %650 = vmatprep.subr.mxu0 0.0
  %651 = vmatpush1.msra.mxu0 %v358
  %652 = vmatprep.subr.mxu0 0.0
  %653 = vmatpush1.msra.mxu0 %v359
  %654 = vmatprep.subr.mxu0 0.0
  %655 = vmatpush1.msra.mxu0 %v360
  %656 = vmatprep.subr.mxu0 0.0
  %657 = vmatpush1.msra.mxu0 %v361
  %658 = vmatprep.subr.mxu0 0.0
  %659 = vmatpush1.msra.mxu0 %v362
  %660 = vmatprep.mubr.f32.mxu0 %v12
  %661 = vmatmul.mubr.f32.gmra.mrb[0].mxu0 %v11
  %v662 = vpop.f32.mrb[0].mxu0
  %v663 = vadd.f32 0.0, %v662
  %v664 = vpop.f32.mrb[0].mxu0
  %665 = vmatprep.mubr.f32.mxu0 %v17
  %666 = vmatmul.mubr.f32.gmra.mrb[0].mxu0 %v16
  %v667 = vpop.f32.mrb[0].mxu0
  %v668 = vadd.f32 0.0, %v667
  %v669 = vpop.f32.mrb[0].mxu0
  %670 = vmatprep.mubr.f32.mxu0 %v22
  %671 = vmatmul.mubr.f32.gmra.mrb[0].mxu0 %v21
  %v672 = vpop.f32.mrb[0].mxu0
  %v673 = vadd.f32 0.0, %v672
  %v674 = vpop.f32.mrb[0].mxu0
  %675 = vmatprep.mubr.f32.mxu0 %v27
  %676 = vmatmul.mubr.f32.gmra.mrb[0].mxu0 %v26
  %v677 = vpop.f32.mrb[0].mxu0
  %v678 = vadd.f32 0.0, %v677
  %v679 = vpop.f32.mrb[0].mxu0
  %680 = vmatprep.mubr.f32.mxu0 %v32
  %681 = vmatmul.mubr.f32.gmra.mrb[0].mxu0 %v31
  %v682 = vpop.f32.mrb[0].mxu0
  %v683 = vadd.f32 0.0, %v682
  %v684 = vpop.f32.mrb[0].mxu0
  %685 = vmatprep.mubr.f32.mxu0 %v37
  %686 = vmatmul.mubr.f32.gmra.mrb[0].mxu0 %v36
  %v687 = vpop.f32.mrb[0].mxu0
  %v688 = vadd.f32 0.0, %v687
  %v689 = vpop.f32.mrb[0].mxu0
  %690 = vmatprep.mubr.f32.mxu0 %v42
  %691 = vmatmul.mubr.f32.gmra.mrb[0].mxu0 %v41
  %v692 = vpop.f32.mrb[0].mxu0
  %v693 = vadd.f32 0.0, %v692
  %v694 = vpop.f32.mrb[0].mxu0
  %695 = vmatprep.mubr.f32.mxu0 %v47
  %696 = vmatmul.mubr.f32.gmra.mrb[0].mxu0 %v46
  %v697 = vpop.f32.mrb[0].mxu0
  %v698 = vadd.f32 0.0, %v697
  %v699 = vpop.f32.mrb[0].mxu0
  %700 = vmatprep.mubr.f32.mxu0 %v52
  %701 = vmatmul.mubr.f32.gmra.mrb[0].mxu0 %v51
  %v702 = vpop.f32.mrb[0].mxu0
  %v703 = vadd.f32 0.0, %v702
  %v704 = vpop.f32.mrb[0].mxu0
  %705 = vmatprep.mubr.f32.mxu0 %v57
  %706 = vmatmul.mubr.f32.gmra.mrb[0].mxu0 %v56
  %v707 = vpop.f32.mrb[0].mxu0
  %v708 = vadd.f32 0.0, %v707
  %v709 = vpop.f32.mrb[0].mxu0
  %710 = vmatprep.mubr.f32.mxu0 %v62
  %711 = vmatmul.mubr.f32.gmra.mrb[0].mxu0 %v61
  %v712 = vpop.f32.mrb[0].mxu0
  %v713 = vadd.f32 0.0, %v712
  %v714 = vpop.f32.mrb[0].mxu0
  %715 = vmatprep.mubr.f32.mxu0 %v67
  %716 = vmatmul.mubr.f32.gmra.mrb[0].mxu0 %v66
  %v717 = vpop.f32.mrb[0].mxu0
  %v718 = vadd.f32 0.0, %v717
  %v719 = vpop.f32.mrb[0].mxu0
  %720 = vmatprep.mubr.f32.mxu0 %v72
  %721 = vmatmul.mubr.f32.gmra.mrb[0].mxu0 %v71
  %v722 = vpop.f32.mrb[0].mxu0
  %v723 = vadd.f32 0.0, %v722
  %v724 = vpop.f32.mrb[0].mxu0
  %725 = vmatprep.mubr.f32.mxu0 %v77
  %726 = vmatmul.mubr.f32.gmra.mrb[0].mxu0 %v76
  %v727 = vpop.f32.mrb[0].mxu0
  %v728 = vadd.f32 0.0, %v727
  %v729 = vpop.f32.mrb[0].mxu0
  %730 = vmatprep.mubr.f32.mxu0 %v82
  %731 = vmatmul.mubr.f32.gmra.mrb[0].mxu0 %v81
  %v732 = vpop.f32.mrb[0].mxu0
  %v733 = vadd.f32 0.0, %v732
  %v734 = vpop.f32.mrb[0].mxu0
  %735 = vmatprep.mubr.f32.mxu0 %v87
  %736 = vmatmul.mubr.f32.gmra.mrb[0].mxu0 %v86
  %v737 = vpop.f32.mrb[0].mxu0
  %v738 = vadd.f32 0.0, %v737
  %v739 = vpop.f32.mrb[0].mxu0
  %740 = vmatprep.mubr.f32.mxu0 %v92
  %741 = vmatmul.mubr.f32.gmra.mrb[0].mxu0 %v91
  %v742 = vpop.f32.mrb[0].mxu0
  %v743 = vadd.f32 0.0, %v742
  %v744 = vpop.f32.mrb[0].mxu0
  %745 = vmatprep.mubr.f32.mxu0 %v97
  %746 = vmatmul.mubr.f32.gmra.mrb[0].mxu0 %v96
  %v747 = vpop.f32.mrb[0].mxu0
  %v748 = vadd.f32 0.0, %v747
  %v749 = vpop.f32.mrb[0].mxu0
  %750 = vmatprep.mubr.f32.mxu0 %v102
  %751 = vmatmul.mubr.f32.gmra.mrb[0].mxu0 %v101
  %v752 = vpop.f32.mrb[0].mxu0
  %v753 = vadd.f32 0.0, %v752
  %v754 = vpop.f32.mrb[0].mxu0
  %755 = vmatprep.mubr.f32.mxu0 %v107
  %756 = vmatmul.mubr.f32.gmra.mrb[0].mxu0 %v106
  %v757 = vpop.f32.mrb[0].mxu0
  %v758 = vadd.f32 0.0, %v757
  %v759 = vpop.f32.mrb[0].mxu0
  %760 = vmatprep.mubr.f32.mxu0 %v112
  %761 = vmatmul.mubr.f32.gmra.mrb[0].mxu0 %v111
  %v762 = vpop.f32.mrb[0].mxu0
  %v763 = vadd.f32 0.0, %v762
  %v764 = vpop.f32.mrb[0].mxu0
  %765 = vmatprep.mubr.f32.mxu0 %v117
  %766 = vmatmul.mubr.f32.gmra.mrb[0].mxu0 %v116
  %v767 = vpop.f32.mrb[0].mxu0
  %v768 = vadd.f32 0.0, %v767
  %v769 = vpop.f32.mrb[0].mxu0
  %770 = vmatprep.mubr.f32.mxu0 %v122
  %771 = vmatmul.mubr.f32.gmra.mrb[0].mxu0 %v121
  %v772 = vpop.f32.mrb[0].mxu0
  %v773 = vadd.f32 0.0, %v772
  %v774 = vpop.f32.mrb[0].mxu0
  %775 = vmatprep.mubr.f32.mxu0 %v127
  %776 = vmatmul.mubr.f32.gmra.mrb[0].mxu0 %v126
  %v777 = vpop.f32.mrb[0].mxu0
  %v778 = vadd.f32 0.0, %v777
  %v779 = vpop.f32.mrb[0].mxu0
  %780 = vmatprep.mubr.f32.mxu0 %v132
  %781 = vmatmul.mubr.f32.gmra.mrb[0].mxu0 %v131
  %v782 = vpop.f32.mrb[0].mxu0
  %v783 = vadd.f32 0.0, %v782
  %v784 = vpop.f32.mrb[0].mxu0
  %785 = vmatprep.mubr.f32.mxu0 %v137
  %786 = vmatmul.mubr.f32.gmra.mrb[0].mxu0 %v136
  %v787 = vpop.f32.mrb[0].mxu0
  %v788 = vadd.f32 0.0, %v787
  %v789 = vpop.f32.mrb[0].mxu0
  %790 = vmatprep.mubr.f32.mxu0 %v142
  %791 = vmatmul.mubr.f32.gmra.mrb[0].mxu0 %v141
  %v792 = vpop.f32.mrb[0].mxu0
  %v793 = vadd.f32 0.0, %v792
  %v794 = vpop.f32.mrb[0].mxu0
  %795 = vmatprep.mubr.f32.mxu0 %v147
  %796 = vmatmul.mubr.f32.gmra.mrb[0].mxu0 %v146
  %v797 = vpop.f32.mrb[0].mxu0
  %v798 = vadd.f32 0.0, %v797
  %v799 = vpop.f32.mrb[0].mxu0
  %800 = vmatprep.mubr.f32.mxu0 %v152
  %801 = vmatmul.mubr.f32.gmra.mrb[0].mxu0 %v151
  %v802 = vpop.f32.mrb[0].mxu0
  %v803 = vadd.f32 0.0, %v802
  %v804 = vpop.f32.mrb[0].mxu0
  %805 = vmatprep.mubr.f32.mxu0 %v157
  %806 = vmatmul.mubr.f32.gmra.mrb[0].mxu0 %v156
  %v807 = vpop.f32.mrb[0].mxu0
  %v808 = vadd.f32 0.0, %v807
  %v809 = vpop.f32.mrb[0].mxu0
  %810 = vmatprep.mubr.f32.mxu0 %v162
  %811 = vmatmul.mubr.f32.gmra.mrb[0].mxu0 %v161
  %v812 = vpop.f32.mrb[0].mxu0
  %v813 = vadd.f32 0.0, %v812
  %v814 = vpop.f32.mrb[0].mxu0
  %815 = vmatprep.mubr.f32.mxu0 %v167
  %816 = vmatmul.mubr.f32.gmra.mrb[0].mxu0 %v166
  %v817 = vpop.f32.mrb[0].mxu0
  %v818 = vadd.f32 0.0, %v817
  %v819 = vpop.f32.mrb[0].mxu0
  %820 = vmatprep.mubr.f32.mxu0 %v172
  %821 = vmatmul.mubr.f32.gmra.mrb[0].mxu0 %v171
  %v822 = vpop.f32.mrb[0].mxu0
  %v823 = vadd.f32 0.0, %v822
  %v824 = vpop.f32.mrb[0].mxu0
  %825 = vmatprep.mubr.f32.mxu0 %v177
  %826 = vmatmul.mubr.f32.gmra.mrb[0].mxu0 %v176
  %v827 = vpop.f32.mrb[0].mxu0
  %v828 = vadd.f32 0.0, %v827
  %v829 = vpop.f32.mrb[0].mxu0
  %830 = vmatprep.mubr.f32.mxu0 %v182
  %831 = vmatmul.mubr.f32.gmra.mrb[0].mxu0 %v181
  %v832 = vpop.f32.mrb[0].mxu0
  %v833 = vadd.f32 0.0, %v832
  %v834 = vpop.f32.mrb[0].mxu0
  %835 = vmatprep.mubr.f32.mxu0 %v187
  %836 = vmatmul.mubr.f32.gmra.mrb[0].mxu0 %v186
  %v837 = vpop.f32.mrb[0].mxu0
  %v838 = vadd.f32 0.0, %v837
  %v839 = vpop.f32.mrb[0].mxu0
  %840 = vmatprep.mubr.f32.mxu0 %v192
  %841 = vmatmul.mubr.f32.gmra.mrb[0].mxu0 %v191
  %v842 = vpop.f32.mrb[0].mxu0
  %v843 = vadd.f32 0.0, %v842
  %v844 = vpop.f32.mrb[0].mxu0
  %845 = vmatprep.mubr.f32.mxu0 %v197
  %846 = vmatmul.mubr.f32.gmra.mrb[0].mxu0 %v196
  %v847 = vpop.f32.mrb[0].mxu0
  %v848 = vadd.f32 0.0, %v847
  %v849 = vpop.f32.mrb[0].mxu0
  %850 = vmatprep.mubr.f32.mxu0 %v202
  %851 = vmatmul.mubr.f32.gmra.mrb[0].mxu0 %v201
  %v852 = vpop.f32.mrb[0].mxu0
  %v853 = vadd.f32 0.0, %v852
  %v854 = vpop.f32.mrb[0].mxu0
  %855 = vmatprep.mubr.f32.mxu0 %v207
  %856 = vmatmul.mubr.f32.gmra.mrb[0].mxu0 %v206
  %v857 = vpop.f32.mrb[0].mxu0
  %v858 = vadd.f32 0.0, %v857
  %v859 = vpop.f32.mrb[0].mxu0
  %860 = vmatprep.mubr.f32.mxu0 %v212
  %861 = vmatmul.mubr.f32.gmra.mrb[0].mxu0 %v211
  %v862 = vpop.f32.mrb[0].mxu0
  %v863 = vadd.f32 0.0, %v862
  %v864 = vpop.f32.mrb[0].mxu0
  %865 = vmatprep.mubr.f32.mxu0 %v217
  %866 = vmatmul.mubr.f32.gmra.mrb[0].mxu0 %v216
  %v867 = vpop.f32.mrb[0].mxu0
  %v868 = vadd.f32 0.0, %v867
  %v869 = vpop.f32.mrb[0].mxu0
  %870 = vmatprep.mubr.f32.mxu0 %v222
  %871 = vmatmul.mubr.f32.gmra.mrb[0].mxu0 %v221
  %v872 = vpop.f32.mrb[0].mxu0
  %v873 = vadd.f32 0.0, %v872
  %v874 = vpop.f32.mrb[0].mxu0
  %875 = vmatprep.mubr.f32.mxu0 %v227
  %876 = vmatmul.mubr.f32.gmra.mrb[0].mxu0 %v226
  %v877 = vpop.f32.mrb[0].mxu0
  %v878 = vadd.f32 0.0, %v877
  %v879 = vpop.f32.mrb[0].mxu0
  %880 = vmatprep.mubr.f32.mxu0 %v232
  %881 = vmatmul.mubr.f32.gmra.mrb[0].mxu0 %v231
  %v882 = vpop.f32.mrb[0].mxu0
  %v883 = vadd.f32 0.0, %v882
  %v884 = vpop.f32.mrb[0].mxu0
  %885 = vmatprep.mubr.f32.mxu0 %v237
  %886 = vmatmul.mubr.f32.gmra.mrb[0].mxu0 %v236
  %v887 = vpop.f32.mrb[0].mxu0
  %v888 = vadd.f32 0.0, %v887
  %v889 = vpop.f32.mrb[0].mxu0
  %890 = vmatprep.mubr.f32.mxu0 %v242
  %891 = vmatmul.mubr.f32.gmra.mrb[0].mxu0 %v241
  %v892 = vpop.f32.mrb[0].mxu0
  %v893 = vadd.f32 0.0, %v892
  %v894 = vpop.f32.mrb[0].mxu0
  %895 = vmatprep.mubr.f32.mxu0 %v247
  %896 = vmatmul.mubr.f32.gmra.mrb[0].mxu0 %v246
  %v897 = vpop.f32.mrb[0].mxu0
  %v898 = vadd.f32 0.0, %v897
  %v899 = vpop.f32.mrb[0].mxu0
  %900 = vmatprep.mubr.f32.mxu0 %v252
  %901 = vmatmul.mubr.f32.gmra.mrb[0].mxu0 %v251
  %v902 = vpop.f32.mrb[0].mxu0
  %v903 = vadd.f32 0.0, %v902
  %v904 = vpop.f32.mrb[0].mxu0
  %905 = vmatprep.mubr.f32.mxu0 %v257
  %906 = vmatmul.mubr.f32.gmra.mrb[0].mxu0 %v256
  %v907 = vpop.f32.mrb[0].mxu0
  %v908 = vadd.f32 0.0, %v907
  %v909 = vpop.f32.mrb[0].mxu0
  %910 = vmatprep.mubr.f32.mxu0 %v262
  %911 = vmatmul.mubr.f32.gmra.mrb[0].mxu0 %v261
  %v912 = vpop.f32.mrb[0].mxu0
  %v913 = vadd.f32 0.0, %v912
  %v914 = vpop.f32.mrb[0].mxu0
  %915 = vmatprep.mubr.f32.mxu0 %v267
  %916 = vmatmul.mubr.f32.gmra.mrb[0].mxu0 %v266
  %v917 = vpop.f32.mrb[0].mxu0
  %v918 = vadd.f32 0.0, %v917
  %v919 = vpop.f32.mrb[0].mxu0
  %920 = vmatprep.mubr.f32.mxu0 %v272
  %921 = vmatmul.mubr.f32.gmra.mrb[0].mxu0 %v271
  %v922 = vpop.f32.mrb[0].mxu0
  %v923 = vadd.f32 0.0, %v922
  %v924 = vpop.f32.mrb[0].mxu0
  %925 = vmatprep.mubr.f32.mxu0 %v277
  %926 = vmatmul.mubr.f32.gmra.mrb[0].mxu0 %v276
  %v927 = vpop.f32.mrb[0].mxu0
  %v928 = vadd.f32 0.0, %v927
  %v929 = vpop.f32.mrb[0].mxu0
  %930 = vmatprep.mubr.f32.mxu0 %v282
  %931 = vmatmul.mubr.f32.gmra.mrb[0].mxu0 %v281
  %v932 = vpop.f32.mrb[0].mxu0
  %v933 = vadd.f32 0.0, %v932
  %v934 = vpop.f32.mrb[0].mxu0
  %935 = vmatprep.mubr.f32.mxu0 %v287
  %936 = vmatmul.mubr.f32.gmra.mrb[0].mxu0 %v286
  %v937 = vpop.f32.mrb[0].mxu0
  %v938 = vadd.f32 0.0, %v937
  %v939 = vpop.f32.mrb[0].mxu0
  %940 = vmatprep.mubr.f32.mxu0 %v292
  %941 = vmatmul.mubr.f32.gmra.mrb[0].mxu0 %v291
  %v942 = vpop.f32.mrb[0].mxu0
  %v943 = vadd.f32 0.0, %v942
  %v944 = vpop.f32.mrb[0].mxu0
  %945 = vmatprep.mubr.f32.mxu0 %v297
  %946 = vmatmul.mubr.f32.gmra.mrb[0].mxu0 %v296
  %v947 = vpop.f32.mrb[0].mxu0
  %v948 = vadd.f32 0.0, %v947
  %v949 = vpop.f32.mrb[0].mxu0
  %950 = vmatprep.mubr.f32.mxu0 %v302
  %951 = vmatmul.mubr.f32.gmra.mrb[0].mxu0 %v301
  %v952 = vpop.f32.mrb[0].mxu0
  %v953 = vadd.f32 0.0, %v952
  %v954 = vpop.f32.mrb[0].mxu0
  %955 = vmatprep.mubr.f32.mxu0 %v307
  %956 = vmatmul.mubr.f32.gmra.mrb[0].mxu0 %v306
  %v957 = vpop.f32.mrb[0].mxu0
  %v958 = vadd.f32 0.0, %v957
  %v959 = vpop.f32.mrb[0].mxu0
  %960 = vmatprep.mubr.f32.mxu0 %v312
  %961 = vmatmul.mubr.f32.gmra.mrb[0].mxu0 %v311
  %v962 = vpop.f32.mrb[0].mxu0
  %v963 = vadd.f32 0.0, %v962
  %v964 = vpop.f32.mrb[0].mxu0
  %965 = vmatprep.mubr.f32.mxu0 %v317
  %966 = vmatmul.mubr.f32.gmra.mrb[0].mxu0 %v316
  %v967 = vpop.f32.mrb[0].mxu0
  %v968 = vadd.f32 0.0, %v967
  %v969 = vpop.f32.mrb[0].mxu0
  %970 = vmatprep.mubr.f32.mxu0 %v322
  %971 = vmatmul.mubr.f32.gmra.mrb[0].mxu0 %v321
  %v972 = vpop.f32.mrb[0].mxu0
  %v973 = vadd.f32 0.0, %v972
  %v974 = vpop.f32.mrb[0].mxu0
  %975 = vmatprep.mubr.f32.mxu0 %v327
  %976 = vmatmul.mubr.f32.gmra.mrb[0].mxu0 %v326
  %v977 = vpop.f32.mrb[0].mxu0
  %v978 = vadd.f32 0.0, %v977
  %v979 = vpop.f32.mrb[0].mxu0
  %980 = vdwg.mxu0
  %981 = vmatprep.subr.mxu0 0.0
  %982 = vmatpush1.msra.mxu0 %v363
  %983 = vmatprep.subr.mxu0 0.0
  %984 = vmatpush1.msra.mxu0 %v364
  %985 = vmatprep.subr.mxu0 0.0
  %986 = vmatpush1.msra.mxu0 %v365
  %987 = vmatprep.subr.mxu0 0.0
  %988 = vmatpush1.msra.mxu0 %v366
  %989 = vmatprep.subr.mxu0 0.0
  %990 = vmatpush1.msra.mxu0 %v367
  %991 = vmatprep.subr.mxu0 0.0
  %992 = vmatpush1.msra.mxu0 %v368
  %993 = vmatprep.subr.mxu0 0.0
  %994 = vmatpush1.msra.mxu0 %v369
  %995 = vmatprep.subr.mxu0 0.0
  %996 = vmatpush1.msra.mxu0 %v370
  %997 = vmatprep.subr.mxu0 0.0
  %998 = vmatpush1.msra.mxu0 %v371
  %999 = vmatprep.subr.mxu0 0.0
  %1000 = vmatpush1.msra.mxu0 %v372
  %1001 = vmatprep.subr.mxu0 0.0
  %1002 = vmatpush1.msra.mxu0 %v373
  %1003 = vmatprep.subr.mxu0 0.0
  %1004 = vmatpush1.msra.mxu0 %v374
  %1005 = vmatprep.subr.mxu0 0.0
  %1006 = vmatpush1.msra.mxu0 %v375
  %1007 = vmatprep.subr.mxu0 0.0
  %1008 = vmatpush1.msra.mxu0 %v376
  %1009 = vmatprep.subr.mxu0 0.0
  %1010 = vmatpush1.msra.mxu0 %v377
  %1011 = vmatprep.subr.mxu0 0.0
  %1012 = vmatpush1.msra.mxu0 %v378
  %1013 = vmatprep.subr.mxu0 0.0
  %1014 = vmatpush1.msra.mxu0 %v379
  %1015 = vmatprep.subr.mxu0 0.0
  %1016 = vmatpush1.msra.mxu0 %v380
  %1017 = vmatprep.subr.mxu0 0.0
  %1018 = vmatpush1.msra.mxu0 %v381
  %1019 = vmatprep.subr.mxu0 0.0
  %1020 = vmatpush1.msra.mxu0 %v382
  %1021 = vmatprep.subr.mxu0 0.0
  %1022 = vmatpush1.msra.mxu0 %v383
  %1023 = vmatprep.subr.mxu0 0.0
  %1024 = vmatpush1.msra.mxu0 %v384
  %1025 = vmatprep.subr.mxu0 0.0
  %1026 = vmatpush1.msra.mxu0 %v385
  %1027 = vmatprep.subr.mxu0 0.0
  %1028 = vmatpush1.msra.mxu0 %v386
  %1029 = vmatprep.subr.mxu0 0.0
  %1030 = vmatpush1.msra.mxu0 %v387
  %1031 = vmatprep.subr.mxu0 0.0
  %1032 = vmatpush1.msra.mxu0 %v388
  %1033 = vmatprep.subr.mxu0 0.0
  %1034 = vmatpush1.msra.mxu0 %v389
  %1035 = vmatprep.subr.mxu0 0.0
  %1036 = vmatpush1.msra.mxu0 %v390
  %1037 = vmatprep.subr.mxu0 0.0
  %1038 = vmatpush1.msra.mxu0 %v391
  %1039 = vmatprep.subr.mxu0 0.0
  %1040 = vmatpush1.msra.mxu0 %v392
  %1041 = vmatprep.subr.mxu0 0.0
  %1042 = vmatpush1.msra.mxu0 %v393
  %1043 = vmatprep.subr.mxu0 0.0
  %1044 = vmatpush1.msra.mxu0 %v394
  %1045 = vmatprep.mubr.f32.mxu0 %v14
  %1046 = vmatmul.mubr.f32.gmra.mrb[0].mxu0 %v13
  %v1047 = vpop.f32.mrb[0].mxu0
  %v1048 = vadd.f32 %v663, %v1047
  %v1049 = vpop.f32.mrb[0].mxu0
  %1050 = vmatprep.mubr.f32.mxu0 %v19
  %1051 = vmatmul.mubr.f32.gmra.mrb[0].mxu0 %v18
  %v1052 = vpop.f32.mrb[0].mxu0
  %v1053 = vadd.f32 %v668, %v1052
  %v1054 = vpop.f32.mrb[0].mxu0
  %1055 = vmatprep.mubr.f32.mxu0 %v24
  %1056 = vmatmul.mubr.f32.gmra.mrb[0].mxu0 %v23
  %v1057 = vpop.f32.mrb[0].mxu0
  %v1058 = vadd.f32 %v673, %v1057
  %v1059 = vpop.f32.mrb[0].mxu0
  %1060 = vmatprep.mubr.f32.mxu0 %v29
  %1061 = vmatmul.mubr.f32.gmra.mrb[0].mxu0 %v28
  %v1062 = vpop.f32.mrb[0].mxu0
  %v1063 = vadd.f32 %v678, %v1062
  %v1064 = vpop.f32.mrb[0].mxu0
  %1065 = vmatprep.mubr.f32.mxu0 %v34
  %1066 = vmatmul.mubr.f32.gmra.mrb[0].mxu0 %v33
  %v1067 = vpop.f32.mrb[0].mxu0
  %v1068 = vadd.f32 %v683, %v1067
  %v1069 = vpop.f32.mrb[0].mxu0
  %1070 = vmatprep.mubr.f32.mxu0 %v39
  %1071 = vmatmul.mubr.f32.gmra.mrb[0].mxu0 %v38
  %v1072 = vpop.f32.mrb[0].mxu0
  %v1073 = vadd.f32 %v688, %v1072
  %v1074 = vpop.f32.mrb[0].mxu0
  %1075 = vmatprep.mubr.f32.mxu0 %v44
  %1076 = vmatmul.mubr.f32.gmra.mrb[0].mxu0 %v43
  %v1077 = vpop.f32.mrb[0].mxu0
  %v1078 = vadd.f32 %v693, %v1077
  %v1079 = vpop.f32.mrb[0].mxu0
  %1080 = vmatprep.mubr.f32.mxu0 %v49
  %1081 = vmatmul.mubr.f32.gmra.mrb[0].mxu0 %v48
  %v1082 = vpop.f32.mrb[0].mxu0
  %v1083 = vadd.f32 %v698, %v1082
  %v1084 = vpop.f32.mrb[0].mxu0
  %1085 = vmatprep.mubr.f32.mxu0 %v54
  %1086 = vmatmul.mubr.f32.gmra.mrb[0].mxu0 %v53
  %v1087 = vpop.f32.mrb[0].mxu0
  %v1088 = vadd.f32 %v703, %v1087
  %v1089 = vpop.f32.mrb[0].mxu0
  %1090 = vmatprep.mubr.f32.mxu0 %v59
  %1091 = vmatmul.mubr.f32.gmra.mrb[0].mxu0 %v58
  %v1092 = vpop.f32.mrb[0].mxu0
  %v1093 = vadd.f32 %v708, %v1092
  %v1094 = vpop.f32.mrb[0].mxu0
  %1095 = vmatprep.mubr.f32.mxu0 %v64
  %1096 = vmatmul.mubr.f32.gmra.mrb[0].mxu0 %v63
  %v1097 = vpop.f32.mrb[0].mxu0
  %v1098 = vadd.f32 %v713, %v1097
  %v1099 = vpop.f32.mrb[0].mxu0
  %1100 = vmatprep.mubr.f32.mxu0 %v69
  %1101 = vmatmul.mubr.f32.gmra.mrb[0].mxu0 %v68
  %v1102 = vpop.f32.mrb[0].mxu0
  %v1103 = vadd.f32 %v718, %v1102
  %v1104 = vpop.f32.mrb[0].mxu0
  %1105 = vmatprep.mubr.f32.mxu0 %v74
  %1106 = vmatmul.mubr.f32.gmra.mrb[0].mxu0 %v73
  %v1107 = vpop.f32.mrb[0].mxu0
  %v1108 = vadd.f32 %v723, %v1107
  %v1109 = vpop.f32.mrb[0].mxu0
  %1110 = vmatprep.mubr.f32.mxu0 %v79
  %1111 = vmatmul.mubr.f32.gmra.mrb[0].mxu0 %v78
  %v1112 = vpop.f32.mrb[0].mxu0
  %v1113 = vadd.f32 %v728, %v1112
  %v1114 = vpop.f32.mrb[0].mxu0
  %1115 = vmatprep.mubr.f32.mxu0 %v84
  %1116 = vmatmul.mubr.f32.gmra.mrb[0].mxu0 %v83
  %v1117 = vpop.f32.mrb[0].mxu0
  %v1118 = vadd.f32 %v733, %v1117
  %v1119 = vpop.f32.mrb[0].mxu0
  %1120 = vmatprep.mubr.f32.mxu0 %v89
  %1121 = vmatmul.mubr.f32.gmra.mrb[0].mxu0 %v88
  %v1122 = vpop.f32.mrb[0].mxu0
  %v1123 = vadd.f32 %v738, %v1122
  %v1124 = vpop.f32.mrb[0].mxu0
  %1125 = vmatprep.mubr.f32.mxu0 %v94
  %1126 = vmatmul.mubr.f32.gmra.mrb[0].mxu0 %v93
  %v1127 = vpop.f32.mrb[0].mxu0
  %v1128 = vadd.f32 %v743, %v1127
  %v1129 = vpop.f32.mrb[0].mxu0
  %1130 = vmatprep.mubr.f32.mxu0 %v99
  %1131 = vmatmul.mubr.f32.gmra.mrb[0].mxu0 %v98
  %v1132 = vpop.f32.mrb[0].mxu0
  %v1133 = vadd.f32 %v748, %v1132
  %v1134 = vpop.f32.mrb[0].mxu0
  %1135 = vmatprep.mubr.f32.mxu0 %v104
  %1136 = vmatmul.mubr.f32.gmra.mrb[0].mxu0 %v103
  %v1137 = vpop.f32.mrb[0].mxu0
  %v1138 = vadd.f32 %v753, %v1137
  %v1139 = vpop.f32.mrb[0].mxu0
  %1140 = vmatprep.mubr.f32.mxu0 %v109
  %1141 = vmatmul.mubr.f32.gmra.mrb[0].mxu0 %v108
  %v1142 = vpop.f32.mrb[0].mxu0
  %v1143 = vadd.f32 %v758, %v1142
  %v1144 = vpop.f32.mrb[0].mxu0
  %1145 = vmatprep.mubr.f32.mxu0 %v114
  %1146 = vmatmul.mubr.f32.gmra.mrb[0].mxu0 %v113
  %v1147 = vpop.f32.mrb[0].mxu0
  %v1148 = vadd.f32 %v763, %v1147
  %v1149 = vpop.f32.mrb[0].mxu0
  %1150 = vmatprep.mubr.f32.mxu0 %v119
  %1151 = vmatmul.mubr.f32.gmra.mrb[0].mxu0 %v118
  %v1152 = vpop.f32.mrb[0].mxu0
  %v1153 = vadd.f32 %v768, %v1152
  %v1154 = vpop.f32.mrb[0].mxu0
  %1155 = vmatprep.mubr.f32.mxu0 %v124
  %1156 = vmatmul.mubr.f32.gmra.mrb[0].mxu0 %v123
  %v1157 = vpop.f32.mrb[0].mxu0
  %v1158 = vadd.f32 %v773, %v1157
  %v1159 = vpop.f32.mrb[0].mxu0
  %1160 = vmatprep.mubr.f32.mxu0 %v129
  %1161 = vmatmul.mubr.f32.gmra.mrb[0].mxu0 %v128
  %v1162 = vpop.f32.mrb[0].mxu0
  %v1163 = vadd.f32 %v778, %v1162
  %v1164 = vpop.f32.mrb[0].mxu0
  %1165 = vmatprep.mubr.f32.mxu0 %v134
  %1166 = vmatmul.mubr.f32.gmra.mrb[0].mxu0 %v133
  %v1167 = vpop.f32.mrb[0].mxu0
  %v1168 = vadd.f32 %v783, %v1167
  %v1169 = vpop.f32.mrb[0].mxu0
  %1170 = vmatprep.mubr.f32.mxu0 %v139
  %1171 = vmatmul.mubr.f32.gmra.mrb[0].mxu0 %v138
  %v1172 = vpop.f32.mrb[0].mxu0
  %v1173 = vadd.f32 %v788, %v1172
  %v1174 = vpop.f32.mrb[0].mxu0
  %1175 = vmatprep.mubr.f32.mxu0 %v144
  %1176 = vmatmul.mubr.f32.gmra.mrb[0].mxu0 %v143
  %v1177 = vpop.f32.mrb[0].mxu0
  %v1178 = vadd.f32 %v793, %v1177
  %v1179 = vpop.f32.mrb[0].mxu0
  %1180 = vmatprep.mubr.f32.mxu0 %v149
  %1181 = vmatmul.mubr.f32.gmra.mrb[0].mxu0 %v148
  %v1182 = vpop.f32.mrb[0].mxu0
  %v1183 = vadd.f32 %v798, %v1182
  %v1184 = vpop.f32.mrb[0].mxu0
  %1185 = vmatprep.mubr.f32.mxu0 %v154
  %1186 = vmatmul.mubr.f32.gmra.mrb[0].mxu0 %v153
  %v1187 = vpop.f32.mrb[0].mxu0
  %v1188 = vadd.f32 %v803, %v1187
  %v1189 = vpop.f32.mrb[0].mxu0
  %1190 = vmatprep.mubr.f32.mxu0 %v159
  %1191 = vmatmul.mubr.f32.gmra.mrb[0].mxu0 %v158
  %v1192 = vpop.f32.mrb[0].mxu0
  %v1193 = vadd.f32 %v808, %v1192
  %v1194 = vpop.f32.mrb[0].mxu0
  %1195 = vmatprep.mubr.f32.mxu0 %v164
  %1196 = vmatmul.mubr.f32.gmra.mrb[0].mxu0 %v163
  %v1197 = vpop.f32.mrb[0].mxu0
  %v1198 = vadd.f32 %v813, %v1197
  %v1199 = vpop.f32.mrb[0].mxu0
  %1200 = vmatprep.mubr.f32.mxu0 %v169
  %1201 = vmatmul.mubr.f32.gmra.mrb[0].mxu0 %v168
  %v1202 = vpop.f32.mrb[0].mxu0
  %v1203 = vadd.f32 %v818, %v1202
  %v1204 = vpop.f32.mrb[0].mxu0
  %1205 = vmatprep.mubr.f32.mxu0 %v174
  %1206 = vmatmul.mubr.f32.gmra.mrb[0].mxu0 %v173
  %v1207 = vpop.f32.mrb[0].mxu0
  %v1208 = vadd.f32 %v823, %v1207
  %v1209 = vpop.f32.mrb[0].mxu0
  %1210 = vmatprep.mubr.f32.mxu0 %v179
  %1211 = vmatmul.mubr.f32.gmra.mrb[0].mxu0 %v178
  %v1212 = vpop.f32.mrb[0].mxu0
  %v1213 = vadd.f32 %v828, %v1212
  %v1214 = vpop.f32.mrb[0].mxu0
  %1215 = vmatprep.mubr.f32.mxu0 %v184
  %1216 = vmatmul.mubr.f32.gmra.mrb[0].mxu0 %v183
  %v1217 = vpop.f32.mrb[0].mxu0
  %v1218 = vadd.f32 %v833, %v1217
  %v1219 = vpop.f32.mrb[0].mxu0
  %1220 = vmatprep.mubr.f32.mxu0 %v189
  %1221 = vmatmul.mubr.f32.gmra.mrb[0].mxu0 %v188
  %v1222 = vpop.f32.mrb[0].mxu0
  %v1223 = vadd.f32 %v838, %v1222
  %v1224 = vpop.f32.mrb[0].mxu0
  %1225 = vmatprep.mubr.f32.mxu0 %v194
  %1226 = vmatmul.mubr.f32.gmra.mrb[0].mxu0 %v193
  %v1227 = vpop.f32.mrb[0].mxu0
  %v1228 = vadd.f32 %v843, %v1227
  %v1229 = vpop.f32.mrb[0].mxu0
  %1230 = vmatprep.mubr.f32.mxu0 %v199
  %1231 = vmatmul.mubr.f32.gmra.mrb[0].mxu0 %v198
  %v1232 = vpop.f32.mrb[0].mxu0
  %v1233 = vadd.f32 %v848, %v1232
  %v1234 = vpop.f32.mrb[0].mxu0
  %1235 = vmatprep.mubr.f32.mxu0 %v204
  %1236 = vmatmul.mubr.f32.gmra.mrb[0].mxu0 %v203
  %v1237 = vpop.f32.mrb[0].mxu0
  %v1238 = vadd.f32 %v853, %v1237
  %v1239 = vpop.f32.mrb[0].mxu0
  %1240 = vmatprep.mubr.f32.mxu0 %v209
  %1241 = vmatmul.mubr.f32.gmra.mrb[0].mxu0 %v208
  %v1242 = vpop.f32.mrb[0].mxu0
  %v1243 = vadd.f32 %v858, %v1242
  %v1244 = vpop.f32.mrb[0].mxu0
  %1245 = vmatprep.mubr.f32.mxu0 %v214
  %1246 = vmatmul.mubr.f32.gmra.mrb[0].mxu0 %v213
  %v1247 = vpop.f32.mrb[0].mxu0
  %v1248 = vadd.f32 %v863, %v1247
  %v1249 = vpop.f32.mrb[0].mxu0
  %1250 = vmatprep.mubr.f32.mxu0 %v219
  %1251 = vmatmul.mubr.f32.gmra.mrb[0].mxu0 %v218
  %v1252 = vpop.f32.mrb[0].mxu0
  %v1253 = vadd.f32 %v868, %v1252
  %v1254 = vpop.f32.mrb[0].mxu0
  %1255 = vmatprep.mubr.f32.mxu0 %v224
  %1256 = vmatmul.mubr.f32.gmra.mrb[0].mxu0 %v223
  %v1257 = vpop.f32.mrb[0].mxu0
  %v1258 = vadd.f32 %v873, %v1257
  %v1259 = vpop.f32.mrb[0].mxu0
  %1260 = vmatprep.mubr.f32.mxu0 %v229
  %1261 = vmatmul.mubr.f32.gmra.mrb[0].mxu0 %v228
  %v1262 = vpop.f32.mrb[0].mxu0
  %v1263 = vadd.f32 %v878, %v1262
  %v1264 = vpop.f32.mrb[0].mxu0
  %1265 = vmatprep.mubr.f32.mxu0 %v234
  %1266 = vmatmul.mubr.f32.gmra.mrb[0].mxu0 %v233
  %v1267 = vpop.f32.mrb[0].mxu0
  %v1268 = vadd.f32 %v883, %v1267
  %v1269 = vpop.f32.mrb[0].mxu0
  %1270 = vmatprep.mubr.f32.mxu0 %v239
  %1271 = vmatmul.mubr.f32.gmra.mrb[0].mxu0 %v238
  %v1272 = vpop.f32.mrb[0].mxu0
  %v1273 = vadd.f32 %v888, %v1272
  %v1274 = vpop.f32.mrb[0].mxu0
  %1275 = vmatprep.mubr.f32.mxu0 %v244
  %1276 = vmatmul.mubr.f32.gmra.mrb[0].mxu0 %v243
  %v1277 = vpop.f32.mrb[0].mxu0
  %v1278 = vadd.f32 %v893, %v1277
  %v1279 = vpop.f32.mrb[0].mxu0
  %1280 = vmatprep.mubr.f32.mxu0 %v249
  %1281 = vmatmul.mubr.f32.gmra.mrb[0].mxu0 %v248
  %v1282 = vpop.f32.mrb[0].mxu0
  %v1283 = vadd.f32 %v898, %v1282
  %v1284 = vpop.f32.mrb[0].mxu0
  %1285 = vmatprep.mubr.f32.mxu0 %v254
  %1286 = vmatmul.mubr.f32.gmra.mrb[0].mxu0 %v253
  %v1287 = vpop.f32.mrb[0].mxu0
  %v1288 = vadd.f32 %v903, %v1287
  %v1289 = vpop.f32.mrb[0].mxu0
  %1290 = vmatprep.mubr.f32.mxu0 %v259
  %1291 = vmatmul.mubr.f32.gmra.mrb[0].mxu0 %v258
  %v1292 = vpop.f32.mrb[0].mxu0
  %v1293 = vadd.f32 %v908, %v1292
  %v1294 = vpop.f32.mrb[0].mxu0
  %1295 = vmatprep.mubr.f32.mxu0 %v264
  %1296 = vmatmul.mubr.f32.gmra.mrb[0].mxu0 %v263
  %v1297 = vpop.f32.mrb[0].mxu0
  %v1298 = vadd.f32 %v913, %v1297
  %v1299 = vpop.f32.mrb[0].mxu0
  %1300 = vmatprep.mubr.f32.mxu0 %v269
  %1301 = vmatmul.mubr.f32.gmra.mrb[0].mxu0 %v268
  %v1302 = vpop.f32.mrb[0].mxu0
  %v1303 = vadd.f32 %v918, %v1302
  %v1304 = vpop.f32.mrb[0].mxu0
  %1305 = vmatprep.mubr.f32.mxu0 %v274
  %1306 = vmatmul.mubr.f32.gmra.mrb[0].mxu0 %v273
  %v1307 = vpop.f32.mrb[0].mxu0
  %v1308 = vadd.f32 %v923, %v1307
  %v1309 = vpop.f32.mrb[0].mxu0
  %1310 = vmatprep.mubr.f32.mxu0 %v279
  %1311 = vmatmul.mubr.f32.gmra.mrb[0].mxu0 %v278
  %v1312 = vpop.f32.mrb[0].mxu0
  %v1313 = vadd.f32 %v928, %v1312
  %v1314 = vpop.f32.mrb[0].mxu0
  %1315 = vmatprep.mubr.f32.mxu0 %v284
  %1316 = vmatmul.mubr.f32.gmra.mrb[0].mxu0 %v283
  %v1317 = vpop.f32.mrb[0].mxu0
  %v1318 = vadd.f32 %v933, %v1317
  %v1319 = vpop.f32.mrb[0].mxu0
  %1320 = vmatprep.mubr.f32.mxu0 %v289
  %1321 = vmatmul.mubr.f32.gmra.mrb[0].mxu0 %v288
  %v1322 = vpop.f32.mrb[0].mxu0
  %v1323 = vadd.f32 %v938, %v1322
  %v1324 = vpop.f32.mrb[0].mxu0
  %1325 = vmatprep.mubr.f32.mxu0 %v294
  %1326 = vmatmul.mubr.f32.gmra.mrb[0].mxu0 %v293
  %v1327 = vpop.f32.mrb[0].mxu0
  %v1328 = vadd.f32 %v943, %v1327
  %v1329 = vpop.f32.mrb[0].mxu0
  %1330 = vmatprep.mubr.f32.mxu0 %v299
  %1331 = vmatmul.mubr.f32.gmra.mrb[0].mxu0 %v298
  %v1332 = vpop.f32.mrb[0].mxu0
  %v1333 = vadd.f32 %v948, %v1332
  %v1334 = vpop.f32.mrb[0].mxu0
  %1335 = vmatprep.mubr.f32.mxu0 %v304
  %1336 = vmatmul.mubr.f32.gmra.mrb[0].mxu0 %v303
  %v1337 = vpop.f32.mrb[0].mxu0
  %v1338 = vadd.f32 %v953, %v1337
  %v1339 = vpop.f32.mrb[0].mxu0
  %1340 = vmatprep.mubr.f32.mxu0 %v309
  %1341 = vmatmul.mubr.f32.gmra.mrb[0].mxu0 %v308
  %v1342 = vpop.f32.mrb[0].mxu0
  %v1343 = vadd.f32 %v958, %v1342
  %v1344 = vpop.f32.mrb[0].mxu0
  %1345 = vmatprep.mubr.f32.mxu0 %v314
  %1346 = vmatmul.mubr.f32.gmra.mrb[0].mxu0 %v313
  %v1347 = vpop.f32.mrb[0].mxu0
  %v1348 = vadd.f32 %v963, %v1347
  %v1349 = vpop.f32.mrb[0].mxu0
  %1350 = vmatprep.mubr.f32.mxu0 %v319
  %1351 = vmatmul.mubr.f32.gmra.mrb[0].mxu0 %v318
  %v1352 = vpop.f32.mrb[0].mxu0
  %v1353 = vadd.f32 %v968, %v1352
  %v1354 = vpop.f32.mrb[0].mxu0
  %1355 = vmatprep.mubr.f32.mxu0 %v324
  %1356 = vmatmul.mubr.f32.gmra.mrb[0].mxu0 %v323
  %v1357 = vpop.f32.mrb[0].mxu0
  %v1358 = vadd.f32 %v973, %v1357
  %v1359 = vpop.f32.mrb[0].mxu0
  %1360 = vmatprep.mubr.f32.mxu0 %v329
  %1361 = vmatmul.mubr.f32.gmra.mrb[0].mxu0 %v328
  %v1362 = vpop.f32.mrb[0].mxu0
  %v1363 = vadd.f32 %v978, %v1362
  %v1364 = vpop.f32.mrb[0].mxu0
  %1365 = vdwg.mxu0
  %1366 = vmatprep.subr.mxu0 0.0
  %1367 = vmatpush1.msra.mxu0 %v395
  %1368 = vmatprep.subr.mxu0 0.0
  %1369 = vmatpush1.msra.mxu0 %v396
  %1370 = vmatprep.subr.mxu0 0.0
  %1371 = vmatpush1.msra.mxu0 %v397
  %1372 = vmatprep.subr.mxu0 0.0
  %1373 = vmatpush1.msra.mxu0 %v398
  %1374 = vmatprep.subr.mxu0 0.0
  %1375 = vmatpush1.msra.mxu0 %v399
  %1376 = vmatprep.subr.mxu0 0.0
  %1377 = vmatpush1.msra.mxu0 %v400
  %1378 = vmatprep.subr.mxu0 0.0
  %1379 = vmatpush1.msra.mxu0 %v401
  %1380 = vmatprep.subr.mxu0 0.0
  %1381 = vmatpush1.msra.mxu0 %v402
  %1382 = vmatprep.subr.mxu0 0.0
  %1383 = vmatpush1.msra.mxu0 0.0
  %1384 = vmatprep.subr.mxu0 0.0
  %1385 = vmatpush1.msra.mxu0 0.0
  %1386 = vmatprep.subr.mxu0 0.0
  %1387 = vmatpush1.msra.mxu0 0.0
  %1388 = vmatprep.subr.mxu0 0.0
  %1389 = vmatpush1.msra.mxu0 0.0
  %1390 = vmatprep.subr.mxu0 0.0
  %1391 = vmatpush1.msra.mxu0 0.0
  %1392 = vmatprep.subr.mxu0 0.0
  %1393 = vmatpush1.msra.mxu0 0.0
  %1394 = vmatprep.subr.mxu0 0.0
  %1395 = vmatpush1.msra.mxu0 0.0
  %1396 = vmatprep.subr.mxu0 0.0
  %1397 = vmatpush1.msra.mxu0 0.0
  %1398 = vmatprep.subr.mxu0 0.0
  %1399 = vmatpush1.msra.mxu0 0.0
  %1400 = vmatprep.subr.mxu0 0.0
  %1401 = vmatpush1.msra.mxu0 0.0
  %1402 = vmatprep.subr.mxu0 0.0
  %1403 = vmatpush1.msra.mxu0 0.0
  %1404 = vmatprep.subr.mxu0 0.0
  %1405 = vmatpush1.msra.mxu0 0.0
  %1406 = vmatprep.subr.mxu0 0.0
  %1407 = vmatpush1.msra.mxu0 0.0
  %1408 = vmatprep.subr.mxu0 0.0
  %1409 = vmatpush1.msra.mxu0 0.0
  %1410 = vmatprep.subr.mxu0 0.0
  %1411 = vmatpush1.msra.mxu0 0.0
  %1412 = vmatprep.subr.mxu0 0.0
  %1413 = vmatpush1.msra.mxu0 0.0
  %1414 = vmatprep.subr.mxu0 0.0
  %1415 = vmatpush1.msra.mxu0 0.0
  %1416 = vmatprep.subr.mxu0 0.0
  %1417 = vmatpush1.msra.mxu0 0.0
  %1418 = vmatprep.subr.mxu0 0.0
  %1419 = vmatpush1.msra.mxu0 0.0
  %1420 = vmatprep.subr.mxu0 0.0
  %1421 = vmatpush1.msra.mxu0 0.0
  %1422 = vmatprep.subr.mxu0 0.0
  %1423 = vmatpush1.msra.mxu0 0.0
  %1424 = vmatprep.subr.mxu0 0.0
  %1425 = vmatpush1.msra.mxu0 0.0
  %1426 = vmatprep.subr.mxu0 0.0
  %1427 = vmatpush1.msra.mxu0 0.0
  %1428 = vmatprep.subr.mxu0 0.0
  %1429 = vmatpush1.msra.mxu0 0.0
  %1430 = vmatprep.mubr.f32.mxu0 0.0
  %1431 = vmatmul.mubr.f32.gmra.mrb[0].mxu0 %v405
  %v1432 = vpop.f32.mrb[0].mxu0
  %v1433 = vadd.f32 %v1048, %v1432
  %v1434 = vpop.f32.mrb[0].mxu0
  %1435 = vmatprep.mubr.f32.mxu0 0.0
  %1436 = vmatmul.mubr.f32.gmra.mrb[0].mxu0 %v408
  %v1437 = vpop.f32.mrb[0].mxu0
  %v1438 = vadd.f32 %v1053, %v1437
  %v1439 = vpop.f32.mrb[0].mxu0
  %1440 = vmatprep.mubr.f32.mxu0 0.0
  %1441 = vmatmul.mubr.f32.gmra.mrb[0].mxu0 %v411
  %v1442 = vpop.f32.mrb[0].mxu0
  %v1443 = vadd.f32 %v1058, %v1442
  %v1444 = vpop.f32.mrb[0].mxu0
  %1445 = vmatprep.mubr.f32.mxu0 0.0
  %1446 = vmatmul.mubr.f32.gmra.mrb[0].mxu0 %v414
  %v1447 = vpop.f32.mrb[0].mxu0
  %v1448 = vadd.f32 %v1063, %v1447
  %v1449 = vpop.f32.mrb[0].mxu0
  %1450 = vmatprep.mubr.f32.mxu0 0.0
  %1451 = vmatmul.mubr.f32.gmra.mrb[0].mxu0 %v417
  %v1452 = vpop.f32.mrb[0].mxu0
  %v1453 = vadd.f32 %v1068, %v1452
  %v1454 = vpop.f32.mrb[0].mxu0
  %1455 = vmatprep.mubr.f32.mxu0 0.0
  %1456 = vmatmul.mubr.f32.gmra.mrb[0].mxu0 %v420
  %v1457 = vpop.f32.mrb[0].mxu0
  %v1458 = vadd.f32 %v1073, %v1457
  %v1459 = vpop.f32.mrb[0].mxu0
  %1460 = vmatprep.mubr.f32.mxu0 0.0
  %1461 = vmatmul.mubr.f32.gmra.mrb[0].mxu0 %v423
  %v1462 = vpop.f32.mrb[0].mxu0
  %v1463 = vadd.f32 %v1078, %v1462
  %v1464 = vpop.f32.mrb[0].mxu0
  %1465 = vmatprep.mubr.f32.mxu0 0.0
  %1466 = vmatmul.mubr.f32.gmra.mrb[0].mxu0 %v426
  %v1467 = vpop.f32.mrb[0].mxu0
  %v1468 = vadd.f32 %v1083, %v1467
  %v1469 = vpop.f32.mrb[0].mxu0
  %1470 = vmatprep.mubr.f32.mxu0 0.0
  %1471 = vmatmul.mubr.f32.gmra.mrb[0].mxu0 %v429
  %v1472 = vpop.f32.mrb[0].mxu0
  %v1473 = vadd.f32 %v1088, %v1472
  %v1474 = vpop.f32.mrb[0].mxu0
  %1475 = vmatprep.mubr.f32.mxu0 0.0
  %1476 = vmatmul.mubr.f32.gmra.mrb[0].mxu0 %v432
  %v1477 = vpop.f32.mrb[0].mxu0
  %v1478 = vadd.f32 %v1093, %v1477
  %v1479 = vpop.f32.mrb[0].mxu0
  %1480 = vmatprep.mubr.f32.mxu0 0.0
  %1481 = vmatmul.mubr.f32.gmra.mrb[0].mxu0 %v435
  %v1482 = vpop.f32.mrb[0].mxu0
  %v1483 = vadd.f32 %v1098, %v1482
  %v1484 = vpop.f32.mrb[0].mxu0
  %1485 = vmatprep.mubr.f32.mxu0 0.0
  %1486 = vmatmul.mubr.f32.gmra.mrb[0].mxu0 %v438
  %v1487 = vpop.f32.mrb[0].mxu0
  %v1488 = vadd.f32 %v1103, %v1487
  %v1489 = vpop.f32.mrb[0].mxu0
  %1490 = vmatprep.mubr.f32.mxu0 0.0
  %1491 = vmatmul.mubr.f32.gmra.mrb[0].mxu0 %v441
  %v1492 = vpop.f32.mrb[0].mxu0
  %v1493 = vadd.f32 %v1108, %v1492
  %v1494 = vpop.f32.mrb[0].mxu0
  %1495 = vmatprep.mubr.f32.mxu0 0.0
  %1496 = vmatmul.mubr.f32.gmra.mrb[0].mxu0 %v444
  %v1497 = vpop.f32.mrb[0].mxu0
  %v1498 = vadd.f32 %v1113, %v1497
  %v1499 = vpop.f32.mrb[0].mxu0
  %1500 = vmatprep.mubr.f32.mxu0 0.0
  %1501 = vmatmul.mubr.f32.gmra.mrb[0].mxu0 %v447
  %v1502 = vpop.f32.mrb[0].mxu0
  %v1503 = vadd.f32 %v1118, %v1502
  %v1504 = vpop.f32.mrb[0].mxu0
  %1505 = vmatprep.mubr.f32.mxu0 0.0
  %1506 = vmatmul.mubr.f32.gmra.mrb[0].mxu0 %v450
  %v1507 = vpop.f32.mrb[0].mxu0
  %v1508 = vadd.f32 %v1123, %v1507
  %v1509 = vpop.f32.mrb[0].mxu0
  %1510 = vmatprep.mubr.f32.mxu0 0.0
  %1511 = vmatmul.mubr.f32.gmra.mrb[0].mxu0 %v453
  %v1512 = vpop.f32.mrb[0].mxu0
  %v1513 = vadd.f32 %v1128, %v1512
  %v1514 = vpop.f32.mrb[0].mxu0
  %1515 = vmatprep.mubr.f32.mxu0 0.0
  %1516 = vmatmul.mubr.f32.gmra.mrb[0].mxu0 %v456
  %v1517 = vpop.f32.mrb[0].mxu0
  %v1518 = vadd.f32 %v1133, %v1517
  %v1519 = vpop.f32.mrb[0].mxu0
  %1520 = vmatprep.mubr.f32.mxu0 0.0
  %1521 = vmatmul.mubr.f32.gmra.mrb[0].mxu0 %v459
  %v1522 = vpop.f32.mrb[0].mxu0
  %v1523 = vadd.f32 %v1138, %v1522
  %v1524 = vpop.f32.mrb[0].mxu0
  %1525 = vmatprep.mubr.f32.mxu0 0.0
  %1526 = vmatmul.mubr.f32.gmra.mrb[0].mxu0 %v462
  %v1527 = vpop.f32.mrb[0].mxu0
  %v1528 = vadd.f32 %v1143, %v1527
  %v1529 = vpop.f32.mrb[0].mxu0
  %1530 = vmatprep.mubr.f32.mxu0 0.0
  %1531 = vmatmul.mubr.f32.gmra.mrb[0].mxu0 %v465
  %v1532 = vpop.f32.mrb[0].mxu0
  %v1533 = vadd.f32 %v1148, %v1532
  %v1534 = vpop.f32.mrb[0].mxu0
  %1535 = vmatprep.mubr.f32.mxu0 0.0
  %1536 = vmatmul.mubr.f32.gmra.mrb[0].mxu0 %v468
  %v1537 = vpop.f32.mrb[0].mxu0
  %v1538 = vadd.f32 %v1153, %v1537
  %v1539 = vpop.f32.mrb[0].mxu0
  %1540 = vmatprep.mubr.f32.mxu0 0.0
  %1541 = vmatmul.mubr.f32.gmra.mrb[0].mxu0 %v471
  %v1542 = vpop.f32.mrb[0].mxu0
  %v1543 = vadd.f32 %v1158, %v1542
  %v1544 = vpop.f32.mrb[0].mxu0
  %1545 = vmatprep.mubr.f32.mxu0 0.0
  %1546 = vmatmul.mubr.f32.gmra.mrb[0].mxu0 %v474
  %v1547 = vpop.f32.mrb[0].mxu0
  %v1548 = vadd.f32 %v1163, %v1547
  %v1549 = vpop.f32.mrb[0].mxu0
  %1550 = vmatprep.mubr.f32.mxu0 0.0
  %1551 = vmatmul.mubr.f32.gmra.mrb[0].mxu0 %v477
  %v1552 = vpop.f32.mrb[0].mxu0
  %v1553 = vadd.f32 %v1168, %v1552
  %v1554 = vpop.f32.mrb[0].mxu0
  %1555 = vmatprep.mubr.f32.mxu0 0.0
  %1556 = vmatmul.mubr.f32.gmra.mrb[0].mxu0 %v480
  %v1557 = vpop.f32.mrb[0].mxu0
  %v1558 = vadd.f32 %v1173, %v1557
  %v1559 = vpop.f32.mrb[0].mxu0
  %1560 = vmatprep.mubr.f32.mxu0 0.0
  %1561 = vmatmul.mubr.f32.gmra.mrb[0].mxu0 %v483
  %v1562 = vpop.f32.mrb[0].mxu0
  %v1563 = vadd.f32 %v1178, %v1562
  %v1564 = vpop.f32.mrb[0].mxu0
  %1565 = vmatprep.mubr.f32.mxu0 0.0
  %1566 = vmatmul.mubr.f32.gmra.mrb[0].mxu0 %v486
  %v1567 = vpop.f32.mrb[0].mxu0
  %v1568 = vadd.f32 %v1183, %v1567
  %v1569 = vpop.f32.mrb[0].mxu0
  %1570 = vmatprep.mubr.f32.mxu0 0.0
  %1571 = vmatmul.mubr.f32.gmra.mrb[0].mxu0 %v489
  %v1572 = vpop.f32.mrb[0].mxu0
  %v1573 = vadd.f32 %v1188, %v1572
  %v1574 = vpop.f32.mrb[0].mxu0
  %1575 = vmatprep.mubr.f32.mxu0 0.0
  %1576 = vmatmul.mubr.f32.gmra.mrb[0].mxu0 %v492
  %v1577 = vpop.f32.mrb[0].mxu0
  %v1578 = vadd.f32 %v1193, %v1577
  %v1579 = vpop.f32.mrb[0].mxu0
  %1580 = vmatprep.mubr.f32.mxu0 0.0
  %1581 = vmatmul.mubr.f32.gmra.mrb[0].mxu0 %v495
  %v1582 = vpop.f32.mrb[0].mxu0
  %v1583 = vadd.f32 %v1198, %v1582
  %v1584 = vpop.f32.mrb[0].mxu0
  %1585 = vmatprep.mubr.f32.mxu0 0.0
  %1586 = vmatmul.mubr.f32.gmra.mrb[0].mxu0 %v498
  %v1587 = vpop.f32.mrb[0].mxu0
  %v1588 = vadd.f32 %v1203, %v1587
  %v1589 = vpop.f32.mrb[0].mxu0
  %1590 = vmatprep.mubr.f32.mxu0 0.0
  %1591 = vmatmul.mubr.f32.gmra.mrb[0].mxu0 %v501
  %v1592 = vpop.f32.mrb[0].mxu0
  %v1593 = vadd.f32 %v1208, %v1592
  %v1594 = vpop.f32.mrb[0].mxu0
  %1595 = vmatprep.mubr.f32.mxu0 0.0
  %1596 = vmatmul.mubr.f32.gmra.mrb[0].mxu0 %v504
  %v1597 = vpop.f32.mrb[0].mxu0
  %v1598 = vadd.f32 %v1213, %v1597
  %v1599 = vpop.f32.mrb[0].mxu0
  %1600 = vmatprep.mubr.f32.mxu0 0.0
  %1601 = vmatmul.mubr.f32.gmra.mrb[0].mxu0 %v507
  %v1602 = vpop.f32.mrb[0].mxu0
  %v1603 = vadd.f32 %v1218, %v1602
  %v1604 = vpop.f32.mrb[0].mxu0
  %1605 = vmatprep.mubr.f32.mxu0 0.0
  %1606 = vmatmul.mubr.f32.gmra.mrb[0].mxu0 %v510
  %v1607 = vpop.f32.mrb[0].mxu0
  %v1608 = vadd.f32 %v1223, %v1607
  %v1609 = vpop.f32.mrb[0].mxu0
  %1610 = vmatprep.mubr.f32.mxu0 0.0
  %1611 = vmatmul.mubr.f32.gmra.mrb[0].mxu0 %v513
  %v1612 = vpop.f32.mrb[0].mxu0
  %v1613 = vadd.f32 %v1228, %v1612
  %v1614 = vpop.f32.mrb[0].mxu0
  %1615 = vmatprep.mubr.f32.mxu0 0.0
  %1616 = vmatmul.mubr.f32.gmra.mrb[0].mxu0 %v516
  %v1617 = vpop.f32.mrb[0].mxu0
  %v1618 = vadd.f32 %v1233, %v1617
  %v1619 = vpop.f32.mrb[0].mxu0
  %1620 = vmatprep.mubr.f32.mxu0 0.0
  %1621 = vmatmul.mubr.f32.gmra.mrb[0].mxu0 %v519
  %v1622 = vpop.f32.mrb[0].mxu0
  %v1623 = vadd.f32 %v1238, %v1622
  %v1624 = vpop.f32.mrb[0].mxu0
  %1625 = vmatprep.mubr.f32.mxu0 0.0
  %1626 = vmatmul.mubr.f32.gmra.mrb[0].mxu0 %v522
  %v1627 = vpop.f32.mrb[0].mxu0
  %v1628 = vadd.f32 %v1243, %v1627
  %v1629 = vpop.f32.mrb[0].mxu0
  %1630 = vmatprep.mubr.f32.mxu0 0.0
  %1631 = vmatmul.mubr.f32.gmra.mrb[0].mxu0 %v525
  %v1632 = vpop.f32.mrb[0].mxu0
  %v1633 = vadd.f32 %v1248, %v1632
  %v1634 = vpop.f32.mrb[0].mxu0
  %1635 = vmatprep.mubr.f32.mxu0 0.0
  %1636 = vmatmul.mubr.f32.gmra.mrb[0].mxu0 %v528
  %v1637 = vpop.f32.mrb[0].mxu0
  %v1638 = vadd.f32 %v1253, %v1637
  %v1639 = vpop.f32.mrb[0].mxu0
  %1640 = vmatprep.mubr.f32.mxu0 0.0
  %1641 = vmatmul.mubr.f32.gmra.mrb[0].mxu0 %v531
  %v1642 = vpop.f32.mrb[0].mxu0
  %v1643 = vadd.f32 %v1258, %v1642
  %v1644 = vpop.f32.mrb[0].mxu0
  %1645 = vmatprep.mubr.f32.mxu0 0.0
  %1646 = vmatmul.mubr.f32.gmra.mrb[0].mxu0 %v534
  %v1647 = vpop.f32.mrb[0].mxu0
  %v1648 = vadd.f32 %v1263, %v1647
  %v1649 = vpop.f32.mrb[0].mxu0
  %1650 = vmatprep.mubr.f32.mxu0 0.0
  %1651 = vmatmul.mubr.f32.gmra.mrb[0].mxu0 %v537
  %v1652 = vpop.f32.mrb[0].mxu0
  %v1653 = vadd.f32 %v1268, %v1652
  %v1654 = vpop.f32.mrb[0].mxu0
  %1655 = vmatprep.mubr.f32.mxu0 0.0
  %1656 = vmatmul.mubr.f32.gmra.mrb[0].mxu0 %v540
  %v1657 = vpop.f32.mrb[0].mxu0
  %v1658 = vadd.f32 %v1273, %v1657
  %v1659 = vpop.f32.mrb[0].mxu0
  %1660 = vmatprep.mubr.f32.mxu0 0.0
  %1661 = vmatmul.mubr.f32.gmra.mrb[0].mxu0 %v543
  %v1662 = vpop.f32.mrb[0].mxu0
  %v1663 = vadd.f32 %v1278, %v1662
  %v1664 = vpop.f32.mrb[0].mxu0
  %1665 = vmatprep.mubr.f32.mxu0 0.0
  %1666 = vmatmul.mubr.f32.gmra.mrb[0].mxu0 %v546
  %v1667 = vpop.f32.mrb[0].mxu0
  %v1668 = vadd.f32 %v1283, %v1667
  %v1669 = vpop.f32.mrb[0].mxu0
  %1670 = vmatprep.mubr.f32.mxu0 0.0
  %1671 = vmatmul.mubr.f32.gmra.mrb[0].mxu0 %v549
  %v1672 = vpop.f32.mrb[0].mxu0
  %v1673 = vadd.f32 %v1288, %v1672
  %v1674 = vpop.f32.mrb[0].mxu0
  %1675 = vmatprep.mubr.f32.mxu0 0.0
  %1676 = vmatmul.mubr.f32.gmra.mrb[0].mxu0 %v552
  %v1677 = vpop.f32.mrb[0].mxu0
  %v1678 = vadd.f32 %v1293, %v1677
  %v1679 = vpop.f32.mrb[0].mxu0
  %1680 = vmatprep.mubr.f32.mxu0 0.0
  %1681 = vmatmul.mubr.f32.gmra.mrb[0].mxu0 %v555
  %v1682 = vpop.f32.mrb[0].mxu0
  %v1683 = vadd.f32 %v1298, %v1682
  %v1684 = vpop.f32.mrb[0].mxu0
  %1685 = vmatprep.mubr.f32.mxu0 0.0
  %1686 = vmatmul.mubr.f32.gmra.mrb[0].mxu0 %v558
  %v1687 = vpop.f32.mrb[0].mxu0
  %v1688 = vadd.f32 %v1303, %v1687
  %v1689 = vpop.f32.mrb[0].mxu0
  %1690 = vmatprep.mubr.f32.mxu0 0.0
  %1691 = vmatmul.mubr.f32.gmra.mrb[0].mxu0 %v561
  %v1692 = vpop.f32.mrb[0].mxu0
  %v1693 = vadd.f32 %v1308, %v1692
  %v1694 = vpop.f32.mrb[0].mxu0
  %1695 = vmatprep.mubr.f32.mxu0 0.0
  %1696 = vmatmul.mubr.f32.gmra.mrb[0].mxu0 %v564
  %v1697 = vpop.f32.mrb[0].mxu0
  %v1698 = vadd.f32 %v1313, %v1697
  %v1699 = vpop.f32.mrb[0].mxu0
  %1700 = vmatprep.mubr.f32.mxu0 0.0
  %1701 = vmatmul.mubr.f32.gmra.mrb[0].mxu0 %v567
  %v1702 = vpop.f32.mrb[0].mxu0
  %v1703 = vadd.f32 %v1318, %v1702
  %v1704 = vpop.f32.mrb[0].mxu0
  %1705 = vmatprep.mubr.f32.mxu0 0.0
  %1706 = vmatmul.mubr.f32.gmra.mrb[0].mxu0 %v570
  %v1707 = vpop.f32.mrb[0].mxu0
  %v1708 = vadd.f32 %v1323, %v1707
  %v1709 = vpop.f32.mrb[0].mxu0
  %1710 = vmatprep.mubr.f32.mxu0 0.0
  %1711 = vmatmul.mubr.f32.gmra.mrb[0].mxu0 %v573
  %v1712 = vpop.f32.mrb[0].mxu0
  %v1713 = vadd.f32 %v1328, %v1712
  %v1714 = vpop.f32.mrb[0].mxu0
  %1715 = vmatprep.mubr.f32.mxu0 0.0
  %1716 = vmatmul.mubr.f32.gmra.mrb[0].mxu0 %v576
  %v1717 = vpop.f32.mrb[0].mxu0
  %v1718 = vadd.f32 %v1333, %v1717
  %v1719 = vpop.f32.mrb[0].mxu0
  %1720 = vmatprep.mubr.f32.mxu0 0.0
  %1721 = vmatmul.mubr.f32.gmra.mrb[0].mxu0 %v579
  %v1722 = vpop.f32.mrb[0].mxu0
  %v1723 = vadd.f32 %v1338, %v1722
  %v1724 = vpop.f32.mrb[0].mxu0
  %1725 = vmatprep.mubr.f32.mxu0 0.0
  %1726 = vmatmul.mubr.f32.gmra.mrb[0].mxu0 %v582
  %v1727 = vpop.f32.mrb[0].mxu0
  %v1728 = vadd.f32 %v1343, %v1727
  %v1729 = vpop.f32.mrb[0].mxu0
  %1730 = vmatprep.mubr.f32.mxu0 0.0
  %1731 = vmatmul.mubr.f32.gmra.mrb[0].mxu0 %v585
  %v1732 = vpop.f32.mrb[0].mxu0
  %v1733 = vadd.f32 %v1348, %v1732
  %v1734 = vpop.f32.mrb[0].mxu0
  %1735 = vmatprep.mubr.f32.mxu0 0.0
  %1736 = vmatmul.mubr.f32.gmra.mrb[0].mxu0 %v588
  %v1737 = vpop.f32.mrb[0].mxu0
  %v1738 = vadd.f32 %v1353, %v1737
  %v1739 = vpop.f32.mrb[0].mxu0
  %1740 = vmatprep.mubr.f32.mxu0 0.0
  %1741 = vmatmul.mubr.f32.gmra.mrb[0].mxu0 %v591
  %v1742 = vpop.f32.mrb[0].mxu0
  %v1743 = vadd.f32 %v1358, %v1742
  %v1744 = vpop.f32.mrb[0].mxu0
  %1745 = vmatprep.mubr.f32.mxu0 0.0
  %1746 = vmatmul.mubr.f32.gmra.mrb[0].mxu0 %v594
  %v1747 = vpop.f32.mrb[0].mxu0
  %v1748 = vadd.f32 %v1363, %v1747
  %v1749 = vpop.f32.mrb[0].mxu0
  %1750 = vdwg.mxu0
  %vm1751 = vcmask 261120
  %v1752 = vsel %vm1751, %v1433, 0.0
  %v1753 = vsel %vm1751, %v1438, 0.0
  %v1754 = vadd.f32 %v1752, %v1753
  %v1755 = vsel %vm1751, %v1443, 0.0
  %v1756 = vadd.f32 %v1754, %v1755
  %v1757 = vsel %vm1751, %v1448, 0.0
  %v1758 = vadd.f32 %v1756, %v1757
  %v1759 = vsel %vm1751, %v1453, 0.0
  %v1760 = vadd.f32 %v1758, %v1759
  %v1761 = vsel %vm1751, %v1458, 0.0
  %v1762 = vadd.f32 %v1760, %v1761
  %v1763 = vsel %vm1751, %v1463, 0.0
  %v1764 = vadd.f32 %v1762, %v1763
  %v1765 = vsel %vm1751, %v1468, 0.0
  %v1766 = vadd.f32 %v1764, %v1765
  %v1767 = vsel %vm1751, %v1473, 0.0
  %v1768 = vadd.f32 %v1766, %v1767
  %v1769 = vsel %vm1751, %v1478, 0.0
  %v1770 = vadd.f32 %v1768, %v1769
  %v1771 = vsel %vm1751, %v1483, 0.0
  %v1772 = vadd.f32 %v1770, %v1771
  %v1773 = vsel %vm1751, %v1488, 0.0
  %v1774 = vadd.f32 %v1772, %v1773
  %v1775 = vsel %vm1751, %v1493, 0.0
  %v1776 = vadd.f32 %v1774, %v1775
  %v1777 = vsel %vm1751, %v1498, 0.0
  %v1778 = vadd.f32 %v1776, %v1777
  %v1779 = vsel %vm1751, %v1503, 0.0
  %v1780 = vadd.f32 %v1778, %v1779
  %v1781 = vsel %vm1751, %v1508, 0.0
  %v1782 = vadd.f32 %v1780, %v1781
  %v1783 = vsel %vm1751, %v1513, 0.0
  %v1784 = vadd.f32 %v1782, %v1783
  %v1785 = vsel %vm1751, %v1518, 0.0
  %v1786 = vadd.f32 %v1784, %v1785
  %v1787 = vsel %vm1751, %v1523, 0.0
  %v1788 = vadd.f32 %v1786, %v1787
  %v1789 = vsel %vm1751, %v1528, 0.0
  %v1790 = vadd.f32 %v1788, %v1789
  %v1791 = vsel %vm1751, %v1533, 0.0
  %v1792 = vadd.f32 %v1790, %v1791
  %v1793 = vsel %vm1751, %v1538, 0.0
  %v1794 = vadd.f32 %v1792, %v1793
  %v1795 = vsel %vm1751, %v1543, 0.0
  %v1796 = vadd.f32 %v1794, %v1795
  %v1797 = vsel %vm1751, %v1548, 0.0
  %v1798 = vadd.f32 %v1796, %v1797
  %v1799 = vsel %vm1751, %v1553, 0.0
  %v1800 = vadd.f32 %v1798, %v1799
  %v1801 = vsel %vm1751, %v1558, 0.0
  %v1802 = vadd.f32 %v1800, %v1801
  %v1803 = vsel %vm1751, %v1563, 0.0
  %v1804 = vadd.f32 %v1802, %v1803
  %v1805 = vsel %vm1751, %v1568, 0.0
  %v1806 = vadd.f32 %v1804, %v1805
  %v1807 = vsel %vm1751, %v1573, 0.0
  %v1808 = vadd.f32 %v1806, %v1807
  %v1809 = vsel %vm1751, %v1578, 0.0
  %v1810 = vadd.f32 %v1808, %v1809
  %v1811 = vsel %vm1751, %v1583, 0.0
  %v1812 = vadd.f32 %v1810, %v1811
  %v1813 = vsel %vm1751, %v1588, 0.0
  %v1814 = vadd.f32 %v1812, %v1813
  %v1815 = vsel %vm1751, %v1593, 0.0
  %v1816 = vadd.f32 %v1814, %v1815
  %v1817 = vsel %vm1751, %v1598, 0.0
  %v1818 = vadd.f32 %v1816, %v1817
  %v1819 = vsel %vm1751, %v1603, 0.0
  %v1820 = vadd.f32 %v1818, %v1819
  %v1821 = vsel %vm1751, %v1608, 0.0
  %v1822 = vadd.f32 %v1820, %v1821
  %v1823 = vsel %vm1751, %v1613, 0.0
  %v1824 = vadd.f32 %v1822, %v1823
  %v1825 = vsel %vm1751, %v1618, 0.0
  %v1826 = vadd.f32 %v1824, %v1825
  %v1827 = vsel %vm1751, %v1623, 0.0
  %v1828 = vadd.f32 %v1826, %v1827
  %v1829 = vsel %vm1751, %v1628, 0.0
  %v1830 = vadd.f32 %v1828, %v1829
  %v1831 = vsel %vm1751, %v1633, 0.0
  %v1832 = vadd.f32 %v1830, %v1831
  %v1833 = vsel %vm1751, %v1638, 0.0
  %v1834 = vadd.f32 %v1832, %v1833
  %v1835 = vsel %vm1751, %v1643, 0.0
  %v1836 = vadd.f32 %v1834, %v1835
  %v1837 = vsel %vm1751, %v1648, 0.0
  %v1838 = vadd.f32 %v1836, %v1837
  %v1839 = vsel %vm1751, %v1653, 0.0
  %v1840 = vadd.f32 %v1838, %v1839
  %v1841 = vsel %vm1751, %v1658, 0.0
  %v1842 = vadd.f32 %v1840, %v1841
  %v1843 = vsel %vm1751, %v1663, 0.0
  %v1844 = vadd.f32 %v1842, %v1843
  %v1845 = vsel %vm1751, %v1668, 0.0
  %v1846 = vadd.f32 %v1844, %v1845
  %v1847 = vsel %vm1751, %v1673, 0.0
  %v1848 = vadd.f32 %v1846, %v1847
  %v1849 = vsel %vm1751, %v1678, 0.0
  %v1850 = vadd.f32 %v1848, %v1849
  %v1851 = vsel %vm1751, %v1683, 0.0
  %v1852 = vadd.f32 %v1850, %v1851
  %v1853 = vsel %vm1751, %v1688, 0.0
  %v1854 = vadd.f32 %v1852, %v1853
  %v1855 = vsel %vm1751, %v1693, 0.0
  %v1856 = vadd.f32 %v1854, %v1855
  %v1857 = vsel %vm1751, %v1698, 0.0
  %v1858 = vadd.f32 %v1856, %v1857
  %v1859 = vsel %vm1751, %v1703, 0.0
  %v1860 = vadd.f32 %v1858, %v1859
  %v1861 = vsel %vm1751, %v1708, 0.0
  %v1862 = vadd.f32 %v1860, %v1861
  %v1863 = vsel %vm1751, %v1713, 0.0
  %v1864 = vadd.f32 %v1862, %v1863
  %v1865 = vsel %vm1751, %v1718, 0.0
  %v1866 = vadd.f32 %v1864, %v1865
  %v1867 = vsel %vm1751, %v1723, 0.0
  %v1868 = vadd.f32 %v1866, %v1867
  %v1869 = vsel %vm1751, %v1728, 0.0
  %v1870 = vadd.f32 %v1868, %v1869
  %v1871 = vsel %vm1751, %v1733, 0.0
  %v1872 = vadd.f32 %v1870, %v1871
  %v1873 = vsel %vm1751, %v1738, 0.0
  %v1874 = vadd.f32 %v1872, %v1873
  %v1875 = vsel %vm1751, %v1743, 0.0
  %v1876 = vadd.f32 %v1874, %v1875
  %v1877 = vsel %vm1751, %v1748, 0.0
  %v1878 = vadd.f32 %v1876, %v1877
  %v1879 = vrot.slane %v1878, 4
  %v1880 = vadd.f32 %v1878, %v1879
  %v1881 = vrot.slane %v1880, 2
  %v1882 = vadd.f32 %v1880, %v1881
  %v1883 = vrot.slane %v1882, 1
  %v1884 = vadd.f32 %v1882, %v1883
  %v1885 = vmul.f32 %v1433, %v1433
  %v1886 = vmul.f32 %v1438, %v1438
  %v1887 = vmul.f32 %v1443, %v1443
  %v1888 = vmul.f32 %v1448, %v1448
  %v1889 = vmul.f32 %v1453, %v1453
  %v1890 = vmul.f32 %v1458, %v1458
  %v1891 = vmul.f32 %v1463, %v1463
  %v1892 = vmul.f32 %v1468, %v1468
  %v1893 = vmul.f32 %v1473, %v1473
  %v1894 = vmul.f32 %v1478, %v1478
  %v1895 = vmul.f32 %v1483, %v1483
  %v1896 = vmul.f32 %v1488, %v1488
  %v1897 = vmul.f32 %v1493, %v1493
  %v1898 = vmul.f32 %v1498, %v1498
  %v1899 = vmul.f32 %v1503, %v1503
  %v1900 = vmul.f32 %v1508, %v1508
  %v1901 = vmul.f32 %v1513, %v1513
  %v1902 = vmul.f32 %v1518, %v1518
  %v1903 = vmul.f32 %v1523, %v1523
  %v1904 = vmul.f32 %v1528, %v1528
  %v1905 = vmul.f32 %v1533, %v1533
  %v1906 = vmul.f32 %v1538, %v1538
  %v1907 = vmul.f32 %v1543, %v1543
  %v1908 = vmul.f32 %v1548, %v1548
  %v1909 = vmul.f32 %v1553, %v1553
  %v1910 = vmul.f32 %v1558, %v1558
  %v1911 = vmul.f32 %v1563, %v1563
  %v1912 = vmul.f32 %v1568, %v1568
  %v1913 = vmul.f32 %v1573, %v1573
  %v1914 = vmul.f32 %v1578, %v1578
  %v1915 = vmul.f32 %v1583, %v1583
  %v1916 = vmul.f32 %v1588, %v1588
  %v1917 = vmul.f32 %v1593, %v1593
  %v1918 = vmul.f32 %v1598, %v1598
  %v1919 = vmul.f32 %v1603, %v1603
  %v1920 = vmul.f32 %v1608, %v1608
  %v1921 = vmul.f32 %v1613, %v1613
  %v1922 = vmul.f32 %v1618, %v1618
  %v1923 = vmul.f32 %v1623, %v1623
  %v1924 = vmul.f32 %v1628, %v1628
  %v1925 = vmul.f32 %v1633, %v1633
  %v1926 = vmul.f32 %v1638, %v1638
  %v1927 = vmul.f32 %v1643, %v1643
  %v1928 = vmul.f32 %v1648, %v1648
  %v1929 = vmul.f32 %v1653, %v1653
  %v1930 = vmul.f32 %v1658, %v1658
  %v1931 = vmul.f32 %v1663, %v1663
  %v1932 = vmul.f32 %v1668, %v1668
  %v1933 = vmul.f32 %v1673, %v1673
  %v1934 = vmul.f32 %v1678, %v1678
  %v1935 = vmul.f32 %v1683, %v1683
  %v1936 = vmul.f32 %v1688, %v1688
  %v1937 = vmul.f32 %v1693, %v1693
  %v1938 = vmul.f32 %v1698, %v1698
  %v1939 = vmul.f32 %v1703, %v1703
  %v1940 = vmul.f32 %v1708, %v1708
  %v1941 = vmul.f32 %v1713, %v1713
  %v1942 = vmul.f32 %v1718, %v1718
  %v1943 = vmul.f32 %v1723, %v1723
  %v1944 = vmul.f32 %v1728, %v1728
  %v1945 = vmul.f32 %v1733, %v1733
  %v1946 = vmul.f32 %v1738, %v1738
  %v1947 = vmul.f32 %v1743, %v1743
  %v1948 = vmul.f32 %v1748, %v1748
  %v1949 = vsel %vm1751, %v1885, 0.0
  %v1950 = vsel %vm1751, %v1886, 0.0
  %v1951 = vadd.f32 %v1949, %v1950
  %v1952 = vsel %vm1751, %v1887, 0.0
  %v1953 = vadd.f32 %v1951, %v1952
  %v1954 = vsel %vm1751, %v1888, 0.0
  %v1955 = vadd.f32 %v1953, %v1954
  %v1956 = vsel %vm1751, %v1889, 0.0
  %v1957 = vadd.f32 %v1955, %v1956
  %v1958 = vsel %vm1751, %v1890, 0.0
  %v1959 = vadd.f32 %v1957, %v1958
  %v1960 = vsel %vm1751, %v1891, 0.0
  %v1961 = vadd.f32 %v1959, %v1960
  %v1962 = vsel %vm1751, %v1892, 0.0
  %v1963 = vadd.f32 %v1961, %v1962
  %v1964 = vsel %vm1751, %v1893, 0.0
  %v1965 = vadd.f32 %v1963, %v1964
  %v1966 = vsel %vm1751, %v1894, 0.0
  %v1967 = vadd.f32 %v1965, %v1966
  %v1968 = vsel %vm1751, %v1895, 0.0
  %v1969 = vadd.f32 %v1967, %v1968
  %v1970 = vsel %vm1751, %v1896, 0.0
  %v1971 = vadd.f32 %v1969, %v1970
  %v1972 = vsel %vm1751, %v1897, 0.0
  %v1973 = vadd.f32 %v1971, %v1972
  %v1974 = vsel %vm1751, %v1898, 0.0
  %v1975 = vadd.f32 %v1973, %v1974
  %v1976 = vsel %vm1751, %v1899, 0.0
  %v1977 = vadd.f32 %v1975, %v1976
  %v1978 = vsel %vm1751, %v1900, 0.0
  %v1979 = vadd.f32 %v1977, %v1978
  %v1980 = vsel %vm1751, %v1901, 0.0
  %v1981 = vadd.f32 %v1979, %v1980
  %v1982 = vsel %vm1751, %v1902, 0.0
  %v1983 = vadd.f32 %v1981, %v1982
  %v1984 = vsel %vm1751, %v1903, 0.0
  %v1985 = vadd.f32 %v1983, %v1984
  %v1986 = vsel %vm1751, %v1904, 0.0
  %v1987 = vadd.f32 %v1985, %v1986
  %v1988 = vsel %vm1751, %v1905, 0.0
  %v1989 = vadd.f32 %v1987, %v1988
  %v1990 = vsel %vm1751, %v1906, 0.0
  %v1991 = vadd.f32 %v1989, %v1990
  %v1992 = vsel %vm1751, %v1907, 0.0
  %v1993 = vadd.f32 %v1991, %v1992
  %v1994 = vsel %vm1751, %v1908, 0.0
  %v1995 = vadd.f32 %v1993, %v1994
  %v1996 = vsel %vm1751, %v1909, 0.0
  %v1997 = vadd.f32 %v1995, %v1996
  %v1998 = vsel %vm1751, %v1910, 0.0
  %v1999 = vadd.f32 %v1997, %v1998
  %v2000 = vsel %vm1751, %v1911, 0.0
  %v2001 = vadd.f32 %v1999, %v2000
  %v2002 = vsel %vm1751, %v1912, 0.0
  %v2003 = vadd.f32 %v2001, %v2002
  %v2004 = vsel %vm1751, %v1913, 0.0
  %v2005 = vadd.f32 %v2003, %v2004
  %v2006 = vsel %vm1751, %v1914, 0.0
  %v2007 = vadd.f32 %v2005, %v2006
  %v2008 = vsel %vm1751, %v1915, 0.0
  %v2009 = vadd.f32 %v2007, %v2008
  %v2010 = vsel %vm1751, %v1916, 0.0
  %v2011 = vadd.f32 %v2009, %v2010
  %v2012 = vsel %vm1751, %v1917, 0.0
  %v2013 = vadd.f32 %v2011, %v2012
  %v2014 = vsel %vm1751, %v1918, 0.0
  %v2015 = vadd.f32 %v2013, %v2014
  %v2016 = vsel %vm1751, %v1919, 0.0
  %v2017 = vadd.f32 %v2015, %v2016
  %v2018 = vsel %vm1751, %v1920, 0.0
  %v2019 = vadd.f32 %v2017, %v2018
  %v2020 = vsel %vm1751, %v1921, 0.0
  %v2021 = vadd.f32 %v2019, %v2020
  %v2022 = vsel %vm1751, %v1922, 0.0
  %v2023 = vadd.f32 %v2021, %v2022
  %v2024 = vsel %vm1751, %v1923, 0.0
  %v2025 = vadd.f32 %v2023, %v2024
  %v2026 = vsel %vm1751, %v1924, 0.0
  %v2027 = vadd.f32 %v2025, %v2026
  %v2028 = vsel %vm1751, %v1925, 0.0
  %v2029 = vadd.f32 %v2027, %v2028
  %v2030 = vsel %vm1751, %v1926, 0.0
  %v2031 = vadd.f32 %v2029, %v2030
  %v2032 = vsel %vm1751, %v1927, 0.0
  %v2033 = vadd.f32 %v2031, %v2032
  %v2034 = vsel %vm1751, %v1928, 0.0
  %v2035 = vadd.f32 %v2033, %v2034
  %v2036 = vsel %vm1751, %v1929, 0.0
  %v2037 = vadd.f32 %v2035, %v2036
  %v2038 = vsel %vm1751, %v1930, 0.0
  %v2039 = vadd.f32 %v2037, %v2038
  %v2040 = vsel %vm1751, %v1931, 0.0
  %v2041 = vadd.f32 %v2039, %v2040
  %v2042 = vsel %vm1751, %v1932, 0.0
  %v2043 = vadd.f32 %v2041, %v2042
  %v2044 = vsel %vm1751, %v1933, 0.0
  %v2045 = vadd.f32 %v2043, %v2044
  %v2046 = vsel %vm1751, %v1934, 0.0
  %v2047 = vadd.f32 %v2045, %v2046
  %v2048 = vsel %vm1751, %v1935, 0.0
  %v2049 = vadd.f32 %v2047, %v2048
  %v2050 = vsel %vm1751, %v1936, 0.0
  %v2051 = vadd.f32 %v2049, %v2050
  %v2052 = vsel %vm1751, %v1937, 0.0
  %v2053 = vadd.f32 %v2051, %v2052
  %v2054 = vsel %vm1751, %v1938, 0.0
  %v2055 = vadd.f32 %v2053, %v2054
  %v2056 = vsel %vm1751, %v1939, 0.0
  %v2057 = vadd.f32 %v2055, %v2056
  %v2058 = vsel %vm1751, %v1940, 0.0
  %v2059 = vadd.f32 %v2057, %v2058
  %v2060 = vsel %vm1751, %v1941, 0.0
  %v2061 = vadd.f32 %v2059, %v2060
  %v2062 = vsel %vm1751, %v1942, 0.0
  %v2063 = vadd.f32 %v2061, %v2062
  %v2064 = vsel %vm1751, %v1943, 0.0
  %v2065 = vadd.f32 %v2063, %v2064
  %v2066 = vsel %vm1751, %v1944, 0.0
  %v2067 = vadd.f32 %v2065, %v2066
  %v2068 = vsel %vm1751, %v1945, 0.0
  %v2069 = vadd.f32 %v2067, %v2068
  %v2070 = vsel %vm1751, %v1946, 0.0
  %v2071 = vadd.f32 %v2069, %v2070
  %v2072 = vsel %vm1751, %v1947, 0.0
  %v2073 = vadd.f32 %v2071, %v2072
  %v2074 = vsel %vm1751, %v1948, 0.0
  %v2075 = vadd.f32 %v2073, %v2074
  %v2076 = vrot.slane %v2075, 4
  %v2077 = vadd.f32 %v2075, %v2076
  %v2078 = vrot.slane %v2077, 2
  %v2079 = vadd.f32 %v2077, %v2078
  %v2080 = vrot.slane %v2079, 1
  %v2081 = vadd.f32 %v2079, %v2080
  %v2082 = vmul.f32 %v1884, 0.001953125
  %v2083 = vmul.f32 %v2081, 0.001953125
  %v2084 = vmul.f32 %v2082, %v2082
  %v2085 = vsub.f32 %v2083, %v2084
  %v2086 = vmax.f32 %v2085, 0.0
  %v2087 = vsub.f32 %v1433, %v2082
  %v2088 = vsub.f32 %v1438, %v2082
  %v2089 = vsub.f32 %v1443, %v2082
  %v2090 = vsub.f32 %v1448, %v2082
  %v2091 = vsub.f32 %v1453, %v2082
  %v2092 = vsub.f32 %v1458, %v2082
  %v2093 = vsub.f32 %v1463, %v2082
  %v2094 = vsub.f32 %v1468, %v2082
  %v2095 = vsub.f32 %v1473, %v2082
  %v2096 = vsub.f32 %v1478, %v2082
  %v2097 = vsub.f32 %v1483, %v2082
  %v2098 = vsub.f32 %v1488, %v2082
  %v2099 = vsub.f32 %v1493, %v2082
  %v2100 = vsub.f32 %v1498, %v2082
  %v2101 = vsub.f32 %v1503, %v2082
  %v2102 = vsub.f32 %v1508, %v2082
  %v2103 = vsub.f32 %v1513, %v2082
  %v2104 = vsub.f32 %v1518, %v2082
  %v2105 = vsub.f32 %v1523, %v2082
  %v2106 = vsub.f32 %v1528, %v2082
  %v2107 = vsub.f32 %v1533, %v2082
  %v2108 = vsub.f32 %v1538, %v2082
  %v2109 = vsub.f32 %v1543, %v2082
  %v2110 = vsub.f32 %v1548, %v2082
  %v2111 = vsub.f32 %v1553, %v2082
  %v2112 = vsub.f32 %v1558, %v2082
  %v2113 = vsub.f32 %v1563, %v2082
  %v2114 = vsub.f32 %v1568, %v2082
  %v2115 = vsub.f32 %v1573, %v2082
  %v2116 = vsub.f32 %v1578, %v2082
  %v2117 = vsub.f32 %v1583, %v2082
  %v2118 = vsub.f32 %v1588, %v2082
  %v2119 = vsub.f32 %v1593, %v2082
  %v2120 = vsub.f32 %v1598, %v2082
  %v2121 = vsub.f32 %v1603, %v2082
  %v2122 = vsub.f32 %v1608, %v2082
  %v2123 = vsub.f32 %v1613, %v2082
  %v2124 = vsub.f32 %v1618, %v2082
  %v2125 = vsub.f32 %v1623, %v2082
  %v2126 = vsub.f32 %v1628, %v2082
  %v2127 = vsub.f32 %v1633, %v2082
  %v2128 = vsub.f32 %v1638, %v2082
  %v2129 = vsub.f32 %v1643, %v2082
  %v2130 = vsub.f32 %v1648, %v2082
  %v2131 = vsub.f32 %v1653, %v2082
  %v2132 = vsub.f32 %v1658, %v2082
  %v2133 = vsub.f32 %v1663, %v2082
  %v2134 = vsub.f32 %v1668, %v2082
  %v2135 = vsub.f32 %v1673, %v2082
  %v2136 = vsub.f32 %v1678, %v2082
  %v2137 = vsub.f32 %v1683, %v2082
  %v2138 = vsub.f32 %v1688, %v2082
  %v2139 = vsub.f32 %v1693, %v2082
  %v2140 = vsub.f32 %v1698, %v2082
  %v2141 = vsub.f32 %v1703, %v2082
  %v2142 = vsub.f32 %v1708, %v2082
  %v2143 = vsub.f32 %v1713, %v2082
  %v2144 = vsub.f32 %v1718, %v2082
  %v2145 = vsub.f32 %v1723, %v2082
  %v2146 = vsub.f32 %v1728, %v2082
  %v2147 = vsub.f32 %v1733, %v2082
  %v2148 = vsub.f32 %v1738, %v2082
  %v2149 = vsub.f32 %v1743, %v2082
  %v2150 = vsub.f32 %v1748, %v2082
  %v2151 = vadd.f32 %v2086, 1e-05
  %v2152 = vrsqrt.pop %v2151
  %v2153 = vmul.f32 %v2087, %v2152
  %v2154 = vmul.f32 %v2088, %v2152
  %v2155 = vmul.f32 %v2089, %v2152
  %v2156 = vmul.f32 %v2090, %v2152
  %v2157 = vmul.f32 %v2091, %v2152
  %v2158 = vmul.f32 %v2092, %v2152
  %v2159 = vmul.f32 %v2093, %v2152
  %v2160 = vmul.f32 %v2094, %v2152
  %v2161 = vmul.f32 %v2095, %v2152
  %v2162 = vmul.f32 %v2096, %v2152
  %v2163 = vmul.f32 %v2097, %v2152
  %v2164 = vmul.f32 %v2098, %v2152
  %v2165 = vmul.f32 %v2099, %v2152
  %v2166 = vmul.f32 %v2100, %v2152
  %v2167 = vmul.f32 %v2101, %v2152
  %v2168 = vmul.f32 %v2102, %v2152
  %v2169 = vmul.f32 %v2103, %v2152
  %v2170 = vmul.f32 %v2104, %v2152
  %v2171 = vmul.f32 %v2105, %v2152
  %v2172 = vmul.f32 %v2106, %v2152
  %v2173 = vmul.f32 %v2107, %v2152
  %v2174 = vmul.f32 %v2108, %v2152
  %v2175 = vmul.f32 %v2109, %v2152
  %v2176 = vmul.f32 %v2110, %v2152
  %v2177 = vmul.f32 %v2111, %v2152
  %v2178 = vmul.f32 %v2112, %v2152
  %v2179 = vmul.f32 %v2113, %v2152
  %v2180 = vmul.f32 %v2114, %v2152
  %v2181 = vmul.f32 %v2115, %v2152
  %v2182 = vmul.f32 %v2116, %v2152
  %v2183 = vmul.f32 %v2117, %v2152
  %v2184 = vmul.f32 %v2118, %v2152
  %v2185 = vmul.f32 %v2119, %v2152
  %v2186 = vmul.f32 %v2120, %v2152
  %v2187 = vmul.f32 %v2121, %v2152
  %v2188 = vmul.f32 %v2122, %v2152
  %v2189 = vmul.f32 %v2123, %v2152
  %v2190 = vmul.f32 %v2124, %v2152
  %v2191 = vmul.f32 %v2125, %v2152
  %v2192 = vmul.f32 %v2126, %v2152
  %v2193 = vmul.f32 %v2127, %v2152
  %v2194 = vmul.f32 %v2128, %v2152
  %v2195 = vmul.f32 %v2129, %v2152
  %v2196 = vmul.f32 %v2130, %v2152
  %v2197 = vmul.f32 %v2131, %v2152
  %v2198 = vmul.f32 %v2132, %v2152
  %v2199 = vmul.f32 %v2133, %v2152
  %v2200 = vmul.f32 %v2134, %v2152
  %v2201 = vmul.f32 %v2135, %v2152
  %v2202 = vmul.f32 %v2136, %v2152
  %v2203 = vmul.f32 %v2137, %v2152
  %v2204 = vmul.f32 %v2138, %v2152
  %v2205 = vmul.f32 %v2139, %v2152
  %v2206 = vmul.f32 %v2140, %v2152
  %v2207 = vmul.f32 %v2141, %v2152
  %v2208 = vmul.f32 %v2142, %v2152
  %v2209 = vmul.f32 %v2143, %v2152
  %v2210 = vmul.f32 %v2144, %v2152
  %v2211 = vmul.f32 %v2145, %v2152
  %v2212 = vmul.f32 %v2146, %v2152
  %v2213 = vmul.f32 %v2147, %v2152
  %v2214 = vmul.f32 %v2148, %v2152
  %v2215 = vmul.f32 %v2149, %v2152
  %v2216 = vmul.f32 %v2150, %v2152
  %v2217 = vtanh.pop %v2153
  %v2218 = vtanh.pop %v2154
  %v2219 = vtanh.pop %v2155
  %v2220 = vtanh.pop %v2156
  %v2221 = vtanh.pop %v2157
  %v2222 = vtanh.pop %v2158
  %v2223 = vtanh.pop %v2159
  %v2224 = vtanh.pop %v2160
  %v2225 = vtanh.pop %v2161
  %v2226 = vtanh.pop %v2162
  %v2227 = vtanh.pop %v2163
  %v2228 = vtanh.pop %v2164
  %v2229 = vtanh.pop %v2165
  %v2230 = vtanh.pop %v2166
  %v2231 = vtanh.pop %v2167
  %v2232 = vtanh.pop %v2168
  %v2233 = vtanh.pop %v2169
  %v2234 = vtanh.pop %v2170
  %v2235 = vtanh.pop %v2171
  %v2236 = vtanh.pop %v2172
  %v2237 = vtanh.pop %v2173
  %v2238 = vtanh.pop %v2174
  %v2239 = vtanh.pop %v2175
  %v2240 = vtanh.pop %v2176
  %v2241 = vtanh.pop %v2177
  %v2242 = vtanh.pop %v2178
  %v2243 = vtanh.pop %v2179
  %v2244 = vtanh.pop %v2180
  %v2245 = vtanh.pop %v2181
  %v2246 = vtanh.pop %v2182
  %v2247 = vtanh.pop %v2183
  %v2248 = vtanh.pop %v2184
  %v2249 = vtanh.pop %v2185
  %v2250 = vtanh.pop %v2186
  %v2251 = vtanh.pop %v2187
  %v2252 = vtanh.pop %v2188
  %v2253 = vtanh.pop %v2189
  %v2254 = vtanh.pop %v2190
  %v2255 = vtanh.pop %v2191
  %v2256 = vtanh.pop %v2192
  %v2257 = vtanh.pop %v2193
  %v2258 = vtanh.pop %v2194
  %v2259 = vtanh.pop %v2195
  %v2260 = vtanh.pop %v2196
  %v2261 = vtanh.pop %v2197
  %v2262 = vtanh.pop %v2198
  %v2263 = vtanh.pop %v2199
  %v2264 = vtanh.pop %v2200
  %v2265 = vtanh.pop %v2201
  %v2266 = vtanh.pop %v2202
  %v2267 = vtanh.pop %v2203
  %v2268 = vtanh.pop %v2204
  %v2269 = vtanh.pop %v2205
  %v2270 = vtanh.pop %v2206
  %v2271 = vtanh.pop %v2207
  %v2272 = vtanh.pop %v2208
  %v2273 = vtanh.pop %v2209
  %v2274 = vtanh.pop %v2210
  %v2275 = vtanh.pop %v2211
  %v2276 = vtanh.pop %v2212
  %v2277 = vtanh.pop %v2213
  %v2278 = vtanh.pop %v2214
  %v2279 = vtanh.pop %v2215
  %v2280 = vtanh.pop %v2216
  %2281 = vst.msk [vmem:[%s2] sm:$0xff] %vm1751, %v2217
  %2282 = vst.msk [vmem:[%s2 + $0x8] sm:$0xff] %vm1751, %v2218
  %2283 = vst.msk [vmem:[%s2 + $0x10] sm:$0xff] %vm1751, %v2219
  %2284 = vst.msk [vmem:[%s2 + $0x18] sm:$0xff] %vm1751, %v2220
  %2285 = vst.msk [vmem:[%s2 + $0x20] sm:$0xff] %vm1751, %v2221
  %2286 = vst.msk [vmem:[%s2 + $0x28] sm:$0xff] %vm1751, %v2222
  %2287 = vst.msk [vmem:[%s2 + $0x30] sm:$0xff] %vm1751, %v2223
  %2288 = vst.msk [vmem:[%s2 + $0x38] sm:$0xff] %vm1751, %v2224
  %2289 = vst.msk [vmem:[%s2 + $0x40] sm:$0xff] %vm1751, %v2225
  %2290 = vst.msk [vmem:[%s2 + $0x48] sm:$0xff] %vm1751, %v2226
  %2291 = vst.msk [vmem:[%s2 + $0x50] sm:$0xff] %vm1751, %v2227
  %2292 = vst.msk [vmem:[%s2 + $0x58] sm:$0xff] %vm1751, %v2228
  %2293 = vst.msk [vmem:[%s2 + $0x60] sm:$0xff] %vm1751, %v2229
  %2294 = vst.msk [vmem:[%s2 + $0x68] sm:$0xff] %vm1751, %v2230
  %2295 = vst.msk [vmem:[%s2 + $0x70] sm:$0xff] %vm1751, %v2231
  %2296 = vst.msk [vmem:[%s2 + $0x78] sm:$0xff] %vm1751, %v2232
  %2297 = vst.msk [vmem:[%s2 + $0x80] sm:$0xff] %vm1751, %v2233
  %2298 = vst.msk [vmem:[%s2 + $0x88] sm:$0xff] %vm1751, %v2234
  %2299 = vst.msk [vmem:[%s2 + $0x90] sm:$0xff] %vm1751, %v2235
  %2300 = vst.msk [vmem:[%s2 + $0x98] sm:$0xff] %vm1751, %v2236
  %2301 = vst.msk [vmem:[%s2 + $0xa0] sm:$0xff] %vm1751, %v2237
  %2302 = vst.msk [vmem:[%s2 + $0xa8] sm:$0xff] %vm1751, %v2238
  %2303 = vst.msk [vmem:[%s2 + $0xb0] sm:$0xff] %vm1751, %v2239
  %2304 = vst.msk [vmem:[%s2 + $0xb8] sm:$0xff] %vm1751, %v2240
  %2305 = vst.msk [vmem:[%s2 + $0xc0] sm:$0xff] %vm1751, %v2241
  %2306 = vst.msk [vmem:[%s2 + $0xc8] sm:$0xff] %vm1751, %v2242
  %2307 = vst.msk [vmem:[%s2 + $0xd0] sm:$0xff] %vm1751, %v2243
  %2308 = vst.msk [vmem:[%s2 + $0xd8] sm:$0xff] %vm1751, %v2244
  %2309 = vst.msk [vmem:[%s2 + $0xe0] sm:$0xff] %vm1751, %v2245
  %2310 = vst.msk [vmem:[%s2 + $0xe8] sm:$0xff] %vm1751, %v2246
  %2311 = vst.msk [vmem:[%s2 + $0xf0] sm:$0xff] %vm1751, %v2247
  %2312 = vst.msk [vmem:[%s2 + $0xf8] sm:$0xff] %vm1751, %v2248
  %2313 = vst.msk [vmem:[%s2 + $0x100] sm:$0xff] %vm1751, %v2249
  %2314 = vst.msk [vmem:[%s2 + $0x108] sm:$0xff] %vm1751, %v2250
  %2315 = vst.msk [vmem:[%s2 + $0x110] sm:$0xff] %vm1751, %v2251
  %2316 = vst.msk [vmem:[%s2 + $0x118] sm:$0xff] %vm1751, %v2252
  %2317 = vst.msk [vmem:[%s2 + $0x120] sm:$0xff] %vm1751, %v2253
  %2318 = vst.msk [vmem:[%s2 + $0x128] sm:$0xff] %vm1751, %v2254
  %2319 = vst.msk [vmem:[%s2 + $0x130] sm:$0xff] %vm1751, %v2255
  %2320 = vst.msk [vmem:[%s2 + $0x138] sm:$0xff] %vm1751, %v2256
  %2321 = vst.msk [vmem:[%s2 + $0x140] sm:$0xff] %vm1751, %v2257
  %2322 = vst.msk [vmem:[%s2 + $0x148] sm:$0xff] %vm1751, %v2258
  %2323 = vst.msk [vmem:[%s2 + $0x150] sm:$0xff] %vm1751, %v2259
  %2324 = vst.msk [vmem:[%s2 + $0x158] sm:$0xff] %vm1751, %v2260
  %2325 = vst.msk [vmem:[%s2 + $0x160] sm:$0xff] %vm1751, %v2261
  %2326 = vst.msk [vmem:[%s2 + $0x168] sm:$0xff] %vm1751, %v2262
  %2327 = vst.msk [vmem:[%s2 + $0x170] sm:$0xff] %vm1751, %v2263
  %2328 = vst.msk [vmem:[%s2 + $0x178] sm:$0xff] %vm1751, %v2264
  %2329 = vst.msk [vmem:[%s2 + $0x180] sm:$0xff] %vm1751, %v2265
  %2330 = vst.msk [vmem:[%s2 + $0x188] sm:$0xff] %vm1751, %v2266
  %2331 = vst.msk [vmem:[%s2 + $0x190] sm:$0xff] %vm1751, %v2267
  %2332 = vst.msk [vmem:[%s2 + $0x198] sm:$0xff] %vm1751, %v2268
  %2333 = vst.msk [vmem:[%s2 + $0x1a0] sm:$0xff] %vm1751, %v2269
  %2334 = vst.msk [vmem:[%s2 + $0x1a8] sm:$0xff] %vm1751, %v2270
  %2335 = vst.msk [vmem:[%s2 + $0x1b0] sm:$0xff] %vm1751, %v2271
  %2336 = vst.msk [vmem:[%s2 + $0x1b8] sm:$0xff] %vm1751, %v2272
  %2337 = vst.msk [vmem:[%s2 + $0x1c0] sm:$0xff] %vm1751, %v2273
  %2338 = vst.msk [vmem:[%s2 + $0x1c8] sm:$0xff] %vm1751, %v2274
  %2339 = vst.msk [vmem:[%s2 + $0x1d0] sm:$0xff] %vm1751, %v2275
  %2340 = vst.msk [vmem:[%s2 + $0x1d8] sm:$0xff] %vm1751, %v2276
  %2341 = vst.msk [vmem:[%s2 + $0x1e0] sm:$0xff] %vm1751, %v2277
  %2342 = vst.msk [vmem:[%s2 + $0x1e8] sm:$0xff] %vm1751, %v2278
  %2343 = vst.msk [vmem:[%s2 + $0x1f0] sm:$0xff] %vm1751, %v2279
  %2344 = vst.msk [vmem:[%s2 + $0x1f8] sm:$0xff] %vm1751, %v2280
  // Predicated region
  $region10: #{vgg5_decoder_forward.6} parent=0 // pred_check
    _
  $region11: #{vgg5_decoder_forward.6} parent=0 // pred_check_branch
    %2346 = sbr.rel (0) target = $region13
  $region12: #{vgg5_decoder_forward.6} parent=0 // pred_region
    _
  $region13: #{vgg5_decoder_forward.6} parent=0 // pred_fallthru
    _
  // Predicated region
  $region14: #{vgg5_decoder_forward.6} parent=0 // pred_check
    _
  $region15: #{vgg5_decoder_forward.6} parent=0 // pred_check_branch
    %2348 = sbr.rel (0) target = $region17
  $region16: #{vgg5_decoder_forward.6} parent=0 // pred_region
    _
  $region17: #{vgg5_decoder_forward.6} parent=0 // pred_fallthru
    _

// kernel: vgg5_decoder_forward.7
$region0: #{vgg5_decoder_forward.7}
  #allocation0 [shape = 'u32[]', space=smem, size = 0x4, offset = 0x4, fixed_abs, tag = 'smem constant byte address 0x4 - core index']
  #allocation1 [shape = 'u32[144,128]{1,0:T(1,128)}', space=vmem, size = 0x12000, scoped, tag = 'internal scratch']
  %s0 = inlined_call_operand.vmem [shape: f32[2048,288], index: 0, kind: input, shape index: {}]
  %s1 = inlined_call_operand.vmem [shape: f32[288,128], index: 1, kind: input, shape index: {}]
  %s2 = inlined_call_operand.vmem [shape: f32[2048,128], index: 2, kind: output, shape index: {}]
  %s3 = sld [smem:[#allocation0]]
  $region18: #{vgg5_decoder_forward.7} parent=0
    _
  %s5 = ssub.s32 1, %s3
  %s6 = scalar_select 0, %s5, %s3
  // Predicated region
  $region2: #{vgg5_decoder_forward.7} parent=0 // pred_check
    _
  $region3: #{vgg5_decoder_forward.7} parent=0 // pred_check_branch
    %8 = sbr.rel (0) target = $region5
  $region4: #{vgg5_decoder_forward.7} parent=0 // pred_region
    _
  $region5: #{vgg5_decoder_forward.7} parent=0 // pred_fallthru
    _
  // Predicated region
  $region6: #{vgg5_decoder_forward.7} parent=0 // pred_check
    _
  $region7: #{vgg5_decoder_forward.7} parent=0 // pred_check_branch
    %10 = sbr.rel (0) target = $region9
  $region8: #{vgg5_decoder_forward.7} parent=0 // pred_region
    _
  $region9: #{vgg5_decoder_forward.7} parent=0 // pred_fallthru
    _
  %v11 = vld [vmem:[%s0] sm:$0xff]
  %v12 = vld [vmem:[%s0 + $0x8] sm:$0xff]
  %v13 = vld [vmem:[%s0 + $0x10] sm:$0xff]
  %v14 = vld [vmem:[%s0 + $0x18] sm:$0xff]
  %v15 = vld [vmem:[%s0 + $0x20] sm:$0xff]
  %v16 = vld [vmem:[%s0 + $0x28] sm:$0xff]
  %v17 = vld [vmem:[%s0 + $0x30] sm:$0xff]
  %v18 = vld [vmem:[%s0 + $0x38] sm:$0xff]
  %v19 = vld [vmem:[%s0 + $0x40] sm:$0xff]
  %v20 = vld [vmem:[%s0 + $0x48] sm:$0xff]
  %v21 = vld [vmem:[%s0 + $0x50] sm:$0xff]
  %v22 = vld [vmem:[%s0 + $0x58] sm:$0xff]
  %v23 = vld [vmem:[%s0 + $0x60] sm:$0xff]
  %v24 = vld [vmem:[%s0 + $0x68] sm:$0xff]
  %v25 = vld [vmem:[%s0 + $0x70] sm:$0xff]
  %v26 = vld [vmem:[%s0 + $0x78] sm:$0xff]
  %v27 = vld [vmem:[%s0 + $0x80] sm:$0xff]
  %v28 = vld [vmem:[%s0 + $0x88] sm:$0xff]
  %v29 = vld [vmem:[%s0 + $0x90] sm:$0xff]
  %v30 = vld [vmem:[%s0 + $0x98] sm:$0xff]
  %v31 = vld [vmem:[%s0 + $0xa0] sm:$0xff]
  %v32 = vld [vmem:[%s0 + $0xa8] sm:$0xff]
  %v33 = vld [vmem:[%s0 + $0xb0] sm:$0xff]
  %v34 = vld [vmem:[%s0 + $0xb8] sm:$0xff]
  %v35 = vld [vmem:[%s0 + $0xc0] sm:$0xff]
  %v36 = vld [vmem:[%s0 + $0xc8] sm:$0xff]
  %v37 = vld [vmem:[%s0 + $0xd0] sm:$0xff]
  %v38 = vld [vmem:[%s0 + $0xd8] sm:$0xff]
  %v39 = vld [vmem:[%s0 + $0xe0] sm:$0xff]
  %v40 = vld [vmem:[%s0 + $0xe8] sm:$0xff]
  %v41 = vld [vmem:[%s0 + $0xf0] sm:$0xff]
  %v42 = vld [vmem:[%s0 + $0xf8] sm:$0xff]
  %v43 = vld [vmem:[%s0 + $0x100] sm:$0xff]
  %v44 = vld [vmem:[%s0 + $0x108] sm:$0xff]
  %v45 = vld [vmem:[%s0 + $0x110] sm:$0xff]
  %v46 = vld [vmem:[%s0 + $0x118] sm:$0xff]
  %v47 = vld [vmem:[%s0 + $0x120] sm:$0xff]
  %v48 = vld [vmem:[%s0 + $0x128] sm:$0xff]
  %v49 = vld [vmem:[%s0 + $0x130] sm:$0xff]
  %v50 = vld [vmem:[%s0 + $0x138] sm:$0xff]
  %v51 = vld [vmem:[%s0 + $0x140] sm:$0xff]
  %v52 = vld [vmem:[%s0 + $0x148] sm:$0xff]
  %v53 = vld [vmem:[%s0 + $0x150] sm:$0xff]
  %v54 = vld [vmem:[%s0 + $0x158] sm:$0xff]
  %v55 = vld [vmem:[%s0 + $0x160] sm:$0xff]
  %v56 = vld [vmem:[%s0 + $0x168] sm:$0xff]
  %v57 = vld [vmem:[%s0 + $0x170] sm:$0xff]
  %v58 = vld [vmem:[%s0 + $0x178] sm:$0xff]
  %v59 = vld [vmem:[%s0 + $0x180] sm:$0xff]
  %v60 = vld [vmem:[%s0 + $0x188] sm:$0xff]
  %v61 = vld [vmem:[%s0 + $0x190] sm:$0xff]
  %v62 = vld [vmem:[%s0 + $0x198] sm:$0xff]
  %v63 = vld [vmem:[%s0 + $0x1a0] sm:$0xff]
  %v64 = vld [vmem:[%s0 + $0x1a8] sm:$0xff]
  %v65 = vld [vmem:[%s0 + $0x1b0] sm:$0xff]
  %v66 = vld [vmem:[%s0 + $0x1b8] sm:$0xff]
  %v67 = vld [vmem:[%s0 + $0x1c0] sm:$0xff]
  %v68 = vld [vmem:[%s0 + $0x1c8] sm:$0xff]
  %v69 = vld [vmem:[%s0 + $0x1d0] sm:$0xff]
  %v70 = vld [vmem:[%s0 + $0x1d8] sm:$0xff]
  %v71 = vld [vmem:[%s0 + $0x1e0] sm:$0xff]
  %v72 = vld [vmem:[%s0 + $0x1e8] sm:$0xff]
  %v73 = vld [vmem:[%s0 + $0x1f0] sm:$0xff]
  %v74 = vld [vmem:[%s0 + $0x1f8] sm:$0xff]
  %v75 = vld [vmem:[%s0 + $0x200] sm:$0xff]
  %v76 = vld [vmem:[%s0 + $0x208] sm:$0xff]
  %v77 = vld [vmem:[%s0 + $0x210] sm:$0xff]
  %v78 = vld [vmem:[%s0 + $0x218] sm:$0xff]
  %v79 = vld [vmem:[%s0 + $0x220] sm:$0xff]
  %v80 = vld [vmem:[%s0 + $0x228] sm:$0xff]
  %v81 = vld [vmem:[%s0 + $0x230] sm:$0xff]
  %v82 = vld [vmem:[%s0 + $0x238] sm:$0xff]
  %v83 = vld [vmem:[%s0 + $0x240] sm:$0xff]
  %v84 = vld [vmem:[%s0 + $0x248] sm:$0xff]
  %v85 = vld [vmem:[%s0 + $0x250] sm:$0xff]
  %v86 = vld [vmem:[%s0 + $0x258] sm:$0xff]
  %v87 = vld [vmem:[%s0 + $0x260] sm:$0xff]
  %v88 = vld [vmem:[%s0 + $0x268] sm:$0xff]
  %v89 = vld [vmem:[%s0 + $0x270] sm:$0xff]
  %v90 = vld [vmem:[%s0 + $0x278] sm:$0xff]
  %v91 = vld [vmem:[%s0 + $0x280] sm:$0xff]
  %v92 = vld [vmem:[%s0 + $0x288] sm:$0xff]
  %v93 = vld [vmem:[%s0 + $0x290] sm:$0xff]
  %v94 = vld [vmem:[%s0 + $0x298] sm:$0xff]
  %v95 = vld [vmem:[%s0 + $0x2a0] sm:$0xff]
  %v96 = vld [vmem:[%s0 + $0x2a8] sm:$0xff]
  %v97 = vld [vmem:[%s0 + $0x2b0] sm:$0xff]
  %v98 = vld [vmem:[%s0 + $0x2b8] sm:$0xff]
  %v99 = vld [vmem:[%s0 + $0x2c0] sm:$0xff]
  %v100 = vld [vmem:[%s0 + $0x2c8] sm:$0xff]
  %v101 = vld [vmem:[%s0 + $0x2d0] sm:$0xff]
  %v102 = vld [vmem:[%s0 + $0x2d8] sm:$0xff]
  %v103 = vld [vmem:[%s0 + $0x2e0] sm:$0xff]
  %v104 = vld [vmem:[%s0 + $0x2e8] sm:$0xff]
  %v105 = vld [vmem:[%s0 + $0x2f0] sm:$0xff]
  %v106 = vld [vmem:[%s0 + $0x2f8] sm:$0xff]
  %v107 = vld [vmem:[%s0 + $0x300] sm:$0xff]
  %v108 = vld [vmem:[%s0 + $0x308] sm:$0xff]
  %v109 = vld [vmem:[%s0 + $0x310] sm:$0xff]
  %v110 = vld [vmem:[%s0 + $0x318] sm:$0xff]
  %v111 = vld [vmem:[%s0 + $0x320] sm:$0xff]
  %v112 = vld [vmem:[%s0 + $0x328] sm:$0xff]
  %v113 = vld [vmem:[%s0 + $0x330] sm:$0xff]
  %v114 = vld [vmem:[%s0 + $0x338] sm:$0xff]
  %v115 = vld [vmem:[%s0 + $0x340] sm:$0xff]
  %v116 = vld [vmem:[%s0 + $0x348] sm:$0xff]
  %v117 = vld [vmem:[%s0 + $0x350] sm:$0xff]
  %v118 = vld [vmem:[%s0 + $0x358] sm:$0xff]
  %v119 = vld [vmem:[%s0 + $0x360] sm:$0xff]
  %v120 = vld [vmem:[%s0 + $0x368] sm:$0xff]
  %v121 = vld [vmem:[%s0 + $0x370] sm:$0xff]
  %v122 = vld [vmem:[%s0 + $0x378] sm:$0xff]
  %v123 = vld [vmem:[%s0 + $0x380] sm:$0xff]
  %v124 = vld [vmem:[%s0 + $0x388] sm:$0xff]
  %v125 = vld [vmem:[%s0 + $0x390] sm:$0xff]
  %v126 = vld [vmem:[%s0 + $0x398] sm:$0xff]
  %v127 = vld [vmem:[%s0 + $0x3a0] sm:$0xff]
  %v128 = vld [vmem:[%s0 + $0x3a8] sm:$0xff]
  %v129 = vld [vmem:[%s0 + $0x3b0] sm:$0xff]
  %v130 = vld [vmem:[%s0 + $0x3b8] sm:$0xff]
  %v131 = vld [vmem:[%s0 + $0x3c0] sm:$0xff]
  %v132 = vld [vmem:[%s0 + $0x3c8] sm:$0xff]
  %v133 = vld [vmem:[%s0 + $0x3d0] sm:$0xff]
  %v134 = vld [vmem:[%s0 + $0x3d8] sm:$0xff]
  %v135 = vld [vmem:[%s0 + $0x3e0] sm:$0xff]
  %v136 = vld [vmem:[%s0 + $0x3e8] sm:$0xff]
  %v137 = vld [vmem:[%s0 + $0x3f0] sm:$0xff]
  %v138 = vld [vmem:[%s0 + $0x3f8] sm:$0xff]
  %v139 = vld [vmem:[%s0 + $0x400] sm:$0xff]
  %v140 = vld [vmem:[%s0 + $0x408] sm:$0xff]
  %v141 = vld [vmem:[%s0 + $0x410] sm:$0xff]
  %v142 = vld [vmem:[%s0 + $0x418] sm:$0xff]
  %v143 = vld [vmem:[%s0 + $0x420] sm:$0xff]
  %v144 = vld [vmem:[%s0 + $0x428] sm:$0xff]
  %v145 = vld [vmem:[%s0 + $0x430] sm:$0xff]
  %v146 = vld [vmem:[%s0 + $0x438] sm:$0xff]
  %v147 = vld [vmem:[%s0 + $0x440] sm:$0xff]
  %v148 = vld [vmem:[%s0 + $0x448] sm:$0xff]
  %v149 = vld [vmem:[%s0 + $0x450] sm:$0xff]
  %v150 = vld [vmem:[%s0 + $0x458] sm:$0xff]
  %v151 = vld [vmem:[%s0 + $0x460] sm:$0xff]
  %v152 = vld [vmem:[%s0 + $0x468] sm:$0xff]
  %v153 = vld [vmem:[%s0 + $0x470] sm:$0xff]
  %v154 = vld [vmem:[%s0 + $0x478] sm:$0xff]
  %v155 = vld [vmem:[%s0 + $0x480] sm:$0xff]
  %v156 = vld [vmem:[%s0 + $0x488] sm:$0xff]
  %v157 = vld [vmem:[%s0 + $0x490] sm:$0xff]
  %v158 = vld [vmem:[%s0 + $0x498] sm:$0xff]
  %v159 = vld [vmem:[%s0 + $0x4a0] sm:$0xff]
  %v160 = vld [vmem:[%s0 + $0x4a8] sm:$0xff]
  %v161 = vld [vmem:[%s0 + $0x4b0] sm:$0xff]
  %v162 = vld [vmem:[%s0 + $0x4b8] sm:$0xff]
  %v163 = vld [vmem:[%s0 + $0x4c0] sm:$0xff]
  %v164 = vld [vmem:[%s0 + $0x4c8] sm:$0xff]
  %v165 = vld [vmem:[%s0 + $0x4d0] sm:$0xff]
  %v166 = vld [vmem:[%s0 + $0x4d8] sm:$0xff]
  %v167 = vld [vmem:[%s0 + $0x4e0] sm:$0xff]
  %v168 = vld [vmem:[%s0 + $0x4e8] sm:$0xff]
  %v169 = vld [vmem:[%s0 + $0x4f0] sm:$0xff]
  %v170 = vld [vmem:[%s0 + $0x4f8] sm:$0xff]
  %v171 = vld [vmem:[%s0 + $0x500] sm:$0xff]
  %v172 = vld [vmem:[%s0 + $0x508] sm:$0xff]
  %v173 = vld [vmem:[%s0 + $0x510] sm:$0xff]
  %v174 = vld [vmem:[%s0 + $0x518] sm:$0xff]
  %v175 = vld [vmem:[%s0 + $0x520] sm:$0xff]
  %v176 = vld [vmem:[%s0 + $0x528] sm:$0xff]
  %v177 = vld [vmem:[%s0 + $0x530] sm:$0xff]
  %v178 = vld [vmem:[%s0 + $0x538] sm:$0xff]
  %v179 = vld [vmem:[%s0 + $0x540] sm:$0xff]
  %v180 = vld [vmem:[%s0 + $0x548] sm:$0xff]
  %v181 = vld [vmem:[%s0 + $0x550] sm:$0xff]
  %v182 = vld [vmem:[%s0 + $0x558] sm:$0xff]
  %v183 = vld [vmem:[%s0 + $0x560] sm:$0xff]
  %v184 = vld [vmem:[%s0 + $0x568] sm:$0xff]
  %v185 = vld [vmem:[%s0 + $0x570] sm:$0xff]
  %v186 = vld [vmem:[%s0 + $0x578] sm:$0xff]
  %v187 = vld [vmem:[%s0 + $0x580] sm:$0xff]
  %v188 = vld [vmem:[%s0 + $0x588] sm:$0xff]
  %v189 = vld [vmem:[%s0 + $0x590] sm:$0xff]
  %v190 = vld [vmem:[%s0 + $0x598] sm:$0xff]
  %v191 = vld [vmem:[%s0 + $0x5a0] sm:$0xff]
  %v192 = vld [vmem:[%s0 + $0x5a8] sm:$0xff]
  %v193 = vld [vmem:[%s0 + $0x5b0] sm:$0xff]
  %v194 = vld [vmem:[%s0 + $0x5b8] sm:$0xff]
  %v195 = vld [vmem:[%s0 + $0x5c0] sm:$0xff]
  %v196 = vld [vmem:[%s0 + $0x5c8] sm:$0xff]
  %v197 = vld [vmem:[%s0 + $0x5d0] sm:$0xff]
  %v198 = vld [vmem:[%s0 + $0x5d8] sm:$0xff]
  %v199 = vld [vmem:[%s0 + $0x5e0] sm:$0xff]
  %v200 = vld [vmem:[%s0 + $0x5e8] sm:$0xff]
  %v201 = vld [vmem:[%s0 + $0x5f0] sm:$0xff]
  %v202 = vld [vmem:[%s0 + $0x5f8] sm:$0xff]
  %v203 = vld [vmem:[%s0 + $0x600] sm:$0xff]
  %v204 = vld [vmem:[%s0 + $0x608] sm:$0xff]
  %v205 = vld [vmem:[%s0 + $0x610] sm:$0xff]
  %v206 = vld [vmem:[%s0 + $0x618] sm:$0xff]
  %v207 = vld [vmem:[%s0 + $0x620] sm:$0xff]
  %v208 = vld [vmem:[%s0 + $0x628] sm:$0xff]
  %v209 = vld [vmem:[%s0 + $0x630] sm:$0xff]
  %v210 = vld [vmem:[%s0 + $0x638] sm:$0xff]
  %v211 = vld [vmem:[%s0 + $0x640] sm:$0xff]
  %v212 = vld [vmem:[%s0 + $0x648] sm:$0xff]
  %v213 = vld [vmem:[%s0 + $0x650] sm:$0xff]
  %v214 = vld [vmem:[%s0 + $0x658] sm:$0xff]
  %v215 = vld [vmem:[%s0 + $0x660] sm:$0xff]
  %v216 = vld [vmem:[%s0 + $0x668] sm:$0xff]
  %v217 = vld [vmem:[%s0 + $0x670] sm:$0xff]
  %v218 = vld [vmem:[%s0 + $0x678] sm:$0xff]
  %v219 = vld [vmem:[%s0 + $0x680] sm:$0xff]
  %v220 = vld [vmem:[%s0 + $0x688] sm:$0xff]
  %v221 = vld [vmem:[%s0 + $0x690] sm:$0xff]
  %v222 = vld [vmem:[%s0 + $0x698] sm:$0xff]
  %v223 = vld [vmem:[%s0 + $0x6a0] sm:$0xff]
  %v224 = vld [vmem:[%s0 + $0x6a8] sm:$0xff]
  %v225 = vld [vmem:[%s0 + $0x6b0] sm:$0xff]
  %v226 = vld [vmem:[%s0 + $0x6b8] sm:$0xff]
  %v227 = vld [vmem:[%s0 + $0x6c0] sm:$0xff]
  %v228 = vld [vmem:[%s0 + $0x6c8] sm:$0xff]
  %v229 = vld [vmem:[%s0 + $0x6d0] sm:$0xff]
  %v230 = vld [vmem:[%s0 + $0x6d8] sm:$0xff]
  %v231 = vld [vmem:[%s0 + $0x6e0] sm:$0xff]
  %v232 = vld [vmem:[%s0 + $0x6e8] sm:$0xff]
  %v233 = vld [vmem:[%s0 + $0x6f0] sm:$0xff]
  %v234 = vld [vmem:[%s0 + $0x6f8] sm:$0xff]
  %v235 = vld [vmem:[%s0 + $0x700] sm:$0xff]
  %v236 = vld [vmem:[%s0 + $0x708] sm:$0xff]
  %v237 = vld [vmem:[%s0 + $0x710] sm:$0xff]
  %v238 = vld [vmem:[%s0 + $0x718] sm:$0xff]
  %v239 = vld [vmem:[%s0 + $0x720] sm:$0xff]
  %v240 = vld [vmem:[%s0 + $0x728] sm:$0xff]
  %v241 = vld [vmem:[%s0 + $0x730] sm:$0xff]
  %v242 = vld [vmem:[%s0 + $0x738] sm:$0xff]
  %v243 = vld [vmem:[%s0 + $0x740] sm:$0xff]
  %v244 = vld [vmem:[%s0 + $0x748] sm:$0xff]
  %v245 = vld [vmem:[%s0 + $0x750] sm:$0xff]
  %v246 = vld [vmem:[%s0 + $0x758] sm:$0xff]
  %v247 = vld [vmem:[%s0 + $0x760] sm:$0xff]
  %v248 = vld [vmem:[%s0 + $0x768] sm:$0xff]
  %v249 = vld [vmem:[%s0 + $0x770] sm:$0xff]
  %v250 = vld [vmem:[%s0 + $0x778] sm:$0xff]
  %v251 = vld [vmem:[%s0 + $0x780] sm:$0xff]
  %v252 = vld [vmem:[%s0 + $0x788] sm:$0xff]
  %v253 = vld [vmem:[%s0 + $0x790] sm:$0xff]
  %v254 = vld [vmem:[%s0 + $0x798] sm:$0xff]
  %v255 = vld [vmem:[%s0 + $0x7a0] sm:$0xff]
  %v256 = vld [vmem:[%s0 + $0x7a8] sm:$0xff]
  %v257 = vld [vmem:[%s0 + $0x7b0] sm:$0xff]
  %v258 = vld [vmem:[%s0 + $0x7b8] sm:$0xff]
  %v259 = vld [vmem:[%s0 + $0x7c0] sm:$0xff]
  %v260 = vld [vmem:[%s0 + $0x7c8] sm:$0xff]
  %v261 = vld [vmem:[%s0 + $0x7d0] sm:$0xff]
  %v262 = vld [vmem:[%s0 + $0x7d8] sm:$0xff]
  %v263 = vld [vmem:[%s0 + $0x7e0] sm:$0xff]
  %v264 = vld [vmem:[%s0 + $0x7e8] sm:$0xff]
  %v265 = vld [vmem:[%s0 + $0x7f0] sm:$0xff]
  %v266 = vld [vmem:[%s0 + $0x7f8] sm:$0xff]
  %v267 = vld [vmem:[%s0 + $0x800] sm:$0xff]
  %v268 = vld [vmem:[%s0 + $0x808] sm:$0xff]
  %v269 = vld [vmem:[%s0 + $0x810] sm:$0xff]
  %v270 = vld [vmem:[%s0 + $0x818] sm:$0xff]
  %v271 = vld [vmem:[%s0 + $0x820] sm:$0xff]
  %v272 = vld [vmem:[%s0 + $0x828] sm:$0xff]
  %v273 = vld [vmem:[%s0 + $0x830] sm:$0xff]
  %v274 = vld [vmem:[%s0 + $0x838] sm:$0xff]
  %v275 = vld [vmem:[%s0 + $0x840] sm:$0xff]
  %v276 = vld [vmem:[%s0 + $0x848] sm:$0xff]
  %v277 = vld [vmem:[%s0 + $0x850] sm:$0xff]
  %v278 = vld [vmem:[%s0 + $0x858] sm:$0xff]
  %v279 = vld [vmem:[%s0 + $0x860] sm:$0xff]
  %v280 = vld [vmem:[%s0 + $0x868] sm:$0xff]
  %v281 = vld [vmem:[%s0 + $0x870] sm:$0xff]
  %v282 = vld [vmem:[%s0 + $0x878] sm:$0xff]
  %v283 = vld [vmem:[%s0 + $0x880] sm:$0xff]
  %v284 = vld [vmem:[%s0 + $0x888] sm:$0xff]
  %v285 = vld [vmem:[%s0 + $0x890] sm:$0xff]
  %v286 = vld [vmem:[%s0 + $0x898] sm:$0xff]
  %v287 = vld [vmem:[%s0 + $0x8a0] sm:$0xff]
  %v288 = vld [vmem:[%s0 + $0x8a8] sm:$0xff]
  %v289 = vld [vmem:[%s0 + $0x8b0] sm:$0xff]
  %v290 = vld [vmem:[%s0 + $0x8b8] sm:$0xff]
  %v291 = vld [vmem:[%s0 + $0x8c0] sm:$0xff]
  %v292 = vld [vmem:[%s0 + $0x8c8] sm:$0xff]
  %v293 = vld [vmem:[%s0 + $0x8d0] sm:$0xff]
  %v294 = vld [vmem:[%s0 + $0x8d8] sm:$0xff]
  %v295 = vld [vmem:[%s0 + $0x8e0] sm:$0xff]
  %v296 = vld [vmem:[%s0 + $0x8e8] sm:$0xff]
  %v297 = vld [vmem:[%s0 + $0x8f0] sm:$0xff]
  %v298 = vld [vmem:[%s0 + $0x8f8] sm:$0xff]
  %v299 = vld [vmem:[%s0 + $0x900] sm:$0xff]
  %v300 = vld [vmem:[%s0 + $0x908] sm:$0xff]
  %v301 = vld [vmem:[%s0 + $0x910] sm:$0xff]
  %v302 = vld [vmem:[%s0 + $0x918] sm:$0xff]
  %v303 = vld [vmem:[%s0 + $0x920] sm:$0xff]
  %v304 = vld [vmem:[%s0 + $0x928] sm:$0xff]
  %v305 = vld [vmem:[%s0 + $0x930] sm:$0xff]
  %v306 = vld [vmem:[%s0 + $0x938] sm:$0xff]
  %v307 = vld [vmem:[%s0 + $0x940] sm:$0xff]
  %v308 = vld [vmem:[%s0 + $0x948] sm:$0xff]
  %v309 = vld [vmem:[%s0 + $0x950] sm:$0xff]
  %v310 = vld [vmem:[%s0 + $0x958] sm:$0xff]
  %v311 = vld [vmem:[%s0 + $0x960] sm:$0xff]
  %v312 = vld [vmem:[%s0 + $0x968] sm:$0xff]
  %v313 = vld [vmem:[%s0 + $0x970] sm:$0xff]
  %v314 = vld [vmem:[%s0 + $0x978] sm:$0xff]
  %v315 = vld [vmem:[%s0 + $0x980] sm:$0xff]
  %v316 = vld [vmem:[%s0 + $0x988] sm:$0xff]
  %v317 = vld [vmem:[%s0 + $0x990] sm:$0xff]
  %v318 = vld [vmem:[%s0 + $0x998] sm:$0xff]
  %v319 = vld [vmem:[%s0 + $0x9a0] sm:$0xff]
  %v320 = vld [vmem:[%s0 + $0x9a8] sm:$0xff]
  %v321 = vld [vmem:[%s0 + $0x9b0] sm:$0xff]
  %v322 = vld [vmem:[%s0 + $0x9b8] sm:$0xff]
  %v323 = vld [vmem:[%s0 + $0x9c0] sm:$0xff]
  %v324 = vld [vmem:[%s0 + $0x9c8] sm:$0xff]
  %v325 = vld [vmem:[%s0 + $0x9d0] sm:$0xff]
  %v326 = vld [vmem:[%s0 + $0x9d8] sm:$0xff]
  %v327 = vld [vmem:[%s0 + $0x9e0] sm:$0xff]
  %v328 = vld [vmem:[%s0 + $0x9e8] sm:$0xff]
  %v329 = vld [vmem:[%s0 + $0x9f0] sm:$0xff]
  %v330 = vld [vmem:[%s0 + $0x9f8] sm:$0xff]
  %v331 = vld [vmem:[%s0 + $0xa00] sm:$0xff]
  %v332 = vld [vmem:[%s0 + $0xa08] sm:$0xff]
  %v333 = vld [vmem:[%s0 + $0xa10] sm:$0xff]
  %v334 = vld [vmem:[%s0 + $0xa18] sm:$0xff]
  %v335 = vld [vmem:[%s0 + $0xa20] sm:$0xff]
  %v336 = vld [vmem:[%s0 + $0xa28] sm:$0xff]
  %v337 = vld [vmem:[%s0 + $0xa30] sm:$0xff]
  %v338 = vld [vmem:[%s0 + $0xa38] sm:$0xff]
  %v339 = vld [vmem:[%s0 + $0xa40] sm:$0xff]
  %v340 = vld [vmem:[%s0 + $0xa48] sm:$0xff]
  %v341 = vld [vmem:[%s0 + $0xa50] sm:$0xff]
  %v342 = vld [vmem:[%s0 + $0xa58] sm:$0xff]
  %v343 = vld [vmem:[%s0 + $0xa60] sm:$0xff]
  %v344 = vld [vmem:[%s0 + $0xa68] sm:$0xff]
  %v345 = vld [vmem:[%s0 + $0xa70] sm:$0xff]
  %v346 = vld [vmem:[%s0 + $0xa78] sm:$0xff]
  %v347 = vld [vmem:[%s0 + $0xa80] sm:$0xff]
  %v348 = vld [vmem:[%s0 + $0xa88] sm:$0xff]
  %v349 = vld [vmem:[%s0 + $0xa90] sm:$0xff]
  %v350 = vld [vmem:[%s0 + $0xa98] sm:$0xff]
  %v351 = vld [vmem:[%s0 + $0xaa0] sm:$0xff]
  %v352 = vld [vmem:[%s0 + $0xaa8] sm:$0xff]
  %v353 = vld [vmem:[%s0 + $0xab0] sm:$0xff]
  %v354 = vld [vmem:[%s0 + $0xab8] sm:$0xff]
  %v355 = vld [vmem:[%s0 + $0xac0] sm:$0xff]
  %v356 = vld [vmem:[%s0 + $0xac8] sm:$0xff]
  %v357 = vld [vmem:[%s0 + $0xad0] sm:$0xff]
  %v358 = vld [vmem:[%s0 + $0xad8] sm:$0xff]
  %v359 = vld [vmem:[%s0 + $0xae0] sm:$0xff]
  %v360 = vld [vmem:[%s0 + $0xae8] sm:$0xff]
  %v361 = vld [vmem:[%s0 + $0xaf0] sm:$0xff]
  %v362 = vld [vmem:[%s0 + $0xaf8] sm:$0xff]
  %v363 = vld [vmem:[%s0 + $0xb00] sm:$0xff]
  %v364 = vld [vmem:[%s0 + $0xb08] sm:$0xff]
  %v365 = vld [vmem:[%s0 + $0xb10] sm:$0xff]
  %v366 = vld [vmem:[%s0 + $0xb18] sm:$0xff]
  %v367 = vld [vmem:[%s0 + $0xb20] sm:$0xff]
  %v368 = vld [vmem:[%s0 + $0xb28] sm:$0xff]
  %v369 = vld [vmem:[%s0 + $0xb30] sm:$0xff]
  %v370 = vld [vmem:[%s0 + $0xb38] sm:$0xff]
  %v371 = vld [vmem:[%s0 + $0xb40] sm:$0xff]
  %v372 = vld [vmem:[%s0 + $0xb48] sm:$0xff]
  %v373 = vld [vmem:[%s0 + $0xb50] sm:$0xff]
  %v374 = vld [vmem:[%s0 + $0xb58] sm:$0xff]
  %v375 = vld [vmem:[%s0 + $0xb60] sm:$0xff]
  %v376 = vld [vmem:[%s0 + $0xb68] sm:$0xff]
  %v377 = vld [vmem:[%s0 + $0xb70] sm:$0xff]
  %v378 = vld [vmem:[%s0 + $0xb78] sm:$0xff]
  %v379 = vld [vmem:[%s0 + $0xb80] sm:$0xff]
  %v380 = vld [vmem:[%s0 + $0xb88] sm:$0xff]
  %v381 = vld [vmem:[%s0 + $0xb90] sm:$0xff]
  %v382 = vld [vmem:[%s0 + $0xb98] sm:$0xff]
  %v383 = vld [vmem:[%s0 + $0xba0] sm:$0xff]
  %v384 = vld [vmem:[%s0 + $0xba8] sm:$0xff]
  %v385 = vld [vmem:[%s0 + $0xbb0] sm:$0xff]
  %v386 = vld [vmem:[%s0 + $0xbb8] sm:$0xff]
  %v387 = vld [vmem:[%s0 + $0xbc0] sm:$0xff]
  %v388 = vld [vmem:[%s0 + $0xbc8] sm:$0xff]
  %v389 = vld [vmem:[%s0 + $0xbd0] sm:$0xff]
  %v390 = vld [vmem:[%s0 + $0xbd8] sm:$0xff]
  %v391 = vld [vmem:[%s0 + $0xbe0] sm:$0xff]
  %v392 = vld [vmem:[%s0 + $0xbe8] sm:$0xff]
  %v393 = vld [vmem:[%s0 + $0xbf0] sm:$0xff]
  %v394 = vld [vmem:[%s0 + $0xbf8] sm:$0xff]
  %v395 = vld [vmem:[%s0 + $0xc00] sm:$0xff]
  %v396 = vld [vmem:[%s0 + $0xc08] sm:$0xff]
  %v397 = vld [vmem:[%s0 + $0xc10] sm:$0xff]
  %v398 = vld [vmem:[%s0 + $0xc18] sm:$0xff]
  %v399 = vld [vmem:[%s0 + $0xc20] sm:$0xff]
  %v400 = vld [vmem:[%s0 + $0xc28] sm:$0xff]
  %v401 = vld [vmem:[%s0 + $0xc30] sm:$0xff]
  %v402 = vld [vmem:[%s0 + $0xc38] sm:$0xff]
  %v403 = vld [vmem:[%s0 + $0xc40] sm:$0xff]
  %v404 = vld [vmem:[%s0 + $0xc48] sm:$0xff]
  %v405 = vld [vmem:[%s0 + $0xc50] sm:$0xff]
  %v406 = vld [vmem:[%s0 + $0xc58] sm:$0xff]
  %v407 = vld [vmem:[%s0 + $0xc60] sm:$0xff]
  %v408 = vld [vmem:[%s0 + $0xc68] sm:$0xff]
  %v409 = vld [vmem:[%s0 + $0xc70] sm:$0xff]
  %v410 = vld [vmem:[%s0 + $0xc78] sm:$0xff]
  %v411 = vld [vmem:[%s0 + $0xc80] sm:$0xff]
  %v412 = vld [vmem:[%s0 + $0xc88] sm:$0xff]
  %v413 = vld [vmem:[%s0 + $0xc90] sm:$0xff]
  %v414 = vld [vmem:[%s0 + $0xc98] sm:$0xff]
  %v415 = vld [vmem:[%s0 + $0xca0] sm:$0xff]
  %v416 = vld [vmem:[%s0 + $0xca8] sm:$0xff]
  %v417 = vld [vmem:[%s0 + $0xcb0] sm:$0xff]
  %v418 = vld [vmem:[%s0 + $0xcb8] sm:$0xff]
  %v419 = vld [vmem:[%s0 + $0xcc0] sm:$0xff]
  %v420 = vld [vmem:[%s0 + $0xcc8] sm:$0xff]
  %v421 = vld [vmem:[%s0 + $0xcd0] sm:$0xff]
  %v422 = vld [vmem:[%s0 + $0xcd8] sm:$0xff]
  %v423 = vld [vmem:[%s0 + $0xce0] sm:$0xff]
  %v424 = vld [vmem:[%s0 + $0xce8] sm:$0xff]
  %v425 = vld [vmem:[%s0 + $0xcf0] sm:$0xff]
  %v426 = vld [vmem:[%s0 + $0xcf8] sm:$0xff]
  %v427 = vld [vmem:[%s0 + $0xd00] sm:$0xff]
  %v428 = vld [vmem:[%s0 + $0xd08] sm:$0xff]
  %v429 = vld [vmem:[%s0 + $0xd10] sm:$0xff]
  %v430 = vld [vmem:[%s0 + $0xd18] sm:$0xff]
  %v431 = vld [vmem:[%s0 + $0xd20] sm:$0xff]
  %v432 = vld [vmem:[%s0 + $0xd28] sm:$0xff]
  %v433 = vld [vmem:[%s0 + $0xd30] sm:$0xff]
  %v434 = vld [vmem:[%s0 + $0xd38] sm:$0xff]
  %v435 = vld [vmem:[%s0 + $0xd40] sm:$0xff]
  %v436 = vld [vmem:[%s0 + $0xd48] sm:$0xff]
  %v437 = vld [vmem:[%s0 + $0xd50] sm:$0xff]
  %v438 = vld [vmem:[%s0 + $0xd58] sm:$0xff]
  %v439 = vld [vmem:[%s0 + $0xd60] sm:$0xff]
  %v440 = vld [vmem:[%s0 + $0xd68] sm:$0xff]
  %v441 = vld [vmem:[%s0 + $0xd70] sm:$0xff]
  %v442 = vld [vmem:[%s0 + $0xd78] sm:$0xff]
  %v443 = vld [vmem:[%s0 + $0xd80] sm:$0xff]
  %v444 = vld [vmem:[%s0 + $0xd88] sm:$0xff]
  %v445 = vld [vmem:[%s0 + $0xd90] sm:$0xff]
  %v446 = vld [vmem:[%s0 + $0xd98] sm:$0xff]
  %v447 = vld [vmem:[%s0 + $0xda0] sm:$0xff]
  %v448 = vld [vmem:[%s0 + $0xda8] sm:$0xff]
  %v449 = vld [vmem:[%s0 + $0xdb0] sm:$0xff]
  %v450 = vld [vmem:[%s0 + $0xdb8] sm:$0xff]
  %v451 = vld [vmem:[%s0 + $0xdc0] sm:$0xff]
  %v452 = vld [vmem:[%s0 + $0xdc8] sm:$0xff]
  %v453 = vld [vmem:[%s0 + $0xdd0] sm:$0xff]
  %v454 = vld [vmem:[%s0 + $0xdd8] sm:$0xff]
  %v455 = vld [vmem:[%s0 + $0xde0] sm:$0xff]
  %v456 = vld [vmem:[%s0 + $0xde8] sm:$0xff]
  %v457 = vld [vmem:[%s0 + $0xdf0] sm:$0xff]
  %v458 = vld [vmem:[%s0 + $0xdf8] sm:$0xff]
  %v459 = vld [vmem:[%s0 + $0xe00] sm:$0xff]
  %v460 = vld [vmem:[%s0 + $0xe08] sm:$0xff]
  %v461 = vld [vmem:[%s0 + $0xe10] sm:$0xff]
  %v462 = vld [vmem:[%s0 + $0xe18] sm:$0xff]
  %v463 = vld [vmem:[%s0 + $0xe20] sm:$0xff]
  %v464 = vld [vmem:[%s0 + $0xe28] sm:$0xff]
  %v465 = vld [vmem:[%s0 + $0xe30] sm:$0xff]
  %v466 = vld [vmem:[%s0 + $0xe38] sm:$0xff]
  %v467 = vld [vmem:[%s0 + $0xe40] sm:$0xff]
  %v468 = vld [vmem:[%s0 + $0xe48] sm:$0xff]
  %v469 = vld [vmem:[%s0 + $0xe50] sm:$0xff]
  %v470 = vld [vmem:[%s0 + $0xe58] sm:$0xff]
  %v471 = vld [vmem:[%s0 + $0xe60] sm:$0xff]
  %v472 = vld [vmem:[%s0 + $0xe68] sm:$0xff]
  %v473 = vld [vmem:[%s0 + $0xe70] sm:$0xff]
  %v474 = vld [vmem:[%s0 + $0xe78] sm:$0xff]
  %v475 = vld [vmem:[%s0 + $0xe80] sm:$0xff]
  %v476 = vld [vmem:[%s0 + $0xe88] sm:$0xff]
  %v477 = vld [vmem:[%s0 + $0xe90] sm:$0xff]
  %v478 = vld [vmem:[%s0 + $0xe98] sm:$0xff]
  %v479 = vld [vmem:[%s0 + $0xea0] sm:$0xff]
  %v480 = vld [vmem:[%s0 + $0xea8] sm:$0xff]
  %v481 = vld [vmem:[%s0 + $0xeb0] sm:$0xff]
  %v482 = vld [vmem:[%s0 + $0xeb8] sm:$0xff]
  %v483 = vld [vmem:[%s0 + $0xec0] sm:$0xff]
  %v484 = vld [vmem:[%s0 + $0xec8] sm:$0xff]
  %v485 = vld [vmem:[%s0 + $0xed0] sm:$0xff]
  %v486 = vld [vmem:[%s0 + $0xed8] sm:$0xff]
  %v487 = vld [vmem:[%s0 + $0xee0] sm:$0xff]
  %v488 = vld [vmem:[%s0 + $0xee8] sm:$0xff]
  %v489 = vld [vmem:[%s0 + $0xef0] sm:$0xff]
  %v490 = vld [vmem:[%s0 + $0xef8] sm:$0xff]
  %v491 = vld [vmem:[%s0 + $0xf00] sm:$0xff]
  %v492 = vld [vmem:[%s0 + $0xf08] sm:$0xff]
  %v493 = vld [vmem:[%s0 + $0xf10] sm:$0xff]
  %v494 = vld [vmem:[%s0 + $0xf18] sm:$0xff]
  %v495 = vld [vmem:[%s0 + $0xf20] sm:$0xff]
  %v496 = vld [vmem:[%s0 + $0xf28] sm:$0xff]
  %v497 = vld [vmem:[%s0 + $0xf30] sm:$0xff]
  %v498 = vld [vmem:[%s0 + $0xf38] sm:$0xff]
  %v499 = vld [vmem:[%s0 + $0xf40] sm:$0xff]
  %v500 = vld [vmem:[%s0 + $0xf48] sm:$0xff]
  %v501 = vld [vmem:[%s0 + $0xf50] sm:$0xff]
  %v502 = vld [vmem:[%s0 + $0xf58] sm:$0xff]
  %v503 = vld [vmem:[%s0 + $0xf60] sm:$0xff]
  %v504 = vld [vmem:[%s0 + $0xf68] sm:$0xff]
  %v505 = vld [vmem:[%s0 + $0xf70] sm:$0xff]
  %v506 = vld [vmem:[%s0 + $0xf78] sm:$0xff]
  %v507 = vld [vmem:[%s0 + $0xf80] sm:$0xff]
  %v508 = vld [vmem:[%s0 + $0xf88] sm:$0xff]
  %v509 = vld [vmem:[%s0 + $0xf90] sm:$0xff]
  %v510 = vld [vmem:[%s0 + $0xf98] sm:$0xff]
  %v511 = vld [vmem:[%s0 + $0xfa0] sm:$0xff]
  %v512 = vld [vmem:[%s0 + $0xfa8] sm:$0xff]
  %v513 = vld [vmem:[%s0 + $0xfb0] sm:$0xff]
  %v514 = vld [vmem:[%s0 + $0xfb8] sm:$0xff]
  %v515 = vld [vmem:[%s0 + $0xfc0] sm:$0xff]
  %v516 = vld [vmem:[%s0 + $0xfc8] sm:$0xff]
  %v517 = vld [vmem:[%s0 + $0xfd0] sm:$0xff]
  %v518 = vld [vmem:[%s0 + $0xfd8] sm:$0xff]
  %v519 = vld [vmem:[%s0 + $0xfe0] sm:$0xff]
  %v520 = vld [vmem:[%s0 + $0xfe8] sm:$0xff]
  %v521 = vld [vmem:[%s0 + $0xff0] sm:$0xff]
  %v522 = vld [vmem:[%s0 + $0xff8] sm:$0xff]
  %v523 = vld [vmem:[%s0 + $0x1000] sm:$0xff]
  %v524 = vld [vmem:[%s0 + $0x1008] sm:$0xff]
  %v525 = vld [vmem:[%s0 + $0x1010] sm:$0xff]
  %v526 = vld [vmem:[%s0 + $0x1018] sm:$0xff]
  %v527 = vld [vmem:[%s0 + $0x1020] sm:$0xff]
  %v528 = vld [vmem:[%s0 + $0x1028] sm:$0xff]
  %v529 = vld [vmem:[%s0 + $0x1030] sm:$0xff]
  %v530 = vld [vmem:[%s0 + $0x1038] sm:$0xff]
  %v531 = vld [vmem:[%s0 + $0x1040] sm:$0xff]
  %v532 = vld [vmem:[%s0 + $0x1048] sm:$0xff]
  %v533 = vld [vmem:[%s0 + $0x1050] sm:$0xff]
  %v534 = vld [vmem:[%s0 + $0x1058] sm:$0xff]
  %v535 = vld [vmem:[%s0 + $0x1060] sm:$0xff]
  %v536 = vld [vmem:[%s0 + $0x1068] sm:$0xff]
  %v537 = vld [vmem:[%s0 + $0x1070] sm:$0xff]
  %v538 = vld [vmem:[%s0 + $0x1078] sm:$0xff]
  %v539 = vld [vmem:[%s0 + $0x1080] sm:$0xff]
  %v540 = vld [vmem:[%s0 + $0x1088] sm:$0xff]
  %v541 = vld [vmem:[%s0 + $0x1090] sm:$0xff]
  %v542 = vld [vmem:[%s0 + $0x1098] sm:$0xff]
  %v543 = vld [vmem:[%s0 + $0x10a0] sm:$0xff]
  %v544 = vld [vmem:[%s0 + $0x10a8] sm:$0xff]
  %v545 = vld [vmem:[%s0 + $0x10b0] sm:$0xff]
  %v546 = vld [vmem:[%s0 + $0x10b8] sm:$0xff]
  %v547 = vld [vmem:[%s0 + $0x10c0] sm:$0xff]
  %v548 = vld [vmem:[%s0 + $0x10c8] sm:$0xff]
  %v549 = vld [vmem:[%s0 + $0x10d0] sm:$0xff]
  %v550 = vld [vmem:[%s0 + $0x10d8] sm:$0xff]
  %v551 = vld [vmem:[%s0 + $0x10e0] sm:$0xff]
  %v552 = vld [vmem:[%s0 + $0x10e8] sm:$0xff]
  %v553 = vld [vmem:[%s0 + $0x10f0] sm:$0xff]
  %v554 = vld [vmem:[%s0 + $0x10f8] sm:$0xff]
  %v555 = vld [vmem:[%s0 + $0x1100] sm:$0xff]
  %v556 = vld [vmem:[%s0 + $0x1108] sm:$0xff]
  %v557 = vld [vmem:[%s0 + $0x1110] sm:$0xff]
  %v558 = vld [vmem:[%s0 + $0x1118] sm:$0xff]
  %v559 = vld [vmem:[%s0 + $0x1120] sm:$0xff]
  %v560 = vld [vmem:[%s0 + $0x1128] sm:$0xff]
  %v561 = vld [vmem:[%s0 + $0x1130] sm:$0xff]
  %v562 = vld [vmem:[%s0 + $0x1138] sm:$0xff]
  %v563 = vld [vmem:[%s0 + $0x1140] sm:$0xff]
  %v564 = vld [vmem:[%s0 + $0x1148] sm:$0xff]
  %v565 = vld [vmem:[%s0 + $0x1150] sm:$0xff]
  %v566 = vld [vmem:[%s0 + $0x1158] sm:$0xff]
  %v567 = vld [vmem:[%s0 + $0x1160] sm:$0xff]
  %v568 = vld [vmem:[%s0 + $0x1168] sm:$0xff]
  %v569 = vld [vmem:[%s0 + $0x1170] sm:$0xff]
  %v570 = vld [vmem:[%s0 + $0x1178] sm:$0xff]
  %v571 = vld [vmem:[%s0 + $0x1180] sm:$0xff]
  %v572 = vld [vmem:[%s0 + $0x1188] sm:$0xff]
  %v573 = vld [vmem:[%s0 + $0x1190] sm:$0xff]
  %v574 = vld [vmem:[%s0 + $0x1198] sm:$0xff]
  %v575 = vld [vmem:[%s0 + $0x11a0] sm:$0xff]
  %v576 = vld [vmem:[%s0 + $0x11a8] sm:$0xff]
  %v577 = vld [vmem:[%s0 + $0x11b0] sm:$0xff]
  %v578 = vld [vmem:[%s0 + $0x11b8] sm:$0xff]
  %v579 = vld [vmem:[%s0 + $0x11c0] sm:$0xff]
  %v580 = vld [vmem:[%s0 + $0x11c8] sm:$0xff]
  %v581 = vld [vmem:[%s0 + $0x11d0] sm:$0xff]
  %v582 = vld [vmem:[%s0 + $0x11d8] sm:$0xff]
  %v583 = vld [vmem:[%s0 + $0x11e0] sm:$0xff]
  %v584 = vld [vmem:[%s0 + $0x11e8] sm:$0xff]
  %v585 = vld [vmem:[%s0 + $0x11f0] sm:$0xff]
  %v586 = vld [vmem:[%s0 + $0x11f8] sm:$0xff]
  %v587 = vld [vmem:[%s0 + $0x1200] sm:$0xff]
  %v588 = vld [vmem:[%s0 + $0x1208] sm:$0xff]
  %v589 = vld [vmem:[%s0 + $0x1210] sm:$0xff]
  %v590 = vld [vmem:[%s0 + $0x1218] sm:$0xff]
  %v591 = vld [vmem:[%s0 + $0x1220] sm:$0xff]
  %v592 = vld [vmem:[%s0 + $0x1228] sm:$0xff]
  %v593 = vld [vmem:[%s0 + $0x1230] sm:$0xff]
  %v594 = vld [vmem:[%s0 + $0x1238] sm:$0xff]
  %v595 = vld [vmem:[%s0 + $0x1240] sm:$0xff]
  %v596 = vld [vmem:[%s0 + $0x1248] sm:$0xff]
  %v597 = vld [vmem:[%s0 + $0x1250] sm:$0xff]
  %v598 = vld [vmem:[%s0 + $0x1258] sm:$0xff]
  %v599 = vld [vmem:[%s0 + $0x1260] sm:$0xff]
  %v600 = vld [vmem:[%s0 + $0x1268] sm:$0xff]
  %v601 = vld [vmem:[%s0 + $0x1270] sm:$0xff]
  %v602 = vld [vmem:[%s0 + $0x1278] sm:$0xff]
  %v603 = vld [vmem:[%s0 + $0x1280] sm:$0xff]
  %v604 = vld [vmem:[%s0 + $0x1288] sm:$0xff]
  %v605 = vld [vmem:[%s0 + $0x1290] sm:$0xff]
  %v606 = vld [vmem:[%s0 + $0x1298] sm:$0xff]
  %v607 = vld [vmem:[%s0 + $0x12a0] sm:$0xff]
  %v608 = vld [vmem:[%s0 + $0x12a8] sm:$0xff]
  %v609 = vld [vmem:[%s0 + $0x12b0] sm:$0xff]
  %v610 = vld [vmem:[%s0 + $0x12b8] sm:$0xff]
  %v611 = vld [vmem:[%s0 + $0x12c0] sm:$0xff]
  %v612 = vld [vmem:[%s0 + $0x12c8] sm:$0xff]
  %v613 = vld [vmem:[%s0 + $0x12d0] sm:$0xff]
  %v614 = vld [vmem:[%s0 + $0x12d8] sm:$0xff]
  %v615 = vld [vmem:[%s0 + $0x12e0] sm:$0xff]
  %v616 = vld [vmem:[%s0 + $0x12e8] sm:$0xff]
  %v617 = vld [vmem:[%s0 + $0x12f0] sm:$0xff]
  %v618 = vld [vmem:[%s0 + $0x12f8] sm:$0xff]
  %v619 = vld [vmem:[%s0 + $0x1300] sm:$0xff]
  %v620 = vld [vmem:[%s0 + $0x1308] sm:$0xff]
  %v621 = vld [vmem:[%s0 + $0x1310] sm:$0xff]
  %v622 = vld [vmem:[%s0 + $0x1318] sm:$0xff]
  %v623 = vld [vmem:[%s0 + $0x1320] sm:$0xff]
  %v624 = vld [vmem:[%s0 + $0x1328] sm:$0xff]
  %v625 = vld [vmem:[%s0 + $0x1330] sm:$0xff]
  %v626 = vld [vmem:[%s0 + $0x1338] sm:$0xff]
  %v627 = vld [vmem:[%s0 + $0x1340] sm:$0xff]
  %v628 = vld [vmem:[%s0 + $0x1348] sm:$0xff]
  %v629 = vld [vmem:[%s0 + $0x1350] sm:$0xff]
  %v630 = vld [vmem:[%s0 + $0x1358] sm:$0xff]
  %v631 = vld [vmem:[%s0 + $0x1360] sm:$0xff]
  %v632 = vld [vmem:[%s0 + $0x1368] sm:$0xff]
  %v633 = vld [vmem:[%s0 + $0x1370] sm:$0xff]
  %v634 = vld [vmem:[%s0 + $0x1378] sm:$0xff]
  %v635 = vld [vmem:[%s0 + $0x1380] sm:$0xff]
  %v636 = vld [vmem:[%s0 + $0x1388] sm:$0xff]
  %v637 = vld [vmem:[%s0 + $0x1390] sm:$0xff]
  %v638 = vld [vmem:[%s0 + $0x1398] sm:$0xff]
  %v639 = vld [vmem:[%s0 + $0x13a0] sm:$0xff]
  %v640 = vld [vmem:[%s0 + $0x13a8] sm:$0xff]
  %v641 = vld [vmem:[%s0 + $0x13b0] sm:$0xff]
  %v642 = vld [vmem:[%s0 + $0x13b8] sm:$0xff]
  %v643 = vld [vmem:[%s0 + $0x13c0] sm:$0xff]
  %v644 = vld [vmem:[%s0 + $0x13c8] sm:$0xff]
  %v645 = vld [vmem:[%s0 + $0x13d0] sm:$0xff]
  %v646 = vld [vmem:[%s0 + $0x13d8] sm:$0xff]
  %v647 = vld [vmem:[%s0 + $0x13e0] sm:$0xff]
  %v648 = vld [vmem:[%s0 + $0x13e8] sm:$0xff]
  %v649 = vld [vmem:[%s0 + $0x13f0] sm:$0xff]
  %v650 = vld [vmem:[%s0 + $0x13f8] sm:$0xff]
  %v651 = vld [vmem:[%s0 + $0x1400] sm:$0xff]
  %v652 = vld [vmem:[%s0 + $0x1408] sm:$0xff]
  %v653 = vld [vmem:[%s0 + $0x1410] sm:$0xff]
  %v654 = vld [vmem:[%s0 + $0x1418] sm:$0xff]
  %v655 = vld [vmem:[%s0 + $0x1420] sm:$0xff]
  %v656 = vld [vmem:[%s0 + $0x1428] sm:$0xff]
  %v657 = vld [vmem:[%s0 + $0x1430] sm:$0xff]
  %v658 = vld [vmem:[%s0 + $0x1438] sm:$0xff]
  %v659 = vld [vmem:[%s0 + $0x1440] sm:$0xff]
  %v660 = vld [vmem:[%s0 + $0x1448] sm:$0xff]
  %v661 = vld [vmem:[%s0 + $0x1450] sm:$0xff]
  %v662 = vld [vmem:[%s0 + $0x1458] sm:$0xff]
  %v663 = vld [vmem:[%s0 + $0x1460] sm:$0xff]
  %v664 = vld [vmem:[%s0 + $0x1468] sm:$0xff]
  %v665 = vld [vmem:[%s0 + $0x1470] sm:$0xff]
  %v666 = vld [vmem:[%s0 + $0x1478] sm:$0xff]
  %v667 = vld [vmem:[%s0 + $0x1480] sm:$0xff]
  %v668 = vld [vmem:[%s0 + $0x1488] sm:$0xff]
  %v669 = vld [vmem:[%s0 + $0x1490] sm:$0xff]
  %v670 = vld [vmem:[%s0 + $0x1498] sm:$0xff]
  %v671 = vld [vmem:[%s0 + $0x14a0] sm:$0xff]
  %v672 = vld [vmem:[%s0 + $0x14a8] sm:$0xff]
  %v673 = vld [vmem:[%s0 + $0x14b0] sm:$0xff]
  %v674 = vld [vmem:[%s0 + $0x14b8] sm:$0xff]
  %v675 = vld [vmem:[%s0 + $0x14c0] sm:$0xff]
  %v676 = vld [vmem:[%s0 + $0x14c8] sm:$0xff]
  %v677 = vld [vmem:[%s0 + $0x14d0] sm:$0xff]
  %v678 = vld [vmem:[%s0 + $0x14d8] sm:$0xff]
  %v679 = vld [vmem:[%s0 + $0x14e0] sm:$0xff]
  %v680 = vld [vmem:[%s0 + $0x14e8] sm:$0xff]
  %v681 = vld [vmem:[%s0 + $0x14f0] sm:$0xff]
  %v682 = vld [vmem:[%s0 + $0x14f8] sm:$0xff]
  %v683 = vld [vmem:[%s0 + $0x1500] sm:$0xff]
  %v684 = vld [vmem:[%s0 + $0x1508] sm:$0xff]
  %v685 = vld [vmem:[%s0 + $0x1510] sm:$0xff]
  %v686 = vld [vmem:[%s0 + $0x1518] sm:$0xff]
  %v687 = vld [vmem:[%s0 + $0x1520] sm:$0xff]
  %v688 = vld [vmem:[%s0 + $0x1528] sm:$0xff]
  %v689 = vld [vmem:[%s0 + $0x1530] sm:$0xff]
  %v690 = vld [vmem:[%s0 + $0x1538] sm:$0xff]
  %v691 = vld [vmem:[%s0 + $0x1540] sm:$0xff]
  %v692 = vld [vmem:[%s0 + $0x1548] sm:$0xff]
  %v693 = vld [vmem:[%s0 + $0x1550] sm:$0xff]
  %v694 = vld [vmem:[%s0 + $0x1558] sm:$0xff]
  %v695 = vld [vmem:[%s0 + $0x1560] sm:$0xff]
  %v696 = vld [vmem:[%s0 + $0x1568] sm:$0xff]
  %v697 = vld [vmem:[%s0 + $0x1570] sm:$0xff]
  %v698 = vld [vmem:[%s0 + $0x1578] sm:$0xff]
  %v699 = vld [vmem:[%s0 + $0x1580] sm:$0xff]
  %v700 = vld [vmem:[%s0 + $0x1588] sm:$0xff]
  %v701 = vld [vmem:[%s0 + $0x1590] sm:$0xff]
  %v702 = vld [vmem:[%s0 + $0x1598] sm:$0xff]
  %v703 = vld [vmem:[%s0 + $0x15a0] sm:$0xff]
  %v704 = vld [vmem:[%s0 + $0x15a8] sm:$0xff]
  %v705 = vld [vmem:[%s0 + $0x15b0] sm:$0xff]
  %v706 = vld [vmem:[%s0 + $0x15b8] sm:$0xff]
  %v707 = vld [vmem:[%s0 + $0x15c0] sm:$0xff]
  %v708 = vld [vmem:[%s0 + $0x15c8] sm:$0xff]
  %v709 = vld [vmem:[%s0 + $0x15d0] sm:$0xff]
  %v710 = vld [vmem:[%s0 + $0x15d8] sm:$0xff]
  %v711 = vld [vmem:[%s0 + $0x15e0] sm:$0xff]
  %v712 = vld [vmem:[%s0 + $0x15e8] sm:$0xff]
  %v713 = vld [vmem:[%s0 + $0x15f0] sm:$0xff]
  %v714 = vld [vmem:[%s0 + $0x15f8] sm:$0xff]
  %v715 = vld [vmem:[%s0 + $0x1600] sm:$0xff]
  %v716 = vld [vmem:[%s0 + $0x1608] sm:$0xff]
  %v717 = vld [vmem:[%s0 + $0x1610] sm:$0xff]
  %v718 = vld [vmem:[%s0 + $0x1618] sm:$0xff]
  %v719 = vld [vmem:[%s0 + $0x1620] sm:$0xff]
  %v720 = vld [vmem:[%s0 + $0x1628] sm:$0xff]
  %v721 = vld [vmem:[%s0 + $0x1630] sm:$0xff]
  %v722 = vld [vmem:[%s0 + $0x1638] sm:$0xff]
  %v723 = vld [vmem:[%s0 + $0x1640] sm:$0xff]
  %v724 = vld [vmem:[%s0 + $0x1648] sm:$0xff]
  %v725 = vld [vmem:[%s0 + $0x1650] sm:$0xff]
  %v726 = vld [vmem:[%s0 + $0x1658] sm:$0xff]
  %v727 = vld [vmem:[%s0 + $0x1660] sm:$0xff]
  %v728 = vld [vmem:[%s0 + $0x1668] sm:$0xff]
  %v729 = vld [vmem:[%s0 + $0x1670] sm:$0xff]
  %v730 = vld [vmem:[%s0 + $0x1678] sm:$0xff]
  %v731 = vld [vmem:[%s0 + $0x1680] sm:$0xff]
  %v732 = vld [vmem:[%s0 + $0x1688] sm:$0xff]
  %v733 = vld [vmem:[%s0 + $0x1690] sm:$0xff]
  %v734 = vld [vmem:[%s0 + $0x1698] sm:$0xff]
  %v735 = vld [vmem:[%s0 + $0x16a0] sm:$0xff]
  %v736 = vld [vmem:[%s0 + $0x16a8] sm:$0xff]
  %v737 = vld [vmem:[%s0 + $0x16b0] sm:$0xff]
  %v738 = vld [vmem:[%s0 + $0x16b8] sm:$0xff]
  %v739 = vld [vmem:[%s0 + $0x16c0] sm:$0xff]
  %v740 = vld [vmem:[%s0 + $0x16c8] sm:$0xff]
  %v741 = vld [vmem:[%s0 + $0x16d0] sm:$0xff]
  %v742 = vld [vmem:[%s0 + $0x16d8] sm:$0xff]
  %v743 = vld [vmem:[%s0 + $0x16e0] sm:$0xff]
  %v744 = vld [vmem:[%s0 + $0x16e8] sm:$0xff]
  %v745 = vld [vmem:[%s0 + $0x16f0] sm:$0xff]
  %v746 = vld [vmem:[%s0 + $0x16f8] sm:$0xff]
  %v747 = vld [vmem:[%s0 + $0x1700] sm:$0xff]
  %v748 = vld [vmem:[%s0 + $0x1708] sm:$0xff]
  %v749 = vld [vmem:[%s0 + $0x1710] sm:$0xff]
  %v750 = vld [vmem:[%s0 + $0x1718] sm:$0xff]
  %v751 = vld [vmem:[%s0 + $0x1720] sm:$0xff]
  %v752 = vld [vmem:[%s0 + $0x1728] sm:$0xff]
  %v753 = vld [vmem:[%s0 + $0x1730] sm:$0xff]
  %v754 = vld [vmem:[%s0 + $0x1738] sm:$0xff]
  %v755 = vld [vmem:[%s0 + $0x1740] sm:$0xff]
  %v756 = vld [vmem:[%s0 + $0x1748] sm:$0xff]
  %v757 = vld [vmem:[%s0 + $0x1750] sm:$0xff]
  %v758 = vld [vmem:[%s0 + $0x1758] sm:$0xff]
  %v759 = vld [vmem:[%s0 + $0x1760] sm:$0xff]
  %v760 = vld [vmem:[%s0 + $0x1768] sm:$0xff]
  %v761 = vld [vmem:[%s0 + $0x1770] sm:$0xff]
  %v762 = vld [vmem:[%s0 + $0x1778] sm:$0xff]
  %v763 = vld [vmem:[%s0 + $0x1780] sm:$0xff]
  %v764 = vld [vmem:[%s0 + $0x1788] sm:$0xff]
  %v765 = vld [vmem:[%s0 + $0x1790] sm:$0xff]
  %v766 = vld [vmem:[%s0 + $0x1798] sm:$0xff]
  %v767 = vld [vmem:[%s0 + $0x17a0] sm:$0xff]
  %v768 = vld [vmem:[%s0 + $0x17a8] sm:$0xff]
  %v769 = vld [vmem:[%s0 + $0x17b0] sm:$0xff]
  %v770 = vld [vmem:[%s0 + $0x17b8] sm:$0xff]
  %v771 = vld [vmem:[%s0 + $0x17c0] sm:$0xff]
  %v772 = vld [vmem:[%s0 + $0x17c8] sm:$0xff]
  %v773 = vld [vmem:[%s0 + $0x17d0] sm:$0xff]
  %v774 = vld [vmem:[%s0 + $0x17d8] sm:$0xff]
  %v775 = vld [vmem:[%s0 + $0x17e0] sm:$0xff]
  %v776 = vld [vmem:[%s0 + $0x17e8] sm:$0xff]
  %v777 = vld [vmem:[%s0 + $0x17f0] sm:$0xff]
  %v778 = vld [vmem:[%s0 + $0x17f8] sm:$0xff]
  %v779 = vld [vmem:[%s1] sm:$0xff]
  %v780 = vld [vmem:[%s1 + $0x8] sm:$0xff]
  %v781 = vld [vmem:[%s1 + $0x10] sm:$0xff]
  %v782 = vld [vmem:[%s1 + $0x18] sm:$0xff]
  %v783 = vld [vmem:[%s1 + $0x20] sm:$0xff]
  %v784 = vld [vmem:[%s1 + $0x28] sm:$0xff]
  %v785 = vld [vmem:[%s1 + $0x30] sm:$0xff]
  %v786 = vld [vmem:[%s1 + $0x38] sm:$0xff]
  %v787 = vld [vmem:[%s1 + $0x40] sm:$0xff]
  %v788 = vld [vmem:[%s1 + $0x48] sm:$0xff]
  %v789 = vld [vmem:[%s1 + $0x50] sm:$0xff]
  %v790 = vld [vmem:[%s1 + $0x58] sm:$0xff]
  %v791 = vld [vmem:[%s1 + $0x60] sm:$0xff]
  %v792 = vld [vmem:[%s1 + $0x68] sm:$0xff]
  %v793 = vld [vmem:[%s1 + $0x70] sm:$0xff]
  %v794 = vld [vmem:[%s1 + $0x78] sm:$0xff]
  %v795 = vld [vmem:[%s1 + $0x80] sm:$0xff]
  %v796 = vld [vmem:[%s1 + $0x88] sm:$0xff]
  %v797 = vld [vmem:[%s1 + $0x90] sm:$0xff]
  %v798 = vld [vmem:[%s1 + $0x98] sm:$0xff]
  %v799 = vld [vmem:[%s1 + $0xa0] sm:$0xff]
  %v800 = vld [vmem:[%s1 + $0xa8] sm:$0xff]
  %v801 = vld [vmem:[%s1 + $0xb0] sm:$0xff]
  %v802 = vld [vmem:[%s1 + $0xb8] sm:$0xff]
  %v803 = vld [vmem:[%s1 + $0xc0] sm:$0xff]
  %v804 = vld [vmem:[%s1 + $0xc8] sm:$0xff]
  %v805 = vld [vmem:[%s1 + $0xd0] sm:$0xff]
  %v806 = vld [vmem:[%s1 + $0xd8] sm:$0xff]
  %v807 = vld [vmem:[%s1 + $0xe0] sm:$0xff]
  %v808 = vld [vmem:[%s1 + $0xe8] sm:$0xff]
  %v809 = vld [vmem:[%s1 + $0xf0] sm:$0xff]
  %v810 = vld [vmem:[%s1 + $0xf8] sm:$0xff]
  %v811 = vld [vmem:[%s1 + $0x100] sm:$0xff]
  %v812 = vld [vmem:[%s1 + $0x108] sm:$0xff]
  %v813 = vld [vmem:[%s1 + $0x110] sm:$0xff]
  %v814 = vld [vmem:[%s1 + $0x118] sm:$0xff]
  %vm815 = vcmask 261120
  %v817 = vsel %vm815, %v13, 0
  %v820 = vsel %vm815, %v16, 0
  %v823 = vsel %vm815, %v19, 0
  %v826 = vsel %vm815, %v22, 0
  %v829 = vsel %vm815, %v25, 0
  %v832 = vsel %vm815, %v28, 0
  %v835 = vsel %vm815, %v31, 0
  %v838 = vsel %vm815, %v34, 0
  %v841 = vsel %vm815, %v37, 0
  %v844 = vsel %vm815, %v40, 0
  %v847 = vsel %vm815, %v43, 0
  %v850 = vsel %vm815, %v46, 0
  %v853 = vsel %vm815, %v49, 0
  %v856 = vsel %vm815, %v52, 0
  %v859 = vsel %vm815, %v55, 0
  %v862 = vsel %vm815, %v58, 0
  %v865 = vsel %vm815, %v61, 0
  %v868 = vsel %vm815, %v64, 0
  %v871 = vsel %vm815, %v67, 0
  %v874 = vsel %vm815, %v70, 0
  %v877 = vsel %vm815, %v73, 0
  %v880 = vsel %vm815, %v76, 0
  %v883 = vsel %vm815, %v79, 0
  %v886 = vsel %vm815, %v82, 0
  %v889 = vsel %vm815, %v85, 0
  %v892 = vsel %vm815, %v88, 0
  %v895 = vsel %vm815, %v91, 0
  %v898 = vsel %vm815, %v94, 0
  %v901 = vsel %vm815, %v97, 0
  %v904 = vsel %vm815, %v100, 0
  %v907 = vsel %vm815, %v103, 0
  %v910 = vsel %vm815, %v106, 0
  %v913 = vsel %vm815, %v109, 0
  %v916 = vsel %vm815, %v112, 0
  %v919 = vsel %vm815, %v115, 0
  %v922 = vsel %vm815, %v118, 0
  %v925 = vsel %vm815, %v121, 0
  %v928 = vsel %vm815, %v124, 0
  %v931 = vsel %vm815, %v127, 0
  %v934 = vsel %vm815, %v130, 0
  %v937 = vsel %vm815, %v133, 0
  %v940 = vsel %vm815, %v136, 0
  %v943 = vsel %vm815, %v139, 0
  %v946 = vsel %vm815, %v142, 0
  %v949 = vsel %vm815, %v145, 0
  %v952 = vsel %vm815, %v148, 0
  %v955 = vsel %vm815, %v151, 0
  %v958 = vsel %vm815, %v154, 0
  %v961 = vsel %vm815, %v157, 0
  %v964 = vsel %vm815, %v160, 0
  %v967 = vsel %vm815, %v163, 0
  %v970 = vsel %vm815, %v166, 0
  %v973 = vsel %vm815, %v169, 0
  %v976 = vsel %vm815, %v172, 0
  %v979 = vsel %vm815, %v175, 0
  %v982 = vsel %vm815, %v178, 0
  %v985 = vsel %vm815, %v181, 0
  %v988 = vsel %vm815, %v184, 0
  %v991 = vsel %vm815, %v187, 0
  %v994 = vsel %vm815, %v190, 0
  %v997 = vsel %vm815, %v193, 0
  %v1000 = vsel %vm815, %v196, 0
  %v1003 = vsel %vm815, %v199, 0
  %v1006 = vsel %vm815, %v202, 0
  %v1009 = vsel %vm815, %v205, 0
  %v1012 = vsel %vm815, %v208, 0
  %v1015 = vsel %vm815, %v211, 0
  %v1018 = vsel %vm815, %v214, 0
  %v1021 = vsel %vm815, %v217, 0
  %v1024 = vsel %vm815, %v220, 0
  %v1027 = vsel %vm815, %v223, 0
  %v1030 = vsel %vm815, %v226, 0
  %v1033 = vsel %vm815, %v229, 0
  %v1036 = vsel %vm815, %v232, 0
  %v1039 = vsel %vm815, %v235, 0
  %v1042 = vsel %vm815, %v238, 0
  %v1045 = vsel %vm815, %v241, 0
  %v1048 = vsel %vm815, %v244, 0
  %v1051 = vsel %vm815, %v247, 0
  %v1054 = vsel %vm815, %v250, 0
  %v1057 = vsel %vm815, %v253, 0
  %v1060 = vsel %vm815, %v256, 0
  %v1063 = vsel %vm815, %v259, 0
  %v1066 = vsel %vm815, %v262, 0
  %v1069 = vsel %vm815, %v265, 0
  %v1072 = vsel %vm815, %v268, 0
  %v1075 = vsel %vm815, %v271, 0
  %v1078 = vsel %vm815, %v274, 0
  %v1081 = vsel %vm815, %v277, 0
  %v1084 = vsel %vm815, %v280, 0
  %v1087 = vsel %vm815, %v283, 0
  %v1090 = vsel %vm815, %v286, 0
  %v1093 = vsel %vm815, %v289, 0
  %v1096 = vsel %vm815, %v292, 0
  %v1099 = vsel %vm815, %v295, 0
  %v1102 = vsel %vm815, %v298, 0
  %v1105 = vsel %vm815, %v301, 0
  %v1108 = vsel %vm815, %v304, 0
  %v1111 = vsel %vm815, %v307, 0
  %v1114 = vsel %vm815, %v310, 0
  %v1117 = vsel %vm815, %v313, 0
  %v1120 = vsel %vm815, %v316, 0
  %v1123 = vsel %vm815, %v319, 0
  %v1126 = vsel %vm815, %v322, 0
  %v1129 = vsel %vm815, %v325, 0
  %v1132 = vsel %vm815, %v328, 0
  %v1135 = vsel %vm815, %v331, 0
  %v1138 = vsel %vm815, %v334, 0
  %v1141 = vsel %vm815, %v337, 0
  %v1144 = vsel %vm815, %v340, 0
  %v1147 = vsel %vm815, %v343, 0
  %v1150 = vsel %vm815, %v346, 0
  %v1153 = vsel %vm815, %v349, 0
  %v1156 = vsel %vm815, %v352, 0
  %v1159 = vsel %vm815, %v355, 0
  %v1162 = vsel %vm815, %v358, 0
  %v1165 = vsel %vm815, %v361, 0
  %v1168 = vsel %vm815, %v364, 0
  %v1171 = vsel %vm815, %v367, 0
  %v1174 = vsel %vm815, %v370, 0
  %v1177 = vsel %vm815, %v373, 0
  %v1180 = vsel %vm815, %v376, 0
  %v1183 = vsel %vm815, %v379, 0
  %v1186 = vsel %vm815, %v382, 0
  %v1189 = vsel %vm815, %v385, 0
  %v1192 = vsel %vm815, %v388, 0
  %v1195 = vsel %vm815, %v391, 0
  %v1198 = vsel %vm815, %v394, 0
  %v1201 = vsel %vm815, %v397, 0
  %v1204 = vsel %vm815, %v400, 0
  %v1207 = vsel %vm815, %v403, 0
  %v1210 = vsel %vm815, %v406, 0
  %v1213 = vsel %vm815, %v409, 0
  %v1216 = vsel %vm815, %v412, 0
  %v1219 = vsel %vm815, %v415, 0
  %v1222 = vsel %vm815, %v418, 0
  %v1225 = vsel %vm815, %v421, 0
  %v1228 = vsel %vm815, %v424, 0
  %v1231 = vsel %vm815, %v427, 0
  %v1234 = vsel %vm815, %v430, 0
  %v1237 = vsel %vm815, %v433, 0
  %v1240 = vsel %vm815, %v436, 0
  %v1243 = vsel %vm815, %v439, 0
  %v1246 = vsel %vm815, %v442, 0
  %v1249 = vsel %vm815, %v445, 0
  %v1252 = vsel %vm815, %v448, 0
  %v1255 = vsel %vm815, %v451, 0
  %v1258 = vsel %vm815, %v454, 0
  %v1261 = vsel %vm815, %v457, 0
  %v1264 = vsel %vm815, %v460, 0
  %v1267 = vsel %vm815, %v463, 0
  %v1270 = vsel %vm815, %v466, 0
  %v1273 = vsel %vm815, %v469, 0
  %v1276 = vsel %vm815, %v472, 0
  %v1279 = vsel %vm815, %v475, 0
  %v1282 = vsel %vm815, %v478, 0
  %v1285 = vsel %vm815, %v481, 0
  %v1288 = vsel %vm815, %v484, 0
  %v1291 = vsel %vm815, %v487, 0
  %v1294 = vsel %vm815, %v490, 0
  %v1297 = vsel %vm815, %v493, 0
  %v1300 = vsel %vm815, %v496, 0
  %v1303 = vsel %vm815, %v499, 0
  %v1306 = vsel %vm815, %v502, 0
  %v1309 = vsel %vm815, %v505, 0
  %v1312 = vsel %vm815, %v508, 0
  %v1315 = vsel %vm815, %v511, 0
  %v1318 = vsel %vm815, %v514, 0
  %v1321 = vsel %vm815, %v517, 0
  %v1324 = vsel %vm815, %v520, 0
  %v1327 = vsel %vm815, %v523, 0
  %v1330 = vsel %vm815, %v526, 0
  %v1333 = vsel %vm815, %v529, 0
  %v1336 = vsel %vm815, %v532, 0
  %v1339 = vsel %vm815, %v535, 0
  %v1342 = vsel %vm815, %v538, 0
  %v1345 = vsel %vm815, %v541, 0
  %v1348 = vsel %vm815, %v544, 0
  %v1351 = vsel %vm815, %v547, 0
  %v1354 = vsel %vm815, %v550, 0
  %v1357 = vsel %vm815, %v553, 0
  %v1360 = vsel %vm815, %v556, 0
  %v1363 = vsel %vm815, %v559, 0
  %v1366 = vsel %vm815, %v562, 0
  %v1369 = vsel %vm815, %v565, 0
  %v1372 = vsel %vm815, %v568, 0
  %v1375 = vsel %vm815, %v571, 0
  %v1378 = vsel %vm815, %v574, 0
  %v1381 = vsel %vm815, %v577, 0
  %v1384 = vsel %vm815, %v580, 0
  %v1387 = vsel %vm815, %v583, 0
  %v1390 = vsel %vm815, %v586, 0
  %v1393 = vsel %vm815, %v589, 0
  %v1396 = vsel %vm815, %v592, 0
  %v1399 = vsel %vm815, %v595, 0
  %v1402 = vsel %vm815, %v598, 0
  %v1405 = vsel %vm815, %v601, 0
  %v1408 = vsel %vm815, %v604, 0
  %v1411 = vsel %vm815, %v607, 0
  %v1414 = vsel %vm815, %v610, 0
  %v1417 = vsel %vm815, %v613, 0
  %v1420 = vsel %vm815, %v616, 0
  %v1423 = vsel %vm815, %v619, 0
  %v1426 = vsel %vm815, %v622, 0
  %v1429 = vsel %vm815, %v625, 0
  %v1432 = vsel %vm815, %v628, 0
  %v1435 = vsel %vm815, %v631, 0
  %v1438 = vsel %vm815, %v634, 0
  %v1441 = vsel %vm815, %v637, 0
  %v1444 = vsel %vm815, %v640, 0
  %v1447 = vsel %vm815, %v643, 0
  %v1450 = vsel %vm815, %v646, 0
  %v1453 = vsel %vm815, %v649, 0
  %v1456 = vsel %vm815, %v652, 0
  %v1459 = vsel %vm815, %v655, 0
  %v1462 = vsel %vm815, %v658, 0
  %v1465 = vsel %vm815, %v661, 0
  %v1468 = vsel %vm815, %v664, 0
  %v1471 = vsel %vm815, %v667, 0
  %v1474 = vsel %vm815, %v670, 0
  %v1477 = vsel %vm815, %v673, 0
  %v1480 = vsel %vm815, %v676, 0
  %v1483 = vsel %vm815, %v679, 0
  %v1486 = vsel %vm815, %v682, 0
  %v1489 = vsel %vm815, %v685, 0
  %v1492 = vsel %vm815, %v688, 0
  %v1495 = vsel %vm815, %v691, 0
  %v1498 = vsel %vm815, %v694, 0
  %v1501 = vsel %vm815, %v697, 0
  %v1504 = vsel %vm815, %v700, 0
  %v1507 = vsel %vm815, %v703, 0
  %v1510 = vsel %vm815, %v706, 0
  %v1513 = vsel %vm815, %v709, 0
  %v1516 = vsel %vm815, %v712, 0
  %v1519 = vsel %vm815, %v715, 0
  %v1522 = vsel %vm815, %v718, 0
  %v1525 = vsel %vm815, %v721, 0
  %v1528 = vsel %vm815, %v724, 0
  %v1531 = vsel %vm815, %v727, 0
  %v1534 = vsel %vm815, %v730, 0
  %v1537 = vsel %vm815, %v733, 0
  %v1540 = vsel %vm815, %v736, 0
  %v1543 = vsel %vm815, %v739, 0
  %v1546 = vsel %vm815, %v742, 0
  %v1549 = vsel %vm815, %v745, 0
  %v1552 = vsel %vm815, %v748, 0
  %v1555 = vsel %vm815, %v751, 0
  %v1558 = vsel %vm815, %v754, 0
  %v1561 = vsel %vm815, %v757, 0
  %v1564 = vsel %vm815, %v760, 0
  %v1567 = vsel %vm815, %v763, 0
  %v1570 = vsel %vm815, %v766, 0
  %v1573 = vsel %vm815, %v769, 0
  %v1576 = vsel %vm815, %v772, 0
  %v1579 = vsel %vm815, %v775, 0
  %v1582 = vsel %vm815, %v778, 0
  %1584 = vmatprep.subr.mxu0 0.0
  %1585 = vmatpush1.msra.mxu0 %v779
  %1586 = vmatprep.subr.mxu0 0.0
  %1587 = vmatpush1.msra.mxu0 %v780
  %1588 = vmatprep.subr.mxu0 0.0
  %1589 = vmatpush1.msra.mxu0 %v781
  %1590 = vmatprep.subr.mxu0 0.0
  %1591 = vmatpush1.msra.mxu0 %v782
  %1592 = vmatprep.subr.mxu0 0.0
  %1593 = vmatpush1.msra.mxu0 %v783
  %1594 = vmatprep.subr.mxu0 0.0
  %1595 = vmatpush1.msra.mxu0 %v784
  %1596 = vmatprep.subr.mxu0 0.0
  %1597 = vmatpush1.msra.mxu0 %v785
  %1598 = vmatprep.subr.mxu0 0.0
  %1599 = vmatpush1.msra.mxu0 %v786
  %1600 = vmatprep.subr.mxu0 0.0
  %1601 = vmatpush1.msra.mxu0 %v787
  %1602 = vmatprep.subr.mxu0 0.0
  %1603 = vmatpush1.msra.mxu0 %v788
  %1604 = vmatprep.subr.mxu0 0.0
  %1605 = vmatpush1.msra.mxu0 %v789
  %1606 = vmatprep.subr.mxu0 0.0
  %1607 = vmatpush1.msra.mxu0 %v790
  %1608 = vmatprep.subr.mxu0 0.0
  %1609 = vmatpush1.msra.mxu0 %v791
  %1610 = vmatprep.subr.mxu0 0.0
  %1611 = vmatpush1.msra.mxu0 %v792
  %1612 = vmatprep.subr.mxu0 0.0
  %1613 = vmatpush1.msra.mxu0 %v793
  %1614 = vmatprep.subr.mxu0 0.0
  %1615 = vmatpush1.msra.mxu0 %v794
  %1616 = vmatprep.subr.mxu0 0.0
  %1617 = vmatpush1.msra.mxu0 %v795
  %1618 = vmatprep.subr.mxu0 0.0
  %1619 = vmatpush1.msra.mxu0 %v796
  %1620 = vmatprep.subr.mxu0 0.0
  %1621 = vmatpush1.msra.mxu0 %v797
  %1622 = vmatprep.subr.mxu0 0.0
  %1623 = vmatpush1.msra.mxu0 %v798
  %1624 = vmatprep.subr.mxu0 0.0
  %1625 = vmatpush1.msra.mxu0 %v799
  %1626 = vmatprep.subr.mxu0 0.0
  %1627 = vmatpush1.msra.mxu0 %v800
  %1628 = vmatprep.subr.mxu0 0.0
  %1629 = vmatpush1.msra.mxu0 %v801
  %1630 = vmatprep.subr.mxu0 0.0
  %1631 = vmatpush1.msra.mxu0 %v802
  %1632 = vmatprep.subr.mxu0 0.0
  %1633 = vmatpush1.msra.mxu0 %v803
  %1634 = vmatprep.subr.mxu0 0.0
  %1635 = vmatpush1.msra.mxu0 %v804
  %1636 = vmatprep.subr.mxu0 0.0
  %1637 = vmatpush1.msra.mxu0 %v805
  %1638 = vmatprep.subr.mxu0 0.0
  %1639 = vmatpush1.msra.mxu0 %v806
  %1640 = vmatprep.subr.mxu0 0.0
  %1641 = vmatpush1.msra.mxu0 %v807
  %1642 = vmatprep.subr.mxu0 0.0
  %1643 = vmatpush1.msra.mxu0 %v808
  %1644 = vmatprep.subr.mxu0 0.0
  %1645 = vmatpush1.msra.mxu0 %v809
  %1646 = vmatprep.subr.mxu0 0.0
  %1647 = vmatpush1.msra.mxu0 %v810
  %1648 = vmatprep.mubr.f32.mxu0 %v12
  %1649 = vmatmul.mubr.f32.gmra.mrb[0].mxu0 %v11
  %v1650 = vpop.f32.mrb[0].mxu0
  %v1651 = vadd.f32 0.0, %v1650
  %v1652 = vpop.f32.mrb[0].mxu0
  %1653 = vmatprep.mubr.f32.mxu0 %v15
  %1654 = vmatmul.mubr.f32.gmra.mrb[0].mxu0 %v14
  %v1655 = vpop.f32.mrb[0].mxu0
  %v1656 = vadd.f32 0.0, %v1655
  %v1657 = vpop.f32.mrb[0].mxu0
  %1658 = vmatprep.mubr.f32.mxu0 %v18
  %1659 = vmatmul.mubr.f32.gmra.mrb[0].mxu0 %v17
  %v1660 = vpop.f32.mrb[0].mxu0
  %v1661 = vadd.f32 0.0, %v1660
  %v1662 = vpop.f32.mrb[0].mxu0
  %1663 = vmatprep.mubr.f32.mxu0 %v21
  %1664 = vmatmul.mubr.f32.gmra.mrb[0].mxu0 %v20
  %v1665 = vpop.f32.mrb[0].mxu0
  %v1666 = vadd.f32 0.0, %v1665
  %v1667 = vpop.f32.mrb[0].mxu0
  %1668 = vmatprep.mubr.f32.mxu0 %v24
  %1669 = vmatmul.mubr.f32.gmra.mrb[0].mxu0 %v23
  %v1670 = vpop.f32.mrb[0].mxu0
  %v1671 = vadd.f32 0.0, %v1670
  %v1672 = vpop.f32.mrb[0].mxu0
  %1673 = vmatprep.mubr.f32.mxu0 %v27
  %1674 = vmatmul.mubr.f32.gmra.mrb[0].mxu0 %v26
  %v1675 = vpop.f32.mrb[0].mxu0
  %v1676 = vadd.f32 0.0, %v1675
  %v1677 = vpop.f32.mrb[0].mxu0
  %1678 = vmatprep.mubr.f32.mxu0 %v30
  %1679 = vmatmul.mubr.f32.gmra.mrb[0].mxu0 %v29
  %v1680 = vpop.f32.mrb[0].mxu0
  %v1681 = vadd.f32 0.0, %v1680
  %v1682 = vpop.f32.mrb[0].mxu0
  %1683 = vmatprep.mubr.f32.mxu0 %v33
  %1684 = vmatmul.mubr.f32.gmra.mrb[0].mxu0 %v32
  %v1685 = vpop.f32.mrb[0].mxu0
  %v1686 = vadd.f32 0.0, %v1685
  %v1687 = vpop.f32.mrb[0].mxu0
  %1688 = vmatprep.mubr.f32.mxu0 %v36
  %1689 = vmatmul.mubr.f32.gmra.mrb[0].mxu0 %v35
  %v1690 = vpop.f32.mrb[0].mxu0
  %v1691 = vadd.f32 0.0, %v1690
  %v1692 = vpop.f32.mrb[0].mxu0
  %1693 = vmatprep.mubr.f32.mxu0 %v39
  %1694 = vmatmul.mubr.f32.gmra.mrb[0].mxu0 %v38
  %v1695 = vpop.f32.mrb[0].mxu0
  %v1696 = vadd.f32 0.0, %v1695
  %v1697 = vpop.f32.mrb[0].mxu0
  %1698 = vmatprep.mubr.f32.mxu0 %v42
  %1699 = vmatmul.mubr.f32.gmra.mrb[0].mxu0 %v41
  %v1700 = vpop.f32.mrb[0].mxu0
  %v1701 = vadd.f32 0.0, %v1700
  %v1702 = vpop.f32.mrb[0].mxu0
  %1703 = vmatprep.mubr.f32.mxu0 %v45
  %1704 = vmatmul.mubr.f32.gmra.mrb[0].mxu0 %v44
  %v1705 = vpop.f32.mrb[0].mxu0
  %v1706 = vadd.f32 0.0, %v1705
  %v1707 = vpop.f32.mrb[0].mxu0
  %1708 = vmatprep.mubr.f32.mxu0 %v48
  %1709 = vmatmul.mubr.f32.gmra.mrb[0].mxu0 %v47
  %v1710 = vpop.f32.mrb[0].mxu0
  %v1711 = vadd.f32 0.0, %v1710
  %v1712 = vpop.f32.mrb[0].mxu0
  %1713 = vmatprep.mubr.f32.mxu0 %v51
  %1714 = vmatmul.mubr.f32.gmra.mrb[0].mxu0 %v50
  %v1715 = vpop.f32.mrb[0].mxu0
  %v1716 = vadd.f32 0.0, %v1715
  %v1717 = vpop.f32.mrb[0].mxu0
  %1718 = vmatprep.mubr.f32.mxu0 %v54
  %1719 = vmatmul.mubr.f32.gmra.mrb[0].mxu0 %v53
  %v1720 = vpop.f32.mrb[0].mxu0
  %v1721 = vadd.f32 0.0, %v1720
  %v1722 = vpop.f32.mrb[0].mxu0
  %1723 = vmatprep.mubr.f32.mxu0 %v57
  %1724 = vmatmul.mubr.f32.gmra.mrb[0].mxu0 %v56
  %v1725 = vpop.f32.mrb[0].mxu0
  %v1726 = vadd.f32 0.0, %v1725
  %v1727 = vpop.f32.mrb[0].mxu0
  %1728 = vmatprep.mubr.f32.mxu0 %v60
  %1729 = vmatmul.mubr.f32.gmra.mrb[0].mxu0 %v59
  %v1730 = vpop.f32.mrb[0].mxu0
  %v1731 = vadd.f32 0.0, %v1730
  %v1732 = vpop.f32.mrb[0].mxu0
  %1733 = vmatprep.mubr.f32.mxu0 %v63
  %1734 = vmatmul.mubr.f32.gmra.mrb[0].mxu0 %v62
  %v1735 = vpop.f32.mrb[0].mxu0
  %v1736 = vadd.f32 0.0, %v1735
  %v1737 = vpop.f32.mrb[0].mxu0
  %1738 = vmatprep.mubr.f32.mxu0 %v66
  %1739 = vmatmul.mubr.f32.gmra.mrb[0].mxu0 %v65
  %v1740 = vpop.f32.mrb[0].mxu0
  %v1741 = vadd.f32 0.0, %v1740
  %v1742 = vpop.f32.mrb[0].mxu0
  %1743 = vmatprep.mubr.f32.mxu0 %v69
  %1744 = vmatmul.mubr.f32.gmra.mrb[0].mxu0 %v68
  %v1745 = vpop.f32.mrb[0].mxu0
  %v1746 = vadd.f32 0.0, %v1745
  %v1747 = vpop.f32.mrb[0].mxu0
  %1748 = vmatprep.mubr.f32.mxu0 %v72
  %1749 = vmatmul.mubr.f32.gmra.mrb[0].mxu0 %v71
  %v1750 = vpop.f32.mrb[0].mxu0
  %v1751 = vadd.f32 0.0, %v1750
  %v1752 = vpop.f32.mrb[0].mxu0
  %1753 = vmatprep.mubr.f32.mxu0 %v75
  %1754 = vmatmul.mubr.f32.gmra.mrb[0].mxu0 %v74
  %v1755 = vpop.f32.mrb[0].mxu0
  %v1756 = vadd.f32 0.0, %v1755
  %v1757 = vpop.f32.mrb[0].mxu0
  %1758 = vmatprep.mubr.f32.mxu0 %v78
  %1759 = vmatmul.mubr.f32.gmra.mrb[0].mxu0 %v77
  %v1760 = vpop.f32.mrb[0].mxu0
  %v1761 = vadd.f32 0.0, %v1760
  %v1762 = vpop.f32.mrb[0].mxu0
  %1763 = vmatprep.mubr.f32.mxu0 %v81
  %1764 = vmatmul.mubr.f32.gmra.mrb[0].mxu0 %v80
  %v1765 = vpop.f32.mrb[0].mxu0
  %v1766 = vadd.f32 0.0, %v1765
  %v1767 = vpop.f32.mrb[0].mxu0
  %1768 = vmatprep.mubr.f32.mxu0 %v84
  %1769 = vmatmul.mubr.f32.gmra.mrb[0].mxu0 %v83
  %v1770 = vpop.f32.mrb[0].mxu0
  %v1771 = vadd.f32 0.0, %v1770
  %v1772 = vpop.f32.mrb[0].mxu0
  %1773 = vmatprep.mubr.f32.mxu0 %v87
  %1774 = vmatmul.mubr.f32.gmra.mrb[0].mxu0 %v86
  %v1775 = vpop.f32.mrb[0].mxu0
  %v1776 = vadd.f32 0.0, %v1775
  %v1777 = vpop.f32.mrb[0].mxu0
  %1778 = vmatprep.mubr.f32.mxu0 %v90
  %1779 = vmatmul.mubr.f32.gmra.mrb[0].mxu0 %v89
  %v1780 = vpop.f32.mrb[0].mxu0
  %v1781 = vadd.f32 0.0, %v1780
  %v1782 = vpop.f32.mrb[0].mxu0
  %1783 = vmatprep.mubr.f32.mxu0 %v93
  %1784 = vmatmul.mubr.f32.gmra.mrb[0].mxu0 %v92
  %v1785 = vpop.f32.mrb[0].mxu0
  %v1786 = vadd.f32 0.0, %v1785
  %v1787 = vpop.f32.mrb[0].mxu0
  %1788 = vmatprep.mubr.f32.mxu0 %v96
  %1789 = vmatmul.mubr.f32.gmra.mrb[0].mxu0 %v95
  %v1790 = vpop.f32.mrb[0].mxu0
  %v1791 = vadd.f32 0.0, %v1790
  %v1792 = vpop.f32.mrb[0].mxu0
  %1793 = vmatprep.mubr.f32.mxu0 %v99
  %1794 = vmatmul.mubr.f32.gmra.mrb[0].mxu0 %v98
  %v1795 = vpop.f32.mrb[0].mxu0
  %v1796 = vadd.f32 0.0, %v1795
  %v1797 = vpop.f32.mrb[0].mxu0
  %1798 = vmatprep.mubr.f32.mxu0 %v102
  %1799 = vmatmul.mubr.f32.gmra.mrb[0].mxu0 %v101
  %v1800 = vpop.f32.mrb[0].mxu0
  %v1801 = vadd.f32 0.0, %v1800
  %v1802 = vpop.f32.mrb[0].mxu0
  %1803 = vmatprep.mubr.f32.mxu0 %v105
  %1804 = vmatmul.mubr.f32.gmra.mrb[0].mxu0 %v104
  %v1805 = vpop.f32.mrb[0].mxu0
  %v1806 = vadd.f32 0.0, %v1805
  %v1807 = vpop.f32.mrb[0].mxu0
  %1808 = vmatprep.mubr.f32.mxu0 %v108
  %1809 = vmatmul.mubr.f32.gmra.mrb[0].mxu0 %v107
  %v1810 = vpop.f32.mrb[0].mxu0
  %v1811 = vadd.f32 0.0, %v1810
  %v1812 = vpop.f32.mrb[0].mxu0
  %1813 = vmatprep.mubr.f32.mxu0 %v111
  %1814 = vmatmul.mubr.f32.gmra.mrb[0].mxu0 %v110
  %v1815 = vpop.f32.mrb[0].mxu0
  %v1816 = vadd.f32 0.0, %v1815
  %v1817 = vpop.f32.mrb[0].mxu0
  %1818 = vmatprep.mubr.f32.mxu0 %v114
  %1819 = vmatmul.mubr.f32.gmra.mrb[0].mxu0 %v113
  %v1820 = vpop.f32.mrb[0].mxu0
  %v1821 = vadd.f32 0.0, %v1820
  %v1822 = vpop.f32.mrb[0].mxu0
  %1823 = vmatprep.mubr.f32.mxu0 %v117
  %1824 = vmatmul.mubr.f32.gmra.mrb[0].mxu0 %v116
  %v1825 = vpop.f32.mrb[0].mxu0
  %v1826 = vadd.f32 0.0, %v1825
  %v1827 = vpop.f32.mrb[0].mxu0
  %1828 = vmatprep.mubr.f32.mxu0 %v120
  %1829 = vmatmul.mubr.f32.gmra.mrb[0].mxu0 %v119
  %v1830 = vpop.f32.mrb[0].mxu0
  %v1831 = vadd.f32 0.0, %v1830
  %v1832 = vpop.f32.mrb[0].mxu0
  %1833 = vmatprep.mubr.f32.mxu0 %v123
  %1834 = vmatmul.mubr.f32.gmra.mrb[0].mxu0 %v122
  %v1835 = vpop.f32.mrb[0].mxu0
  %v1836 = vadd.f32 0.0, %v1835
  %v1837 = vpop.f32.mrb[0].mxu0
  %1838 = vmatprep.mubr.f32.mxu0 %v126
  %1839 = vmatmul.mubr.f32.gmra.mrb[0].mxu0 %v125
  %v1840 = vpop.f32.mrb[0].mxu0
  %v1841 = vadd.f32 0.0, %v1840
  %v1842 = vpop.f32.mrb[0].mxu0
  %1843 = vmatprep.mubr.f32.mxu0 %v129
  %1844 = vmatmul.mubr.f32.gmra.mrb[0].mxu0 %v128
  %v1845 = vpop.f32.mrb[0].mxu0
  %v1846 = vadd.f32 0.0, %v1845
  %v1847 = vpop.f32.mrb[0].mxu0
  %1848 = vmatprep.mubr.f32.mxu0 %v132
  %1849 = vmatmul.mubr.f32.gmra.mrb[0].mxu0 %v131
  %v1850 = vpop.f32.mrb[0].mxu0
  %v1851 = vadd.f32 0.0, %v1850
  %v1852 = vpop.f32.mrb[0].mxu0
  %1853 = vmatprep.mubr.f32.mxu0 %v135
  %1854 = vmatmul.mubr.f32.gmra.mrb[0].mxu0 %v134
  %v1855 = vpop.f32.mrb[0].mxu0
  %v1856 = vadd.f32 0.0, %v1855
  %v1857 = vpop.f32.mrb[0].mxu0
  %1858 = vmatprep.mubr.f32.mxu0 %v138
  %1859 = vmatmul.mubr.f32.gmra.mrb[0].mxu0 %v137
  %v1860 = vpop.f32.mrb[0].mxu0
  %v1861 = vadd.f32 0.0, %v1860
  %v1862 = vpop.f32.mrb[0].mxu0
  %1863 = vmatprep.mubr.f32.mxu0 %v141
  %1864 = vmatmul.mubr.f32.gmra.mrb[0].mxu0 %v140
  %v1865 = vpop.f32.mrb[0].mxu0
  %v1866 = vadd.f32 0.0, %v1865
  %v1867 = vpop.f32.mrb[0].mxu0
  %1868 = vmatprep.mubr.f32.mxu0 %v144
  %1869 = vmatmul.mubr.f32.gmra.mrb[0].mxu0 %v143
  %v1870 = vpop.f32.mrb[0].mxu0
  %v1871 = vadd.f32 0.0, %v1870
  %v1872 = vpop.f32.mrb[0].mxu0
  %1873 = vmatprep.mubr.f32.mxu0 %v147
  %1874 = vmatmul.mubr.f32.gmra.mrb[0].mxu0 %v146
  %v1875 = vpop.f32.mrb[0].mxu0
  %v1876 = vadd.f32 0.0, %v1875
  %v1877 = vpop.f32.mrb[0].mxu0
  %1878 = vmatprep.mubr.f32.mxu0 %v150
  %1879 = vmatmul.mubr.f32.gmra.mrb[0].mxu0 %v149
  %v1880 = vpop.f32.mrb[0].mxu0
  %v1881 = vadd.f32 0.0, %v1880
  %v1882 = vpop.f32.mrb[0].mxu0
  %1883 = vmatprep.mubr.f32.mxu0 %v153
  %1884 = vmatmul.mubr.f32.gmra.mrb[0].mxu0 %v152
  %v1885 = vpop.f32.mrb[0].mxu0
  %v1886 = vadd.f32 0.0, %v1885
  %v1887 = vpop.f32.mrb[0].mxu0
  %1888 = vmatprep.mubr.f32.mxu0 %v156
  %1889 = vmatmul.mubr.f32.gmra.mrb[0].mxu0 %v155
  %v1890 = vpop.f32.mrb[0].mxu0
  %v1891 = vadd.f32 0.0, %v1890
  %v1892 = vpop.f32.mrb[0].mxu0
  %1893 = vmatprep.mubr.f32.mxu0 %v159
  %1894 = vmatmul.mubr.f32.gmra.mrb[0].mxu0 %v158
  %v1895 = vpop.f32.mrb[0].mxu0
  %v1896 = vadd.f32 0.0, %v1895
  %v1897 = vpop.f32.mrb[0].mxu0
  %1898 = vmatprep.mubr.f32.mxu0 %v162
  %1899 = vmatmul.mubr.f32.gmra.mrb[0].mxu0 %v161
  %v1900 = vpop.f32.mrb[0].mxu0
  %v1901 = vadd.f32 0.0, %v1900
  %v1902 = vpop.f32.mrb[0].mxu0
  %1903 = vmatprep.mubr.f32.mxu0 %v165
  %1904 = vmatmul.mubr.f32.gmra.mrb[0].mxu0 %v164
  %v1905 = vpop.f32.mrb[0].mxu0
  %v1906 = vadd.f32 0.0, %v1905
  %v1907 = vpop.f32.mrb[0].mxu0
  %1908 = vmatprep.mubr.f32.mxu0 %v168
  %1909 = vmatmul.mubr.f32.gmra.mrb[0].mxu0 %v167
  %v1910 = vpop.f32.mrb[0].mxu0
  %v1911 = vadd.f32 0.0, %v1910
  %v1912 = vpop.f32.mrb[0].mxu0
  %1913 = vmatprep.mubr.f32.mxu0 %v171
  %1914 = vmatmul.mubr.f32.gmra.mrb[0].mxu0 %v170
  %v1915 = vpop.f32.mrb[0].mxu0
  %v1916 = vadd.f32 0.0, %v1915
  %v1917 = vpop.f32.mrb[0].mxu0
  %1918 = vmatprep.mubr.f32.mxu0 %v174
  %1919 = vmatmul.mubr.f32.gmra.mrb[0].mxu0 %v173
  %v1920 = vpop.f32.mrb[0].mxu0
  %v1921 = vadd.f32 0.0, %v1920
  %v1922 = vpop.f32.mrb[0].mxu0
  %1923 = vmatprep.mubr.f32.mxu0 %v177
  %1924 = vmatmul.mubr.f32.gmra.mrb[0].mxu0 %v176
  %v1925 = vpop.f32.mrb[0].mxu0
  %v1926 = vadd.f32 0.0, %v1925
  %v1927 = vpop.f32.mrb[0].mxu0
  %1928 = vmatprep.mubr.f32.mxu0 %v180
  %1929 = vmatmul.mubr.f32.gmra.mrb[0].mxu0 %v179
  %v1930 = vpop.f32.mrb[0].mxu0
  %v1931 = vadd.f32 0.0, %v1930
  %v1932 = vpop.f32.mrb[0].mxu0
  %1933 = vmatprep.mubr.f32.mxu0 %v183
  %1934 = vmatmul.mubr.f32.gmra.mrb[0].mxu0 %v182
  %v1935 = vpop.f32.mrb[0].mxu0
  %v1936 = vadd.f32 0.0, %v1935
  %v1937 = vpop.f32.mrb[0].mxu0
  %1938 = vmatprep.mubr.f32.mxu0 %v186
  %1939 = vmatmul.mubr.f32.gmra.mrb[0].mxu0 %v185
  %v1940 = vpop.f32.mrb[0].mxu0
  %v1941 = vadd.f32 0.0, %v1940
  %v1942 = vpop.f32.mrb[0].mxu0
  %1943 = vmatprep.mubr.f32.mxu0 %v189
  %1944 = vmatmul.mubr.f32.gmra.mrb[0].mxu0 %v188
  %v1945 = vpop.f32.mrb[0].mxu0
  %v1946 = vadd.f32 0.0, %v1945
  %v1947 = vpop.f32.mrb[0].mxu0
  %1948 = vmatprep.mubr.f32.mxu0 %v192
  %1949 = vmatmul.mubr.f32.gmra.mrb[0].mxu0 %v191
  %v1950 = vpop.f32.mrb[0].mxu0
  %v1951 = vadd.f32 0.0, %v1950
  %v1952 = vpop.f32.mrb[0].mxu0
  %1953 = vmatprep.mubr.f32.mxu0 %v195
  %1954 = vmatmul.mubr.f32.gmra.mrb[0].mxu0 %v194
  %v1955 = vpop.f32.mrb[0].mxu0
  %v1956 = vadd.f32 0.0, %v1955
  %v1957 = vpop.f32.mrb[0].mxu0
  %1958 = vmatprep.mubr.f32.mxu0 %v198
  %1959 = vmatmul.mubr.f32.gmra.mrb[0].mxu0 %v197
  %v1960 = vpop.f32.mrb[0].mxu0
  %v1961 = vadd.f32 0.0, %v1960
  %v1962 = vpop.f32.mrb[0].mxu0
  %1963 = vmatprep.mubr.f32.mxu0 %v201
  %1964 = vmatmul.mubr.f32.gmra.mrb[0].mxu0 %v200
  %v1965 = vpop.f32.mrb[0].mxu0
  %v1966 = vadd.f32 0.0, %v1965
  %v1967 = vpop.f32.mrb[0].mxu0
  %1968 = vmatprep.mubr.f32.mxu0 %v204
  %1969 = vmatmul.mubr.f32.gmra.mrb[0].mxu0 %v203
  %v1970 = vpop.f32.mrb[0].mxu0
  %v1971 = vadd.f32 0.0, %v1970
  %v1972 = vpop.f32.mrb[0].mxu0
  %1973 = vmatprep.mubr.f32.mxu0 %v207
  %1974 = vmatmul.mubr.f32.gmra.mrb[0].mxu0 %v206
  %v1975 = vpop.f32.mrb[0].mxu0
  %v1976 = vadd.f32 0.0, %v1975
  %v1977 = vpop.f32.mrb[0].mxu0
  %1978 = vmatprep.mubr.f32.mxu0 %v210
  %1979 = vmatmul.mubr.f32.gmra.mrb[0].mxu0 %v209
  %v1980 = vpop.f32.mrb[0].mxu0
  %v1981 = vadd.f32 0.0, %v1980
  %v1982 = vpop.f32.mrb[0].mxu0
  %1983 = vmatprep.mubr.f32.mxu0 %v213
  %1984 = vmatmul.mubr.f32.gmra.mrb[0].mxu0 %v212
  %v1985 = vpop.f32.mrb[0].mxu0
  %v1986 = vadd.f32 0.0, %v1985
  %v1987 = vpop.f32.mrb[0].mxu0
  %1988 = vmatprep.mubr.f32.mxu0 %v216
  %1989 = vmatmul.mubr.f32.gmra.mrb[0].mxu0 %v215
  %v1990 = vpop.f32.mrb[0].mxu0
  %v1991 = vadd.f32 0.0, %v1990
  %v1992 = vpop.f32.mrb[0].mxu0
  %1993 = vmatprep.mubr.f32.mxu0 %v219
  %1994 = vmatmul.mubr.f32.gmra.mrb[0].mxu0 %v218
  %v1995 = vpop.f32.mrb[0].mxu0
  %v1996 = vadd.f32 0.0, %v1995
  %v1997 = vpop.f32.mrb[0].mxu0
  %1998 = vmatprep.mubr.f32.mxu0 %v222
  %1999 = vmatmul.mubr.f32.gmra.mrb[0].mxu0 %v221
  %v2000 = vpop.f32.mrb[0].mxu0
  %v2001 = vadd.f32 0.0, %v2000
  %v2002 = vpop.f32.mrb[0].mxu0
  %2003 = vmatprep.mubr.f32.mxu0 %v225
  %2004 = vmatmul.mubr.f32.gmra.mrb[0].mxu0 %v224
  %v2005 = vpop.f32.mrb[0].mxu0
  %v2006 = vadd.f32 0.0, %v2005
  %v2007 = vpop.f32.mrb[0].mxu0
  %2008 = vmatprep.mubr.f32.mxu0 %v228
  %2009 = vmatmul.mubr.f32.gmra.mrb[0].mxu0 %v227
  %v2010 = vpop.f32.mrb[0].mxu0
  %v2011 = vadd.f32 0.0, %v2010
  %v2012 = vpop.f32.mrb[0].mxu0
  %2013 = vmatprep.mubr.f32.mxu0 %v231
  %2014 = vmatmul.mubr.f32.gmra.mrb[0].mxu0 %v230
  %v2015 = vpop.f32.mrb[0].mxu0
  %v2016 = vadd.f32 0.0, %v2015
  %v2017 = vpop.f32.mrb[0].mxu0
  %2018 = vmatprep.mubr.f32.mxu0 %v234
  %2019 = vmatmul.mubr.f32.gmra.mrb[0].mxu0 %v233
  %v2020 = vpop.f32.mrb[0].mxu0
  %v2021 = vadd.f32 0.0, %v2020
  %v2022 = vpop.f32.mrb[0].mxu0
  %2023 = vmatprep.mubr.f32.mxu0 %v237
  %2024 = vmatmul.mubr.f32.gmra.mrb[0].mxu0 %v236
  %v2025 = vpop.f32.mrb[0].mxu0
  %v2026 = vadd.f32 0.0, %v2025
  %v2027 = vpop.f32.mrb[0].mxu0
  %2028 = vmatprep.mubr.f32.mxu0 %v240
  %2029 = vmatmul.mubr.f32.gmra.mrb[0].mxu0 %v239
  %v2030 = vpop.f32.mrb[0].mxu0
  %v2031 = vadd.f32 0.0, %v2030
  %v2032 = vpop.f32.mrb[0].mxu0
  %2033 = vmatprep.mubr.f32.mxu0 %v243
  %2034 = vmatmul.mubr.f32.gmra.mrb[0].mxu0 %v242
  %v2035 = vpop.f32.mrb[0].mxu0
  %v2036 = vadd.f32 0.0, %v2035
  %v2037 = vpop.f32.mrb[0].mxu0
  %2038 = vmatprep.mubr.f32.mxu0 %v246
  %2039 = vmatmul.mubr.f32.gmra.mrb[0].mxu0 %v245
  %v2040 = vpop.f32.mrb[0].mxu0
  %v2041 = vadd.f32 0.0, %v2040
  %v2042 = vpop.f32.mrb[0].mxu0
  %2043 = vmatprep.mubr.f32.mxu0 %v249
  %2044 = vmatmul.mubr.f32.gmra.mrb[0].mxu0 %v248
  %v2045 = vpop.f32.mrb[0].mxu0
  %v2046 = vadd.f32 0.0, %v2045
  %v2047 = vpop.f32.mrb[0].mxu0
  %2048 = vmatprep.mubr.f32.mxu0 %v252
  %2049 = vmatmul.mubr.f32.gmra.mrb[0].mxu0 %v251
  %v2050 = vpop.f32.mrb[0].mxu0
  %v2051 = vadd.f32 0.0, %v2050
  %v2052 = vpop.f32.mrb[0].mxu0
  %2053 = vmatprep.mubr.f32.mxu0 %v255
  %2054 = vmatmul.mubr.f32.gmra.mrb[0].mxu0 %v254
  %v2055 = vpop.f32.mrb[0].mxu0
  %v2056 = vadd.f32 0.0, %v2055
  %v2057 = vpop.f32.mrb[0].mxu0
  %2058 = vmatprep.mubr.f32.mxu0 %v258
  %2059 = vmatmul.mubr.f32.gmra.mrb[0].mxu0 %v257
  %v2060 = vpop.f32.mrb[0].mxu0
  %v2061 = vadd.f32 0.0, %v2060
  %v2062 = vpop.f32.mrb[0].mxu0
  %2063 = vmatprep.mubr.f32.mxu0 %v261
  %2064 = vmatmul.mubr.f32.gmra.mrb[0].mxu0 %v260
  %v2065 = vpop.f32.mrb[0].mxu0
  %v2066 = vadd.f32 0.0, %v2065
  %v2067 = vpop.f32.mrb[0].mxu0
  %2068 = vmatprep.mubr.f32.mxu0 %v264
  %2069 = vmatmul.mubr.f32.gmra.mrb[0].mxu0 %v263
  %v2070 = vpop.f32.mrb[0].mxu0
  %v2071 = vadd.f32 0.0, %v2070
  %v2072 = vpop.f32.mrb[0].mxu0
  %2073 = vmatprep.mubr.f32.mxu0 %v267
  %2074 = vmatmul.mubr.f32.gmra.mrb[0].mxu0 %v266
  %v2075 = vpop.f32.mrb[0].mxu0
  %v2076 = vadd.f32 0.0, %v2075
  %v2077 = vpop.f32.mrb[0].mxu0
  %2078 = vmatprep.mubr.f32.mxu0 %v270
  %2079 = vmatmul.mubr.f32.gmra.mrb[0].mxu0 %v269
  %v2080 = vpop.f32.mrb[0].mxu0
  %v2081 = vadd.f32 0.0, %v2080
  %v2082 = vpop.f32.mrb[0].mxu0
  %2083 = vmatprep.mubr.f32.mxu0 %v273
  %2084 = vmatmul.mubr.f32.gmra.mrb[0].mxu0 %v272
  %v2085 = vpop.f32.mrb[0].mxu0
  %v2086 = vadd.f32 0.0, %v2085
  %v2087 = vpop.f32.mrb[0].mxu0
  %2088 = vmatprep.mubr.f32.mxu0 %v276
  %2089 = vmatmul.mubr.f32.gmra.mrb[0].mxu0 %v275
  %v2090 = vpop.f32.mrb[0].mxu0
  %v2091 = vadd.f32 0.0, %v2090
  %v2092 = vpop.f32.mrb[0].mxu0
  %2093 = vmatprep.mubr.f32.mxu0 %v279
  %2094 = vmatmul.mubr.f32.gmra.mrb[0].mxu0 %v278
  %v2095 = vpop.f32.mrb[0].mxu0
  %v2096 = vadd.f32 0.0, %v2095
  %v2097 = vpop.f32.mrb[0].mxu0
  %2098 = vmatprep.mubr.f32.mxu0 %v282
  %2099 = vmatmul.mubr.f32.gmra.mrb[0].mxu0 %v281
  %v2100 = vpop.f32.mrb[0].mxu0
  %v2101 = vadd.f32 0.0, %v2100
  %v2102 = vpop.f32.mrb[0].mxu0
  %2103 = vmatprep.mubr.f32.mxu0 %v285
  %2104 = vmatmul.mubr.f32.gmra.mrb[0].mxu0 %v284
  %v2105 = vpop.f32.mrb[0].mxu0
  %v2106 = vadd.f32 0.0, %v2105
  %v2107 = vpop.f32.mrb[0].mxu0
  %2108 = vmatprep.mubr.f32.mxu0 %v288
  %2109 = vmatmul.mubr.f32.gmra.mrb[0].mxu0 %v287
  %v2110 = vpop.f32.mrb[0].mxu0
  %v2111 = vadd.f32 0.0, %v2110
  %v2112 = vpop.f32.mrb[0].mxu0
  %2113 = vmatprep.mubr.f32.mxu0 %v291
  %2114 = vmatmul.mubr.f32.gmra.mrb[0].mxu0 %v290
  %v2115 = vpop.f32.mrb[0].mxu0
  %v2116 = vadd.f32 0.0, %v2115
  %v2117 = vpop.f32.mrb[0].mxu0
  %2118 = vmatprep.mubr.f32.mxu0 %v294
  %2119 = vmatmul.mubr.f32.gmra.mrb[0].mxu0 %v293
  %v2120 = vpop.f32.mrb[0].mxu0
  %v2121 = vadd.f32 0.0, %v2120
  %v2122 = vpop.f32.mrb[0].mxu0
  %2123 = vmatprep.mubr.f32.mxu0 %v297
  %2124 = vmatmul.mubr.f32.gmra.mrb[0].mxu0 %v296
  %v2125 = vpop.f32.mrb[0].mxu0
  %v2126 = vadd.f32 0.0, %v2125
  %v2127 = vpop.f32.mrb[0].mxu0
  %2128 = vmatprep.mubr.f32.mxu0 %v300
  %2129 = vmatmul.mubr.f32.gmra.mrb[0].mxu0 %v299
  %v2130 = vpop.f32.mrb[0].mxu0
  %v2131 = vadd.f32 0.0, %v2130
  %v2132 = vpop.f32.mrb[0].mxu0
  %2133 = vmatprep.mubr.f32.mxu0 %v303
  %2134 = vmatmul.mubr.f32.gmra.mrb[0].mxu0 %v302
  %v2135 = vpop.f32.mrb[0].mxu0
  %v2136 = vadd.f32 0.0, %v2135
  %v2137 = vpop.f32.mrb[0].mxu0
  %2138 = vmatprep.mubr.f32.mxu0 %v306
  %2139 = vmatmul.mubr.f32.gmra.mrb[0].mxu0 %v305
  %v2140 = vpop.f32.mrb[0].mxu0
  %v2141 = vadd.f32 0.0, %v2140
  %v2142 = vpop.f32.mrb[0].mxu0
  %2143 = vmatprep.mubr.f32.mxu0 %v309
  %2144 = vmatmul.mubr.f32.gmra.mrb[0].mxu0 %v308
  %v2145 = vpop.f32.mrb[0].mxu0
  %v2146 = vadd.f32 0.0, %v2145
  %v2147 = vpop.f32.mrb[0].mxu0
  %2148 = vmatprep.mubr.f32.mxu0 %v312
  %2149 = vmatmul.mubr.f32.gmra.mrb[0].mxu0 %v311
  %v2150 = vpop.f32.mrb[0].mxu0
  %v2151 = vadd.f32 0.0, %v2150
  %v2152 = vpop.f32.mrb[0].mxu0
  %2153 = vmatprep.mubr.f32.mxu0 %v315
  %2154 = vmatmul.mubr.f32.gmra.mrb[0].mxu0 %v314
  %v2155 = vpop.f32.mrb[0].mxu0
  %v2156 = vadd.f32 0.0, %v2155
  %v2157 = vpop.f32.mrb[0].mxu0
  %2158 = vmatprep.mubr.f32.mxu0 %v318
  %2159 = vmatmul.mubr.f32.gmra.mrb[0].mxu0 %v317
  %v2160 = vpop.f32.mrb[0].mxu0
  %v2161 = vadd.f32 0.0, %v2160
  %v2162 = vpop.f32.mrb[0].mxu0
  %2163 = vmatprep.mubr.f32.mxu0 %v321
  %2164 = vmatmul.mubr.f32.gmra.mrb[0].mxu0 %v320
  %v2165 = vpop.f32.mrb[0].mxu0
  %v2166 = vadd.f32 0.0, %v2165
  %v2167 = vpop.f32.mrb[0].mxu0
  %2168 = vmatprep.mubr.f32.mxu0 %v324
  %2169 = vmatmul.mubr.f32.gmra.mrb[0].mxu0 %v323
  %v2170 = vpop.f32.mrb[0].mxu0
  %v2171 = vadd.f32 0.0, %v2170
  %v2172 = vpop.f32.mrb[0].mxu0
  %2173 = vmatprep.mubr.f32.mxu0 %v327
  %2174 = vmatmul.mubr.f32.gmra.mrb[0].mxu0 %v326
  %v2175 = vpop.f32.mrb[0].mxu0
  %v2176 = vadd.f32 0.0, %v2175
  %v2177 = vpop.f32.mrb[0].mxu0
  %2178 = vmatprep.mubr.f32.mxu0 %v330
  %2179 = vmatmul.mubr.f32.gmra.mrb[0].mxu0 %v329
  %v2180 = vpop.f32.mrb[0].mxu0
  %v2181 = vadd.f32 0.0, %v2180
  %v2182 = vpop.f32.mrb[0].mxu0
  %2183 = vmatprep.mubr.f32.mxu0 %v333
  %2184 = vmatmul.mubr.f32.gmra.mrb[0].mxu0 %v332
  %v2185 = vpop.f32.mrb[0].mxu0
  %v2186 = vadd.f32 0.0, %v2185
  %v2187 = vpop.f32.mrb[0].mxu0
  %2188 = vmatprep.mubr.f32.mxu0 %v336
  %2189 = vmatmul.mubr.f32.gmra.mrb[0].mxu0 %v335
  %v2190 = vpop.f32.mrb[0].mxu0
  %v2191 = vadd.f32 0.0, %v2190
  %v2192 = vpop.f32.mrb[0].mxu0
  %2193 = vmatprep.mubr.f32.mxu0 %v339
  %2194 = vmatmul.mubr.f32.gmra.mrb[0].mxu0 %v338
  %v2195 = vpop.f32.mrb[0].mxu0
  %v2196 = vadd.f32 0.0, %v2195
  %v2197 = vpop.f32.mrb[0].mxu0
  %2198 = vmatprep.mubr.f32.mxu0 %v342
  %2199 = vmatmul.mubr.f32.gmra.mrb[0].mxu0 %v341
  %v2200 = vpop.f32.mrb[0].mxu0
  %v2201 = vadd.f32 0.0, %v2200
  %v2202 = vpop.f32.mrb[0].mxu0
  %2203 = vmatprep.mubr.f32.mxu0 %v345
  %2204 = vmatmul.mubr.f32.gmra.mrb[0].mxu0 %v344
  %v2205 = vpop.f32.mrb[0].mxu0
  %v2206 = vadd.f32 0.0, %v2205
  %v2207 = vpop.f32.mrb[0].mxu0
  %2208 = vmatprep.mubr.f32.mxu0 %v348
  %2209 = vmatmul.mubr.f32.gmra.mrb[0].mxu0 %v347
  %v2210 = vpop.f32.mrb[0].mxu0
  %v2211 = vadd.f32 0.0, %v2210
  %v2212 = vpop.f32.mrb[0].mxu0
  %2213 = vmatprep.mubr.f32.mxu0 %v351
  %2214 = vmatmul.mubr.f32.gmra.mrb[0].mxu0 %v350
  %v2215 = vpop.f32.mrb[0].mxu0
  %v2216 = vadd.f32 0.0, %v2215
  %v2217 = vpop.f32.mrb[0].mxu0
  %2218 = vmatprep.mubr.f32.mxu0 %v354
  %2219 = vmatmul.mubr.f32.gmra.mrb[0].mxu0 %v353
  %v2220 = vpop.f32.mrb[0].mxu0
  %v2221 = vadd.f32 0.0, %v2220
  %v2222 = vpop.f32.mrb[0].mxu0
  %2223 = vmatprep.mubr.f32.mxu0 %v357
  %2224 = vmatmul.mubr.f32.gmra.mrb[0].mxu0 %v356
  %v2225 = vpop.f32.mrb[0].mxu0
  %v2226 = vadd.f32 0.0, %v2225
  %v2227 = vpop.f32.mrb[0].mxu0
  %2228 = vmatprep.mubr.f32.mxu0 %v360
  %2229 = vmatmul.mubr.f32.gmra.mrb[0].mxu0 %v359
  %v2230 = vpop.f32.mrb[0].mxu0
  %v2231 = vadd.f32 0.0, %v2230
  %v2232 = vpop.f32.mrb[0].mxu0
  %2233 = vmatprep.mubr.f32.mxu0 %v363
  %2234 = vmatmul.mubr.f32.gmra.mrb[0].mxu0 %v362
  %v2235 = vpop.f32.mrb[0].mxu0
  %v2236 = vadd.f32 0.0, %v2235
  %v2237 = vpop.f32.mrb[0].mxu0
  %2238 = vmatprep.mubr.f32.mxu0 %v366
  %2239 = vmatmul.mubr.f32.gmra.mrb[0].mxu0 %v365
  %v2240 = vpop.f32.mrb[0].mxu0
  %v2241 = vadd.f32 0.0, %v2240
  %v2242 = vpop.f32.mrb[0].mxu0
  %2243 = vmatprep.mubr.f32.mxu0 %v369
  %2244 = vmatmul.mubr.f32.gmra.mrb[0].mxu0 %v368
  %v2245 = vpop.f32.mrb[0].mxu0
  %v2246 = vadd.f32 0.0, %v2245
  %v2247 = vpop.f32.mrb[0].mxu0
  %2248 = vmatprep.mubr.f32.mxu0 %v372
  %2249 = vmatmul.mubr.f32.gmra.mrb[0].mxu0 %v371
  %v2250 = vpop.f32.mrb[0].mxu0
  %v2251 = vadd.f32 0.0, %v2250
  %v2252 = vpop.f32.mrb[0].mxu0
  %2253 = vmatprep.mubr.f32.mxu0 %v375
  %2254 = vmatmul.mubr.f32.gmra.mrb[0].mxu0 %v374
  %v2255 = vpop.f32.mrb[0].mxu0
  %v2256 = vadd.f32 0.0, %v2255
  %v2257 = vpop.f32.mrb[0].mxu0
  %2258 = vmatprep.mubr.f32.mxu0 %v378
  %2259 = vmatmul.mubr.f32.gmra.mrb[0].mxu0 %v377
  %v2260 = vpop.f32.mrb[0].mxu0
  %v2261 = vadd.f32 0.0, %v2260
  %v2262 = vpop.f32.mrb[0].mxu0
  %2263 = vmatprep.mubr.f32.mxu0 %v381
  %2264 = vmatmul.mubr.f32.gmra.mrb[0].mxu0 %v380
  %v2265 = vpop.f32.mrb[0].mxu0
  %v2266 = vadd.f32 0.0, %v2265
  %v2267 = vpop.f32.mrb[0].mxu0
  %2268 = vmatprep.mubr.f32.mxu0 %v384
  %2269 = vmatmul.mubr.f32.gmra.mrb[0].mxu0 %v383
  %v2270 = vpop.f32.mrb[0].mxu0
  %v2271 = vadd.f32 0.0, %v2270
  %v2272 = vpop.f32.mrb[0].mxu0
  %2273 = vmatprep.mubr.f32.mxu0 %v387
  %2274 = vmatmul.mubr.f32.gmra.mrb[0].mxu0 %v386
  %v2275 = vpop.f32.mrb[0].mxu0
  %v2276 = vadd.f32 0.0, %v2275
  %v2277 = vpop.f32.mrb[0].mxu0
  %2278 = vmatprep.mubr.f32.mxu0 %v390
  %2279 = vmatmul.mubr.f32.gmra.mrb[0].mxu0 %v389
  %v2280 = vpop.f32.mrb[0].mxu0
  %v2281 = vadd.f32 0.0, %v2280
  %v2282 = vpop.f32.mrb[0].mxu0
  %2283 = vmatprep.mubr.f32.mxu0 %v393
  %2284 = vmatmul.mubr.f32.gmra.mrb[0].mxu0 %v392
  %v2285 = vpop.f32.mrb[0].mxu0
  %v2286 = vadd.f32 0.0, %v2285
  %v2287 = vpop.f32.mrb[0].mxu0
  %2288 = vmatprep.mubr.f32.mxu0 %v396
  %2289 = vmatmul.mubr.f32.gmra.mrb[0].mxu0 %v395
  %v2290 = vpop.f32.mrb[0].mxu0
  %v2291 = vadd.f32 0.0, %v2290
  %v2292 = vpop.f32.mrb[0].mxu0
  %2293 = vmatprep.mubr.f32.mxu0 %v399
  %2294 = vmatmul.mubr.f32.gmra.mrb[0].mxu0 %v398
  %v2295 = vpop.f32.mrb[0].mxu0
  %v2296 = vadd.f32 0.0, %v2295
  %v2297 = vpop.f32.mrb[0].mxu0
  %2298 = vmatprep.mubr.f32.mxu0 %v402
  %2299 = vmatmul.mubr.f32.gmra.mrb[0].mxu0 %v401
  %v2300 = vpop.f32.mrb[0].mxu0
  %v2301 = vadd.f32 0.0, %v2300
  %v2302 = vpop.f32.mrb[0].mxu0
  %2303 = vmatprep.mubr.f32.mxu0 %v405
  %2304 = vmatmul.mubr.f32.gmra.mrb[0].mxu0 %v404
  %v2305 = vpop.f32.mrb[0].mxu0
  %v2306 = vadd.f32 0.0, %v2305
  %v2307 = vpop.f32.mrb[0].mxu0
  %2308 = vmatprep.mubr.f32.mxu0 %v408
  %2309 = vmatmul.mubr.f32.gmra.mrb[0].mxu0 %v407
  %v2310 = vpop.f32.mrb[0].mxu0
  %v2311 = vadd.f32 0.0, %v2310
  %v2312 = vpop.f32.mrb[0].mxu0
  %2313 = vmatprep.mubr.f32.mxu0 %v411
  %2314 = vmatmul.mubr.f32.gmra.mrb[0].mxu0 %v410
  %v2315 = vpop.f32.mrb[0].mxu0
  %v2316 = vadd.f32 0.0, %v2315
  %v2317 = vpop.f32.mrb[0].mxu0
  %2318 = vmatprep.mubr.f32.mxu0 %v414
  %2319 = vmatmul.mubr.f32.gmra.mrb[0].mxu0 %v413
  %v2320 = vpop.f32.mrb[0].mxu0
  %v2321 = vadd.f32 0.0, %v2320
  %v2322 = vpop.f32.mrb[0].mxu0
  %2323 = vmatprep.mubr.f32.mxu0 %v417
  %2324 = vmatmul.mubr.f32.gmra.mrb[0].mxu0 %v416
  %v2325 = vpop.f32.mrb[0].mxu0
  %v2326 = vadd.f32 0.0, %v2325
  %v2327 = vpop.f32.mrb[0].mxu0
  %2328 = vmatprep.mubr.f32.mxu0 %v420
  %2329 = vmatmul.mubr.f32.gmra.mrb[0].mxu0 %v419
  %v2330 = vpop.f32.mrb[0].mxu0
  %v2331 = vadd.f32 0.0, %v2330
  %v2332 = vpop.f32.mrb[0].mxu0
  %2333 = vmatprep.mubr.f32.mxu0 %v423
  %2334 = vmatmul.mubr.f32.gmra.mrb[0].mxu0 %v422
  %v2335 = vpop.f32.mrb[0].mxu0
  %v2336 = vadd.f32 0.0, %v2335
  %v2337 = vpop.f32.mrb[0].mxu0
  %2338 = vmatprep.mubr.f32.mxu0 %v426
  %2339 = vmatmul.mubr.f32.gmra.mrb[0].mxu0 %v425
  %v2340 = vpop.f32.mrb[0].mxu0
  %v2341 = vadd.f32 0.0, %v2340
  %v2342 = vpop.f32.mrb[0].mxu0
  %2343 = vmatprep.mubr.f32.mxu0 %v429
  %2344 = vmatmul.mubr.f32.gmra.mrb[0].mxu0 %v428
  %v2345 = vpop.f32.mrb[0].mxu0
  %v2346 = vadd.f32 0.0, %v2345
  %v2347 = vpop.f32.mrb[0].mxu0
  %2348 = vmatprep.mubr.f32.mxu0 %v432
  %2349 = vmatmul.mubr.f32.gmra.mrb[0].mxu0 %v431
  %v2350 = vpop.f32.mrb[0].mxu0
  %v2351 = vadd.f32 0.0, %v2350
  %v2352 = vpop.f32.mrb[0].mxu0
  %2353 = vmatprep.mubr.f32.mxu0 %v435
  %2354 = vmatmul.mubr.f32.gmra.mrb[0].mxu0 %v434
  %v2355 = vpop.f32.mrb[0].mxu0
  %v2356 = vadd.f32 0.0, %v2355
  %v2357 = vpop.f32.mrb[0].mxu0
  %2358 = vmatprep.mubr.f32.mxu0 %v438
  %2359 = vmatmul.mubr.f32.gmra.mrb[0].mxu0 %v437
  %v2360 = vpop.f32.mrb[0].mxu0
  %v2361 = vadd.f32 0.0, %v2360
  %v2362 = vpop.f32.mrb[0].mxu0
  %2363 = vmatprep.mubr.f32.mxu0 %v441
  %2364 = vmatmul.mubr.f32.gmra.mrb[0].mxu0 %v440
  %v2365 = vpop.f32.mrb[0].mxu0
  %v2366 = vadd.f32 0.0, %v2365
  %v2367 = vpop.f32.mrb[0].mxu0
  %2368 = vmatprep.mubr.f32.mxu0 %v444
  %2369 = vmatmul.mubr.f32.gmra.mrb[0].mxu0 %v443
  %v2370 = vpop.f32.mrb[0].mxu0
  %v2371 = vadd.f32 0.0, %v2370
  %v2372 = vpop.f32.mrb[0].mxu0
  %2373 = vmatprep.mubr.f32.mxu0 %v447
  %2374 = vmatmul.mubr.f32.gmra.mrb[0].mxu0 %v446
  %v2375 = vpop.f32.mrb[0].mxu0
  %v2376 = vadd.f32 0.0, %v2375
  %v2377 = vpop.f32.mrb[0].mxu0
  %2378 = vmatprep.mubr.f32.mxu0 %v450
  %2379 = vmatmul.mubr.f32.gmra.mrb[0].mxu0 %v449
  %v2380 = vpop.f32.mrb[0].mxu0
  %v2381 = vadd.f32 0.0, %v2380
  %v2382 = vpop.f32.mrb[0].mxu0
  %2383 = vmatprep.mubr.f32.mxu0 %v453
  %2384 = vmatmul.mubr.f32.gmra.mrb[0].mxu0 %v452
  %v2385 = vpop.f32.mrb[0].mxu0
  %v2386 = vadd.f32 0.0, %v2385
  %v2387 = vpop.f32.mrb[0].mxu0
  %2388 = vmatprep.mubr.f32.mxu0 %v456
  %2389 = vmatmul.mubr.f32.gmra.mrb[0].mxu0 %v455
  %v2390 = vpop.f32.mrb[0].mxu0
  %v2391 = vadd.f32 0.0, %v2390
  %v2392 = vpop.f32.mrb[0].mxu0
  %2393 = vmatprep.mubr.f32.mxu0 %v459
  %2394 = vmatmul.mubr.f32.gmra.mrb[0].mxu0 %v458
  %v2395 = vpop.f32.mrb[0].mxu0
  %v2396 = vadd.f32 0.0, %v2395
  %v2397 = vpop.f32.mrb[0].mxu0
  %2398 = vmatprep.mubr.f32.mxu0 %v462
  %2399 = vmatmul.mubr.f32.gmra.mrb[0].mxu0 %v461
  %v2400 = vpop.f32.mrb[0].mxu0
  %v2401 = vadd.f32 0.0, %v2400
  %v2402 = vpop.f32.mrb[0].mxu0
  %2403 = vmatprep.mubr.f32.mxu0 %v465
  %2404 = vmatmul.mubr.f32.gmra.mrb[0].mxu0 %v464
  %v2405 = vpop.f32.mrb[0].mxu0
  %v2406 = vadd.f32 0.0, %v2405
  %v2407 = vpop.f32.mrb[0].mxu0
  %2408 = vmatprep.mubr.f32.mxu0 %v468
  %2409 = vmatmul.mubr.f32.gmra.mrb[0].mxu0 %v467
  %v2410 = vpop.f32.mrb[0].mxu0
  %v2411 = vadd.f32 0.0, %v2410
  %v2412 = vpop.f32.mrb[0].mxu0
  %2413 = vmatprep.mubr.f32.mxu0 %v471
  %2414 = vmatmul.mubr.f32.gmra.mrb[0].mxu0 %v470
  %v2415 = vpop.f32.mrb[0].mxu0
  %v2416 = vadd.f32 0.0, %v2415
  %v2417 = vpop.f32.mrb[0].mxu0
  %2418 = vmatprep.mubr.f32.mxu0 %v474
  %2419 = vmatmul.mubr.f32.gmra.mrb[0].mxu0 %v473
  %v2420 = vpop.f32.mrb[0].mxu0
  %v2421 = vadd.f32 0.0, %v2420
  %v2422 = vpop.f32.mrb[0].mxu0
  %2423 = vmatprep.mubr.f32.mxu0 %v477
  %2424 = vmatmul.mubr.f32.gmra.mrb[0].mxu0 %v476
  %v2425 = vpop.f32.mrb[0].mxu0
  %v2426 = vadd.f32 0.0, %v2425
  %v2427 = vpop.f32.mrb[0].mxu0
  %2428 = vmatprep.mubr.f32.mxu0 %v480
  %2429 = vmatmul.mubr.f32.gmra.mrb[0].mxu0 %v479
  %v2430 = vpop.f32.mrb[0].mxu0
  %v2431 = vadd.f32 0.0, %v2430
  %v2432 = vpop.f32.mrb[0].mxu0
  %2433 = vmatprep.mubr.f32.mxu0 %v483
  %2434 = vmatmul.mubr.f32.gmra.mrb[0].mxu0 %v482
  %v2435 = vpop.f32.mrb[0].mxu0
  %v2436 = vadd.f32 0.0, %v2435
  %v2437 = vpop.f32.mrb[0].mxu0
  %2438 = vmatprep.mubr.f32.mxu0 %v486
  %2439 = vmatmul.mubr.f32.gmra.mrb[0].mxu0 %v485
  %v2440 = vpop.f32.mrb[0].mxu0
  %v2441 = vadd.f32 0.0, %v2440
  %v2442 = vpop.f32.mrb[0].mxu0
  %2443 = vmatprep.mubr.f32.mxu0 %v489
  %2444 = vmatmul.mubr.f32.gmra.mrb[0].mxu0 %v488
  %v2445 = vpop.f32.mrb[0].mxu0
  %v2446 = vadd.f32 0.0, %v2445
  %v2447 = vpop.f32.mrb[0].mxu0
  %2448 = vmatprep.mubr.f32.mxu0 %v492
  %2449 = vmatmul.mubr.f32.gmra.mrb[0].mxu0 %v491
  %v2450 = vpop.f32.mrb[0].mxu0
  %v2451 = vadd.f32 0.0, %v2450
  %v2452 = vpop.f32.mrb[0].mxu0
  %2453 = vmatprep.mubr.f32.mxu0 %v495
  %2454 = vmatmul.mubr.f32.gmra.mrb[0].mxu0 %v494
  %v2455 = vpop.f32.mrb[0].mxu0
  %v2456 = vadd.f32 0.0, %v2455
  %v2457 = vpop.f32.mrb[0].mxu0
  %2458 = vmatprep.mubr.f32.mxu0 %v498
  %2459 = vmatmul.mubr.f32.gmra.mrb[0].mxu0 %v497
  %v2460 = vpop.f32.mrb[0].mxu0
  %v2461 = vadd.f32 0.0, %v2460
  %v2462 = vpop.f32.mrb[0].mxu0
  %2463 = vmatprep.mubr.f32.mxu0 %v501
  %2464 = vmatmul.mubr.f32.gmra.mrb[0].mxu0 %v500
  %v2465 = vpop.f32.mrb[0].mxu0
  %v2466 = vadd.f32 0.0, %v2465
  %v2467 = vpop.f32.mrb[0].mxu0
  %2468 = vmatprep.mubr.f32.mxu0 %v504
  %2469 = vmatmul.mubr.f32.gmra.mrb[0].mxu0 %v503
  %v2470 = vpop.f32.mrb[0].mxu0
  %v2471 = vadd.f32 0.0, %v2470
  %v2472 = vpop.f32.mrb[0].mxu0
  %2473 = vmatprep.mubr.f32.mxu0 %v507
  %2474 = vmatmul.mubr.f32.gmra.mrb[0].mxu0 %v506
  %v2475 = vpop.f32.mrb[0].mxu0
  %v2476 = vadd.f32 0.0, %v2475
  %v2477 = vpop.f32.mrb[0].mxu0
  %2478 = vmatprep.mubr.f32.mxu0 %v510
  %2479 = vmatmul.mubr.f32.gmra.mrb[0].mxu0 %v509
  %v2480 = vpop.f32.mrb[0].mxu0
  %v2481 = vadd.f32 0.0, %v2480
  %v2482 = vpop.f32.mrb[0].mxu0
  %2483 = vmatprep.mubr.f32.mxu0 %v513
  %2484 = vmatmul.mubr.f32.gmra.mrb[0].mxu0 %v512
  %v2485 = vpop.f32.mrb[0].mxu0
  %v2486 = vadd.f32 0.0, %v2485
  %v2487 = vpop.f32.mrb[0].mxu0
  %2488 = vmatprep.mubr.f32.mxu0 %v516
  %2489 = vmatmul.mubr.f32.gmra.mrb[0].mxu0 %v515
  %v2490 = vpop.f32.mrb[0].mxu0
  %v2491 = vadd.f32 0.0, %v2490
  %v2492 = vpop.f32.mrb[0].mxu0
  %2493 = vmatprep.mubr.f32.mxu0 %v519
  %2494 = vmatmul.mubr.f32.gmra.mrb[0].mxu0 %v518
  %v2495 = vpop.f32.mrb[0].mxu0
  %v2496 = vadd.f32 0.0, %v2495
  %v2497 = vpop.f32.mrb[0].mxu0
  %2498 = vmatprep.mubr.f32.mxu0 %v522
  %2499 = vmatmul.mubr.f32.gmra.mrb[0].mxu0 %v521
  %v2500 = vpop.f32.mrb[0].mxu0
  %v2501 = vadd.f32 0.0, %v2500
  %v2502 = vpop.f32.mrb[0].mxu0
  %2503 = vmatprep.mubr.f32.mxu0 %v525
  %2504 = vmatmul.mubr.f32.gmra.mrb[0].mxu0 %v524
  %v2505 = vpop.f32.mrb[0].mxu0
  %v2506 = vadd.f32 0.0, %v2505
  %v2507 = vpop.f32.mrb[0].mxu0
  %2508 = vmatprep.mubr.f32.mxu0 %v528
  %2509 = vmatmul.mubr.f32.gmra.mrb[0].mxu0 %v527
  %v2510 = vpop.f32.mrb[0].mxu0
  %v2511 = vadd.f32 0.0, %v2510
  %v2512 = vpop.f32.mrb[0].mxu0
  %2513 = vmatprep.mubr.f32.mxu0 %v531
  %2514 = vmatmul.mubr.f32.gmra.mrb[0].mxu0 %v530
  %v2515 = vpop.f32.mrb[0].mxu0
  %v2516 = vadd.f32 0.0, %v2515
  %v2517 = vpop.f32.mrb[0].mxu0
  %2518 = vmatprep.mubr.f32.mxu0 %v534
  %2519 = vmatmul.mubr.f32.gmra.mrb[0].mxu0 %v533
  %v2520 = vpop.f32.mrb[0].mxu0
  %v2521 = vadd.f32 0.0, %v2520
  %v2522 = vpop.f32.mrb[0].mxu0
  %2523 = vmatprep.mubr.f32.mxu0 %v537
  %2524 = vmatmul.mubr.f32.gmra.mrb[0].mxu0 %v536
  %v2525 = vpop.f32.mrb[0].mxu0
  %v2526 = vadd.f32 0.0, %v2525
  %v2527 = vpop.f32.mrb[0].mxu0
  %2528 = vmatprep.mubr.f32.mxu0 %v540
  %2529 = vmatmul.mubr.f32.gmra.mrb[0].mxu0 %v539
  %v2530 = vpop.f32.mrb[0].mxu0
  %v2531 = vadd.f32 0.0, %v2530
  %v2532 = vpop.f32.mrb[0].mxu0
  %2533 = vmatprep.mubr.f32.mxu0 %v543
  %2534 = vmatmul.mubr.f32.gmra.mrb[0].mxu0 %v542
  %v2535 = vpop.f32.mrb[0].mxu0
  %v2536 = vadd.f32 0.0, %v2535
  %v2537 = vpop.f32.mrb[0].mxu0
  %2538 = vmatprep.mubr.f32.mxu0 %v546
  %2539 = vmatmul.mubr.f32.gmra.mrb[0].mxu0 %v545
  %v2540 = vpop.f32.mrb[0].mxu0
  %v2541 = vadd.f32 0.0, %v2540
  %v2542 = vpop.f32.mrb[0].mxu0
  %2543 = vmatprep.mubr.f32.mxu0 %v549
  %2544 = vmatmul.mubr.f32.gmra.mrb[0].mxu0 %v548
  %v2545 = vpop.f32.mrb[0].mxu0
  %v2546 = vadd.f32 0.0, %v2545
  %v2547 = vpop.f32.mrb[0].mxu0
  %2548 = vmatprep.mubr.f32.mxu0 %v552
  %2549 = vmatmul.mubr.f32.gmra.mrb[0].mxu0 %v551
  %v2550 = vpop.f32.mrb[0].mxu0
  %v2551 = vadd.f32 0.0, %v2550
  %v2552 = vpop.f32.mrb[0].mxu0
  %2553 = vmatprep.mubr.f32.mxu0 %v555
  %2554 = vmatmul.mubr.f32.gmra.mrb[0].mxu0 %v554
  %v2555 = vpop.f32.mrb[0].mxu0
  %v2556 = vadd.f32 0.0, %v2555
  %v2557 = vpop.f32.mrb[0].mxu0
  %2558 = vmatprep.mubr.f32.mxu0 %v558
  %2559 = vmatmul.mubr.f32.gmra.mrb[0].mxu0 %v557
  %v2560 = vpop.f32.mrb[0].mxu0
  %v2561 = vadd.f32 0.0, %v2560
  %v2562 = vpop.f32.mrb[0].mxu0
  %2563 = vmatprep.mubr.f32.mxu0 %v561
  %2564 = vmatmul.mubr.f32.gmra.mrb[0].mxu0 %v560
  %v2565 = vpop.f32.mrb[0].mxu0
  %v2566 = vadd.f32 0.0, %v2565
  %v2567 = vpop.f32.mrb[0].mxu0
  %2568 = vmatprep.mubr.f32.mxu0 %v564
  %2569 = vmatmul.mubr.f32.gmra.mrb[0].mxu0 %v563
  %v2570 = vpop.f32.mrb[0].mxu0
  %v2571 = vadd.f32 0.0, %v2570
  %v2572 = vpop.f32.mrb[0].mxu0
  %2573 = vmatprep.mubr.f32.mxu0 %v567
  %2574 = vmatmul.mubr.f32.gmra.mrb[0].mxu0 %v566
  %v2575 = vpop.f32.mrb[0].mxu0
  %v2576 = vadd.f32 0.0, %v2575
  %v2577 = vpop.f32.mrb[0].mxu0
  %2578 = vmatprep.mubr.f32.mxu0 %v570
  %2579 = vmatmul.mubr.f32.gmra.mrb[0].mxu0 %v569
  %v2580 = vpop.f32.mrb[0].mxu0
  %v2581 = vadd.f32 0.0, %v2580
  %v2582 = vpop.f32.mrb[0].mxu0
  %2583 = vmatprep.mubr.f32.mxu0 %v573
  %2584 = vmatmul.mubr.f32.gmra.mrb[0].mxu0 %v572
  %v2585 = vpop.f32.mrb[0].mxu0
  %v2586 = vadd.f32 0.0, %v2585
  %v2587 = vpop.f32.mrb[0].mxu0
  %2588 = vmatprep.mubr.f32.mxu0 %v576
  %2589 = vmatmul.mubr.f32.gmra.mrb[0].mxu0 %v575
  %v2590 = vpop.f32.mrb[0].mxu0
  %v2591 = vadd.f32 0.0, %v2590
  %v2592 = vpop.f32.mrb[0].mxu0
  %2593 = vmatprep.mubr.f32.mxu0 %v579
  %2594 = vmatmul.mubr.f32.gmra.mrb[0].mxu0 %v578
  %v2595 = vpop.f32.mrb[0].mxu0
  %v2596 = vadd.f32 0.0, %v2595
  %v2597 = vpop.f32.mrb[0].mxu0
  %2598 = vmatprep.mubr.f32.mxu0 %v582
  %2599 = vmatmul.mubr.f32.gmra.mrb[0].mxu0 %v581
  %v2600 = vpop.f32.mrb[0].mxu0
  %v2601 = vadd.f32 0.0, %v2600
  %v2602 = vpop.f32.mrb[0].mxu0
  %2603 = vmatprep.mubr.f32.mxu0 %v585
  %2604 = vmatmul.mubr.f32.gmra.mrb[0].mxu0 %v584
  %v2605 = vpop.f32.mrb[0].mxu0
  %v2606 = vadd.f32 0.0, %v2605
  %v2607 = vpop.f32.mrb[0].mxu0
  %2608 = vmatprep.mubr.f32.mxu0 %v588
  %2609 = vmatmul.mubr.f32.gmra.mrb[0].mxu0 %v587
  %v2610 = vpop.f32.mrb[0].mxu0
  %v2611 = vadd.f32 0.0, %v2610
  %v2612 = vpop.f32.mrb[0].mxu0
  %2613 = vmatprep.mubr.f32.mxu0 %v591
  %2614 = vmatmul.mubr.f32.gmra.mrb[0].mxu0 %v590
  %v2615 = vpop.f32.mrb[0].mxu0
  %v2616 = vadd.f32 0.0, %v2615
  %v2617 = vpop.f32.mrb[0].mxu0
  %2618 = vmatprep.mubr.f32.mxu0 %v594
  %2619 = vmatmul.mubr.f32.gmra.mrb[0].mxu0 %v593
  %v2620 = vpop.f32.mrb[0].mxu0
  %v2621 = vadd.f32 0.0, %v2620
  %v2622 = vpop.f32.mrb[0].mxu0
  %2623 = vmatprep.mubr.f32.mxu0 %v597
  %2624 = vmatmul.mubr.f32.gmra.mrb[0].mxu0 %v596
  %v2625 = vpop.f32.mrb[0].mxu0
  %v2626 = vadd.f32 0.0, %v2625
  %v2627 = vpop.f32.mrb[0].mxu0
  %2628 = vmatprep.mubr.f32.mxu0 %v600
  %2629 = vmatmul.mubr.f32.gmra.mrb[0].mxu0 %v599
  %v2630 = vpop.f32.mrb[0].mxu0
  %v2631 = vadd.f32 0.0, %v2630
  %v2632 = vpop.f32.mrb[0].mxu0
  %2633 = vmatprep.mubr.f32.mxu0 %v603
  %2634 = vmatmul.mubr.f32.gmra.mrb[0].mxu0 %v602
  %v2635 = vpop.f32.mrb[0].mxu0
  %v2636 = vadd.f32 0.0, %v2635
  %v2637 = vpop.f32.mrb[0].mxu0
  %2638 = vmatprep.mubr.f32.mxu0 %v606
  %2639 = vmatmul.mubr.f32.gmra.mrb[0].mxu0 %v605
  %v2640 = vpop.f32.mrb[0].mxu0
  %v2641 = vadd.f32 0.0, %v2640
  %v2642 = vpop.f32.mrb[0].mxu0
  %2643 = vmatprep.mubr.f32.mxu0 %v609
  %2644 = vmatmul.mubr.f32.gmra.mrb[0].mxu0 %v608
  %v2645 = vpop.f32.mrb[0].mxu0
  %v2646 = vadd.f32 0.0, %v2645
  %v2647 = vpop.f32.mrb[0].mxu0
  %2648 = vmatprep.mubr.f32.mxu0 %v612
  %2649 = vmatmul.mubr.f32.gmra.mrb[0].mxu0 %v611
  %v2650 = vpop.f32.mrb[0].mxu0
  %v2651 = vadd.f32 0.0, %v2650
  %v2652 = vpop.f32.mrb[0].mxu0
  %2653 = vmatprep.mubr.f32.mxu0 %v615
  %2654 = vmatmul.mubr.f32.gmra.mrb[0].mxu0 %v614
  %v2655 = vpop.f32.mrb[0].mxu0
  %v2656 = vadd.f32 0.0, %v2655
  %v2657 = vpop.f32.mrb[0].mxu0
  %2658 = vmatprep.mubr.f32.mxu0 %v618
  %2659 = vmatmul.mubr.f32.gmra.mrb[0].mxu0 %v617
  %v2660 = vpop.f32.mrb[0].mxu0
  %v2661 = vadd.f32 0.0, %v2660
  %v2662 = vpop.f32.mrb[0].mxu0
  %2663 = vmatprep.mubr.f32.mxu0 %v621
  %2664 = vmatmul.mubr.f32.gmra.mrb[0].mxu0 %v620
  %v2665 = vpop.f32.mrb[0].mxu0
  %v2666 = vadd.f32 0.0, %v2665
  %v2667 = vpop.f32.mrb[0].mxu0
  %2668 = vmatprep.mubr.f32.mxu0 %v624
  %2669 = vmatmul.mubr.f32.gmra.mrb[0].mxu0 %v623
  %v2670 = vpop.f32.mrb[0].mxu0
  %v2671 = vadd.f32 0.0, %v2670
  %v2672 = vpop.f32.mrb[0].mxu0
  %2673 = vmatprep.mubr.f32.mxu0 %v627
  %2674 = vmatmul.mubr.f32.gmra.mrb[0].mxu0 %v626
  %v2675 = vpop.f32.mrb[0].mxu0
  %v2676 = vadd.f32 0.0, %v2675
  %v2677 = vpop.f32.mrb[0].mxu0
  %2678 = vmatprep.mubr.f32.mxu0 %v630
  %2679 = vmatmul.mubr.f32.gmra.mrb[0].mxu0 %v629
  %v2680 = vpop.f32.mrb[0].mxu0
  %v2681 = vadd.f32 0.0, %v2680
  %v2682 = vpop.f32.mrb[0].mxu0
  %2683 = vmatprep.mubr.f32.mxu0 %v633
  %2684 = vmatmul.mubr.f32.gmra.mrb[0].mxu0 %v632
  %v2685 = vpop.f32.mrb[0].mxu0
  %v2686 = vadd.f32 0.0, %v2685
  %v2687 = vpop.f32.mrb[0].mxu0
  %2688 = vmatprep.mubr.f32.mxu0 %v636
  %2689 = vmatmul.mubr.f32.gmra.mrb[0].mxu0 %v635
  %v2690 = vpop.f32.mrb[0].mxu0
  %v2691 = vadd.f32 0.0, %v2690
  %v2692 = vpop.f32.mrb[0].mxu0
  %2693 = vmatprep.mubr.f32.mxu0 %v639
  %2694 = vmatmul.mubr.f32.gmra.mrb[0].mxu0 %v638
  %v2695 = vpop.f32.mrb[0].mxu0
  %v2696 = vadd.f32 0.0, %v2695
  %v2697 = vpop.f32.mrb[0].mxu0
  %2698 = vmatprep.mubr.f32.mxu0 %v642
  %2699 = vmatmul.mubr.f32.gmra.mrb[0].mxu0 %v641
  %v2700 = vpop.f32.mrb[0].mxu0
  %v2701 = vadd.f32 0.0, %v2700
  %v2702 = vpop.f32.mrb[0].mxu0
  %2703 = vmatprep.mubr.f32.mxu0 %v645
  %2704 = vmatmul.mubr.f32.gmra.mrb[0].mxu0 %v644
  %v2705 = vpop.f32.mrb[0].mxu0
  %v2706 = vadd.f32 0.0, %v2705
  %v2707 = vpop.f32.mrb[0].mxu0
  %2708 = vmatprep.mubr.f32.mxu0 %v648
  %2709 = vmatmul.mubr.f32.gmra.mrb[0].mxu0 %v647
  %v2710 = vpop.f32.mrb[0].mxu0
  %v2711 = vadd.f32 0.0, %v2710
  %v2712 = vpop.f32.mrb[0].mxu0
  %2713 = vmatprep.mubr.f32.mxu0 %v651
  %2714 = vmatmul.mubr.f32.gmra.mrb[0].mxu0 %v650
  %v2715 = vpop.f32.mrb[0].mxu0
  %v2716 = vadd.f32 0.0, %v2715
  %v2717 = vpop.f32.mrb[0].mxu0
  %2718 = vmatprep.mubr.f32.mxu0 %v654
  %2719 = vmatmul.mubr.f32.gmra.mrb[0].mxu0 %v653
  %v2720 = vpop.f32.mrb[0].mxu0
  %v2721 = vadd.f32 0.0, %v2720
  %v2722 = vpop.f32.mrb[0].mxu0
  %2723 = vmatprep.mubr.f32.mxu0 %v657
  %2724 = vmatmul.mubr.f32.gmra.mrb[0].mxu0 %v656
  %v2725 = vpop.f32.mrb[0].mxu0
  %v2726 = vadd.f32 0.0, %v2725
  %v2727 = vpop.f32.mrb[0].mxu0
  %2728 = vmatprep.mubr.f32.mxu0 %v660
  %2729 = vmatmul.mubr.f32.gmra.mrb[0].mxu0 %v659
  %v2730 = vpop.f32.mrb[0].mxu0
  %v2731 = vadd.f32 0.0, %v2730
  %v2732 = vpop.f32.mrb[0].mxu0
  %2733 = vmatprep.mubr.f32.mxu0 %v663
  %2734 = vmatmul.mubr.f32.gmra.mrb[0].mxu0 %v662
  %v2735 = vpop.f32.mrb[0].mxu0
  %v2736 = vadd.f32 0.0, %v2735
  %v2737 = vpop.f32.mrb[0].mxu0
  %2738 = vmatprep.mubr.f32.mxu0 %v666
  %2739 = vmatmul.mubr.f32.gmra.mrb[0].mxu0 %v665
  %v2740 = vpop.f32.mrb[0].mxu0
  %v2741 = vadd.f32 0.0, %v2740
  %v2742 = vpop.f32.mrb[0].mxu0
  %2743 = vmatprep.mubr.f32.mxu0 %v669
  %2744 = vmatmul.mubr.f32.gmra.mrb[0].mxu0 %v668
  %v2745 = vpop.f32.mrb[0].mxu0
  %v2746 = vadd.f32 0.0, %v2745
  %v2747 = vpop.f32.mrb[0].mxu0
  %2748 = vmatprep.mubr.f32.mxu0 %v672
  %2749 = vmatmul.mubr.f32.gmra.mrb[0].mxu0 %v671
  %v2750 = vpop.f32.mrb[0].mxu0
  %v2751 = vadd.f32 0.0, %v2750
  %v2752 = vpop.f32.mrb[0].mxu0
  %2753 = vmatprep.mubr.f32.mxu0 %v675
  %2754 = vmatmul.mubr.f32.gmra.mrb[0].mxu0 %v674
  %v2755 = vpop.f32.mrb[0].mxu0
  %v2756 = vadd.f32 0.0, %v2755
  %v2757 = vpop.f32.mrb[0].mxu0
  %2758 = vmatprep.mubr.f32.mxu0 %v678
  %2759 = vmatmul.mubr.f32.gmra.mrb[0].mxu0 %v677
  %v2760 = vpop.f32.mrb[0].mxu0
  %v2761 = vadd.f32 0.0, %v2760
  %v2762 = vpop.f32.mrb[0].mxu0
  %2763 = vmatprep.mubr.f32.mxu0 %v681
  %2764 = vmatmul.mubr.f32.gmra.mrb[0].mxu0 %v680
  %v2765 = vpop.f32.mrb[0].mxu0
  %v2766 = vadd.f32 0.0, %v2765
  %v2767 = vpop.f32.mrb[0].mxu0
  %2768 = vmatprep.mubr.f32.mxu0 %v684
  %2769 = vmatmul.mubr.f32.gmra.mrb[0].mxu0 %v683
  %v2770 = vpop.f32.mrb[0].mxu0
  %v2771 = vadd.f32 0.0, %v2770
  %v2772 = vpop.f32.mrb[0].mxu0
  %2773 = vmatprep.mubr.f32.mxu0 %v687
  %2774 = vmatmul.mubr.f32.gmra.mrb[0].mxu0 %v686
  %v2775 = vpop.f32.mrb[0].mxu0
  %v2776 = vadd.f32 0.0, %v2775
  %v2777 = vpop.f32.mrb[0].mxu0
  %2778 = vmatprep.mubr.f32.mxu0 %v690
  %2779 = vmatmul.mubr.f32.gmra.mrb[0].mxu0 %v689
  %v2780 = vpop.f32.mrb[0].mxu0
  %v2781 = vadd.f32 0.0, %v2780
  %v2782 = vpop.f32.mrb[0].mxu0
  %2783 = vmatprep.mubr.f32.mxu0 %v693
  %2784 = vmatmul.mubr.f32.gmra.mrb[0].mxu0 %v692
  %v2785 = vpop.f32.mrb[0].mxu0
  %v2786 = vadd.f32 0.0, %v2785
  %v2787 = vpop.f32.mrb[0].mxu0
  %2788 = vmatprep.mubr.f32.mxu0 %v696
  %2789 = vmatmul.mubr.f32.gmra.mrb[0].mxu0 %v695
  %v2790 = vpop.f32.mrb[0].mxu0
  %v2791 = vadd.f32 0.0, %v2790
  %v2792 = vpop.f32.mrb[0].mxu0
  %2793 = vmatprep.mubr.f32.mxu0 %v699
  %2794 = vmatmul.mubr.f32.gmra.mrb[0].mxu0 %v698
  %v2795 = vpop.f32.mrb[0].mxu0
  %v2796 = vadd.f32 0.0, %v2795
  %v2797 = vpop.f32.mrb[0].mxu0
  %2798 = vmatprep.mubr.f32.mxu0 %v702
  %2799 = vmatmul.mubr.f32.gmra.mrb[0].mxu0 %v701
  %v2800 = vpop.f32.mrb[0].mxu0
  %v2801 = vadd.f32 0.0, %v2800
  %v2802 = vpop.f32.mrb[0].mxu0
  %2803 = vmatprep.mubr.f32.mxu0 %v705
  %2804 = vmatmul.mubr.f32.gmra.mrb[0].mxu0 %v704
  %v2805 = vpop.f32.mrb[0].mxu0
  %v2806 = vadd.f32 0.0, %v2805
  %v2807 = vpop.f32.mrb[0].mxu0
  %2808 = vmatprep.mubr.f32.mxu0 %v708
  %2809 = vmatmul.mubr.f32.gmra.mrb[0].mxu0 %v707
  %v2810 = vpop.f32.mrb[0].mxu0
  %v2811 = vadd.f32 0.0, %v2810
  %v2812 = vpop.f32.mrb[0].mxu0
  %2813 = vmatprep.mubr.f32.mxu0 %v711
  %2814 = vmatmul.mubr.f32.gmra.mrb[0].mxu0 %v710
  %v2815 = vpop.f32.mrb[0].mxu0
  %v2816 = vadd.f32 0.0, %v2815
  %v2817 = vpop.f32.mrb[0].mxu0
  %2818 = vmatprep.mubr.f32.mxu0 %v714
  %2819 = vmatmul.mubr.f32.gmra.mrb[0].mxu0 %v713
  %v2820 = vpop.f32.mrb[0].mxu0
  %v2821 = vadd.f32 0.0, %v2820
  %v2822 = vpop.f32.mrb[0].mxu0
  %2823 = vmatprep.mubr.f32.mxu0 %v717
  %2824 = vmatmul.mubr.f32.gmra.mrb[0].mxu0 %v716
  %v2825 = vpop.f32.mrb[0].mxu0
  %v2826 = vadd.f32 0.0, %v2825
  %v2827 = vpop.f32.mrb[0].mxu0
  %2828 = vmatprep.mubr.f32.mxu0 %v720
  %2829 = vmatmul.mubr.f32.gmra.mrb[0].mxu0 %v719
  %v2830 = vpop.f32.mrb[0].mxu0
  %v2831 = vadd.f32 0.0, %v2830
  %v2832 = vpop.f32.mrb[0].mxu0
  %2833 = vmatprep.mubr.f32.mxu0 %v723
  %2834 = vmatmul.mubr.f32.gmra.mrb[0].mxu0 %v722
  %v2835 = vpop.f32.mrb[0].mxu0
  %v2836 = vadd.f32 0.0, %v2835
  %v2837 = vpop.f32.mrb[0].mxu0
  %2838 = vmatprep.mubr.f32.mxu0 %v726
  %2839 = vmatmul.mubr.f32.gmra.mrb[0].mxu0 %v725
  %v2840 = vpop.f32.mrb[0].mxu0
  %v2841 = vadd.f32 0.0, %v2840
  %v2842 = vpop.f32.mrb[0].mxu0
  %2843 = vmatprep.mubr.f32.mxu0 %v729
  %2844 = vmatmul.mubr.f32.gmra.mrb[0].mxu0 %v728
  %v2845 = vpop.f32.mrb[0].mxu0
  %v2846 = vadd.f32 0.0, %v2845
  %v2847 = vpop.f32.mrb[0].mxu0
  %2848 = vmatprep.mubr.f32.mxu0 %v732
  %2849 = vmatmul.mubr.f32.gmra.mrb[0].mxu0 %v731
  %v2850 = vpop.f32.mrb[0].mxu0
  %v2851 = vadd.f32 0.0, %v2850
  %v2852 = vpop.f32.mrb[0].mxu0
  %2853 = vmatprep.mubr.f32.mxu0 %v735
  %2854 = vmatmul.mubr.f32.gmra.mrb[0].mxu0 %v734
  %v2855 = vpop.f32.mrb[0].mxu0
  %v2856 = vadd.f32 0.0, %v2855
  %v2857 = vpop.f32.mrb[0].mxu0
  %2858 = vmatprep.mubr.f32.mxu0 %v738
  %2859 = vmatmul.mubr.f32.gmra.mrb[0].mxu0 %v737
  %v2860 = vpop.f32.mrb[0].mxu0
  %v2861 = vadd.f32 0.0, %v2860
  %v2862 = vpop.f32.mrb[0].mxu0
  %2863 = vmatprep.mubr.f32.mxu0 %v741
  %2864 = vmatmul.mubr.f32.gmra.mrb[0].mxu0 %v740
  %v2865 = vpop.f32.mrb[0].mxu0
  %v2866 = vadd.f32 0.0, %v2865
  %v2867 = vpop.f32.mrb[0].mxu0
  %2868 = vmatprep.mubr.f32.mxu0 %v744
  %2869 = vmatmul.mubr.f32.gmra.mrb[0].mxu0 %v743
  %v2870 = vpop.f32.mrb[0].mxu0
  %v2871 = vadd.f32 0.0, %v2870
  %v2872 = vpop.f32.mrb[0].mxu0
  %2873 = vmatprep.mubr.f32.mxu0 %v747
  %2874 = vmatmul.mubr.f32.gmra.mrb[0].mxu0 %v746
  %v2875 = vpop.f32.mrb[0].mxu0
  %v2876 = vadd.f32 0.0, %v2875
  %v2877 = vpop.f32.mrb[0].mxu0
  %2878 = vmatprep.mubr.f32.mxu0 %v750
  %2879 = vmatmul.mubr.f32.gmra.mrb[0].mxu0 %v749
  %v2880 = vpop.f32.mrb[0].mxu0
  %v2881 = vadd.f32 0.0, %v2880
  %v2882 = vpop.f32.mrb[0].mxu0
  %2883 = vmatprep.mubr.f32.mxu0 %v753
  %2884 = vmatmul.mubr.f32.gmra.mrb[0].mxu0 %v752
  %v2885 = vpop.f32.mrb[0].mxu0
  %v2886 = vadd.f32 0.0, %v2885
  %v2887 = vpop.f32.mrb[0].mxu0
  %2888 = vmatprep.mubr.f32.mxu0 %v756
  %2889 = vmatmul.mubr.f32.gmra.mrb[0].mxu0 %v755
  %v2890 = vpop.f32.mrb[0].mxu0
  %v2891 = vadd.f32 0.0, %v2890
  %v2892 = vpop.f32.mrb[0].mxu0
  %2893 = vmatprep.mubr.f32.mxu0 %v759
  %2894 = vmatmul.mubr.f32.gmra.mrb[0].mxu0 %v758
  %v2895 = vpop.f32.mrb[0].mxu0
  %v2896 = vadd.f32 0.0, %v2895
  %v2897 = vpop.f32.mrb[0].mxu0
  %2898 = vmatprep.mubr.f32.mxu0 %v762
  %2899 = vmatmul.mubr.f32.gmra.mrb[0].mxu0 %v761
  %v2900 = vpop.f32.mrb[0].mxu0
  %v2901 = vadd.f32 0.0, %v2900
  %v2902 = vpop.f32.mrb[0].mxu0
  %2903 = vmatprep.mubr.f32.mxu0 %v765
  %2904 = vmatmul.mubr.f32.gmra.mrb[0].mxu0 %v764
  %v2905 = vpop.f32.mrb[0].mxu0
  %v2906 = vadd.f32 0.0, %v2905
  %v2907 = vpop.f32.mrb[0].mxu0
  %2908 = vmatprep.mubr.f32.mxu0 %v768
  %2909 = vmatmul.mubr.f32.gmra.mrb[0].mxu0 %v767
  %v2910 = vpop.f32.mrb[0].mxu0
  %v2911 = vadd.f32 0.0, %v2910
  %v2912 = vpop.f32.mrb[0].mxu0
  %2913 = vmatprep.mubr.f32.mxu0 %v771
  %2914 = vmatmul.mubr.f32.gmra.mrb[0].mxu0 %v770
  %v2915 = vpop.f32.mrb[0].mxu0
  %v2916 = vadd.f32 0.0, %v2915
  %v2917 = vpop.f32.mrb[0].mxu0
  %2918 = vmatprep.mubr.f32.mxu0 %v774
  %2919 = vmatmul.mubr.f32.gmra.mrb[0].mxu0 %v773
  %v2920 = vpop.f32.mrb[0].mxu0
  %v2921 = vadd.f32 0.0, %v2920
  %v2922 = vpop.f32.mrb[0].mxu0
  %2923 = vmatprep.mubr.f32.mxu0 %v777
  %2924 = vmatmul.mubr.f32.gmra.mrb[0].mxu0 %v776
  %v2925 = vpop.f32.mrb[0].mxu0
  %v2926 = vadd.f32 0.0, %v2925
  %v2927 = vpop.f32.mrb[0].mxu0
  %2928 = vdwg.mxu0
  %2929 = vmatprep.subr.mxu0 0.0
  %2930 = vmatpush1.msra.mxu0 %v811
  %2931 = vmatprep.subr.mxu0 0.0
  %2932 = vmatpush1.msra.mxu0 %v812
  %2933 = vmatprep.subr.mxu0 0.0
  %2934 = vmatpush1.msra.mxu0 %v813
  %2935 = vmatprep.subr.mxu0 0.0
  %2936 = vmatpush1.msra.mxu0 %v814
  %2937 = vmatprep.subr.mxu0 0.0
  %2938 = vmatpush1.msra.mxu0 0.0
  %2939 = vmatprep.subr.mxu0 0.0
  %2940 = vmatpush1.msra.mxu0 0.0
  %2941 = vmatprep.subr.mxu0 0.0
  %2942 = vmatpush1.msra.mxu0 0.0
  %2943 = vmatprep.subr.mxu0 0.0
  %2944 = vmatpush1.msra.mxu0 0.0
  %2945 = vmatprep.subr.mxu0 0.0
  %2946 = vmatpush1.msra.mxu0 0.0
  %2947 = vmatprep.subr.mxu0 0.0
  %2948 = vmatpush1.msra.mxu0 0.0
  %2949 = vmatprep.subr.mxu0 0.0
  %2950 = vmatpush1.msra.mxu0 0.0
  %2951 = vmatprep.subr.mxu0 0.0
  %2952 = vmatpush1.msra.mxu0 0.0
  %2953 = vmatprep.subr.mxu0 0.0
  %2954 = vmatpush1.msra.mxu0 0.0
  %2955 = vmatprep.subr.mxu0 0.0
  %2956 = vmatpush1.msra.mxu0 0.0
  %2957 = vmatprep.subr.mxu0 0.0
  %2958 = vmatpush1.msra.mxu0 0.0
  %2959 = vmatprep.subr.mxu0 0.0
  %2960 = vmatpush1.msra.mxu0 0.0
  %2961 = vmatprep.subr.mxu0 0.0
  %2962 = vmatpush1.msra.mxu0 0.0
  %2963 = vmatprep.subr.mxu0 0.0
  %2964 = vmatpush1.msra.mxu0 0.0
  %2965 = vmatprep.subr.mxu0 0.0
  %2966 = vmatpush1.msra.mxu0 0.0
  %2967 = vmatprep.subr.mxu0 0.0
  %2968 = vmatpush1.msra.mxu0 0.0
  %2969 = vmatprep.subr.mxu0 0.0
  %2970 = vmatpush1.msra.mxu0 0.0
  %2971 = vmatprep.subr.mxu0 0.0
  %2972 = vmatpush1.msra.mxu0 0.0
  %2973 = vmatprep.subr.mxu0 0.0
  %2974 = vmatpush1.msra.mxu0 0.0
  %2975 = vmatprep.subr.mxu0 0.0
  %2976 = vmatpush1.msra.mxu0 0.0
  %2977 = vmatprep.subr.mxu0 0.0
  %2978 = vmatpush1.msra.mxu0 0.0
  %2979 = vmatprep.subr.mxu0 0.0
  %2980 = vmatpush1.msra.mxu0 0.0
  %2981 = vmatprep.subr.mxu0 0.0
  %2982 = vmatpush1.msra.mxu0 0.0
  %2983 = vmatprep.subr.mxu0 0.0
  %2984 = vmatpush1.msra.mxu0 0.0
  %2985 = vmatprep.subr.mxu0 0.0
  %2986 = vmatpush1.msra.mxu0 0.0
  %2987 = vmatprep.subr.mxu0 0.0
  %2988 = vmatpush1.msra.mxu0 0.0
  %2989 = vmatprep.subr.mxu0 0.0
  %2990 = vmatpush1.msra.mxu0 0.0
  %2991 = vmatprep.subr.mxu0 0.0
  %2992 = vmatpush1.msra.mxu0 0.0
  %2993 = vmatprep.mubr.f32.mxu0 0.0
  %2994 = vmatmul.mubr.f32.gmra.mrb[0].mxu0 %v817
  %v2995 = vpop.f32.mrb[0].mxu0
  %v2996 = vadd.f32 %v1651, %v2995
  %v2997 = vpop.f32.mrb[0].mxu0
  %2998 = vmatprep.mubr.f32.mxu0 0.0
  %2999 = vmatmul.mubr.f32.gmra.mrb[0].mxu0 %v820
  %v3000 = vpop.f32.mrb[0].mxu0
  %v3001 = vadd.f32 %v1656, %v3000
  %v3002 = vpop.f32.mrb[0].mxu0
  %3003 = vmatprep.mubr.f32.mxu0 0.0
  %3004 = vmatmul.mubr.f32.gmra.mrb[0].mxu0 %v823
  %v3005 = vpop.f32.mrb[0].mxu0
  %v3006 = vadd.f32 %v1661, %v3005
  %v3007 = vpop.f32.mrb[0].mxu0
  %3008 = vmatprep.mubr.f32.mxu0 0.0
  %3009 = vmatmul.mubr.f32.gmra.mrb[0].mxu0 %v826
  %v3010 = vpop.f32.mrb[0].mxu0
  %v3011 = vadd.f32 %v1666, %v3010
  %v3012 = vpop.f32.mrb[0].mxu0
  %3013 = vmatprep.mubr.f32.mxu0 0.0
  %3014 = vmatmul.mubr.f32.gmra.mrb[0].mxu0 %v829
  %v3015 = vpop.f32.mrb[0].mxu0
  %v3016 = vadd.f32 %v1671, %v3015
  %v3017 = vpop.f32.mrb[0].mxu0
  %3018 = vmatprep.mubr.f32.mxu0 0.0
  %3019 = vmatmul.mubr.f32.gmra.mrb[0].mxu0 %v832
  %v3020 = vpop.f32.mrb[0].mxu0
  %v3021 = vadd.f32 %v1676, %v3020
  %v3022 = vpop.f32.mrb[0].mxu0
  %3023 = vmatprep.mubr.f32.mxu0 0.0
  %3024 = vmatmul.mubr.f32.gmra.mrb[0].mxu0 %v835
  %v3025 = vpop.f32.mrb[0].mxu0
  %v3026 = vadd.f32 %v1681, %v3025
  %v3027 = vpop.f32.mrb[0].mxu0
  %3028 = vmatprep.mubr.f32.mxu0 0.0
  %3029 = vmatmul.mubr.f32.gmra.mrb[0].mxu0 %v838
  %v3030 = vpop.f32.mrb[0].mxu0
  %v3031 = vadd.f32 %v1686, %v3030
  %v3032 = vpop.f32.mrb[0].mxu0
  %3033 = vmatprep.mubr.f32.mxu0 0.0
  %3034 = vmatmul.mubr.f32.gmra.mrb[0].mxu0 %v841
  %v3035 = vpop.f32.mrb[0].mxu0
  %v3036 = vadd.f32 %v1691, %v3035
  %v3037 = vpop.f32.mrb[0].mxu0
  %3038 = vmatprep.mubr.f32.mxu0 0.0
  %3039 = vmatmul.mubr.f32.gmra.mrb[0].mxu0 %v844
  %v3040 = vpop.f32.mrb[0].mxu0
  %v3041 = vadd.f32 %v1696, %v3040
  %v3042 = vpop.f32.mrb[0].mxu0
  %3043 = vmatprep.mubr.f32.mxu0 0.0
  %3044 = vmatmul.mubr.f32.gmra.mrb[0].mxu0 %v847
  %v3045 = vpop.f32.mrb[0].mxu0
  %v3046 = vadd.f32 %v1701, %v3045
  %v3047 = vpop.f32.mrb[0].mxu0
  %3048 = vmatprep.mubr.f32.mxu0 0.0
  %3049 = vmatmul.mubr.f32.gmra.mrb[0].mxu0 %v850
  %v3050 = vpop.f32.mrb[0].mxu0
  %v3051 = vadd.f32 %v1706, %v3050
  %v3052 = vpop.f32.mrb[0].mxu0
  %3053 = vmatprep.mubr.f32.mxu0 0.0
  %3054 = vmatmul.mubr.f32.gmra.mrb[0].mxu0 %v853
  %v3055 = vpop.f32.mrb[0].mxu0
  %v3056 = vadd.f32 %v1711, %v3055
  %v3057 = vpop.f32.mrb[0].mxu0
  %3058 = vmatprep.mubr.f32.mxu0 0.0
  %3059 = vmatmul.mubr.f32.gmra.mrb[0].mxu0 %v856
  %v3060 = vpop.f32.mrb[0].mxu0
  %v3061 = vadd.f32 %v1716, %v3060
  %v3062 = vpop.f32.mrb[0].mxu0
  %3063 = vmatprep.mubr.f32.mxu0 0.0
  %3064 = vmatmul.mubr.f32.gmra.mrb[0].mxu0 %v859
  %v3065 = vpop.f32.mrb[0].mxu0
  %v3066 = vadd.f32 %v1721, %v3065
  %v3067 = vpop.f32.mrb[0].mxu0
  %3068 = vmatprep.mubr.f32.mxu0 0.0
  %3069 = vmatmul.mubr.f32.gmra.mrb[0].mxu0 %v862
  %v3070 = vpop.f32.mrb[0].mxu0
  %v3071 = vadd.f32 %v1726, %v3070
  %v3072 = vpop.f32.mrb[0].mxu0
  %3073 = vmatprep.mubr.f32.mxu0 0.0
  %3074 = vmatmul.mubr.f32.gmra.mrb[0].mxu0 %v865
  %v3075 = vpop.f32.mrb[0].mxu0
  %v3076 = vadd.f32 %v1731, %v3075
  %v3077 = vpop.f32.mrb[0].mxu0
  %3078 = vmatprep.mubr.f32.mxu0 0.0
  %3079 = vmatmul.mubr.f32.gmra.mrb[0].mxu0 %v868
  %v3080 = vpop.f32.mrb[0].mxu0
  %v3081 = vadd.f32 %v1736, %v3080
  %v3082 = vpop.f32.mrb[0].mxu0
  %3083 = vmatprep.mubr.f32.mxu0 0.0
  %3084 = vmatmul.mubr.f32.gmra.mrb[0].mxu0 %v871
  %v3085 = vpop.f32.mrb[0].mxu0
  %v3086 = vadd.f32 %v1741, %v3085
  %v3087 = vpop.f32.mrb[0].mxu0
  %3088 = vmatprep.mubr.f32.mxu0 0.0
  %3089 = vmatmul.mubr.f32.gmra.mrb[0].mxu0 %v874
  %v3090 = vpop.f32.mrb[0].mxu0
  %v3091 = vadd.f32 %v1746, %v3090
  %v3092 = vpop.f32.mrb[0].mxu0
  %3093 = vmatprep.mubr.f32.mxu0 0.0
  %3094 = vmatmul.mubr.f32.gmra.mrb[0].mxu0 %v877
  %v3095 = vpop.f32.mrb[0].mxu0
  %v3096 = vadd.f32 %v1751, %v3095
  %v3097 = vpop.f32.mrb[0].mxu0
  %3098 = vmatprep.mubr.f32.mxu0 0.0
  %3099 = vmatmul.mubr.f32.gmra.mrb[0].mxu0 %v880
  %v3100 = vpop.f32.mrb[0].mxu0
  %v3101 = vadd.f32 %v1756, %v3100
  %v3102 = vpop.f32.mrb[0].mxu0
  %3103 = vmatprep.mubr.f32.mxu0 0.0
  %3104 = vmatmul.mubr.f32.gmra.mrb[0].mxu0 %v883
  %v3105 = vpop.f32.mrb[0].mxu0
  %v3106 = vadd.f32 %v1761, %v3105
  %v3107 = vpop.f32.mrb[0].mxu0
  %3108 = vmatprep.mubr.f32.mxu0 0.0
  %3109 = vmatmul.mubr.f32.gmra.mrb[0].mxu0 %v886
  %v3110 = vpop.f32.mrb[0].mxu0
  %v3111 = vadd.f32 %v1766, %v3110
  %v3112 = vpop.f32.mrb[0].mxu0
  %3113 = vmatprep.mubr.f32.mxu0 0.0
  %3114 = vmatmul.mubr.f32.gmra.mrb[0].mxu0 %v889
  %v3115 = vpop.f32.mrb[0].mxu0
  %v3116 = vadd.f32 %v1771, %v3115
  %v3117 = vpop.f32.mrb[0].mxu0
  %3118 = vmatprep.mubr.f32.mxu0 0.0
  %3119 = vmatmul.mubr.f32.gmra.mrb[0].mxu0 %v892
  %v3120 = vpop.f32.mrb[0].mxu0
  %v3121 = vadd.f32 %v1776, %v3120
  %v3122 = vpop.f32.mrb[0].mxu0
  %3123 = vmatprep.mubr.f32.mxu0 0.0
  %3124 = vmatmul.mubr.f32.gmra.mrb[0].mxu0 %v895
  %v3125 = vpop.f32.mrb[0].mxu0
  %v3126 = vadd.f32 %v1781, %v3125
  %v3127 = vpop.f32.mrb[0].mxu0
  %3128 = vmatprep.mubr.f32.mxu0 0.0
  %3129 = vmatmul.mubr.f32.gmra.mrb[0].mxu0 %v898
  %v3130 = vpop.f32.mrb[0].mxu0
  %v3131 = vadd.f32 %v1786, %v3130
  %v3132 = vpop.f32.mrb[0].mxu0
  %3133 = vmatprep.mubr.f32.mxu0 0.0
  %3134 = vmatmul.mubr.f32.gmra.mrb[0].mxu0 %v901
  %v3135 = vpop.f32.mrb[0].mxu0
  %v3136 = vadd.f32 %v1791, %v3135
  %v3137 = vpop.f32.mrb[0].mxu0
  %3138 = vmatprep.mubr.f32.mxu0 0.0
  %3139 = vmatmul.mubr.f32.gmra.mrb[0].mxu0 %v904
  %v3140 = vpop.f32.mrb[0].mxu0
  %v3141 = vadd.f32 %v1796, %v3140
  %v3142 = vpop.f32.mrb[0].mxu0
  %3143 = vmatprep.mubr.f32.mxu0 0.0
  %3144 = vmatmul.mubr.f32.gmra.mrb[0].mxu0 %v907
  %v3145 = vpop.f32.mrb[0].mxu0
  %v3146 = vadd.f32 %v1801, %v3145
  %v3147 = vpop.f32.mrb[0].mxu0
  %3148 = vmatprep.mubr.f32.mxu0 0.0
  %3149 = vmatmul.mubr.f32.gmra.mrb[0].mxu0 %v910
  %v3150 = vpop.f32.mrb[0].mxu0
  %v3151 = vadd.f32 %v1806, %v3150
  %v3152 = vpop.f32.mrb[0].mxu0
  %3153 = vmatprep.mubr.f32.mxu0 0.0
  %3154 = vmatmul.mubr.f32.gmra.mrb[0].mxu0 %v913
  %v3155 = vpop.f32.mrb[0].mxu0
  %v3156 = vadd.f32 %v1811, %v3155
  %v3157 = vpop.f32.mrb[0].mxu0
  %3158 = vmatprep.mubr.f32.mxu0 0.0
  %3159 = vmatmul.mubr.f32.gmra.mrb[0].mxu0 %v916
  %v3160 = vpop.f32.mrb[0].mxu0
  %v3161 = vadd.f32 %v1816, %v3160
  %v3162 = vpop.f32.mrb[0].mxu0
  %3163 = vmatprep.mubr.f32.mxu0 0.0
  %3164 = vmatmul.mubr.f32.gmra.mrb[0].mxu0 %v919
  %v3165 = vpop.f32.mrb[0].mxu0
  %v3166 = vadd.f32 %v1821, %v3165
  %v3167 = vpop.f32.mrb[0].mxu0
  %3168 = vmatprep.mubr.f32.mxu0 0.0
  %3169 = vmatmul.mubr.f32.gmra.mrb[0].mxu0 %v922
  %v3170 = vpop.f32.mrb[0].mxu0
  %v3171 = vadd.f32 %v1826, %v3170
  %v3172 = vpop.f32.mrb[0].mxu0
  %3173 = vmatprep.mubr.f32.mxu0 0.0
  %3174 = vmatmul.mubr.f32.gmra.mrb[0].mxu0 %v925
  %v3175 = vpop.f32.mrb[0].mxu0
  %v3176 = vadd.f32 %v1831, %v3175
  %v3177 = vpop.f32.mrb[0].mxu0
  %3178 = vmatprep.mubr.f32.mxu0 0.0
  %3179 = vmatmul.mubr.f32.gmra.mrb[0].mxu0 %v928
  %v3180 = vpop.f32.mrb[0].mxu0
  %v3181 = vadd.f32 %v1836, %v3180
  %v3182 = vpop.f32.mrb[0].mxu0
  %3183 = vmatprep.mubr.f32.mxu0 0.0
  %3184 = vmatmul.mubr.f32.gmra.mrb[0].mxu0 %v931
  %v3185 = vpop.f32.mrb[0].mxu0
  %v3186 = vadd.f32 %v1841, %v3185
  %v3187 = vpop.f32.mrb[0].mxu0
  %3188 = vmatprep.mubr.f32.mxu0 0.0
  %3189 = vmatmul.mubr.f32.gmra.mrb[0].mxu0 %v934
  %v3190 = vpop.f32.mrb[0].mxu0
  %v3191 = vadd.f32 %v1846, %v3190
  %v3192 = vpop.f32.mrb[0].mxu0
  %3193 = vmatprep.mubr.f32.mxu0 0.0
  %3194 = vmatmul.mubr.f32.gmra.mrb[0].mxu0 %v937
  %v3195 = vpop.f32.mrb[0].mxu0
  %v3196 = vadd.f32 %v1851, %v3195
  %v3197 = vpop.f32.mrb[0].mxu0
  %3198 = vmatprep.mubr.f32.mxu0 0.0
  %3199 = vmatmul.mubr.f32.gmra.mrb[0].mxu0 %v940
  %v3200 = vpop.f32.mrb[0].mxu0
  %v3201 = vadd.f32 %v1856, %v3200
  %v3202 = vpop.f32.mrb[0].mxu0
  %3203 = vmatprep.mubr.f32.mxu0 0.0
  %3204 = vmatmul.mubr.f32.gmra.mrb[0].mxu0 %v943
  %v3205 = vpop.f32.mrb[0].mxu0
  %v3206 = vadd.f32 %v1861, %v3205
  %v3207 = vpop.f32.mrb[0].mxu0
  %3208 = vmatprep.mubr.f32.mxu0 0.0
  %3209 = vmatmul.mubr.f32.gmra.mrb[0].mxu0 %v946
  %v3210 = vpop.f32.mrb[0].mxu0
  %v3211 = vadd.f32 %v1866, %v3210
  %v3212 = vpop.f32.mrb[0].mxu0
  %3213 = vmatprep.mubr.f32.mxu0 0.0
  %3214 = vmatmul.mubr.f32.gmra.mrb[0].mxu0 %v949
  %v3215 = vpop.f32.mrb[0].mxu0
  %v3216 = vadd.f32 %v1871, %v3215
  %v3217 = vpop.f32.mrb[0].mxu0
  %3218 = vmatprep.mubr.f32.mxu0 0.0
  %3219 = vmatmul.mubr.f32.gmra.mrb[0].mxu0 %v952
  %v3220 = vpop.f32.mrb[0].mxu0
  %v3221 = vadd.f32 %v1876, %v3220
  %v3222 = vpop.f32.mrb[0].mxu0
  %3223 = vmatprep.mubr.f32.mxu0 0.0
  %3224 = vmatmul.mubr.f32.gmra.mrb[0].mxu0 %v955
  %v3225 = vpop.f32.mrb[0].mxu0
  %v3226 = vadd.f32 %v1881, %v3225
  %v3227 = vpop.f32.mrb[0].mxu0
  %3228 = vmatprep.mubr.f32.mxu0 0.0
  %3229 = vmatmul.mubr.f32.gmra.mrb[0].mxu0 %v958
  %v3230 = vpop.f32.mrb[0].mxu0
  %v3231 = vadd.f32 %v1886, %v3230
  %v3232 = vpop.f32.mrb[0].mxu0
  %3233 = vmatprep.mubr.f32.mxu0 0.0
  %3234 = vmatmul.mubr.f32.gmra.mrb[0].mxu0 %v961
  %v3235 = vpop.f32.mrb[0].mxu0
  %v3236 = vadd.f32 %v1891, %v3235
  %v3237 = vpop.f32.mrb[0].mxu0
  %3238 = vmatprep.mubr.f32.mxu0 0.0
  %3239 = vmatmul.mubr.f32.gmra.mrb[0].mxu0 %v964
  %v3240 = vpop.f32.mrb[0].mxu0
  %v3241 = vadd.f32 %v1896, %v3240
  %v3242 = vpop.f32.mrb[0].mxu0
  %3243 = vmatprep.mubr.f32.mxu0 0.0
  %3244 = vmatmul.mubr.f32.gmra.mrb[0].mxu0 %v967
  %v3245 = vpop.f32.mrb[0].mxu0
  %v3246 = vadd.f32 %v1901, %v3245
  %v3247 = vpop.f32.mrb[0].mxu0
  %3248 = vmatprep.mubr.f32.mxu0 0.0
  %3249 = vmatmul.mubr.f32.gmra.mrb[0].mxu0 %v970
  %v3250 = vpop.f32.mrb[0].mxu0
  %v3251 = vadd.f32 %v1906, %v3250
  %v3252 = vpop.f32.mrb[0].mxu0
  %3253 = vmatprep.mubr.f32.mxu0 0.0
  %3254 = vmatmul.mubr.f32.gmra.mrb[0].mxu0 %v973
  %v3255 = vpop.f32.mrb[0].mxu0
  %v3256 = vadd.f32 %v1911, %v3255
  %v3257 = vpop.f32.mrb[0].mxu0
  %3258 = vmatprep.mubr.f32.mxu0 0.0
  %3259 = vmatmul.mubr.f32.gmra.mrb[0].mxu0 %v976
  %v3260 = vpop.f32.mrb[0].mxu0
  %v3261 = vadd.f32 %v1916, %v3260
  %v3262 = vpop.f32.mrb[0].mxu0
  %3263 = vmatprep.mubr.f32.mxu0 0.0
  %3264 = vmatmul.mubr.f32.gmra.mrb[0].mxu0 %v979
  %v3265 = vpop.f32.mrb[0].mxu0
  %v3266 = vadd.f32 %v1921, %v3265
  %v3267 = vpop.f32.mrb[0].mxu0
  %3268 = vmatprep.mubr.f32.mxu0 0.0
  %3269 = vmatmul.mubr.f32.gmra.mrb[0].mxu0 %v982
  %v3270 = vpop.f32.mrb[0].mxu0
  %v3271 = vadd.f32 %v1926, %v3270
  %v3272 = vpop.f32.mrb[0].mxu0
  %3273 = vmatprep.mubr.f32.mxu0 0.0
  %3274 = vmatmul.mubr.f32.gmra.mrb[0].mxu0 %v985
  %v3275 = vpop.f32.mrb[0].mxu0
  %v3276 = vadd.f32 %v1931, %v3275
  %v3277 = vpop.f32.mrb[0].mxu0
  %3278 = vmatprep.mubr.f32.mxu0 0.0
  %3279 = vmatmul.mubr.f32.gmra.mrb[0].mxu0 %v988
  %v3280 = vpop.f32.mrb[0].mxu0
  %v3281 = vadd.f32 %v1936, %v3280
  %v3282 = vpop.f32.mrb[0].mxu0
  %3283 = vmatprep.mubr.f32.mxu0 0.0
  %3284 = vmatmul.mubr.f32.gmra.mrb[0].mxu0 %v991
  %v3285 = vpop.f32.mrb[0].mxu0
  %v3286 = vadd.f32 %v1941, %v3285
  %v3287 = vpop.f32.mrb[0].mxu0
  %3288 = vmatprep.mubr.f32.mxu0 0.0
  %3289 = vmatmul.mubr.f32.gmra.mrb[0].mxu0 %v994
  %v3290 = vpop.f32.mrb[0].mxu0
  %v3291 = vadd.f32 %v1946, %v3290
  %v3292 = vpop.f32.mrb[0].mxu0
  %3293 = vmatprep.mubr.f32.mxu0 0.0
  %3294 = vmatmul.mubr.f32.gmra.mrb[0].mxu0 %v997
  %v3295 = vpop.f32.mrb[0].mxu0
  %v3296 = vadd.f32 %v1951, %v3295
  %v3297 = vpop.f32.mrb[0].mxu0
  %3298 = vmatprep.mubr.f32.mxu0 0.0
  %3299 = vmatmul.mubr.f32.gmra.mrb[0].mxu0 %v1000
  %v3300 = vpop.f32.mrb[0].mxu0
  %v3301 = vadd.f32 %v1956, %v3300
  %v3302 = vpop.f32.mrb[0].mxu0
  %3303 = vmatprep.mubr.f32.mxu0 0.0
  %3304 = vmatmul.mubr.f32.gmra.mrb[0].mxu0 %v1003
  %v3305 = vpop.f32.mrb[0].mxu0
  %v3306 = vadd.f32 %v1961, %v3305
  %v3307 = vpop.f32.mrb[0].mxu0
  %3308 = vmatprep.mubr.f32.mxu0 0.0
  %3309 = vmatmul.mubr.f32.gmra.mrb[0].mxu0 %v1006
  %v3310 = vpop.f32.mrb[0].mxu0
  %v3311 = vadd.f32 %v1966, %v3310
  %v3312 = vpop.f32.mrb[0].mxu0
  %3313 = vmatprep.mubr.f32.mxu0 0.0
  %3314 = vmatmul.mubr.f32.gmra.mrb[0].mxu0 %v1009
  %v3315 = vpop.f32.mrb[0].mxu0
  %v3316 = vadd.f32 %v1971, %v3315
  %v3317 = vpop.f32.mrb[0].mxu0
  %3318 = vmatprep.mubr.f32.mxu0 0.0
  %3319 = vmatmul.mubr.f32.gmra.mrb[0].mxu0 %v1012
  %v3320 = vpop.f32.mrb[0].mxu0
  %v3321 = vadd.f32 %v1976, %v3320
  %v3322 = vpop.f32.mrb[0].mxu0
  %3323 = vmatprep.mubr.f32.mxu0 0.0
  %3324 = vmatmul.mubr.f32.gmra.mrb[0].mxu0 %v1015
  %v3325 = vpop.f32.mrb[0].mxu0
  %v3326 = vadd.f32 %v1981, %v3325
  %v3327 = vpop.f32.mrb[0].mxu0
  %3328 = vmatprep.mubr.f32.mxu0 0.0
  %3329 = vmatmul.mubr.f32.gmra.mrb[0].mxu0 %v1018
  %v3330 = vpop.f32.mrb[0].mxu0
  %v3331 = vadd.f32 %v1986, %v3330
  %v3332 = vpop.f32.mrb[0].mxu0
  %3333 = vmatprep.mubr.f32.mxu0 0.0
  %3334 = vmatmul.mubr.f32.gmra.mrb[0].mxu0 %v1021
  %v3335 = vpop.f32.mrb[0].mxu0
  %v3336 = vadd.f32 %v1991, %v3335
  %v3337 = vpop.f32.mrb[0].mxu0
  %3338 = vmatprep.mubr.f32.mxu0 0.0
  %3339 = vmatmul.mubr.f32.gmra.mrb[0].mxu0 %v1024
  %v3340 = vpop.f32.mrb[0].mxu0
  %v3341 = vadd.f32 %v1996, %v3340
  %v3342 = vpop.f32.mrb[0].mxu0
  %3343 = vmatprep.mubr.f32.mxu0 0.0
  %3344 = vmatmul.mubr.f32.gmra.mrb[0].mxu0 %v1027
  %v3345 = vpop.f32.mrb[0].mxu0
  %v3346 = vadd.f32 %v2001, %v3345
  %v3347 = vpop.f32.mrb[0].mxu0
  %3348 = vmatprep.mubr.f32.mxu0 0.0
  %3349 = vmatmul.mubr.f32.gmra.mrb[0].mxu0 %v1030
  %v3350 = vpop.f32.mrb[0].mxu0
  %v3351 = vadd.f32 %v2006, %v3350
  %v3352 = vpop.f32.mrb[0].mxu0
  %3353 = vmatprep.mubr.f32.mxu0 0.0
  %3354 = vmatmul.mubr.f32.gmra.mrb[0].mxu0 %v1033
  %v3355 = vpop.f32.mrb[0].mxu0
  %v3356 = vadd.f32 %v2011, %v3355
  %v3357 = vpop.f32.mrb[0].mxu0
  %3358 = vmatprep.mubr.f32.mxu0 0.0
  %3359 = vmatmul.mubr.f32.gmra.mrb[0].mxu0 %v1036
  %v3360 = vpop.f32.mrb[0].mxu0
  %v3361 = vadd.f32 %v2016, %v3360
  %v3362 = vpop.f32.mrb[0].mxu0
  %3363 = vmatprep.mubr.f32.mxu0 0.0
  %3364 = vmatmul.mubr.f32.gmra.mrb[0].mxu0 %v1039
  %v3365 = vpop.f32.mrb[0].mxu0
  %v3366 = vadd.f32 %v2021, %v3365
  %v3367 = vpop.f32.mrb[0].mxu0
  %3368 = vmatprep.mubr.f32.mxu0 0.0
  %3369 = vmatmul.mubr.f32.gmra.mrb[0].mxu0 %v1042
  %v3370 = vpop.f32.mrb[0].mxu0
  %v3371 = vadd.f32 %v2026, %v3370
  %v3372 = vpop.f32.mrb[0].mxu0
  %3373 = vmatprep.mubr.f32.mxu0 0.0
  %3374 = vmatmul.mubr.f32.gmra.mrb[0].mxu0 %v1045
  %v3375 = vpop.f32.mrb[0].mxu0
  %v3376 = vadd.f32 %v2031, %v3375
  %v3377 = vpop.f32.mrb[0].mxu0
  %3378 = vmatprep.mubr.f32.mxu0 0.0
  %3379 = vmatmul.mubr.f32.gmra.mrb[0].mxu0 %v1048
  %v3380 = vpop.f32.mrb[0].mxu0
  %v3381 = vadd.f32 %v2036, %v3380
  %v3382 = vpop.f32.mrb[0].mxu0
  %3383 = vmatprep.mubr.f32.mxu0 0.0
  %3384 = vmatmul.mubr.f32.gmra.mrb[0].mxu0 %v1051
  %v3385 = vpop.f32.mrb[0].mxu0
  %v3386 = vadd.f32 %v2041, %v3385
  %v3387 = vpop.f32.mrb[0].mxu0
  %3388 = vmatprep.mubr.f32.mxu0 0.0
  %3389 = vmatmul.mubr.f32.gmra.mrb[0].mxu0 %v1054
  %v3390 = vpop.f32.mrb[0].mxu0
  %v3391 = vadd.f32 %v2046, %v3390
  %v3392 = vpop.f32.mrb[0].mxu0
  %3393 = vmatprep.mubr.f32.mxu0 0.0
  %3394 = vmatmul.mubr.f32.gmra.mrb[0].mxu0 %v1057
  %v3395 = vpop.f32.mrb[0].mxu0
  %v3396 = vadd.f32 %v2051, %v3395
  %v3397 = vpop.f32.mrb[0].mxu0
  %3398 = vmatprep.mubr.f32.mxu0 0.0
  %3399 = vmatmul.mubr.f32.gmra.mrb[0].mxu0 %v1060
  %v3400 = vpop.f32.mrb[0].mxu0
  %v3401 = vadd.f32 %v2056, %v3400
  %v3402 = vpop.f32.mrb[0].mxu0
  %3403 = vmatprep.mubr.f32.mxu0 0.0
  %3404 = vmatmul.mubr.f32.gmra.mrb[0].mxu0 %v1063
  %v3405 = vpop.f32.mrb[0].mxu0
  %v3406 = vadd.f32 %v2061, %v3405
  %v3407 = vpop.f32.mrb[0].mxu0
  %3408 = vmatprep.mubr.f32.mxu0 0.0
  %3409 = vmatmul.mubr.f32.gmra.mrb[0].mxu0 %v1066
  %v3410 = vpop.f32.mrb[0].mxu0
  %v3411 = vadd.f32 %v2066, %v3410
  %v3412 = vpop.f32.mrb[0].mxu0
  %3413 = vmatprep.mubr.f32.mxu0 0.0
  %3414 = vmatmul.mubr.f32.gmra.mrb[0].mxu0 %v1069
  %v3415 = vpop.f32.mrb[0].mxu0
  %v3416 = vadd.f32 %v2071, %v3415
  %v3417 = vpop.f32.mrb[0].mxu0
  %3418 = vmatprep.mubr.f32.mxu0 0.0
  %3419 = vmatmul.mubr.f32.gmra.mrb[0].mxu0 %v1072
  %v3420 = vpop.f32.mrb[0].mxu0
  %v3421 = vadd.f32 %v2076, %v3420
  %v3422 = vpop.f32.mrb[0].mxu0
  %3423 = vmatprep.mubr.f32.mxu0 0.0
  %3424 = vmatmul.mubr.f32.gmra.mrb[0].mxu0 %v1075
  %v3425 = vpop.f32.mrb[0].mxu0
  %v3426 = vadd.f32 %v2081, %v3425
  %v3427 = vpop.f32.mrb[0].mxu0
  %3428 = vmatprep.mubr.f32.mxu0 0.0
  %3429 = vmatmul.mubr.f32.gmra.mrb[0].mxu0 %v1078
  %v3430 = vpop.f32.mrb[0].mxu0
  %v3431 = vadd.f32 %v2086, %v3430
  %v3432 = vpop.f32.mrb[0].mxu0
  %3433 = vmatprep.mubr.f32.mxu0 0.0
  %3434 = vmatmul.mubr.f32.gmra.mrb[0].mxu0 %v1081
  %v3435 = vpop.f32.mrb[0].mxu0
  %v3436 = vadd.f32 %v2091, %v3435
  %v3437 = vpop.f32.mrb[0].mxu0
  %3438 = vmatprep.mubr.f32.mxu0 0.0
  %3439 = vmatmul.mubr.f32.gmra.mrb[0].mxu0 %v1084
  %v3440 = vpop.f32.mrb[0].mxu0
  %v3441 = vadd.f32 %v2096, %v3440
  %v3442 = vpop.f32.mrb[0].mxu0
  %3443 = vmatprep.mubr.f32.mxu0 0.0
  %3444 = vmatmul.mubr.f32.gmra.mrb[0].mxu0 %v1087
  %v3445 = vpop.f32.mrb[0].mxu0
  %v3446 = vadd.f32 %v2101, %v3445
  %v3447 = vpop.f32.mrb[0].mxu0
  %3448 = vmatprep.mubr.f32.mxu0 0.0
  %3449 = vmatmul.mubr.f32.gmra.mrb[0].mxu0 %v1090
  %v3450 = vpop.f32.mrb[0].mxu0
  %v3451 = vadd.f32 %v2106, %v3450
  %v3452 = vpop.f32.mrb[0].mxu0
  %3453 = vmatprep.mubr.f32.mxu0 0.0
  %3454 = vmatmul.mubr.f32.gmra.mrb[0].mxu0 %v1093
  %v3455 = vpop.f32.mrb[0].mxu0
  %v3456 = vadd.f32 %v2111, %v3455
  %v3457 = vpop.f32.mrb[0].mxu0
  %3458 = vmatprep.mubr.f32.mxu0 0.0
  %3459 = vmatmul.mubr.f32.gmra.mrb[0].mxu0 %v1096
  %v3460 = vpop.f32.mrb[0].mxu0
  %v3461 = vadd.f32 %v2116, %v3460
  %v3462 = vpop.f32.mrb[0].mxu0
  %3463 = vmatprep.mubr.f32.mxu0 0.0
  %3464 = vmatmul.mubr.f32.gmra.mrb[0].mxu0 %v1099
  %v3465 = vpop.f32.mrb[0].mxu0
  %v3466 = vadd.f32 %v2121, %v3465
  %v3467 = vpop.f32.mrb[0].mxu0
  %3468 = vmatprep.mubr.f32.mxu0 0.0
  %3469 = vmatmul.mubr.f32.gmra.mrb[0].mxu0 %v1102
  %v3470 = vpop.f32.mrb[0].mxu0
  %v3471 = vadd.f32 %v2126, %v3470
  %v3472 = vpop.f32.mrb[0].mxu0
  %3473 = vmatprep.mubr.f32.mxu0 0.0
  %3474 = vmatmul.mubr.f32.gmra.mrb[0].mxu0 %v1105
  %v3475 = vpop.f32.mrb[0].mxu0
  %v3476 = vadd.f32 %v2131, %v3475
  %v3477 = vpop.f32.mrb[0].mxu0
  %3478 = vmatprep.mubr.f32.mxu0 0.0
  %3479 = vmatmul.mubr.f32.gmra.mrb[0].mxu0 %v1108
  %v3480 = vpop.f32.mrb[0].mxu0
  %v3481 = vadd.f32 %v2136, %v3480
  %v3482 = vpop.f32.mrb[0].mxu0
  %3483 = vmatprep.mubr.f32.mxu0 0.0
  %3484 = vmatmul.mubr.f32.gmra.mrb[0].mxu0 %v1111
  %v3485 = vpop.f32.mrb[0].mxu0
  %v3486 = vadd.f32 %v2141, %v3485
  %v3487 = vpop.f32.mrb[0].mxu0
  %3488 = vmatprep.mubr.f32.mxu0 0.0
  %3489 = vmatmul.mubr.f32.gmra.mrb[0].mxu0 %v1114
  %v3490 = vpop.f32.mrb[0].mxu0
  %v3491 = vadd.f32 %v2146, %v3490
  %v3492 = vpop.f32.mrb[0].mxu0
  %3493 = vmatprep.mubr.f32.mxu0 0.0
  %3494 = vmatmul.mubr.f32.gmra.mrb[0].mxu0 %v1117
  %v3495 = vpop.f32.mrb[0].mxu0
  %v3496 = vadd.f32 %v2151, %v3495
  %v3497 = vpop.f32.mrb[0].mxu0
  %3498 = vmatprep.mubr.f32.mxu0 0.0
  %3499 = vmatmul.mubr.f32.gmra.mrb[0].mxu0 %v1120
  %v3500 = vpop.f32.mrb[0].mxu0
  %v3501 = vadd.f32 %v2156, %v3500
  %v3502 = vpop.f32.mrb[0].mxu0
  %3503 = vmatprep.mubr.f32.mxu0 0.0
  %3504 = vmatmul.mubr.f32.gmra.mrb[0].mxu0 %v1123
  %v3505 = vpop.f32.mrb[0].mxu0
  %v3506 = vadd.f32 %v2161, %v3505
  %v3507 = vpop.f32.mrb[0].mxu0
  %3508 = vmatprep.mubr.f32.mxu0 0.0
  %3509 = vmatmul.mubr.f32.gmra.mrb[0].mxu0 %v1126
  %v3510 = vpop.f32.mrb[0].mxu0
  %v3511 = vadd.f32 %v2166, %v3510
  %v3512 = vpop.f32.mrb[0].mxu0
  %3513 = vmatprep.mubr.f32.mxu0 0.0
  %3514 = vmatmul.mubr.f32.gmra.mrb[0].mxu0 %v1129
  %v3515 = vpop.f32.mrb[0].mxu0
  %v3516 = vadd.f32 %v2171, %v3515
  %v3517 = vpop.f32.mrb[0].mxu0
  %3518 = vmatprep.mubr.f32.mxu0 0.0
  %3519 = vmatmul.mubr.f32.gmra.mrb[0].mxu0 %v1132
  %v3520 = vpop.f32.mrb[0].mxu0
  %v3521 = vadd.f32 %v2176, %v3520
  %v3522 = vpop.f32.mrb[0].mxu0
  %3523 = vmatprep.mubr.f32.mxu0 0.0
  %3524 = vmatmul.mubr.f32.gmra.mrb[0].mxu0 %v1135
  %v3525 = vpop.f32.mrb[0].mxu0
  %v3526 = vadd.f32 %v2181, %v3525
  %v3527 = vpop.f32.mrb[0].mxu0
  %3528 = vmatprep.mubr.f32.mxu0 0.0
  %3529 = vmatmul.mubr.f32.gmra.mrb[0].mxu0 %v1138
  %v3530 = vpop.f32.mrb[0].mxu0
  %v3531 = vadd.f32 %v2186, %v3530
  %v3532 = vpop.f32.mrb[0].mxu0
  %3533 = vmatprep.mubr.f32.mxu0 0.0
  %3534 = vmatmul.mubr.f32.gmra.mrb[0].mxu0 %v1141
  %v3535 = vpop.f32.mrb[0].mxu0
  %v3536 = vadd.f32 %v2191, %v3535
  %v3537 = vpop.f32.mrb[0].mxu0
  %3538 = vmatprep.mubr.f32.mxu0 0.0
  %3539 = vmatmul.mubr.f32.gmra.mrb[0].mxu0 %v1144
  %v3540 = vpop.f32.mrb[0].mxu0
  %v3541 = vadd.f32 %v2196, %v3540
  %v3542 = vpop.f32.mrb[0].mxu0
  %3543 = vmatprep.mubr.f32.mxu0 0.0
  %3544 = vmatmul.mubr.f32.gmra.mrb[0].mxu0 %v1147
  %v3545 = vpop.f32.mrb[0].mxu0
  %v3546 = vadd.f32 %v2201, %v3545
  %v3547 = vpop.f32.mrb[0].mxu0
  %3548 = vmatprep.mubr.f32.mxu0 0.0
  %3549 = vmatmul.mubr.f32.gmra.mrb[0].mxu0 %v1150
  %v3550 = vpop.f32.mrb[0].mxu0
  %v3551 = vadd.f32 %v2206, %v3550
  %v3552 = vpop.f32.mrb[0].mxu0
  %3553 = vmatprep.mubr.f32.mxu0 0.0
  %3554 = vmatmul.mubr.f32.gmra.mrb[0].mxu0 %v1153
  %v3555 = vpop.f32.mrb[0].mxu0
  %v3556 = vadd.f32 %v2211, %v3555
  %v3557 = vpop.f32.mrb[0].mxu0
  %3558 = vmatprep.mubr.f32.mxu0 0.0
  %3559 = vmatmul.mubr.f32.gmra.mrb[0].mxu0 %v1156
  %v3560 = vpop.f32.mrb[0].mxu0
  %v3561 = vadd.f32 %v2216, %v3560
  %v3562 = vpop.f32.mrb[0].mxu0
  %3563 = vmatprep.mubr.f32.mxu0 0.0
  %3564 = vmatmul.mubr.f32.gmra.mrb[0].mxu0 %v1159
  %v3565 = vpop.f32.mrb[0].mxu0
  %v3566 = vadd.f32 %v2221, %v3565
  %v3567 = vpop.f32.mrb[0].mxu0
  %3568 = vmatprep.mubr.f32.mxu0 0.0
  %3569 = vmatmul.mubr.f32.gmra.mrb[0].mxu0 %v1162
  %v3570 = vpop.f32.mrb[0].mxu0
  %v3571 = vadd.f32 %v2226, %v3570
  %v3572 = vpop.f32.mrb[0].mxu0
  %3573 = vmatprep.mubr.f32.mxu0 0.0
  %3574 = vmatmul.mubr.f32.gmra.mrb[0].mxu0 %v1165
  %v3575 = vpop.f32.mrb[0].mxu0
  %v3576 = vadd.f32 %v2231, %v3575
  %v3577 = vpop.f32.mrb[0].mxu0
  %3578 = vmatprep.mubr.f32.mxu0 0.0
  %3579 = vmatmul.mubr.f32.gmra.mrb[0].mxu0 %v1168
  %v3580 = vpop.f32.mrb[0].mxu0
  %v3581 = vadd.f32 %v2236, %v3580
  %v3582 = vpop.f32.mrb[0].mxu0
  %3583 = vmatprep.mubr.f32.mxu0 0.0
  %3584 = vmatmul.mubr.f32.gmra.mrb[0].mxu0 %v1171
  %v3585 = vpop.f32.mrb[0].mxu0
  %v3586 = vadd.f32 %v2241, %v3585
  %v3587 = vpop.f32.mrb[0].mxu0
  %3588 = vmatprep.mubr.f32.mxu0 0.0
  %3589 = vmatmul.mubr.f32.gmra.mrb[0].mxu0 %v1174
  %v3590 = vpop.f32.mrb[0].mxu0
  %v3591 = vadd.f32 %v2246, %v3590
  %v3592 = vpop.f32.mrb[0].mxu0
  %3593 = vmatprep.mubr.f32.mxu0 0.0
  %3594 = vmatmul.mubr.f32.gmra.mrb[0].mxu0 %v1177
  %v3595 = vpop.f32.mrb[0].mxu0
  %v3596 = vadd.f32 %v2251, %v3595
  %v3597 = vpop.f32.mrb[0].mxu0
  %3598 = vmatprep.mubr.f32.mxu0 0.0
  %3599 = vmatmul.mubr.f32.gmra.mrb[0].mxu0 %v1180
  %v3600 = vpop.f32.mrb[0].mxu0
  %v3601 = vadd.f32 %v2256, %v3600
  %v3602 = vpop.f32.mrb[0].mxu0
  %3603 = vmatprep.mubr.f32.mxu0 0.0
  %3604 = vmatmul.mubr.f32.gmra.mrb[0].mxu0 %v1183
  %v3605 = vpop.f32.mrb[0].mxu0
  %v3606 = vadd.f32 %v2261, %v3605
  %v3607 = vpop.f32.mrb[0].mxu0
  %3608 = vmatprep.mubr.f32.mxu0 0.0
  %3609 = vmatmul.mubr.f32.gmra.mrb[0].mxu0 %v1186
  %v3610 = vpop.f32.mrb[0].mxu0
  %v3611 = vadd.f32 %v2266, %v3610
  %v3612 = vpop.f32.mrb[0].mxu0
  %3613 = vmatprep.mubr.f32.mxu0 0.0
  %3614 = vmatmul.mubr.f32.gmra.mrb[0].mxu0 %v1189
  %v3615 = vpop.f32.mrb[0].mxu0
  %v3616 = vadd.f32 %v2271, %v3615
  %v3617 = vpop.f32.mrb[0].mxu0
  %3618 = vmatprep.mubr.f32.mxu0 0.0
  %3619 = vmatmul.mubr.f32.gmra.mrb[0].mxu0 %v1192
  %v3620 = vpop.f32.mrb[0].mxu0
  %v3621 = vadd.f32 %v2276, %v3620
  %v3622 = vpop.f32.mrb[0].mxu0
  %3623 = vmatprep.mubr.f32.mxu0 0.0
  %3624 = vmatmul.mubr.f32.gmra.mrb[0].mxu0 %v1195
  %v3625 = vpop.f32.mrb[0].mxu0
  %v3626 = vadd.f32 %v2281, %v3625
  %v3627 = vpop.f32.mrb[0].mxu0
  %3628 = vmatprep.mubr.f32.mxu0 0.0
  %3629 = vmatmul.mubr.f32.gmra.mrb[0].mxu0 %v1198
  %v3630 = vpop.f32.mrb[0].mxu0
  %v3631 = vadd.f32 %v2286, %v3630
  %v3632 = vpop.f32.mrb[0].mxu0
  %3633 = vmatprep.mubr.f32.mxu0 0.0
  %3634 = vmatmul.mubr.f32.gmra.mrb[0].mxu0 %v1201
  %v3635 = vpop.f32.mrb[0].mxu0
  %v3636 = vadd.f32 %v2291, %v3635
  %v3637 = vpop.f32.mrb[0].mxu0
  %3638 = vmatprep.mubr.f32.mxu0 0.0
  %3639 = vmatmul.mubr.f32.gmra.mrb[0].mxu0 %v1204
  %v3640 = vpop.f32.mrb[0].mxu0
  %v3641 = vadd.f32 %v2296, %v3640
  %v3642 = vpop.f32.mrb[0].mxu0
  %3643 = vmatprep.mubr.f32.mxu0 0.0
  %3644 = vmatmul.mubr.f32.gmra.mrb[0].mxu0 %v1207
  %v3645 = vpop.f32.mrb[0].mxu0
  %v3646 = vadd.f32 %v2301, %v3645
  %v3647 = vpop.f32.mrb[0].mxu0
  %3648 = vmatprep.mubr.f32.mxu0 0.0
  %3649 = vmatmul.mubr.f32.gmra.mrb[0].mxu0 %v1210
  %v3650 = vpop.f32.mrb[0].mxu0
  %v3651 = vadd.f32 %v2306, %v3650
  %v3652 = vpop.f32.mrb[0].mxu0
  %3653 = vmatprep.mubr.f32.mxu0 0.0
  %3654 = vmatmul.mubr.f32.gmra.mrb[0].mxu0 %v1213
  %v3655 = vpop.f32.mrb[0].mxu0
  %v3656 = vadd.f32 %v2311, %v3655
  %v3657 = vpop.f32.mrb[0].mxu0
  %3658 = vmatprep.mubr.f32.mxu0 0.0
  %3659 = vmatmul.mubr.f32.gmra.mrb[0].mxu0 %v1216
  %v3660 = vpop.f32.mrb[0].mxu0
  %v3661 = vadd.f32 %v2316, %v3660
  %v3662 = vpop.f32.mrb[0].mxu0
  %3663 = vmatprep.mubr.f32.mxu0 0.0
  %3664 = vmatmul.mubr.f32.gmra.mrb[0].mxu0 %v1219
  %v3665 = vpop.f32.mrb[0].mxu0
  %v3666 = vadd.f32 %v2321, %v3665
  %v3667 = vpop.f32.mrb[0].mxu0
  %3668 = vmatprep.mubr.f32.mxu0 0.0
  %3669 = vmatmul.mubr.f32.gmra.mrb[0].mxu0 %v1222
  %v3670 = vpop.f32.mrb[0].mxu0
  %v3671 = vadd.f32 %v2326, %v3670
  %v3672 = vpop.f32.mrb[0].mxu0
  %3673 = vmatprep.mubr.f32.mxu0 0.0
  %3674 = vmatmul.mubr.f32.gmra.mrb[0].mxu0 %v1225
  %v3675 = vpop.f32.mrb[0].mxu0
  %v3676 = vadd.f32 %v2331, %v3675
  %v3677 = vpop.f32.mrb[0].mxu0
  %3678 = vmatprep.mubr.f32.mxu0 0.0
  %3679 = vmatmul.mubr.f32.gmra.mrb[0].mxu0 %v1228
  %v3680 = vpop.f32.mrb[0].mxu0
  %v3681 = vadd.f32 %v2336, %v3680
  %v3682 = vpop.f32.mrb[0].mxu0
  %3683 = vmatprep.mubr.f32.mxu0 0.0
  %3684 = vmatmul.mubr.f32.gmra.mrb[0].mxu0 %v1231
  %v3685 = vpop.f32.mrb[0].mxu0
  %v3686 = vadd.f32 %v2341, %v3685
  %v3687 = vpop.f32.mrb[0].mxu0
  %3688 = vmatprep.mubr.f32.mxu0 0.0
  %3689 = vmatmul.mubr.f32.gmra.mrb[0].mxu0 %v1234
  %v3690 = vpop.f32.mrb[0].mxu0
  %v3691 = vadd.f32 %v2346, %v3690
  %v3692 = vpop.f32.mrb[0].mxu0
  %3693 = vmatprep.mubr.f32.mxu0 0.0
  %3694 = vmatmul.mubr.f32.gmra.mrb[0].mxu0 %v1237
  %v3695 = vpop.f32.mrb[0].mxu0
  %v3696 = vadd.f32 %v2351, %v3695
  %v3697 = vpop.f32.mrb[0].mxu0
  %3698 = vmatprep.mubr.f32.mxu0 0.0
  %3699 = vmatmul.mubr.f32.gmra.mrb[0].mxu0 %v1240
  %v3700 = vpop.f32.mrb[0].mxu0
  %v3701 = vadd.f32 %v2356, %v3700
  %v3702 = vpop.f32.mrb[0].mxu0
  %3703 = vmatprep.mubr.f32.mxu0 0.0
  %3704 = vmatmul.mubr.f32.gmra.mrb[0].mxu0 %v1243
  %v3705 = vpop.f32.mrb[0].mxu0
  %v3706 = vadd.f32 %v2361, %v3705
  %v3707 = vpop.f32.mrb[0].mxu0
  %3708 = vmatprep.mubr.f32.mxu0 0.0
  %3709 = vmatmul.mubr.f32.gmra.mrb[0].mxu0 %v1246
  %v3710 = vpop.f32.mrb[0].mxu0
  %v3711 = vadd.f32 %v2366, %v3710
  %v3712 = vpop.f32.mrb[0].mxu0
  %3713 = vmatprep.mubr.f32.mxu0 0.0
  %3714 = vmatmul.mubr.f32.gmra.mrb[0].mxu0 %v1249
  %v3715 = vpop.f32.mrb[0].mxu0
  %v3716 = vadd.f32 %v2371, %v3715
  %v3717 = vpop.f32.mrb[0].mxu0
  %3718 = vmatprep.mubr.f32.mxu0 0.0
  %3719 = vmatmul.mubr.f32.gmra.mrb[0].mxu0 %v1252
  %v3720 = vpop.f32.mrb[0].mxu0
  %v3721 = vadd.f32 %v2376, %v3720
  %v3722 = vpop.f32.mrb[0].mxu0
  %3723 = vmatprep.mubr.f32.mxu0 0.0
  %3724 = vmatmul.mubr.f32.gmra.mrb[0].mxu0 %v1255
  %v3725 = vpop.f32.mrb[0].mxu0
  %v3726 = vadd.f32 %v2381, %v3725
  %v3727 = vpop.f32.mrb[0].mxu0
  %3728 = vmatprep.mubr.f32.mxu0 0.0
  %3729 = vmatmul.mubr.f32.gmra.mrb[0].mxu0 %v1258
  %v3730 = vpop.f32.mrb[0].mxu0
  %v3731 = vadd.f32 %v2386, %v3730
  %v3732 = vpop.f32.mrb[0].mxu0
  %3733 = vmatprep.mubr.f32.mxu0 0.0
  %3734 = vmatmul.mubr.f32.gmra.mrb[0].mxu0 %v1261
  %v3735 = vpop.f32.mrb[0].mxu0
  %v3736 = vadd.f32 %v2391, %v3735
  %v3737 = vpop.f32.mrb[0].mxu0
  %3738 = vmatprep.mubr.f32.mxu0 0.0
  %3739 = vmatmul.mubr.f32.gmra.mrb[0].mxu0 %v1264
  %v3740 = vpop.f32.mrb[0].mxu0
  %v3741 = vadd.f32 %v2396, %v3740
  %v3742 = vpop.f32.mrb[0].mxu0
  %3743 = vmatprep.mubr.f32.mxu0 0.0
  %3744 = vmatmul.mubr.f32.gmra.mrb[0].mxu0 %v1267
  %v3745 = vpop.f32.mrb[0].mxu0
  %v3746 = vadd.f32 %v2401, %v3745
  %v3747 = vpop.f32.mrb[0].mxu0
  %3748 = vmatprep.mubr.f32.mxu0 0.0
  %3749 = vmatmul.mubr.f32.gmra.mrb[0].mxu0 %v1270
  %v3750 = vpop.f32.mrb[0].mxu0
  %v3751 = vadd.f32 %v2406, %v3750
  %v3752 = vpop.f32.mrb[0].mxu0
  %3753 = vmatprep.mubr.f32.mxu0 0.0
  %3754 = vmatmul.mubr.f32.gmra.mrb[0].mxu0 %v1273
  %v3755 = vpop.f32.mrb[0].mxu0
  %v3756 = vadd.f32 %v2411, %v3755
  %v3757 = vpop.f32.mrb[0].mxu0
  %3758 = vmatprep.mubr.f32.mxu0 0.0
  %3759 = vmatmul.mubr.f32.gmra.mrb[0].mxu0 %v1276
  %v3760 = vpop.f32.mrb[0].mxu0
  %v3761 = vadd.f32 %v2416, %v3760
  %v3762 = vpop.f32.mrb[0].mxu0
  %3763 = vmatprep.mubr.f32.mxu0 0.0
  %3764 = vmatmul.mubr.f32.gmra.mrb[0].mxu0 %v1279
  %v3765 = vpop.f32.mrb[0].mxu0
  %v3766 = vadd.f32 %v2421, %v3765
  %v3767 = vpop.f32.mrb[0].mxu0
  %3768 = vmatprep.mubr.f32.mxu0 0.0
  %3769 = vmatmul.mubr.f32.gmra.mrb[0].mxu0 %v1282
  %v3770 = vpop.f32.mrb[0].mxu0
  %v3771 = vadd.f32 %v2426, %v3770
  %v3772 = vpop.f32.mrb[0].mxu0
  %3773 = vmatprep.mubr.f32.mxu0 0.0
  %3774 = vmatmul.mubr.f32.gmra.mrb[0].mxu0 %v1285
  %v3775 = vpop.f32.mrb[0].mxu0
  %v3776 = vadd.f32 %v2431, %v3775
  %v3777 = vpop.f32.mrb[0].mxu0
  %3778 = vmatprep.mubr.f32.mxu0 0.0
  %3779 = vmatmul.mubr.f32.gmra.mrb[0].mxu0 %v1288
  %v3780 = vpop.f32.mrb[0].mxu0
  %v3781 = vadd.f32 %v2436, %v3780
  %v3782 = vpop.f32.mrb[0].mxu0
  %3783 = vmatprep.mubr.f32.mxu0 0.0
  %3784 = vmatmul.mubr.f32.gmra.mrb[0].mxu0 %v1291
  %v3785 = vpop.f32.mrb[0].mxu0
  %v3786 = vadd.f32 %v2441, %v3785
  %v3787 = vpop.f32.mrb[0].mxu0
  %3788 = vmatprep.mubr.f32.mxu0 0.0
  %3789 = vmatmul.mubr.f32.gmra.mrb[0].mxu0 %v1294
  %v3790 = vpop.f32.mrb[0].mxu0
  %v3791 = vadd.f32 %v2446, %v3790
  %v3792 = vpop.f32.mrb[0].mxu0
  %3793 = vmatprep.mubr.f32.mxu0 0.0
  %3794 = vmatmul.mubr.f32.gmra.mrb[0].mxu0 %v1297
  %v3795 = vpop.f32.mrb[0].mxu0
  %v3796 = vadd.f32 %v2451, %v3795
  %v3797 = vpop.f32.mrb[0].mxu0
  %3798 = vmatprep.mubr.f32.mxu0 0.0
  %3799 = vmatmul.mubr.f32.gmra.mrb[0].mxu0 %v1300
  %v3800 = vpop.f32.mrb[0].mxu0
  %v3801 = vadd.f32 %v2456, %v3800
  %v3802 = vpop.f32.mrb[0].mxu0
  %3803 = vmatprep.mubr.f32.mxu0 0.0
  %3804 = vmatmul.mubr.f32.gmra.mrb[0].mxu0 %v1303
  %v3805 = vpop.f32.mrb[0].mxu0
  %v3806 = vadd.f32 %v2461, %v3805
  %v3807 = vpop.f32.mrb[0].mxu0
  %3808 = vmatprep.mubr.f32.mxu0 0.0
  %3809 = vmatmul.mubr.f32.gmra.mrb[0].mxu0 %v1306
  %v3810 = vpop.f32.mrb[0].mxu0
  %v3811 = vadd.f32 %v2466, %v3810
  %v3812 = vpop.f32.mrb[0].mxu0
  %3813 = vmatprep.mubr.f32.mxu0 0.0
  %3814 = vmatmul.mubr.f32.gmra.mrb[0].mxu0 %v1309
  %v3815 = vpop.f32.mrb[0].mxu0
  %v3816 = vadd.f32 %v2471, %v3815
  %v3817 = vpop.f32.mrb[0].mxu0
  %3818 = vmatprep.mubr.f32.mxu0 0.0
  %3819 = vmatmul.mubr.f32.gmra.mrb[0].mxu0 %v1312
  %v3820 = vpop.f32.mrb[0].mxu0
  %v3821 = vadd.f32 %v2476, %v3820
  %v3822 = vpop.f32.mrb[0].mxu0
  %3823 = vmatprep.mubr.f32.mxu0 0.0
  %3824 = vmatmul.mubr.f32.gmra.mrb[0].mxu0 %v1315
  %v3825 = vpop.f32.mrb[0].mxu0
  %v3826 = vadd.f32 %v2481, %v3825
  %v3827 = vpop.f32.mrb[0].mxu0
  %3828 = vmatprep.mubr.f32.mxu0 0.0
  %3829 = vmatmul.mubr.f32.gmra.mrb[0].mxu0 %v1318
  %v3830 = vpop.f32.mrb[0].mxu0
  %v3831 = vadd.f32 %v2486, %v3830
  %v3832 = vpop.f32.mrb[0].mxu0
  %3833 = vmatprep.mubr.f32.mxu0 0.0
  %3834 = vmatmul.mubr.f32.gmra.mrb[0].mxu0 %v1321
  %v3835 = vpop.f32.mrb[0].mxu0
  %v3836 = vadd.f32 %v2491, %v3835
  %v3837 = vpop.f32.mrb[0].mxu0
  %3838 = vmatprep.mubr.f32.mxu0 0.0
  %3839 = vmatmul.mubr.f32.gmra.mrb[0].mxu0 %v1324
  %v3840 = vpop.f32.mrb[0].mxu0
  %v3841 = vadd.f32 %v2496, %v3840
  %v3842 = vpop.f32.mrb[0].mxu0
  %3843 = vmatprep.mubr.f32.mxu0 0.0
  %3844 = vmatmul.mubr.f32.gmra.mrb[0].mxu0 %v1327
  %v3845 = vpop.f32.mrb[0].mxu0
  %v3846 = vadd.f32 %v2501, %v3845
  %v3847 = vpop.f32.mrb[0].mxu0
  %3848 = vmatprep.mubr.f32.mxu0 0.0
  %3849 = vmatmul.mubr.f32.gmra.mrb[0].mxu0 %v1330
  %v3850 = vpop.f32.mrb[0].mxu0
  %v3851 = vadd.f32 %v2506, %v3850
  %v3852 = vpop.f32.mrb[0].mxu0
  %3853 = vmatprep.mubr.f32.mxu0 0.0
  %3854 = vmatmul.mubr.f32.gmra.mrb[0].mxu0 %v1333
  %v3855 = vpop.f32.mrb[0].mxu0
  %v3856 = vadd.f32 %v2511, %v3855
  %v3857 = vpop.f32.mrb[0].mxu0
  %3858 = vmatprep.mubr.f32.mxu0 0.0
  %3859 = vmatmul.mubr.f32.gmra.mrb[0].mxu0 %v1336
  %v3860 = vpop.f32.mrb[0].mxu0
  %v3861 = vadd.f32 %v2516, %v3860
  %v3862 = vpop.f32.mrb[0].mxu0
  %3863 = vmatprep.mubr.f32.mxu0 0.0
  %3864 = vmatmul.mubr.f32.gmra.mrb[0].mxu0 %v1339
  %v3865 = vpop.f32.mrb[0].mxu0
  %v3866 = vadd.f32 %v2521, %v3865
  %v3867 = vpop.f32.mrb[0].mxu0
  %3868 = vmatprep.mubr.f32.mxu0 0.0
  %3869 = vmatmul.mubr.f32.gmra.mrb[0].mxu0 %v1342
  %v3870 = vpop.f32.mrb[0].mxu0
  %v3871 = vadd.f32 %v2526, %v3870
  %v3872 = vpop.f32.mrb[0].mxu0
  %3873 = vmatprep.mubr.f32.mxu0 0.0
  %3874 = vmatmul.mubr.f32.gmra.mrb[0].mxu0 %v1345
  %v3875 = vpop.f32.mrb[0].mxu0
  %v3876 = vadd.f32 %v2531, %v3875
  %v3877 = vpop.f32.mrb[0].mxu0
  %3878 = vmatprep.mubr.f32.mxu0 0.0
  %3879 = vmatmul.mubr.f32.gmra.mrb[0].mxu0 %v1348
  %v3880 = vpop.f32.mrb[0].mxu0
  %v3881 = vadd.f32 %v2536, %v3880
  %v3882 = vpop.f32.mrb[0].mxu0
  %3883 = vmatprep.mubr.f32.mxu0 0.0
  %3884 = vmatmul.mubr.f32.gmra.mrb[0].mxu0 %v1351
  %v3885 = vpop.f32.mrb[0].mxu0
  %v3886 = vadd.f32 %v2541, %v3885
  %v3887 = vpop.f32.mrb[0].mxu0
  %3888 = vmatprep.mubr.f32.mxu0 0.0
  %3889 = vmatmul.mubr.f32.gmra.mrb[0].mxu0 %v1354
  %v3890 = vpop.f32.mrb[0].mxu0
  %v3891 = vadd.f32 %v2546, %v3890
  %v3892 = vpop.f32.mrb[0].mxu0
  %3893 = vmatprep.mubr.f32.mxu0 0.0
  %3894 = vmatmul.mubr.f32.gmra.mrb[0].mxu0 %v1357
  %v3895 = vpop.f32.mrb[0].mxu0
  %v3896 = vadd.f32 %v2551, %v3895
  %v3897 = vpop.f32.mrb[0].mxu0
  %3898 = vmatprep.mubr.f32.mxu0 0.0
  %3899 = vmatmul.mubr.f32.gmra.mrb[0].mxu0 %v1360
  %v3900 = vpop.f32.mrb[0].mxu0
  %v3901 = vadd.f32 %v2556, %v3900
  %v3902 = vpop.f32.mrb[0].mxu0
  %3903 = vmatprep.mubr.f32.mxu0 0.0
  %3904 = vmatmul.mubr.f32.gmra.mrb[0].mxu0 %v1363
  %v3905 = vpop.f32.mrb[0].mxu0
  %v3906 = vadd.f32 %v2561, %v3905
  %v3907 = vpop.f32.mrb[0].mxu0
  %3908 = vmatprep.mubr.f32.mxu0 0.0
  %3909 = vmatmul.mubr.f32.gmra.mrb[0].mxu0 %v1366
  %v3910 = vpop.f32.mrb[0].mxu0
  %v3911 = vadd.f32 %v2566, %v3910
  %v3912 = vpop.f32.mrb[0].mxu0
  %3913 = vmatprep.mubr.f32.mxu0 0.0
  %3914 = vmatmul.mubr.f32.gmra.mrb[0].mxu0 %v1369
  %v3915 = vpop.f32.mrb[0].mxu0
  %v3916 = vadd.f32 %v2571, %v3915
  %v3917 = vpop.f32.mrb[0].mxu0
  %3918 = vmatprep.mubr.f32.mxu0 0.0
  %3919 = vmatmul.mubr.f32.gmra.mrb[0].mxu0 %v1372
  %v3920 = vpop.f32.mrb[0].mxu0
  %v3921 = vadd.f32 %v2576, %v3920
  %v3922 = vpop.f32.mrb[0].mxu0
  %3923 = vmatprep.mubr.f32.mxu0 0.0
  %3924 = vmatmul.mubr.f32.gmra.mrb[0].mxu0 %v1375
  %v3925 = vpop.f32.mrb[0].mxu0
  %v3926 = vadd.f32 %v2581, %v3925
  %v3927 = vpop.f32.mrb[0].mxu0
  %3928 = vmatprep.mubr.f32.mxu0 0.0
  %3929 = vmatmul.mubr.f32.gmra.mrb[0].mxu0 %v1378
  %v3930 = vpop.f32.mrb[0].mxu0
  %v3931 = vadd.f32 %v2586, %v3930
  %v3932 = vpop.f32.mrb[0].mxu0
  %3933 = vmatprep.mubr.f32.mxu0 0.0
  %3934 = vmatmul.mubr.f32.gmra.mrb[0].mxu0 %v1381
  %v3935 = vpop.f32.mrb[0].mxu0
  %v3936 = vadd.f32 %v2591, %v3935
  %v3937 = vpop.f32.mrb[0].mxu0
  %3938 = vmatprep.mubr.f32.mxu0 0.0
  %3939 = vmatmul.mubr.f32.gmra.mrb[0].mxu0 %v1384
  %v3940 = vpop.f32.mrb[0].mxu0
  %v3941 = vadd.f32 %v2596, %v3940
  %v3942 = vpop.f32.mrb[0].mxu0
  %3943 = vmatprep.mubr.f32.mxu0 0.0
  %3944 = vmatmul.mubr.f32.gmra.mrb[0].mxu0 %v1387
  %v3945 = vpop.f32.mrb[0].mxu0
  %v3946 = vadd.f32 %v2601, %v3945
  %v3947 = vpop.f32.mrb[0].mxu0
  %3948 = vmatprep.mubr.f32.mxu0 0.0
  %3949 = vmatmul.mubr.f32.gmra.mrb[0].mxu0 %v1390
  %v3950 = vpop.f32.mrb[0].mxu0
  %v3951 = vadd.f32 %v2606, %v3950
  %v3952 = vpop.f32.mrb[0].mxu0
  %3953 = vmatprep.mubr.f32.mxu0 0.0
  %3954 = vmatmul.mubr.f32.gmra.mrb[0].mxu0 %v1393
  %v3955 = vpop.f32.mrb[0].mxu0
  %v3956 = vadd.f32 %v2611, %v3955
  %v3957 = vpop.f32.mrb[0].mxu0
  %3958 = vmatprep.mubr.f32.mxu0 0.0
  %3959 = vmatmul.mubr.f32.gmra.mrb[0].mxu0 %v1396
  %v3960 = vpop.f32.mrb[0].mxu0
  %v3961 = vadd.f32 %v2616, %v3960
  %v3962 = vpop.f32.mrb[0].mxu0
  %3963 = vmatprep.mubr.f32.mxu0 0.0
  %3964 = vmatmul.mubr.f32.gmra.mrb[0].mxu0 %v1399
  %v3965 = vpop.f32.mrb[0].mxu0
  %v3966 = vadd.f32 %v2621, %v3965
  %v3967 = vpop.f32.mrb[0].mxu0
  %3968 = vmatprep.mubr.f32.mxu0 0.0
  %3969 = vmatmul.mubr.f32.gmra.mrb[0].mxu0 %v1402
  %v3970 = vpop.f32.mrb[0].mxu0
  %v3971 = vadd.f32 %v2626, %v3970
  %v3972 = vpop.f32.mrb[0].mxu0
  %3973 = vmatprep.mubr.f32.mxu0 0.0
  %3974 = vmatmul.mubr.f32.gmra.mrb[0].mxu0 %v1405
  %v3975 = vpop.f32.mrb[0].mxu0
  %v3976 = vadd.f32 %v2631, %v3975
  %v3977 = vpop.f32.mrb[0].mxu0
  %3978 = vmatprep.mubr.f32.mxu0 0.0
  %3979 = vmatmul.mubr.f32.gmra.mrb[0].mxu0 %v1408
  %v3980 = vpop.f32.mrb[0].mxu0
  %v3981 = vadd.f32 %v2636, %v3980
  %v3982 = vpop.f32.mrb[0].mxu0
  %3983 = vmatprep.mubr.f32.mxu0 0.0
  %3984 = vmatmul.mubr.f32.gmra.mrb[0].mxu0 %v1411
  %v3985 = vpop.f32.mrb[0].mxu0
  %v3986 = vadd.f32 %v2641, %v3985
  %v3987 = vpop.f32.mrb[0].mxu0
  %3988 = vmatprep.mubr.f32.mxu0 0.0
  %3989 = vmatmul.mubr.f32.gmra.mrb[0].mxu0 %v1414
  %v3990 = vpop.f32.mrb[0].mxu0
  %v3991 = vadd.f32 %v2646, %v3990
  %v3992 = vpop.f32.mrb[0].mxu0
  %3993 = vmatprep.mubr.f32.mxu0 0.0
  %3994 = vmatmul.mubr.f32.gmra.mrb[0].mxu0 %v1417
  %v3995 = vpop.f32.mrb[0].mxu0
  %v3996 = vadd.f32 %v2651, %v3995
  %v3997 = vpop.f32.mrb[0].mxu0
  %3998 = vmatprep.mubr.f32.mxu0 0.0
  %3999 = vmatmul.mubr.f32.gmra.mrb[0].mxu0 %v1420
  %v4000 = vpop.f32.mrb[0].mxu0
  %v4001 = vadd.f32 %v2656, %v4000
  %v4002 = vpop.f32.mrb[0].mxu0
  %4003 = vmatprep.mubr.f32.mxu0 0.0
  %4004 = vmatmul.mubr.f32.gmra.mrb[0].mxu0 %v1423
  %v4005 = vpop.f32.mrb[0].mxu0
  %v4006 = vadd.f32 %v2661, %v4005
  %v4007 = vpop.f32.mrb[0].mxu0
  %4008 = vmatprep.mubr.f32.mxu0 0.0
  %4009 = vmatmul.mubr.f32.gmra.mrb[0].mxu0 %v1426
  %v4010 = vpop.f32.mrb[0].mxu0
  %v4011 = vadd.f32 %v2666, %v4010
  %v4012 = vpop.f32.mrb[0].mxu0
  %4013 = vmatprep.mubr.f32.mxu0 0.0
  %4014 = vmatmul.mubr.f32.gmra.mrb[0].mxu0 %v1429
  %v4015 = vpop.f32.mrb[0].mxu0
  %v4016 = vadd.f32 %v2671, %v4015
  %v4017 = vpop.f32.mrb[0].mxu0
  %4018 = vmatprep.mubr.f32.mxu0 0.0
  %4019 = vmatmul.mubr.f32.gmra.mrb[0].mxu0 %v1432
  %v4020 = vpop.f32.mrb[0].mxu0
  %v4021 = vadd.f32 %v2676, %v4020
  %v4022 = vpop.f32.mrb[0].mxu0
  %4023 = vmatprep.mubr.f32.mxu0 0.0
  %4024 = vmatmul.mubr.f32.gmra.mrb[0].mxu0 %v1435
  %v4025 = vpop.f32.mrb[0].mxu0
  %v4026 = vadd.f32 %v2681, %v4025
  %v4027 = vpop.f32.mrb[0].mxu0
  %4028 = vmatprep.mubr.f32.mxu0 0.0
  %4029 = vmatmul.mubr.f32.gmra.mrb[0].mxu0 %v1438
  %v4030 = vpop.f32.mrb[0].mxu0
  %v4031 = vadd.f32 %v2686, %v4030
  %v4032 = vpop.f32.mrb[0].mxu0
  %4033 = vmatprep.mubr.f32.mxu0 0.0
  %4034 = vmatmul.mubr.f32.gmra.mrb[0].mxu0 %v1441
  %v4035 = vpop.f32.mrb[0].mxu0
  %v4036 = vadd.f32 %v2691, %v4035
  %v4037 = vpop.f32.mrb[0].mxu0
  %4038 = vmatprep.mubr.f32.mxu0 0.0
  %4039 = vmatmul.mubr.f32.gmra.mrb[0].mxu0 %v1444
  %v4040 = vpop.f32.mrb[0].mxu0
  %v4041 = vadd.f32 %v2696, %v4040
  %v4042 = vpop.f32.mrb[0].mxu0
  %4043 = vmatprep.mubr.f32.mxu0 0.0
  %4044 = vmatmul.mubr.f32.gmra.mrb[0].mxu0 %v1447
  %v4045 = vpop.f32.mrb[0].mxu0
  %v4046 = vadd.f32 %v2701, %v4045
  %v4047 = vpop.f32.mrb[0].mxu0
  %4048 = vmatprep.mubr.f32.mxu0 0.0
  %4049 = vmatmul.mubr.f32.gmra.mrb[0].mxu0 %v1450
  %v4050 = vpop.f32.mrb[0].mxu0
  %v4051 = vadd.f32 %v2706, %v4050
  %v4052 = vpop.f32.mrb[0].mxu0
  %4053 = vmatprep.mubr.f32.mxu0 0.0
  %4054 = vmatmul.mubr.f32.gmra.mrb[0].mxu0 %v1453
  %v4055 = vpop.f32.mrb[0].mxu0
  %v4056 = vadd.f32 %v2711, %v4055
  %v4057 = vpop.f32.mrb[0].mxu0
  %4058 = vmatprep.mubr.f32.mxu0 0.0
  %4059 = vmatmul.mubr.f32.gmra.mrb[0].mxu0 %v1456
  %v4060 = vpop.f32.mrb[0].mxu0
  %v4061 = vadd.f32 %v2716, %v4060
  %v4062 = vpop.f32.mrb[0].mxu0
  %4063 = vmatprep.mubr.f32.mxu0 0.0
  %4064 = vmatmul.mubr.f32.gmra.mrb[0].mxu0 %v1459
  %v4065 = vpop.f32.mrb[0].mxu0
  %v4066 = vadd.f32 %v2721, %v4065
  %v4067 = vpop.f32.mrb[0].mxu0
  %4068 = vmatprep.mubr.f32.mxu0 0.0
  %4069 = vmatmul.mubr.f32.gmra.mrb[0].mxu0 %v1462
  %v4070 = vpop.f32.mrb[0].mxu0
  %v4071 = vadd.f32 %v2726, %v4070
  %v4072 = vpop.f32.mrb[0].mxu0
  %4073 = vmatprep.mubr.f32.mxu0 0.0
  %4074 = vmatmul.mubr.f32.gmra.mrb[0].mxu0 %v1465
  %v4075 = vpop.f32.mrb[0].mxu0
  %v4076 = vadd.f32 %v2731, %v4075
  %v4077 = vpop.f32.mrb[0].mxu0
  %4078 = vmatprep.mubr.f32.mxu0 0.0
  %4079 = vmatmul.mubr.f32.gmra.mrb[0].mxu0 %v1468
  %v4080 = vpop.f32.mrb[0].mxu0
  %v4081 = vadd.f32 %v2736, %v4080
  %v4082 = vpop.f32.mrb[0].mxu0
  %4083 = vmatprep.mubr.f32.mxu0 0.0
  %4084 = vmatmul.mubr.f32.gmra.mrb[0].mxu0 %v1471
  %v4085 = vpop.f32.mrb[0].mxu0
  %v4086 = vadd.f32 %v2741, %v4085
  %v4087 = vpop.f32.mrb[0].mxu0
  %4088 = vmatprep.mubr.f32.mxu0 0.0
  %4089 = vmatmul.mubr.f32.gmra.mrb[0].mxu0 %v1474
  %v4090 = vpop.f32.mrb[0].mxu0
  %v4091 = vadd.f32 %v2746, %v4090
  %v4092 = vpop.f32.mrb[0].mxu0
  %4093 = vmatprep.mubr.f32.mxu0 0.0
  %4094 = vmatmul.mubr.f32.gmra.mrb[0].mxu0 %v1477
  %v4095 = vpop.f32.mrb[0].mxu0
  %v4096 = vadd.f32 %v2751, %v4095
  %v4097 = vpop.f32.mrb[0].mxu0
  %4098 = vmatprep.mubr.f32.mxu0 0.0
  %4099 = vmatmul.mubr.f32.gmra.mrb[0].mxu0 %v1480
  %v4100 = vpop.f32.mrb[0].mxu0
  %v4101 = vadd.f32 %v2756, %v4100
  %v4102 = vpop.f32.mrb[0].mxu0
  %4103 = vmatprep.mubr.f32.mxu0 0.0
  %4104 = vmatmul.mubr.f32.gmra.mrb[0].mxu0 %v1483
  %v4105 = vpop.f32.mrb[0].mxu0
  %v4106 = vadd.f32 %v2761, %v4105
  %v4107 = vpop.f32.mrb[0].mxu0
  %4108 = vmatprep.mubr.f32.mxu0 0.0
  %4109 = vmatmul.mubr.f32.gmra.mrb[0].mxu0 %v1486
  %v4110 = vpop.f32.mrb[0].mxu0
  %v4111 = vadd.f32 %v2766, %v4110
  %v4112 = vpop.f32.mrb[0].mxu0
  %4113 = vmatprep.mubr.f32.mxu0 0.0
  %4114 = vmatmul.mubr.f32.gmra.mrb[0].mxu0 %v1489
  %v4115 = vpop.f32.mrb[0].mxu0
  %v4116 = vadd.f32 %v2771, %v4115
  %v4117 = vpop.f32.mrb[0].mxu0
  %4118 = vmatprep.mubr.f32.mxu0 0.0
  %4119 = vmatmul.mubr.f32.gmra.mrb[0].mxu0 %v1492
  %v4120 = vpop.f32.mrb[0].mxu0
  %v4121 = vadd.f32 %v2776, %v4120
  %v4122 = vpop.f32.mrb[0].mxu0
  %4123 = vmatprep.mubr.f32.mxu0 0.0
  %4124 = vmatmul.mubr.f32.gmra.mrb[0].mxu0 %v1495
  %v4125 = vpop.f32.mrb[0].mxu0
  %v4126 = vadd.f32 %v2781, %v4125
  %v4127 = vpop.f32.mrb[0].mxu0
  %4128 = vmatprep.mubr.f32.mxu0 0.0
  %4129 = vmatmul.mubr.f32.gmra.mrb[0].mxu0 %v1498
  %v4130 = vpop.f32.mrb[0].mxu0
  %v4131 = vadd.f32 %v2786, %v4130
  %v4132 = vpop.f32.mrb[0].mxu0
  %4133 = vmatprep.mubr.f32.mxu0 0.0
  %4134 = vmatmul.mubr.f32.gmra.mrb[0].mxu0 %v1501
  %v4135 = vpop.f32.mrb[0].mxu0
  %v4136 = vadd.f32 %v2791, %v4135
  %v4137 = vpop.f32.mrb[0].mxu0
  %4138 = vmatprep.mubr.f32.mxu0 0.0
  %4139 = vmatmul.mubr.f32.gmra.mrb[0].mxu0 %v1504
  %v4140 = vpop.f32.mrb[0].mxu0
  %v4141 = vadd.f32 %v2796, %v4140
  %v4142 = vpop.f32.mrb[0].mxu0
  %4143 = vmatprep.mubr.f32.mxu0 0.0
  %4144 = vmatmul.mubr.f32.gmra.mrb[0].mxu0 %v1507
  %v4145 = vpop.f32.mrb[0].mxu0
  %v4146 = vadd.f32 %v2801, %v4145
  %v4147 = vpop.f32.mrb[0].mxu0
  %4148 = vmatprep.mubr.f32.mxu0 0.0
  %4149 = vmatmul.mubr.f32.gmra.mrb[0].mxu0 %v1510
  %v4150 = vpop.f32.mrb[0].mxu0
  %v4151 = vadd.f32 %v2806, %v4150
  %v4152 = vpop.f32.mrb[0].mxu0
  %4153 = vmatprep.mubr.f32.mxu0 0.0
  %4154 = vmatmul.mubr.f32.gmra.mrb[0].mxu0 %v1513
  %v4155 = vpop.f32.mrb[0].mxu0
  %v4156 = vadd.f32 %v2811, %v4155
  %v4157 = vpop.f32.mrb[0].mxu0
  %4158 = vmatprep.mubr.f32.mxu0 0.0
  %4159 = vmatmul.mubr.f32.gmra.mrb[0].mxu0 %v1516
  %v4160 = vpop.f32.mrb[0].mxu0
  %v4161 = vadd.f32 %v2816, %v4160
  %v4162 = vpop.f32.mrb[0].mxu0
  %4163 = vmatprep.mubr.f32.mxu0 0.0
  %4164 = vmatmul.mubr.f32.gmra.mrb[0].mxu0 %v1519
  %v4165 = vpop.f32.mrb[0].mxu0
  %v4166 = vadd.f32 %v2821, %v4165
  %v4167 = vpop.f32.mrb[0].mxu0
  %4168 = vmatprep.mubr.f32.mxu0 0.0
  %4169 = vmatmul.mubr.f32.gmra.mrb[0].mxu0 %v1522
  %v4170 = vpop.f32.mrb[0].mxu0
  %v4171 = vadd.f32 %v2826, %v4170
  %v4172 = vpop.f32.mrb[0].mxu0
  %4173 = vmatprep.mubr.f32.mxu0 0.0
  %4174 = vmatmul.mubr.f32.gmra.mrb[0].mxu0 %v1525
  %v4175 = vpop.f32.mrb[0].mxu0
  %v4176 = vadd.f32 %v2831, %v4175
  %v4177 = vpop.f32.mrb[0].mxu0
  %4178 = vmatprep.mubr.f32.mxu0 0.0
  %4179 = vmatmul.mubr.f32.gmra.mrb[0].mxu0 %v1528
  %v4180 = vpop.f32.mrb[0].mxu0
  %v4181 = vadd.f32 %v2836, %v4180
  %v4182 = vpop.f32.mrb[0].mxu0
  %4183 = vmatprep.mubr.f32.mxu0 0.0
  %4184 = vmatmul.mubr.f32.gmra.mrb[0].mxu0 %v1531
  %v4185 = vpop.f32.mrb[0].mxu0
  %v4186 = vadd.f32 %v2841, %v4185
  %v4187 = vpop.f32.mrb[0].mxu0
  %4188 = vmatprep.mubr.f32.mxu0 0.0
  %4189 = vmatmul.mubr.f32.gmra.mrb[0].mxu0 %v1534
  %v4190 = vpop.f32.mrb[0].mxu0
  %v4191 = vadd.f32 %v2846, %v4190
  %v4192 = vpop.f32.mrb[0].mxu0
  %4193 = vmatprep.mubr.f32.mxu0 0.0
  %4194 = vmatmul.mubr.f32.gmra.mrb[0].mxu0 %v1537
  %v4195 = vpop.f32.mrb[0].mxu0
  %v4196 = vadd.f32 %v2851, %v4195
  %v4197 = vpop.f32.mrb[0].mxu0
  %4198 = vmatprep.mubr.f32.mxu0 0.0
  %4199 = vmatmul.mubr.f32.gmra.mrb[0].mxu0 %v1540
  %v4200 = vpop.f32.mrb[0].mxu0
  %v4201 = vadd.f32 %v2856, %v4200
  %v4202 = vpop.f32.mrb[0].mxu0
  %4203 = vmatprep.mubr.f32.mxu0 0.0
  %4204 = vmatmul.mubr.f32.gmra.mrb[0].mxu0 %v1543
  %v4205 = vpop.f32.mrb[0].mxu0
  %v4206 = vadd.f32 %v2861, %v4205
  %v4207 = vpop.f32.mrb[0].mxu0
  %4208 = vmatprep.mubr.f32.mxu0 0.0
  %4209 = vmatmul.mubr.f32.gmra.mrb[0].mxu0 %v1546
  %v4210 = vpop.f32.mrb[0].mxu0
  %v4211 = vadd.f32 %v2866, %v4210
  %v4212 = vpop.f32.mrb[0].mxu0
  %4213 = vmatprep.mubr.f32.mxu0 0.0
  %4214 = vmatmul.mubr.f32.gmra.mrb[0].mxu0 %v1549
  %v4215 = vpop.f32.mrb[0].mxu0
  %v4216 = vadd.f32 %v2871, %v4215
  %v4217 = vpop.f32.mrb[0].mxu0
  %4218 = vmatprep.mubr.f32.mxu0 0.0
  %4219 = vmatmul.mubr.f32.gmra.mrb[0].mxu0 %v1552
  %v4220 = vpop.f32.mrb[0].mxu0
  %v4221 = vadd.f32 %v2876, %v4220
  %v4222 = vpop.f32.mrb[0].mxu0
  %4223 = vmatprep.mubr.f32.mxu0 0.0
  %4224 = vmatmul.mubr.f32.gmra.mrb[0].mxu0 %v1555
  %v4225 = vpop.f32.mrb[0].mxu0
  %v4226 = vadd.f32 %v2881, %v4225
  %v4227 = vpop.f32.mrb[0].mxu0
  %4228 = vmatprep.mubr.f32.mxu0 0.0
  %4229 = vmatmul.mubr.f32.gmra.mrb[0].mxu0 %v1558
  %v4230 = vpop.f32.mrb[0].mxu0
  %v4231 = vadd.f32 %v2886, %v4230
  %v4232 = vpop.f32.mrb[0].mxu0
  %4233 = vmatprep.mubr.f32.mxu0 0.0
  %4234 = vmatmul.mubr.f32.gmra.mrb[0].mxu0 %v1561
  %v4235 = vpop.f32.mrb[0].mxu0
  %v4236 = vadd.f32 %v2891, %v4235
  %v4237 = vpop.f32.mrb[0].mxu0
  %4238 = vmatprep.mubr.f32.mxu0 0.0
  %4239 = vmatmul.mubr.f32.gmra.mrb[0].mxu0 %v1564
  %v4240 = vpop.f32.mrb[0].mxu0
  %v4241 = vadd.f32 %v2896, %v4240
  %v4242 = vpop.f32.mrb[0].mxu0
  %4243 = vmatprep.mubr.f32.mxu0 0.0
  %4244 = vmatmul.mubr.f32.gmra.mrb[0].mxu0 %v1567
  %v4245 = vpop.f32.mrb[0].mxu0
  %v4246 = vadd.f32 %v2901, %v4245
  %v4247 = vpop.f32.mrb[0].mxu0
  %4248 = vmatprep.mubr.f32.mxu0 0.0
  %4249 = vmatmul.mubr.f32.gmra.mrb[0].mxu0 %v1570
  %v4250 = vpop.f32.mrb[0].mxu0
  %v4251 = vadd.f32 %v2906, %v4250
  %v4252 = vpop.f32.mrb[0].mxu0
  %4253 = vmatprep.mubr.f32.mxu0 0.0
  %4254 = vmatmul.mubr.f32.gmra.mrb[0].mxu0 %v1573
  %v4255 = vpop.f32.mrb[0].mxu0
  %v4256 = vadd.f32 %v2911, %v4255
  %v4257 = vpop.f32.mrb[0].mxu0
  %4258 = vmatprep.mubr.f32.mxu0 0.0
  %4259 = vmatmul.mubr.f32.gmra.mrb[0].mxu0 %v1576
  %v4260 = vpop.f32.mrb[0].mxu0
  %v4261 = vadd.f32 %v2916, %v4260
  %v4262 = vpop.f32.mrb[0].mxu0
  %4263 = vmatprep.mubr.f32.mxu0 0.0
  %4264 = vmatmul.mubr.f32.gmra.mrb[0].mxu0 %v1579
  %v4265 = vpop.f32.mrb[0].mxu0
  %v4266 = vadd.f32 %v2921, %v4265
  %v4267 = vpop.f32.mrb[0].mxu0
  %4268 = vmatprep.mubr.f32.mxu0 0.0
  %4269 = vmatmul.mubr.f32.gmra.mrb[0].mxu0 %v1582
  %v4270 = vpop.f32.mrb[0].mxu0
  %v4271 = vadd.f32 %v2926, %v4270
  %v4272 = vpop.f32.mrb[0].mxu0
  %4273 = vdwg.mxu0
  %v4274 = vadd.f32 %v2996, %v3001
  %v4275 = vadd.f32 %v4274, %v3006
  %v4276 = vadd.f32 %v4275, %v3011
  %v4277 = vadd.f32 %v4276, %v3016
  %v4278 = vadd.f32 %v4277, %v3021
  %v4279 = vadd.f32 %v4278, %v3026
  %v4280 = vadd.f32 %v4279, %v3031
  %v4281 = vadd.f32 %v4280, %v3036
  %v4282 = vadd.f32 %v4281, %v3041
  %v4283 = vadd.f32 %v4282, %v3046
  %v4284 = vadd.f32 %v4283, %v3051
  %v4285 = vadd.f32 %v4284, %v3056
  %v4286 = vadd.f32 %v4285, %v3061
  %v4287 = vadd.f32 %v4286, %v3066
  %v4288 = vadd.f32 %v4287, %v3071
  %v4289 = vadd.f32 %v4288, %v3076
  %v4290 = vadd.f32 %v4289, %v3081
  %v4291 = vadd.f32 %v4290, %v3086
  %v4292 = vadd.f32 %v4291, %v3091
  %v4293 = vadd.f32 %v4292, %v3096
  %v4294 = vadd.f32 %v4293, %v3101
  %v4295 = vadd.f32 %v4294, %v3106
  %v4296 = vadd.f32 %v4295, %v3111
  %v4297 = vadd.f32 %v4296, %v3116
  %v4298 = vadd.f32 %v4297, %v3121
  %v4299 = vadd.f32 %v4298, %v3126
  %v4300 = vadd.f32 %v4299, %v3131
  %v4301 = vadd.f32 %v4300, %v3136
  %v4302 = vadd.f32 %v4301, %v3141
  %v4303 = vadd.f32 %v4302, %v3146
  %v4304 = vadd.f32 %v4303, %v3151
  %v4305 = vadd.f32 %v4304, %v3156
  %v4306 = vadd.f32 %v4305, %v3161
  %v4307 = vadd.f32 %v4306, %v3166
  %v4308 = vadd.f32 %v4307, %v3171
  %v4309 = vadd.f32 %v4308, %v3176
  %v4310 = vadd.f32 %v4309, %v3181
  %v4311 = vadd.f32 %v4310, %v3186
  %v4312 = vadd.f32 %v4311, %v3191
  %v4313 = vadd.f32 %v4312, %v3196
  %v4314 = vadd.f32 %v4313, %v3201
  %v4315 = vadd.f32 %v4314, %v3206
  %v4316 = vadd.f32 %v4315, %v3211
  %v4317 = vadd.f32 %v4316, %v3216
  %v4318 = vadd.f32 %v4317, %v3221
  %v4319 = vadd.f32 %v4318, %v3226
  %v4320 = vadd.f32 %v4319, %v3231
  %v4321 = vadd.f32 %v4320, %v3236
  %v4322 = vadd.f32 %v4321, %v3241
  %v4323 = vadd.f32 %v4322, %v3246
  %v4324 = vadd.f32 %v4323, %v3251
  %v4325 = vadd.f32 %v4324, %v3256
  %v4326 = vadd.f32 %v4325, %v3261
  %v4327 = vadd.f32 %v4326, %v3266
  %v4328 = vadd.f32 %v4327, %v3271
  %v4329 = vadd.f32 %v4328, %v3276
  %v4330 = vadd.f32 %v4329, %v3281
  %v4331 = vadd.f32 %v4330, %v3286
  %v4332 = vadd.f32 %v4331, %v3291
  %v4333 = vadd.f32 %v4332, %v3296
  %v4334 = vadd.f32 %v4333, %v3301
  %v4335 = vadd.f32 %v4334, %v3306
  %v4336 = vadd.f32 %v4335, %v3311
  %v4337 = vadd.f32 %v4336, %v3316
  %v4338 = vadd.f32 %v4337, %v3321
  %v4339 = vadd.f32 %v4338, %v3326
  %v4340 = vadd.f32 %v4339, %v3331
  %v4341 = vadd.f32 %v4340, %v3336
  %v4342 = vadd.f32 %v4341, %v3341
  %v4343 = vadd.f32 %v4342, %v3346
  %v4344 = vadd.f32 %v4343, %v3351
  %v4345 = vadd.f32 %v4344, %v3356
  %v4346 = vadd.f32 %v4345, %v3361
  %v4347 = vadd.f32 %v4346, %v3366
  %v4348 = vadd.f32 %v4347, %v3371
  %v4349 = vadd.f32 %v4348, %v3376
  %v4350 = vadd.f32 %v4349, %v3381
  %v4351 = vadd.f32 %v4350, %v3386
  %v4352 = vadd.f32 %v4351, %v3391
  %v4353 = vadd.f32 %v4352, %v3396
  %v4354 = vadd.f32 %v4353, %v3401
  %v4355 = vadd.f32 %v4354, %v3406
  %v4356 = vadd.f32 %v4355, %v3411
  %v4357 = vadd.f32 %v4356, %v3416
  %v4358 = vadd.f32 %v4357, %v3421
  %v4359 = vadd.f32 %v4358, %v3426
  %v4360 = vadd.f32 %v4359, %v3431
  %v4361 = vadd.f32 %v4360, %v3436
  %v4362 = vadd.f32 %v4361, %v3441
  %v4363 = vadd.f32 %v4362, %v3446
  %v4364 = vadd.f32 %v4363, %v3451
  %v4365 = vadd.f32 %v4364, %v3456
  %v4366 = vadd.f32 %v4365, %v3461
  %v4367 = vadd.f32 %v4366, %v3466
  %v4368 = vadd.f32 %v4367, %v3471
  %v4369 = vadd.f32 %v4368, %v3476
  %v4370 = vadd.f32 %v4369, %v3481
  %v4371 = vadd.f32 %v4370, %v3486
  %v4372 = vadd.f32 %v4371, %v3491
  %v4373 = vadd.f32 %v4372, %v3496
  %v4374 = vadd.f32 %v4373, %v3501
  %v4375 = vadd.f32 %v4374, %v3506
  %v4376 = vadd.f32 %v4375, %v3511
  %v4377 = vadd.f32 %v4376, %v3516
  %v4378 = vadd.f32 %v4377, %v3521
  %v4379 = vadd.f32 %v4378, %v3526
  %v4380 = vadd.f32 %v4379, %v3531
  %v4381 = vadd.f32 %v4380, %v3536
  %v4382 = vadd.f32 %v4381, %v3541
  %v4383 = vadd.f32 %v4382, %v3546
  %v4384 = vadd.f32 %v4383, %v3551
  %v4385 = vadd.f32 %v4384, %v3556
  %v4386 = vadd.f32 %v4385, %v3561
  %v4387 = vadd.f32 %v4386, %v3566
  %v4388 = vadd.f32 %v4387, %v3571
  %v4389 = vadd.f32 %v4388, %v3576
  %v4390 = vadd.f32 %v4389, %v3581
  %v4391 = vadd.f32 %v4390, %v3586
  %v4392 = vadd.f32 %v4391, %v3591
  %v4393 = vadd.f32 %v4392, %v3596
  %v4394 = vadd.f32 %v4393, %v3601
  %v4395 = vadd.f32 %v4394, %v3606
  %v4396 = vadd.f32 %v4395, %v3611
  %v4397 = vadd.f32 %v4396, %v3616
  %v4398 = vadd.f32 %v4397, %v3621
  %v4399 = vadd.f32 %v4398, %v3626
  %v4400 = vadd.f32 %v4399, %v3631
  %v4401 = vadd.f32 %v4400, %v3636
  %v4402 = vadd.f32 %v4401, %v3641
  %v4403 = vadd.f32 %v4402, %v3646
  %v4404 = vadd.f32 %v4403, %v3651
  %v4405 = vadd.f32 %v4404, %v3656
  %v4406 = vadd.f32 %v4405, %v3661
  %v4407 = vadd.f32 %v4406, %v3666
  %v4408 = vadd.f32 %v4407, %v3671
  %v4409 = vadd.f32 %v4408, %v3676
  %v4410 = vadd.f32 %v4409, %v3681
  %v4411 = vadd.f32 %v4410, %v3686
  %v4412 = vadd.f32 %v4411, %v3691
  %v4413 = vadd.f32 %v4412, %v3696
  %v4414 = vadd.f32 %v4413, %v3701
  %v4415 = vadd.f32 %v4414, %v3706
  %v4416 = vadd.f32 %v4415, %v3711
  %v4417 = vadd.f32 %v4416, %v3716
  %v4418 = vadd.f32 %v4417, %v3721
  %v4419 = vadd.f32 %v4418, %v3726
  %v4420 = vadd.f32 %v4419, %v3731
  %v4421 = vadd.f32 %v4420, %v3736
  %v4422 = vadd.f32 %v4421, %v3741
  %v4423 = vadd.f32 %v4422, %v3746
  %v4424 = vadd.f32 %v4423, %v3751
  %v4425 = vadd.f32 %v4424, %v3756
  %v4426 = vadd.f32 %v4425, %v3761
  %v4427 = vadd.f32 %v4426, %v3766
  %v4428 = vadd.f32 %v4427, %v3771
  %v4429 = vadd.f32 %v4428, %v3776
  %v4430 = vadd.f32 %v4429, %v3781
  %v4431 = vadd.f32 %v4430, %v3786
  %v4432 = vadd.f32 %v4431, %v3791
  %v4433 = vadd.f32 %v4432, %v3796
  %v4434 = vadd.f32 %v4433, %v3801
  %v4435 = vadd.f32 %v4434, %v3806
  %v4436 = vadd.f32 %v4435, %v3811
  %v4437 = vadd.f32 %v4436, %v3816
  %v4438 = vadd.f32 %v4437, %v3821
  %v4439 = vadd.f32 %v4438, %v3826
  %v4440 = vadd.f32 %v4439, %v3831
  %v4441 = vadd.f32 %v4440, %v3836
  %v4442 = vadd.f32 %v4441, %v3841
  %v4443 = vadd.f32 %v4442, %v3846
  %v4444 = vadd.f32 %v4443, %v3851
  %v4445 = vadd.f32 %v4444, %v3856
  %v4446 = vadd.f32 %v4445, %v3861
  %v4447 = vadd.f32 %v4446, %v3866
  %v4448 = vadd.f32 %v4447, %v3871
  %v4449 = vadd.f32 %v4448, %v3876
  %v4450 = vadd.f32 %v4449, %v3881
  %v4451 = vadd.f32 %v4450, %v3886
  %v4452 = vadd.f32 %v4451, %v3891
  %v4453 = vadd.f32 %v4452, %v3896
  %v4454 = vadd.f32 %v4453, %v3901
  %v4455 = vadd.f32 %v4454, %v3906
  %v4456 = vadd.f32 %v4455, %v3911
  %v4457 = vadd.f32 %v4456, %v3916
  %v4458 = vadd.f32 %v4457, %v3921
  %v4459 = vadd.f32 %v4458, %v3926
  %v4460 = vadd.f32 %v4459, %v3931
  %v4461 = vadd.f32 %v4460, %v3936
  %v4462 = vadd.f32 %v4461, %v3941
  %v4463 = vadd.f32 %v4462, %v3946
  %v4464 = vadd.f32 %v4463, %v3951
  %v4465 = vadd.f32 %v4464, %v3956
  %v4466 = vadd.f32 %v4465, %v3961
  %v4467 = vadd.f32 %v4466, %v3966
  %v4468 = vadd.f32 %v4467, %v3971
  %v4469 = vadd.f32 %v4468, %v3976
  %v4470 = vadd.f32 %v4469, %v3981
  %v4471 = vadd.f32 %v4470, %v3986
  %v4472 = vadd.f32 %v4471, %v3991
  %v4473 = vadd.f32 %v4472, %v3996
  %v4474 = vadd.f32 %v4473, %v4001
  %v4475 = vadd.f32 %v4474, %v4006
  %v4476 = vadd.f32 %v4475, %v4011
  %v4477 = vadd.f32 %v4476, %v4016
  %v4478 = vadd.f32 %v4477, %v4021
  %v4479 = vadd.f32 %v4478, %v4026
  %v4480 = vadd.f32 %v4479, %v4031
  %v4481 = vadd.f32 %v4480, %v4036
  %v4482 = vadd.f32 %v4481, %v4041
  %v4483 = vadd.f32 %v4482, %v4046
  %v4484 = vadd.f32 %v4483, %v4051
  %v4485 = vadd.f32 %v4484, %v4056
  %v4486 = vadd.f32 %v4485, %v4061
  %v4487 = vadd.f32 %v4486, %v4066
  %v4488 = vadd.f32 %v4487, %v4071
  %v4489 = vadd.f32 %v4488, %v4076
  %v4490 = vadd.f32 %v4489, %v4081
  %v4491 = vadd.f32 %v4490, %v4086
  %v4492 = vadd.f32 %v4491, %v4091
  %v4493 = vadd.f32 %v4492, %v4096
  %v4494 = vadd.f32 %v4493, %v4101
  %v4495 = vadd.f32 %v4494, %v4106
  %v4496 = vadd.f32 %v4495, %v4111
  %v4497 = vadd.f32 %v4496, %v4116
  %v4498 = vadd.f32 %v4497, %v4121
  %v4499 = vadd.f32 %v4498, %v4126
  %v4500 = vadd.f32 %v4499, %v4131
  %v4501 = vadd.f32 %v4500, %v4136
  %v4502 = vadd.f32 %v4501, %v4141
  %v4503 = vadd.f32 %v4502, %v4146
  %v4504 = vadd.f32 %v4503, %v4151
  %v4505 = vadd.f32 %v4504, %v4156
  %v4506 = vadd.f32 %v4505, %v4161
  %v4507 = vadd.f32 %v4506, %v4166
  %v4508 = vadd.f32 %v4507, %v4171
  %v4509 = vadd.f32 %v4508, %v4176
  %v4510 = vadd.f32 %v4509, %v4181
  %v4511 = vadd.f32 %v4510, %v4186
  %v4512 = vadd.f32 %v4511, %v4191
  %v4513 = vadd.f32 %v4512, %v4196
  %v4514 = vadd.f32 %v4513, %v4201
  %v4515 = vadd.f32 %v4514, %v4206
  %v4516 = vadd.f32 %v4515, %v4211
  %v4517 = vadd.f32 %v4516, %v4216
  %v4518 = vadd.f32 %v4517, %v4221
  %v4519 = vadd.f32 %v4518, %v4226
  %v4520 = vadd.f32 %v4519, %v4231
  %v4521 = vadd.f32 %v4520, %v4236
  %v4522 = vadd.f32 %v4521, %v4241
  %v4523 = vadd.f32 %v4522, %v4246
  %v4524 = vadd.f32 %v4523, %v4251
  %v4525 = vadd.f32 %v4524, %v4256
  %v4526 = vadd.f32 %v4525, %v4261
  %v4527 = vadd.f32 %v4526, %v4266
  %v4528 = vadd.f32 %v4527, %v4271
  %v4529 = vrot.slane %v4528, 4
  %v4530 = vadd.f32 %v4528, %v4529
  %v4531 = vrot.slane %v4530, 2
  %v4532 = vadd.f32 %v4530, %v4531
  %v4533 = vrot.slane %v4532, 1
  %v4534 = vadd.f32 %v4532, %v4533
  %v4535 = vmul.f32 %v2996, %v2996
  %v4536 = vmul.f32 %v3001, %v3001
  %v4537 = vmul.f32 %v3006, %v3006
  %v4538 = vmul.f32 %v3011, %v3011
  %v4539 = vmul.f32 %v3016, %v3016
  %v4540 = vmul.f32 %v3021, %v3021
  %v4541 = vmul.f32 %v3026, %v3026
  %v4542 = vmul.f32 %v3031, %v3031
  %v4543 = vmul.f32 %v3036, %v3036
  %v4544 = vmul.f32 %v3041, %v3041
  %v4545 = vmul.f32 %v3046, %v3046
  %v4546 = vmul.f32 %v3051, %v3051
  %v4547 = vmul.f32 %v3056, %v3056
  %v4548 = vmul.f32 %v3061, %v3061
  %v4549 = vmul.f32 %v3066, %v3066
  %v4550 = vmul.f32 %v3071, %v3071
  %v4551 = vmul.f32 %v3076, %v3076
  %v4552 = vmul.f32 %v3081, %v3081
  %v4553 = vmul.f32 %v3086, %v3086
  %v4554 = vmul.f32 %v3091, %v3091
  %v4555 = vmul.f32 %v3096, %v3096
  %v4556 = vmul.f32 %v3101, %v3101
  %v4557 = vmul.f32 %v3106, %v3106
  %v4558 = vmul.f32 %v3111, %v3111
  %v4559 = vmul.f32 %v3116, %v3116
  %v4560 = vmul.f32 %v3121, %v3121
  %v4561 = vmul.f32 %v3126, %v3126
  %v4562 = vmul.f32 %v3131, %v3131
  %v4563 = vmul.f32 %v3136, %v3136
  %v4564 = vmul.f32 %v3141, %v3141
  %v4565 = vmul.f32 %v3146, %v3146
  %v4566 = vmul.f32 %v3151, %v3151
  %v4567 = vmul.f32 %v3156, %v3156
  %v4568 = vmul.f32 %v3161, %v3161
  %v4569 = vmul.f32 %v3166, %v3166
  %v4570 = vmul.f32 %v3171, %v3171
  %v4571 = vmul.f32 %v3176, %v3176
  %v4572 = vmul.f32 %v3181, %v3181
  %v4573 = vmul.f32 %v3186, %v3186
  %v4574 = vmul.f32 %v3191, %v3191
  %v4575 = vmul.f32 %v3196, %v3196
  %v4576 = vmul.f32 %v3201, %v3201
  %v4577 = vmul.f32 %v3206, %v3206
  %v4578 = vmul.f32 %v3211, %v3211
  %v4579 = vmul.f32 %v3216, %v3216
  %v4580 = vmul.f32 %v3221, %v3221
  %v4581 = vmul.f32 %v3226, %v3226
  %v4582 = vmul.f32 %v3231, %v3231
  %v4583 = vmul.f32 %v3236, %v3236
  %v4584 = vmul.f32 %v3241, %v3241
  %v4585 = vmul.f32 %v3246, %v3246
  %v4586 = vmul.f32 %v3251, %v3251
  %v4587 = vmul.f32 %v3256, %v3256
  %v4588 = vmul.f32 %v3261, %v3261
  %v4589 = vmul.f32 %v3266, %v3266
  %v4590 = vmul.f32 %v3271, %v3271
  %v4591 = vmul.f32 %v3276, %v3276
  %v4592 = vmul.f32 %v3281, %v3281
  %v4593 = vmul.f32 %v3286, %v3286
  %v4594 = vmul.f32 %v3291, %v3291
  %v4595 = vmul.f32 %v3296, %v3296
  %v4596 = vmul.f32 %v3301, %v3301
  %v4597 = vmul.f32 %v3306, %v3306
  %v4598 = vmul.f32 %v3311, %v3311
  %v4599 = vmul.f32 %v3316, %v3316
  %v4600 = vmul.f32 %v3321, %v3321
  %v4601 = vmul.f32 %v3326, %v3326
  %v4602 = vmul.f32 %v3331, %v3331
  %v4603 = vmul.f32 %v3336, %v3336
  %v4604 = vmul.f32 %v3341, %v3341
  %v4605 = vmul.f32 %v3346, %v3346
  %v4606 = vmul.f32 %v3351, %v3351
  %v4607 = vmul.f32 %v3356, %v3356
  %v4608 = vmul.f32 %v3361, %v3361
  %v4609 = vmul.f32 %v3366, %v3366
  %v4610 = vmul.f32 %v3371, %v3371
  %v4611 = vmul.f32 %v3376, %v3376
  %v4612 = vmul.f32 %v3381, %v3381
  %v4613 = vmul.f32 %v3386, %v3386
  %v4614 = vmul.f32 %v3391, %v3391
  %v4615 = vmul.f32 %v3396, %v3396
  %v4616 = vmul.f32 %v3401, %v3401
  %v4617 = vmul.f32 %v3406, %v3406
  %v4618 = vmul.f32 %v3411, %v3411
  %v4619 = vmul.f32 %v3416, %v3416
  %v4620 = vmul.f32 %v3421, %v3421
  %v4621 = vmul.f32 %v3426, %v3426
  %v4622 = vmul.f32 %v3431, %v3431
  %v4623 = vmul.f32 %v3436, %v3436
  %v4624 = vmul.f32 %v3441, %v3441
  %v4625 = vmul.f32 %v3446, %v3446
  %v4626 = vmul.f32 %v3451, %v3451
  %v4627 = vmul.f32 %v3456, %v3456
  %v4628 = vmul.f32 %v3461, %v3461
  %v4629 = vmul.f32 %v3466, %v3466
  %v4630 = vmul.f32 %v3471, %v3471
  %v4631 = vmul.f32 %v3476, %v3476
  %v4632 = vmul.f32 %v3481, %v3481
  %v4633 = vmul.f32 %v3486, %v3486
  %v4634 = vmul.f32 %v3491, %v3491
  %v4635 = vmul.f32 %v3496, %v3496
  %v4636 = vmul.f32 %v3501, %v3501
  %v4637 = vmul.f32 %v3506, %v3506
  %v4638 = vmul.f32 %v3511, %v3511
  %v4639 = vmul.f32 %v3516, %v3516
  %v4640 = vmul.f32 %v3521, %v3521
  %v4641 = vmul.f32 %v3526, %v3526
  %v4642 = vmul.f32 %v3531, %v3531
  %v4643 = vmul.f32 %v3536, %v3536
  %v4644 = vmul.f32 %v3541, %v3541
  %v4645 = vmul.f32 %v3546, %v3546
  %v4646 = vmul.f32 %v3551, %v3551
  %v4647 = vmul.f32 %v3556, %v3556
  %v4648 = vmul.f32 %v3561, %v3561
  %v4649 = vmul.f32 %v3566, %v3566
  %v4650 = vmul.f32 %v3571, %v3571
  %v4651 = vmul.f32 %v3576, %v3576
  %v4652 = vmul.f32 %v3581, %v3581
  %v4653 = vmul.f32 %v3586, %v3586
  %v4654 = vmul.f32 %v3591, %v3591
  %v4655 = vmul.f32 %v3596, %v3596
  %v4656 = vmul.f32 %v3601, %v3601
  %v4657 = vmul.f32 %v3606, %v3606
  %v4658 = vmul.f32 %v3611, %v3611
  %v4659 = vmul.f32 %v3616, %v3616
  %v4660 = vmul.f32 %v3621, %v3621
  %v4661 = vmul.f32 %v3626, %v3626
  %v4662 = vmul.f32 %v3631, %v3631
  %v4663 = vmul.f32 %v3636, %v3636
  %v4664 = vmul.f32 %v3641, %v3641
  %v4665 = vmul.f32 %v3646, %v3646
  %v4666 = vmul.f32 %v3651, %v3651
  %v4667 = vmul.f32 %v3656, %v3656
  %v4668 = vmul.f32 %v3661, %v3661
  %v4669 = vmul.f32 %v3666, %v3666
  %v4670 = vmul.f32 %v3671, %v3671
  %v4671 = vmul.f32 %v3676, %v3676
  %v4672 = vmul.f32 %v3681, %v3681
  %v4673 = vmul.f32 %v3686, %v3686
  %v4674 = vmul.f32 %v3691, %v3691
  %v4675 = vmul.f32 %v3696, %v3696
  %v4676 = vmul.f32 %v3701, %v3701
  %v4677 = vmul.f32 %v3706, %v3706
  %v4678 = vmul.f32 %v3711, %v3711
  %v4679 = vmul.f32 %v3716, %v3716
  %v4680 = vmul.f32 %v3721, %v3721
  %v4681 = vmul.f32 %v3726, %v3726
  %v4682 = vmul.f32 %v3731, %v3731
  %v4683 = vmul.f32 %v3736, %v3736
  %v4684 = vmul.f32 %v3741, %v3741
  %v4685 = vmul.f32 %v3746, %v3746
  %v4686 = vmul.f32 %v3751, %v3751
  %v4687 = vmul.f32 %v3756, %v3756
  %v4688 = vmul.f32 %v3761, %v3761
  %v4689 = vmul.f32 %v3766, %v3766
  %v4690 = vmul.f32 %v3771, %v3771
  %v4691 = vmul.f32 %v3776, %v3776
  %v4692 = vmul.f32 %v3781, %v3781
  %v4693 = vmul.f32 %v3786, %v3786
  %v4694 = vmul.f32 %v3791, %v3791
  %v4695 = vmul.f32 %v3796, %v3796
  %v4696 = vmul.f32 %v3801, %v3801
  %v4697 = vmul.f32 %v3806, %v3806
  %v4698 = vmul.f32 %v3811, %v3811
  %v4699 = vmul.f32 %v3816, %v3816
  %v4700 = vmul.f32 %v3821, %v3821
  %v4701 = vmul.f32 %v3826, %v3826
  %v4702 = vmul.f32 %v3831, %v3831
  %v4703 = vmul.f32 %v3836, %v3836
  %v4704 = vmul.f32 %v3841, %v3841
  %v4705 = vmul.f32 %v3846, %v3846
  %v4706 = vmul.f32 %v3851, %v3851
  %v4707 = vmul.f32 %v3856, %v3856
  %v4708 = vmul.f32 %v3861, %v3861
  %v4709 = vmul.f32 %v3866, %v3866
  %v4710 = vmul.f32 %v3871, %v3871
  %v4711 = vmul.f32 %v3876, %v3876
  %v4712 = vmul.f32 %v3881, %v3881
  %v4713 = vmul.f32 %v3886, %v3886
  %v4714 = vmul.f32 %v3891, %v3891
  %v4715 = vmul.f32 %v3896, %v3896
  %v4716 = vmul.f32 %v3901, %v3901
  %v4717 = vmul.f32 %v3906, %v3906
  %v4718 = vmul.f32 %v3911, %v3911
  %v4719 = vmul.f32 %v3916, %v3916
  %v4720 = vmul.f32 %v3921, %v3921
  %v4721 = vmul.f32 %v3926, %v3926
  %v4722 = vmul.f32 %v3931, %v3931
  %v4723 = vmul.f32 %v3936, %v3936
  %v4724 = vmul.f32 %v3941, %v3941
  %v4725 = vmul.f32 %v3946, %v3946
  %v4726 = vmul.f32 %v3951, %v3951
  %v4727 = vmul.f32 %v3956, %v3956
  %v4728 = vmul.f32 %v3961, %v3961
  %v4729 = vmul.f32 %v3966, %v3966
  %v4730 = vmul.f32 %v3971, %v3971
  %v4731 = vmul.f32 %v3976, %v3976
  %v4732 = vmul.f32 %v3981, %v3981
  %v4733 = vmul.f32 %v3986, %v3986
  %v4734 = vmul.f32 %v3991, %v3991
  %v4735 = vmul.f32 %v3996, %v3996
  %v4736 = vmul.f32 %v4001, %v4001
  %v4737 = vmul.f32 %v4006, %v4006
  %v4738 = vmul.f32 %v4011, %v4011
  %v4739 = vmul.f32 %v4016, %v4016
  %v4740 = vmul.f32 %v4021, %v4021
  %v4741 = vmul.f32 %v4026, %v4026
  %v4742 = vmul.f32 %v4031, %v4031
  %v4743 = vmul.f32 %v4036, %v4036
  %v4744 = vmul.f32 %v4041, %v4041
  %v4745 = vmul.f32 %v4046, %v4046
  %v4746 = vmul.f32 %v4051, %v4051
  %v4747 = vmul.f32 %v4056, %v4056
  %v4748 = vmul.f32 %v4061, %v4061
  %v4749 = vmul.f32 %v4066, %v4066
  %v4750 = vmul.f32 %v4071, %v4071
  %v4751 = vmul.f32 %v4076, %v4076
  %v4752 = vmul.f32 %v4081, %v4081
  %v4753 = vmul.f32 %v4086, %v4086
  %v4754 = vmul.f32 %v4091, %v4091
  %v4755 = vmul.f32 %v4096, %v4096
  %v4756 = vmul.f32 %v4101, %v4101
  %v4757 = vmul.f32 %v4106, %v4106
  %v4758 = vmul.f32 %v4111, %v4111
  %v4759 = vmul.f32 %v4116, %v4116
  %v4760 = vmul.f32 %v4121, %v4121
  %v4761 = vmul.f32 %v4126, %v4126
  %v4762 = vmul.f32 %v4131, %v4131
  %v4763 = vmul.f32 %v4136, %v4136
  %v4764 = vmul.f32 %v4141, %v4141
  %v4765 = vmul.f32 %v4146, %v4146
  %v4766 = vmul.f32 %v4151, %v4151
  %v4767 = vmul.f32 %v4156, %v4156
  %v4768 = vmul.f32 %v4161, %v4161
  %v4769 = vmul.f32 %v4166, %v4166
  %v4770 = vmul.f32 %v4171, %v4171
  %v4771 = vmul.f32 %v4176, %v4176
  %v4772 = vmul.f32 %v4181, %v4181
  %v4773 = vmul.f32 %v4186, %v4186
  %v4774 = vmul.f32 %v4191, %v4191
  %v4775 = vmul.f32 %v4196, %v4196
  %v4776 = vmul.f32 %v4201, %v4201
  %v4777 = vmul.f32 %v4206, %v4206
  %v4778 = vmul.f32 %v4211, %v4211
  %v4779 = vmul.f32 %v4216, %v4216
  %v4780 = vmul.f32 %v4221, %v4221
  %v4781 = vmul.f32 %v4226, %v4226
  %v4782 = vmul.f32 %v4231, %v4231
  %v4783 = vmul.f32 %v4236, %v4236
  %v4784 = vmul.f32 %v4241, %v4241
  %v4785 = vmul.f32 %v4246, %v4246
  %v4786 = vmul.f32 %v4251, %v4251
  %v4787 = vmul.f32 %v4256, %v4256
  %v4788 = vmul.f32 %v4261, %v4261
  %v4789 = vmul.f32 %v4266, %v4266
  %v4790 = vmul.f32 %v4271, %v4271
  %v4791 = vadd.f32 %v4535, %v4536
  %v4792 = vadd.f32 %v4791, %v4537
  %v4793 = vadd.f32 %v4792, %v4538
  %v4794 = vadd.f32 %v4793, %v4539
  %v4795 = vadd.f32 %v4794, %v4540
  %v4796 = vadd.f32 %v4795, %v4541
  %v4797 = vadd.f32 %v4796, %v4542
  %v4798 = vadd.f32 %v4797, %v4543
  %v4799 = vadd.f32 %v4798, %v4544
  %v4800 = vadd.f32 %v4799, %v4545
  %v4801 = vadd.f32 %v4800, %v4546
  %v4802 = vadd.f32 %v4801, %v4547
  %v4803 = vadd.f32 %v4802, %v4548
  %v4804 = vadd.f32 %v4803, %v4549
  %v4805 = vadd.f32 %v4804, %v4550
  %v4806 = vadd.f32 %v4805, %v4551
  %v4807 = vadd.f32 %v4806, %v4552
  %v4808 = vadd.f32 %v4807, %v4553
  %v4809 = vadd.f32 %v4808, %v4554
  %v4810 = vadd.f32 %v4809, %v4555
  %v4811 = vadd.f32 %v4810, %v4556
  %v4812 = vadd.f32 %v4811, %v4557
  %v4813 = vadd.f32 %v4812, %v4558
  %v4814 = vadd.f32 %v4813, %v4559
  %v4815 = vadd.f32 %v4814, %v4560
  %v4816 = vadd.f32 %v4815, %v4561
  %v4817 = vadd.f32 %v4816, %v4562
  %v4818 = vadd.f32 %v4817, %v4563
  %v4819 = vadd.f32 %v4818, %v4564
  %v4820 = vadd.f32 %v4819, %v4565
  %v4821 = vadd.f32 %v4820, %v4566
  %v4822 = vadd.f32 %v4821, %v4567
  %v4823 = vadd.f32 %v4822, %v4568
  %v4824 = vadd.f32 %v4823, %v4569
  %v4825 = vadd.f32 %v4824, %v4570
  %v4826 = vadd.f32 %v4825, %v4571
  %v4827 = vadd.f32 %v4826, %v4572
  %v4828 = vadd.f32 %v4827, %v4573
  %v4829 = vadd.f32 %v4828, %v4574
  %v4830 = vadd.f32 %v4829, %v4575
  %v4831 = vadd.f32 %v4830, %v4576
  %v4832 = vadd.f32 %v4831, %v4577
  %v4833 = vadd.f32 %v4832, %v4578
  %v4834 = vadd.f32 %v4833, %v4579
  %v4835 = vadd.f32 %v4834, %v4580
  %v4836 = vadd.f32 %v4835, %v4581
  %v4837 = vadd.f32 %v4836, %v4582
  %v4838 = vadd.f32 %v4837, %v4583
  %v4839 = vadd.f32 %v4838, %v4584
  %v4840 = vadd.f32 %v4839, %v4585
  %v4841 = vadd.f32 %v4840, %v4586
  %v4842 = vadd.f32 %v4841, %v4587
  %v4843 = vadd.f32 %v4842, %v4588
  %v4844 = vadd.f32 %v4843, %v4589
  %v4845 = vadd.f32 %v4844, %v4590
  %v4846 = vadd.f32 %v4845, %v4591
  %v4847 = vadd.f32 %v4846, %v4592
  %v4848 = vadd.f32 %v4847, %v4593
  %v4849 = vadd.f32 %v4848, %v4594
  %v4850 = vadd.f32 %v4849, %v4595
  %v4851 = vadd.f32 %v4850, %v4596
  %v4852 = vadd.f32 %v4851, %v4597
  %v4853 = vadd.f32 %v4852, %v4598
  %v4854 = vadd.f32 %v4853, %v4599
  %v4855 = vadd.f32 %v4854, %v4600
  %v4856 = vadd.f32 %v4855, %v4601
  %v4857 = vadd.f32 %v4856, %v4602
  %v4858 = vadd.f32 %v4857, %v4603
  %v4859 = vadd.f32 %v4858, %v4604
  %v4860 = vadd.f32 %v4859, %v4605
  %v4861 = vadd.f32 %v4860, %v4606
  %v4862 = vadd.f32 %v4861, %v4607
  %v4863 = vadd.f32 %v4862, %v4608
  %v4864 = vadd.f32 %v4863, %v4609
  %v4865 = vadd.f32 %v4864, %v4610
  %v4866 = vadd.f32 %v4865, %v4611
  %v4867 = vadd.f32 %v4866, %v4612
  %v4868 = vadd.f32 %v4867, %v4613
  %v4869 = vadd.f32 %v4868, %v4614
  %v4870 = vadd.f32 %v4869, %v4615
  %v4871 = vadd.f32 %v4870, %v4616
  %v4872 = vadd.f32 %v4871, %v4617
  %v4873 = vadd.f32 %v4872, %v4618
  %v4874 = vadd.f32 %v4873, %v4619
  %v4875 = vadd.f32 %v4874, %v4620
  %v4876 = vadd.f32 %v4875, %v4621
  %v4877 = vadd.f32 %v4876, %v4622
  %v4878 = vadd.f32 %v4877, %v4623
  %v4879 = vadd.f32 %v4878, %v4624
  %v4880 = vadd.f32 %v4879, %v4625
  %v4881 = vadd.f32 %v4880, %v4626
  %v4882 = vadd.f32 %v4881, %v4627
  %v4883 = vadd.f32 %v4882, %v4628
  %v4884 = vadd.f32 %v4883, %v4629
  %v4885 = vadd.f32 %v4884, %v4630
  %v4886 = vadd.f32 %v4885, %v4631
  %v4887 = vadd.f32 %v4886, %v4632
  %v4888 = vadd.f32 %v4887, %v4633
  %v4889 = vadd.f32 %v4888, %v4634
  %v4890 = vadd.f32 %v4889, %v4635
  %v4891 = vadd.f32 %v4890, %v4636
  %v4892 = vadd.f32 %v4891, %v4637
  %v4893 = vadd.f32 %v4892, %v4638
  %v4894 = vadd.f32 %v4893, %v4639
  %v4895 = vadd.f32 %v4894, %v4640
  %v4896 = vadd.f32 %v4895, %v4641
  %v4897 = vadd.f32 %v4896, %v4642
  %v4898 = vadd.f32 %v4897, %v4643
  %v4899 = vadd.f32 %v4898, %v4644
  %v4900 = vadd.f32 %v4899, %v4645
  %v4901 = vadd.f32 %v4900, %v4646
  %v4902 = vadd.f32 %v4901, %v4647
  %v4903 = vadd.f32 %v4902, %v4648
  %v4904 = vadd.f32 %v4903, %v4649
  %v4905 = vadd.f32 %v4904, %v4650
  %v4906 = vadd.f32 %v4905, %v4651
  %v4907 = vadd.f32 %v4906, %v4652
  %v4908 = vadd.f32 %v4907, %v4653
  %v4909 = vadd.f32 %v4908, %v4654
  %v4910 = vadd.f32 %v4909, %v4655
  %v4911 = vadd.f32 %v4910, %v4656
  %v4912 = vadd.f32 %v4911, %v4657
  %v4913 = vadd.f32 %v4912, %v4658
  %v4914 = vadd.f32 %v4913, %v4659
  %v4915 = vadd.f32 %v4914, %v4660
  %v4916 = vadd.f32 %v4915, %v4661
  %v4917 = vadd.f32 %v4916, %v4662
  %v4918 = vadd.f32 %v4917, %v4663
  %v4919 = vadd.f32 %v4918, %v4664
  %v4920 = vadd.f32 %v4919, %v4665
  %v4921 = vadd.f32 %v4920, %v4666
  %v4922 = vadd.f32 %v4921, %v4667
  %v4923 = vadd.f32 %v4922, %v4668
  %v4924 = vadd.f32 %v4923, %v4669
  %v4925 = vadd.f32 %v4924, %v4670
  %v4926 = vadd.f32 %v4925, %v4671
  %v4927 = vadd.f32 %v4926, %v4672
  %v4928 = vadd.f32 %v4927, %v4673
  %v4929 = vadd.f32 %v4928, %v4674
  %v4930 = vadd.f32 %v4929, %v4675
  %v4931 = vadd.f32 %v4930, %v4676
  %v4932 = vadd.f32 %v4931, %v4677
  %v4933 = vadd.f32 %v4932, %v4678
  %v4934 = vadd.f32 %v4933, %v4679
  %v4935 = vadd.f32 %v4934, %v4680
  %v4936 = vadd.f32 %v4935, %v4681
  %v4937 = vadd.f32 %v4936, %v4682
  %v4938 = vadd.f32 %v4937, %v4683
  %v4939 = vadd.f32 %v4938, %v4684
  %v4940 = vadd.f32 %v4939, %v4685
  %v4941 = vadd.f32 %v4940, %v4686
  %v4942 = vadd.f32 %v4941, %v4687
  %v4943 = vadd.f32 %v4942, %v4688
  %v4944 = vadd.f32 %v4943, %v4689
  %v4945 = vadd.f32 %v4944, %v4690
  %v4946 = vadd.f32 %v4945, %v4691
  %v4947 = vadd.f32 %v4946, %v4692
  %v4948 = vadd.f32 %v4947, %v4693
  %v4949 = vadd.f32 %v4948, %v4694
  %v4950 = vadd.f32 %v4949, %v4695
  %v4951 = vadd.f32 %v4950, %v4696
  %v4952 = vadd.f32 %v4951, %v4697
  %v4953 = vadd.f32 %v4952, %v4698
  %v4954 = vadd.f32 %v4953, %v4699
  %v4955 = vadd.f32 %v4954, %v4700
  %v4956 = vadd.f32 %v4955, %v4701
  %v4957 = vadd.f32 %v4956, %v4702
  %v4958 = vadd.f32 %v4957, %v4703
  %v4959 = vadd.f32 %v4958, %v4704
  %v4960 = vadd.f32 %v4959, %v4705
  %v4961 = vadd.f32 %v4960, %v4706
  %v4962 = vadd.f32 %v4961, %v4707
  %v4963 = vadd.f32 %v4962, %v4708
  %v4964 = vadd.f32 %v4963, %v4709
  %v4965 = vadd.f32 %v4964, %v4710
  %v4966 = vadd.f32 %v4965, %v4711
  %v4967 = vadd.f32 %v4966, %v4712
  %v4968 = vadd.f32 %v4967, %v4713
  %v4969 = vadd.f32 %v4968, %v4714
  %v4970 = vadd.f32 %v4969, %v4715
  %v4971 = vadd.f32 %v4970, %v4716
  %v4972 = vadd.f32 %v4971, %v4717
  %v4973 = vadd.f32 %v4972, %v4718
  %v4974 = vadd.f32 %v4973, %v4719
  %v4975 = vadd.f32 %v4974, %v4720
  %v4976 = vadd.f32 %v4975, %v4721
  %v4977 = vadd.f32 %v4976, %v4722
  %v4978 = vadd.f32 %v4977, %v4723
  %v4979 = vadd.f32 %v4978, %v4724
  %v4980 = vadd.f32 %v4979, %v4725
  %v4981 = vadd.f32 %v4980, %v4726
  %v4982 = vadd.f32 %v4981, %v4727
  %v4983 = vadd.f32 %v4982, %v4728
  %v4984 = vadd.f32 %v4983, %v4729
  %v4985 = vadd.f32 %v4984, %v4730
  %v4986 = vadd.f32 %v4985, %v4731
  %v4987 = vadd.f32 %v4986, %v4732
  %v4988 = vadd.f32 %v4987, %v4733
  %v4989 = vadd.f32 %v4988, %v4734
  %v4990 = vadd.f32 %v4989, %v4735
  %v4991 = vadd.f32 %v4990, %v4736
  %v4992 = vadd.f32 %v4991, %v4737
  %v4993 = vadd.f32 %v4992, %v4738
  %v4994 = vadd.f32 %v4993, %v4739
  %v4995 = vadd.f32 %v4994, %v4740
  %v4996 = vadd.f32 %v4995, %v4741
  %v4997 = vadd.f32 %v4996, %v4742
  %v4998 = vadd.f32 %v4997, %v4743
  %v4999 = vadd.f32 %v4998, %v4744
  %v5000 = vadd.f32 %v4999, %v4745
  %v5001 = vadd.f32 %v5000, %v4746
  %v5002 = vadd.f32 %v5001, %v4747
  %v5003 = vadd.f32 %v5002, %v4748
  %v5004 = vadd.f32 %v5003, %v4749
  %v5005 = vadd.f32 %v5004, %v4750
  %v5006 = vadd.f32 %v5005, %v4751
  %v5007 = vadd.f32 %v5006, %v4752
  %v5008 = vadd.f32 %v5007, %v4753
  %v5009 = vadd.f32 %v5008, %v4754
  %v5010 = vadd.f32 %v5009, %v4755
  %v5011 = vadd.f32 %v5010, %v4756
  %v5012 = vadd.f32 %v5011, %v4757
  %v5013 = vadd.f32 %v5012, %v4758
  %v5014 = vadd.f32 %v5013, %v4759
  %v5015 = vadd.f32 %v5014, %v4760
  %v5016 = vadd.f32 %v5015, %v4761
  %v5017 = vadd.f32 %v5016, %v4762
  %v5018 = vadd.f32 %v5017, %v4763
  %v5019 = vadd.f32 %v5018, %v4764
  %v5020 = vadd.f32 %v5019, %v4765
  %v5021 = vadd.f32 %v5020, %v4766
  %v5022 = vadd.f32 %v5021, %v4767
  %v5023 = vadd.f32 %v5022, %v4768
  %v5024 = vadd.f32 %v5023, %v4769
  %v5025 = vadd.f32 %v5024, %v4770
  %v5026 = vadd.f32 %v5025, %v4771
  %v5027 = vadd.f32 %v5026, %v4772
  %v5028 = vadd.f32 %v5027, %v4773
  %v5029 = vadd.f32 %v5028, %v4774
  %v5030 = vadd.f32 %v5029, %v4775
  %v5031 = vadd.f32 %v5030, %v4776
  %v5032 = vadd.f32 %v5031, %v4777
  %v5033 = vadd.f32 %v5032, %v4778
  %v5034 = vadd.f32 %v5033, %v4779
  %v5035 = vadd.f32 %v5034, %v4780
  %v5036 = vadd.f32 %v5035, %v4781
  %v5037 = vadd.f32 %v5036, %v4782
  %v5038 = vadd.f32 %v5037, %v4783
  %v5039 = vadd.f32 %v5038, %v4784
  %v5040 = vadd.f32 %v5039, %v4785
  %v5041 = vadd.f32 %v5040, %v4786
  %v5042 = vadd.f32 %v5041, %v4787
  %v5043 = vadd.f32 %v5042, %v4788
  %v5044 = vadd.f32 %v5043, %v4789
  %v5045 = vadd.f32 %v5044, %v4790
  %v5046 = vrot.slane %v5045, 4
  %v5047 = vadd.f32 %v5045, %v5046
  %v5048 = vrot.slane %v5047, 2
  %v5049 = vadd.f32 %v5047, %v5048
  %v5050 = vrot.slane %v5049, 1
  %v5051 = vadd.f32 %v5049, %v5050
  %v5052 = vmul.f32 %v4534, 0.00048828125
  %v5053 = vmul.f32 %v5051, 0.00048828125
  %v5054 = vmul.f32 %v5052, %v5052
  %v5055 = vsub.f32 %v5053, %v5054
  %v5056 = vmax.f32 %v5055, 0.0
  %v5057 = vsub.f32 %v2996, %v5052
  %v5058 = vsub.f32 %v3001, %v5052
  %v5059 = vsub.f32 %v3006, %v5052
  %v5060 = vsub.f32 %v3011, %v5052
  %v5061 = vsub.f32 %v3016, %v5052
  %v5062 = vsub.f32 %v3021, %v5052
  %v5063 = vsub.f32 %v3026, %v5052
  %v5064 = vsub.f32 %v3031, %v5052
  %v5065 = vsub.f32 %v3036, %v5052
  %v5066 = vsub.f32 %v3041, %v5052
  %v5067 = vsub.f32 %v3046, %v5052
  %v5068 = vsub.f32 %v3051, %v5052
  %v5069 = vsub.f32 %v3056, %v5052
  %v5070 = vsub.f32 %v3061, %v5052
  %v5071 = vsub.f32 %v3066, %v5052
  %v5072 = vsub.f32 %v3071, %v5052
  %v5073 = vsub.f32 %v3076, %v5052
  %v5074 = vsub.f32 %v3081, %v5052
  %v5075 = vsub.f32 %v3086, %v5052
  %v5076 = vsub.f32 %v3091, %v5052
  %v5077 = vsub.f32 %v3096, %v5052
  %v5078 = vsub.f32 %v3101, %v5052
  %v5079 = vsub.f32 %v3106, %v5052
  %v5080 = vsub.f32 %v3111, %v5052
  %v5081 = vsub.f32 %v3116, %v5052
  %v5082 = vsub.f32 %v3121, %v5052
  %v5083 = vsub.f32 %v3126, %v5052
  %v5084 = vsub.f32 %v3131, %v5052
  %v5085 = vsub.f32 %v3136, %v5052
  %v5086 = vsub.f32 %v3141, %v5052
  %v5087 = vsub.f32 %v3146, %v5052
  %v5088 = vsub.f32 %v3151, %v5052
  %v5089 = vsub.f32 %v3156, %v5052
  %v5090 = vsub.f32 %v3161, %v5052
  %v5091 = vsub.f32 %v3166, %v5052
  %v5092 = vsub.f32 %v3171, %v5052
  %v5093 = vsub.f32 %v3176, %v5052
  %v5094 = vsub.f32 %v3181, %v5052
  %v5095 = vsub.f32 %v3186, %v5052
  %v5096 = vsub.f32 %v3191, %v5052
  %v5097 = vsub.f32 %v3196, %v5052
  %v5098 = vsub.f32 %v3201, %v5052
  %v5099 = vsub.f32 %v3206, %v5052
  %v5100 = vsub.f32 %v3211, %v5052
  %v5101 = vsub.f32 %v3216, %v5052
  %v5102 = vsub.f32 %v3221, %v5052
  %v5103 = vsub.f32 %v3226, %v5052
  %v5104 = vsub.f32 %v3231, %v5052
  %v5105 = vsub.f32 %v3236, %v5052
  %v5106 = vsub.f32 %v3241, %v5052
  %v5107 = vsub.f32 %v3246, %v5052
  %v5108 = vsub.f32 %v3251, %v5052
  %v5109 = vsub.f32 %v3256, %v5052
  %v5110 = vsub.f32 %v3261, %v5052
  %v5111 = vsub.f32 %v3266, %v5052
  %v5112 = vsub.f32 %v3271, %v5052
  %v5113 = vsub.f32 %v3276, %v5052
  %v5114 = vsub.f32 %v3281, %v5052
  %v5115 = vsub.f32 %v3286, %v5052
  %v5116 = vsub.f32 %v3291, %v5052
  %v5117 = vsub.f32 %v3296, %v5052
  %v5118 = vsub.f32 %v3301, %v5052
  %v5119 = vsub.f32 %v3306, %v5052
  %v5120 = vsub.f32 %v3311, %v5052
  %v5121 = vsub.f32 %v3316, %v5052
  %v5122 = vsub.f32 %v3321, %v5052
  %v5123 = vsub.f32 %v3326, %v5052
  %v5124 = vsub.f32 %v3331, %v5052
  %v5125 = vsub.f32 %v3336, %v5052
  %v5126 = vsub.f32 %v3341, %v5052
  %v5127 = vsub.f32 %v3346, %v5052
  %v5128 = vsub.f32 %v3351, %v5052
  %v5129 = vsub.f32 %v3356, %v5052
  %v5130 = vsub.f32 %v3361, %v5052
  %v5131 = vsub.f32 %v3366, %v5052
  %v5132 = vsub.f32 %v3371, %v5052
  %v5133 = vsub.f32 %v3376, %v5052
  %v5134 = vsub.f32 %v3381, %v5052
  %v5135 = vsub.f32 %v3386, %v5052
  %v5136 = vsub.f32 %v3391, %v5052
  %v5137 = vsub.f32 %v3396, %v5052
  %v5138 = vsub.f32 %v3401, %v5052
  %v5139 = vsub.f32 %v3406, %v5052
  %v5140 = vsub.f32 %v3411, %v5052
  %v5141 = vsub.f32 %v3416, %v5052
  %v5142 = vsub.f32 %v3421, %v5052
  %v5143 = vsub.f32 %v3426, %v5052
  %v5144 = vsub.f32 %v3431, %v5052
  %v5145 = vsub.f32 %v3436, %v5052
  %v5146 = vsub.f32 %v3441, %v5052
  %v5147 = vsub.f32 %v3446, %v5052
  %v5148 = vsub.f32 %v3451, %v5052
  %v5149 = vsub.f32 %v3456, %v5052
  %v5150 = vsub.f32 %v3461, %v5052
  %v5151 = vsub.f32 %v3466, %v5052
  %v5152 = vsub.f32 %v3471, %v5052
  %v5153 = vsub.f32 %v3476, %v5052
  %v5154 = vsub.f32 %v3481, %v5052
  %v5155 = vsub.f32 %v3486, %v5052
  %v5156 = vsub.f32 %v3491, %v5052
  %v5157 = vsub.f32 %v3496, %v5052
  %v5158 = vsub.f32 %v3501, %v5052
  %v5159 = vsub.f32 %v3506, %v5052
  %v5160 = vsub.f32 %v3511, %v5052
  %v5161 = vsub.f32 %v3516, %v5052
  %v5162 = vsub.f32 %v3521, %v5052
  %v5163 = vsub.f32 %v3526, %v5052
  %v5164 = vsub.f32 %v3531, %v5052
  %v5165 = vsub.f32 %v3536, %v5052
  %v5166 = vsub.f32 %v3541, %v5052
  %v5167 = vsub.f32 %v3546, %v5052
  %v5168 = vsub.f32 %v3551, %v5052
  %v5169 = vsub.f32 %v3556, %v5052
  %v5170 = vsub.f32 %v3561, %v5052
  %v5171 = vsub.f32 %v3566, %v5052
  %v5172 = vsub.f32 %v3571, %v5052
  %v5173 = vsub.f32 %v3576, %v5052
  %v5174 = vsub.f32 %v3581, %v5052
  %v5175 = vsub.f32 %v3586, %v5052
  %v5176 = vsub.f32 %v3591, %v5052
  %v5177 = vsub.f32 %v3596, %v5052
  %v5178 = vsub.f32 %v3601, %v5052
  %v5179 = vsub.f32 %v3606, %v5052
  %v5180 = vsub.f32 %v3611, %v5052
  %v5181 = vsub.f32 %v3616, %v5052
  %v5182 = vsub.f32 %v3621, %v5052
  %v5183 = vsub.f32 %v3626, %v5052
  %v5184 = vsub.f32 %v3631, %v5052
  %v5185 = vsub.f32 %v3636, %v5052
  %v5186 = vsub.f32 %v3641, %v5052
  %v5187 = vsub.f32 %v3646, %v5052
  %v5188 = vsub.f32 %v3651, %v5052
  %v5189 = vsub.f32 %v3656, %v5052
  %v5190 = vsub.f32 %v3661, %v5052
  %v5191 = vsub.f32 %v3666, %v5052
  %v5192 = vsub.f32 %v3671, %v5052
  %v5193 = vsub.f32 %v3676, %v5052
  %v5194 = vsub.f32 %v3681, %v5052
  %v5195 = vsub.f32 %v3686, %v5052
  %v5196 = vsub.f32 %v3691, %v5052
  %v5197 = vsub.f32 %v3696, %v5052
  %v5198 = vsub.f32 %v3701, %v5052
  %v5199 = vsub.f32 %v3706, %v5052
  %v5200 = vsub.f32 %v3711, %v5052
  %v5201 = vsub.f32 %v3716, %v5052
  %v5202 = vsub.f32 %v3721, %v5052
  %v5203 = vsub.f32 %v3726, %v5052
  %v5204 = vsub.f32 %v3731, %v5052
  %v5205 = vsub.f32 %v3736, %v5052
  %v5206 = vsub.f32 %v3741, %v5052
  %v5207 = vsub.f32 %v3746, %v5052
  %v5208 = vsub.f32 %v3751, %v5052
  %v5209 = vsub.f32 %v3756, %v5052
  %v5210 = vsub.f32 %v3761, %v5052
  %v5211 = vsub.f32 %v3766, %v5052
  %v5212 = vsub.f32 %v3771, %v5052
  %v5213 = vsub.f32 %v3776, %v5052
  %v5214 = vsub.f32 %v3781, %v5052
  %v5215 = vsub.f32 %v3786, %v5052
  %v5216 = vsub.f32 %v3791, %v5052
  %v5217 = vsub.f32 %v3796, %v5052
  %v5218 = vsub.f32 %v3801, %v5052
  %v5219 = vsub.f32 %v3806, %v5052
  %v5220 = vsub.f32 %v3811, %v5052
  %v5221 = vsub.f32 %v3816, %v5052
  %v5222 = vsub.f32 %v3821, %v5052
  %v5223 = vsub.f32 %v3826, %v5052
  %v5224 = vsub.f32 %v3831, %v5052
  %v5225 = vsub.f32 %v3836, %v5052
  %v5226 = vsub.f32 %v3841, %v5052
  %v5227 = vsub.f32 %v3846, %v5052
  %v5228 = vsub.f32 %v3851, %v5052
  %v5229 = vsub.f32 %v3856, %v5052
  %v5230 = vsub.f32 %v3861, %v5052
  %v5231 = vsub.f32 %v3866, %v5052
  %v5232 = vsub.f32 %v3871, %v5052
  %v5233 = vsub.f32 %v3876, %v5052
  %v5234 = vsub.f32 %v3881, %v5052
  %v5235 = vsub.f32 %v3886, %v5052
  %v5236 = vsub.f32 %v3891, %v5052
  %v5237 = vsub.f32 %v3896, %v5052
  %v5238 = vsub.f32 %v3901, %v5052
  %v5239 = vsub.f32 %v3906, %v5052
  %v5240 = vsub.f32 %v3911, %v5052
  %v5241 = vsub.f32 %v3916, %v5052
  %v5242 = vsub.f32 %v3921, %v5052
  %v5243 = vsub.f32 %v3926, %v5052
  %v5244 = vsub.f32 %v3931, %v5052
  %v5245 = vsub.f32 %v3936, %v5052
  %v5246 = vsub.f32 %v3941, %v5052
  %v5247 = vsub.f32 %v3946, %v5052
  %v5248 = vsub.f32 %v3951, %v5052
  %v5249 = vsub.f32 %v3956, %v5052
  %v5250 = vsub.f32 %v3961, %v5052
  %v5251 = vsub.f32 %v3966, %v5052
  %v5252 = vsub.f32 %v3971, %v5052
  %v5253 = vsub.f32 %v3976, %v5052
  %v5254 = vsub.f32 %v3981, %v5052
  %v5255 = vsub.f32 %v3986, %v5052
  %v5256 = vsub.f32 %v3991, %v5052
  %v5257 = vsub.f32 %v3996, %v5052
  %v5258 = vsub.f32 %v4001, %v5052
  %v5259 = vsub.f32 %v4006, %v5052
  %v5260 = vsub.f32 %v4011, %v5052
  %v5261 = vsub.f32 %v4016, %v5052
  %v5262 = vsub.f32 %v4021, %v5052
  %v5263 = vsub.f32 %v4026, %v5052
  %v5264 = vsub.f32 %v4031, %v5052
  %v5265 = vsub.f32 %v4036, %v5052
  %v5266 = vsub.f32 %v4041, %v5052
  %v5267 = vsub.f32 %v4046, %v5052
  %v5268 = vsub.f32 %v4051, %v5052
  %v5269 = vsub.f32 %v4056, %v5052
  %v5270 = vsub.f32 %v4061, %v5052
  %v5271 = vsub.f32 %v4066, %v5052
  %v5272 = vsub.f32 %v4071, %v5052
  %v5273 = vsub.f32 %v4076, %v5052
  %v5274 = vsub.f32 %v4081, %v5052
  %v5275 = vsub.f32 %v4086, %v5052
  %v5276 = vsub.f32 %v4091, %v5052
  %v5277 = vsub.f32 %v4096, %v5052
  %v5278 = vsub.f32 %v4101, %v5052
  %v5279 = vsub.f32 %v4106, %v5052
  %v5280 = vsub.f32 %v4111, %v5052
  %v5281 = vsub.f32 %v4116, %v5052
  %v5282 = vsub.f32 %v4121, %v5052
  %v5283 = vsub.f32 %v4126, %v5052
  %v5284 = vsub.f32 %v4131, %v5052
  %v5285 = vsub.f32 %v4136, %v5052
  %v5286 = vsub.f32 %v4141, %v5052
  %v5287 = vsub.f32 %v4146, %v5052
  %v5288 = vsub.f32 %v4151, %v5052
  %v5289 = vsub.f32 %v4156, %v5052
  %v5290 = vsub.f32 %v4161, %v5052
  %v5291 = vsub.f32 %v4166, %v5052
  %v5292 = vsub.f32 %v4171, %v5052
  %v5293 = vsub.f32 %v4176, %v5052
  %v5294 = vsub.f32 %v4181, %v5052
  %v5295 = vsub.f32 %v4186, %v5052
  %v5296 = vsub.f32 %v4191, %v5052
  %v5297 = vsub.f32 %v4196, %v5052
  %v5298 = vsub.f32 %v4201, %v5052
  %v5299 = vsub.f32 %v4206, %v5052
  %v5300 = vsub.f32 %v4211, %v5052
  %v5301 = vsub.f32 %v4216, %v5052
  %v5302 = vsub.f32 %v4221, %v5052
  %v5303 = vsub.f32 %v4226, %v5052
  %v5304 = vsub.f32 %v4231, %v5052
  %v5305 = vsub.f32 %v4236, %v5052
  %v5306 = vsub.f32 %v4241, %v5052
  %v5307 = vsub.f32 %v4246, %v5052
  %v5308 = vsub.f32 %v4251, %v5052
  %v5309 = vsub.f32 %v4256, %v5052
  %v5310 = vsub.f32 %v4261, %v5052
  %v5311 = vsub.f32 %v4266, %v5052
  %v5312 = vsub.f32 %v4271, %v5052
  %v5313 = vadd.f32 %v5056, 1e-05
  %v5314 = vrsqrt.pop %v5313
  %v5315 = vmul.f32 %v5057, %v5314
  %v5316 = vmul.f32 %v5058, %v5314
  %v5317 = vmul.f32 %v5059, %v5314
  %v5318 = vmul.f32 %v5060, %v5314
  %v5319 = vmul.f32 %v5061, %v5314
  %v5320 = vmul.f32 %v5062, %v5314
  %v5321 = vmul.f32 %v5063, %v5314
  %v5322 = vmul.f32 %v5064, %v5314
  %v5323 = vmul.f32 %v5065, %v5314
  %v5324 = vmul.f32 %v5066, %v5314
  %v5325 = vmul.f32 %v5067, %v5314
  %v5326 = vmul.f32 %v5068, %v5314
  %v5327 = vmul.f32 %v5069, %v5314
  %v5328 = vmul.f32 %v5070, %v5314
  %v5329 = vmul.f32 %v5071, %v5314
  %v5330 = vmul.f32 %v5072, %v5314
  %v5331 = vmul.f32 %v5073, %v5314
  %v5332 = vmul.f32 %v5074, %v5314
  %v5333 = vmul.f32 %v5075, %v5314
  %v5334 = vmul.f32 %v5076, %v5314
  %v5335 = vmul.f32 %v5077, %v5314
  %v5336 = vmul.f32 %v5078, %v5314
  %v5337 = vmul.f32 %v5079, %v5314
  %v5338 = vmul.f32 %v5080, %v5314
  %v5339 = vmul.f32 %v5081, %v5314
  %v5340 = vmul.f32 %v5082, %v5314
  %v5341 = vmul.f32 %v5083, %v5314
  %v5342 = vmul.f32 %v5084, %v5314
  %v5343 = vmul.f32 %v5085, %v5314
  %v5344 = vmul.f32 %v5086, %v5314
  %v5345 = vmul.f32 %v5087, %v5314
  %v5346 = vmul.f32 %v5088, %v5314
  %v5347 = vmul.f32 %v5089, %v5314
  %v5348 = vmul.f32 %v5090, %v5314
  %v5349 = vmul.f32 %v5091, %v5314
  %v5350 = vmul.f32 %v5092, %v5314
  %v5351 = vmul.f32 %v5093, %v5314
  %v5352 = vmul.f32 %v5094, %v5314
  %v5353 = vmul.f32 %v5095, %v5314
  %v5354 = vmul.f32 %v5096, %v5314
  %v5355 = vmul.f32 %v5097, %v5314
  %v5356 = vmul.f32 %v5098, %v5314
  %v5357 = vmul.f32 %v5099, %v5314
  %v5358 = vmul.f32 %v5100, %v5314
  %v5359 = vmul.f32 %v5101, %v5314
  %v5360 = vmul.f32 %v5102, %v5314
  %v5361 = vmul.f32 %v5103, %v5314
  %v5362 = vmul.f32 %v5104, %v5314
  %v5363 = vmul.f32 %v5105, %v5314
  %v5364 = vmul.f32 %v5106, %v5314
  %v5365 = vmul.f32 %v5107, %v5314
  %v5366 = vmul.f32 %v5108, %v5314
  %v5367 = vmul.f32 %v5109, %v5314
  %v5368 = vmul.f32 %v5110, %v5314
  %v5369 = vmul.f32 %v5111, %v5314
  %v5370 = vmul.f32 %v5112, %v5314
  %v5371 = vmul.f32 %v5113, %v5314
  %v5372 = vmul.f32 %v5114, %v5314
  %v5373 = vmul.f32 %v5115, %v5314
  %v5374 = vmul.f32 %v5116, %v5314
  %v5375 = vmul.f32 %v5117, %v5314
  %v5376 = vmul.f32 %v5118, %v5314
  %v5377 = vmul.f32 %v5119, %v5314
  %v5378 = vmul.f32 %v5120, %v5314
  %v5379 = vmul.f32 %v5121, %v5314
  %v5380 = vmul.f32 %v5122, %v5314
  %v5381 = vmul.f32 %v5123, %v5314
  %v5382 = vmul.f32 %v5124, %v5314
  %v5383 = vmul.f32 %v5125, %v5314
  %v5384 = vmul.f32 %v5126, %v5314
  %v5385 = vmul.f32 %v5127, %v5314
  %v5386 = vmul.f32 %v5128, %v5314
  %v5387 = vmul.f32 %v5129, %v5314
  %v5388 = vmul.f32 %v5130, %v5314
  %v5389 = vmul.f32 %v5131, %v5314
  %v5390 = vmul.f32 %v5132, %v5314
  %v5391 = vmul.f32 %v5133, %v5314
  %v5392 = vmul.f32 %v5134, %v5314
  %v5393 = vmul.f32 %v5135, %v5314
  %v5394 = vmul.f32 %v5136, %v5314
  %v5395 = vmul.f32 %v5137, %v5314
  %v5396 = vmul.f32 %v5138, %v5314
  %v5397 = vmul.f32 %v5139, %v5314
  %v5398 = vmul.f32 %v5140, %v5314
  %v5399 = vmul.f32 %v5141, %v5314
  %v5400 = vmul.f32 %v5142, %v5314
  %v5401 = vmul.f32 %v5143, %v5314
  %v5402 = vmul.f32 %v5144, %v5314
  %v5403 = vmul.f32 %v5145, %v5314
  %v5404 = vmul.f32 %v5146, %v5314
  %v5405 = vmul.f32 %v5147, %v5314
  %v5406 = vmul.f32 %v5148, %v5314
  %v5407 = vmul.f32 %v5149, %v5314
  %v5408 = vmul.f32 %v5150, %v5314
  %v5409 = vmul.f32 %v5151, %v5314
  %v5410 = vmul.f32 %v5152, %v5314
  %v5411 = vmul.f32 %v5153, %v5314
  %v5412 = vmul.f32 %v5154, %v5314
  %v5413 = vmul.f32 %v5155, %v5314
  %v5414 = vmul.f32 %v5156, %v5314
  %v5415 = vmul.f32 %v5157, %v5314
  %v5416 = vmul.f32 %v5158, %v5314
  %v5417 = vmul.f32 %v5159, %v5314
  %v5418 = vmul.f32 %v5160, %v5314
  %v5419 = vmul.f32 %v5161, %v5314
  %v5420 = vmul.f32 %v5162, %v5314
  %v5421 = vmul.f32 %v5163, %v5314
  %v5422 = vmul.f32 %v5164, %v5314
  %v5423 = vmul.f32 %v5165, %v5314
  %v5424 = vmul.f32 %v5166, %v5314
  %v5425 = vmul.f32 %v5167, %v5314
  %v5426 = vmul.f32 %v5168, %v5314
  %v5427 = vmul.f32 %v5169, %v5314
  %v5428 = vmul.f32 %v5170, %v5314
  %v5429 = vmul.f32 %v5171, %v5314
  %v5430 = vmul.f32 %v5172, %v5314
  %v5431 = vmul.f32 %v5173, %v5314
  %v5432 = vmul.f32 %v5174, %v5314
  %v5433 = vmul.f32 %v5175, %v5314
  %v5434 = vmul.f32 %v5176, %v5314
  %v5435 = vmul.f32 %v5177, %v5314
  %v5436 = vmul.f32 %v5178, %v5314
  %v5437 = vmul.f32 %v5179, %v5314
  %v5438 = vmul.f32 %v5180, %v5314
  %v5439 = vmul.f32 %v5181, %v5314
  %v5440 = vmul.f32 %v5182, %v5314
  %v5441 = vmul.f32 %v5183, %v5314
  %v5442 = vmul.f32 %v5184, %v5314
  %v5443 = vmul.f32 %v5185, %v5314
  %v5444 = vmul.f32 %v5186, %v5314
  %v5445 = vmul.f32 %v5187, %v5314
  %v5446 = vmul.f32 %v5188, %v5314
  %v5447 = vmul.f32 %v5189, %v5314
  %v5448 = vmul.f32 %v5190, %v5314
  %v5449 = vmul.f32 %v5191, %v5314
  %v5450 = vmul.f32 %v5192, %v5314
  %v5451 = vmul.f32 %v5193, %v5314
  %v5452 = vmul.f32 %v5194, %v5314
  %v5453 = vmul.f32 %v5195, %v5314
  %v5454 = vmul.f32 %v5196, %v5314
  %v5455 = vmul.f32 %v5197, %v5314
  %v5456 = vmul.f32 %v5198, %v5314
  %v5457 = vmul.f32 %v5199, %v5314
  %v5458 = vmul.f32 %v5200, %v5314
  %v5459 = vmul.f32 %v5201, %v5314
  %v5460 = vmul.f32 %v5202, %v5314
  %v5461 = vmul.f32 %v5203, %v5314
  %v5462 = vmul.f32 %v5204, %v5314
  %v5463 = vmul.f32 %v5205, %v5314
  %v5464 = vmul.f32 %v5206, %v5314
  %v5465 = vmul.f32 %v5207, %v5314
  %v5466 = vmul.f32 %v5208, %v5314
  %v5467 = vmul.f32 %v5209, %v5314
  %v5468 = vmul.f32 %v5210, %v5314
  %v5469 = vmul.f32 %v5211, %v5314
  %v5470 = vmul.f32 %v5212, %v5314
  %v5471 = vmul.f32 %v5213, %v5314
  %v5472 = vmul.f32 %v5214, %v5314
  %v5473 = vmul.f32 %v5215, %v5314
  %v5474 = vmul.f32 %v5216, %v5314
  %v5475 = vmul.f32 %v5217, %v5314
  %v5476 = vmul.f32 %v5218, %v5314
  %v5477 = vmul.f32 %v5219, %v5314
  %v5478 = vmul.f32 %v5220, %v5314
  %v5479 = vmul.f32 %v5221, %v5314
  %v5480 = vmul.f32 %v5222, %v5314
  %v5481 = vmul.f32 %v5223, %v5314
  %v5482 = vmul.f32 %v5224, %v5314
  %v5483 = vmul.f32 %v5225, %v5314
  %v5484 = vmul.f32 %v5226, %v5314
  %v5485 = vmul.f32 %v5227, %v5314
  %v5486 = vmul.f32 %v5228, %v5314
  %v5487 = vmul.f32 %v5229, %v5314
  %v5488 = vmul.f32 %v5230, %v5314
  %v5489 = vmul.f32 %v5231, %v5314
  %v5490 = vmul.f32 %v5232, %v5314
  %v5491 = vmul.f32 %v5233, %v5314
  %v5492 = vmul.f32 %v5234, %v5314
  %v5493 = vmul.f32 %v5235, %v5314
  %v5494 = vmul.f32 %v5236, %v5314
  %v5495 = vmul.f32 %v5237, %v5314
  %v5496 = vmul.f32 %v5238, %v5314
  %v5497 = vmul.f32 %v5239, %v5314
  %v5498 = vmul.f32 %v5240, %v5314
  %v5499 = vmul.f32 %v5241, %v5314
  %v5500 = vmul.f32 %v5242, %v5314
  %v5501 = vmul.f32 %v5243, %v5314
  %v5502 = vmul.f32 %v5244, %v5314
  %v5503 = vmul.f32 %v5245, %v5314
  %v5504 = vmul.f32 %v5246, %v5314
  %v5505 = vmul.f32 %v5247, %v5314
  %v5506 = vmul.f32 %v5248, %v5314
  %v5507 = vmul.f32 %v5249, %v5314
  %v5508 = vmul.f32 %v5250, %v5314
  %v5509 = vmul.f32 %v5251, %v5314
  %v5510 = vmul.f32 %v5252, %v5314
  %v5511 = vmul.f32 %v5253, %v5314
  %v5512 = vmul.f32 %v5254, %v5314
  %v5513 = vmul.f32 %v5255, %v5314
  %v5514 = vmul.f32 %v5256, %v5314
  %v5515 = vmul.f32 %v5257, %v5314
  %v5516 = vmul.f32 %v5258, %v5314
  %v5517 = vmul.f32 %v5259, %v5314
  %v5518 = vmul.f32 %v5260, %v5314
  %v5519 = vmul.f32 %v5261, %v5314
  %v5520 = vmul.f32 %v5262, %v5314
  %v5521 = vmul.f32 %v5263, %v5314
  %v5522 = vmul.f32 %v5264, %v5314
  %v5523 = vmul.f32 %v5265, %v5314
  %v5524 = vmul.f32 %v5266, %v5314
  %v5525 = vmul.f32 %v5267, %v5314
  %v5526 = vmul.f32 %v5268, %v5314
  %v5527 = vmul.f32 %v5269, %v5314
  %v5528 = vmul.f32 %v5270, %v5314
  %v5529 = vmul.f32 %v5271, %v5314
  %v5530 = vmul.f32 %v5272, %v5314
  %v5531 = vmul.f32 %v5273, %v5314
  %v5532 = vmul.f32 %v5274, %v5314
  %v5533 = vmul.f32 %v5275, %v5314
  %v5534 = vmul.f32 %v5276, %v5314
  %v5535 = vmul.f32 %v5277, %v5314
  %v5536 = vmul.f32 %v5278, %v5314
  %v5537 = vmul.f32 %v5279, %v5314
  %v5538 = vmul.f32 %v5280, %v5314
  %v5539 = vmul.f32 %v5281, %v5314
  %v5540 = vmul.f32 %v5282, %v5314
  %v5541 = vmul.f32 %v5283, %v5314
  %v5542 = vmul.f32 %v5284, %v5314
  %v5543 = vmul.f32 %v5285, %v5314
  %v5544 = vmul.f32 %v5286, %v5314
  %v5545 = vmul.f32 %v5287, %v5314
  %v5546 = vmul.f32 %v5288, %v5314
  %v5547 = vmul.f32 %v5289, %v5314
  %v5548 = vmul.f32 %v5290, %v5314
  %v5549 = vmul.f32 %v5291, %v5314
  %v5550 = vmul.f32 %v5292, %v5314
  %v5551 = vmul.f32 %v5293, %v5314
  %v5552 = vmul.f32 %v5294, %v5314
  %v5553 = vmul.f32 %v5295, %v5314
  %v5554 = vmul.f32 %v5296, %v5314
  %v5555 = vmul.f32 %v5297, %v5314
  %v5556 = vmul.f32 %v5298, %v5314
  %v5557 = vmul.f32 %v5299, %v5314
  %v5558 = vmul.f32 %v5300, %v5314
  %v5559 = vmul.f32 %v5301, %v5314
  %v5560 = vmul.f32 %v5302, %v5314
  %v5561 = vmul.f32 %v5303, %v5314
  %v5562 = vmul.f32 %v5304, %v5314
  %v5563 = vmul.f32 %v5305, %v5314
  %v5564 = vmul.f32 %v5306, %v5314
  %v5565 = vmul.f32 %v5307, %v5314
  %v5566 = vmul.f32 %v5308, %v5314
  %v5567 = vmul.f32 %v5309, %v5314
  %v5568 = vmul.f32 %v5310, %v5314
  %v5569 = vmul.f32 %v5311, %v5314
  %v5570 = vmul.f32 %v5312, %v5314
  %v5571 = vtanh.pop %v5315
  %v5572 = vtanh.pop %v5316
  %v5573 = vtanh.pop %v5317
  %v5574 = vtanh.pop %v5318
  %v5575 = vtanh.pop %v5319
  %v5576 = vtanh.pop %v5320
  %v5577 = vtanh.pop %v5321
  %v5578 = vtanh.pop %v5322
  %v5579 = vtanh.pop %v5323
  %v5580 = vtanh.pop %v5324
  %v5581 = vtanh.pop %v5325
  %v5582 = vtanh.pop %v5326
  %v5583 = vtanh.pop %v5327
  %v5584 = vtanh.pop %v5328
  %v5585 = vtanh.pop %v5329
  %v5586 = vtanh.pop %v5330
  %v5587 = vtanh.pop %v5331
  %v5588 = vtanh.pop %v5332
  %v5589 = vtanh.pop %v5333
  %v5590 = vtanh.pop %v5334
  %v5591 = vtanh.pop %v5335
  %v5592 = vtanh.pop %v5336
  %v5593 = vtanh.pop %v5337
  %v5594 = vtanh.pop %v5338
  %v5595 = vtanh.pop %v5339
  %v5596 = vtanh.pop %v5340
  %v5597 = vtanh.pop %v5341
  %v5598 = vtanh.pop %v5342
  %v5599 = vtanh.pop %v5343
  %v5600 = vtanh.pop %v5344
  %v5601 = vtanh.pop %v5345
  %v5602 = vtanh.pop %v5346
  %v5603 = vtanh.pop %v5347
  %v5604 = vtanh.pop %v5348
  %v5605 = vtanh.pop %v5349
  %v5606 = vtanh.pop %v5350
  %v5607 = vtanh.pop %v5351
  %v5608 = vtanh.pop %v5352
  %v5609 = vtanh.pop %v5353
  %v5610 = vtanh.pop %v5354
  %v5611 = vtanh.pop %v5355
  %v5612 = vtanh.pop %v5356
  %v5613 = vtanh.pop %v5357
  %v5614 = vtanh.pop %v5358
  %v5615 = vtanh.pop %v5359
  %v5616 = vtanh.pop %v5360
  %v5617 = vtanh.pop %v5361
  %v5618 = vtanh.pop %v5362
  %v5619 = vtanh.pop %v5363
  %v5620 = vtanh.pop %v5364
  %v5621 = vtanh.pop %v5365
  %v5622 = vtanh.pop %v5366
  %v5623 = vtanh.pop %v5367
  %v5624 = vtanh.pop %v5368
  %v5625 = vtanh.pop %v5369
  %v5626 = vtanh.pop %v5370
  %v5627 = vtanh.pop %v5371
  %v5628 = vtanh.pop %v5372
  %v5629 = vtanh.pop %v5373
  %v5630 = vtanh.pop %v5374
  %v5631 = vtanh.pop %v5375
  %v5632 = vtanh.pop %v5376
  %v5633 = vtanh.pop %v5377
  %v5634 = vtanh.pop %v5378
  %v5635 = vtanh.pop %v5379
  %v5636 = vtanh.pop %v5380
  %v5637 = vtanh.pop %v5381
  %v5638 = vtanh.pop %v5382
  %v5639 = vtanh.pop %v5383
  %v5640 = vtanh.pop %v5384
  %v5641 = vtanh.pop %v5385
  %v5642 = vtanh.pop %v5386
  %v5643 = vtanh.pop %v5387
  %v5644 = vtanh.pop %v5388
  %v5645 = vtanh.pop %v5389
  %v5646 = vtanh.pop %v5390
  %v5647 = vtanh.pop %v5391
  %v5648 = vtanh.pop %v5392
  %v5649 = vtanh.pop %v5393
  %v5650 = vtanh.pop %v5394
  %v5651 = vtanh.pop %v5395
  %v5652 = vtanh.pop %v5396
  %v5653 = vtanh.pop %v5397
  %v5654 = vtanh.pop %v5398
  %v5655 = vtanh.pop %v5399
  %v5656 = vtanh.pop %v5400
  %v5657 = vtanh.pop %v5401
  %v5658 = vtanh.pop %v5402
  %v5659 = vtanh.pop %v5403
  %v5660 = vtanh.pop %v5404
  %v5661 = vtanh.pop %v5405
  %v5662 = vtanh.pop %v5406
  %v5663 = vtanh.pop %v5407
  %v5664 = vtanh.pop %v5408
  %v5665 = vtanh.pop %v5409
  %v5666 = vtanh.pop %v5410
  %v5667 = vtanh.pop %v5411
  %v5668 = vtanh.pop %v5412
  %v5669 = vtanh.pop %v5413
  %v5670 = vtanh.pop %v5414
  %v5671 = vtanh.pop %v5415
  %v5672 = vtanh.pop %v5416
  %v5673 = vtanh.pop %v5417
  %v5674 = vtanh.pop %v5418
  %v5675 = vtanh.pop %v5419
  %v5676 = vtanh.pop %v5420
  %v5677 = vtanh.pop %v5421
  %v5678 = vtanh.pop %v5422
  %v5679 = vtanh.pop %v5423
  %v5680 = vtanh.pop %v5424
  %v5681 = vtanh.pop %v5425
  %v5682 = vtanh.pop %v5426
  %v5683 = vtanh.pop %v5427
  %v5684 = vtanh.pop %v5428
  %v5685 = vtanh.pop %v5429
  %v5686 = vtanh.pop %v5430
  %v5687 = vtanh.pop %v5431
  %v5688 = vtanh.pop %v5432
  %v5689 = vtanh.pop %v5433
  %v5690 = vtanh.pop %v5434
  %v5691 = vtanh.pop %v5435
  %v5692 = vtanh.pop %v5436
  %v5693 = vtanh.pop %v5437
  %v5694 = vtanh.pop %v5438
  %v5695 = vtanh.pop %v5439
  %v5696 = vtanh.pop %v5440
  %v5697 = vtanh.pop %v5441
  %v5698 = vtanh.pop %v5442
  %v5699 = vtanh.pop %v5443
  %v5700 = vtanh.pop %v5444
  %v5701 = vtanh.pop %v5445
  %v5702 = vtanh.pop %v5446
  %v5703 = vtanh.pop %v5447
  %v5704 = vtanh.pop %v5448
  %v5705 = vtanh.pop %v5449
  %v5706 = vtanh.pop %v5450
  %v5707 = vtanh.pop %v5451
  %v5708 = vtanh.pop %v5452
  %v5709 = vtanh.pop %v5453
  %v5710 = vtanh.pop %v5454
  %v5711 = vtanh.pop %v5455
  %v5712 = vtanh.pop %v5456
  %v5713 = vtanh.pop %v5457
  %v5714 = vtanh.pop %v5458
  %v5715 = vtanh.pop %v5459
  %v5716 = vtanh.pop %v5460
  %v5717 = vtanh.pop %v5461
  %v5718 = vtanh.pop %v5462
  %v5719 = vtanh.pop %v5463
  %v5720 = vtanh.pop %v5464
  %v5721 = vtanh.pop %v5465
  %v5722 = vtanh.pop %v5466
  %v5723 = vtanh.pop %v5467
  %v5724 = vtanh.pop %v5468
  %v5725 = vtanh.pop %v5469
  %v5726 = vtanh.pop %v5470
  %v5727 = vtanh.pop %v5471
  %v5728 = vtanh.pop %v5472
  %v5729 = vtanh.pop %v5473
  %v5730 = vtanh.pop %v5474
  %v5731 = vtanh.pop %v5475
  %v5732 = vtanh.pop %v5476
  %v5733 = vtanh.pop %v5477
  %v5734 = vtanh.pop %v5478
  %v5735 = vtanh.pop %v5479
  %v5736 = vtanh.pop %v5480
  %v5737 = vtanh.pop %v5481
  %v5738 = vtanh.pop %v5482
  %v5739 = vtanh.pop %v5483
  %v5740 = vtanh.pop %v5484
  %v5741 = vtanh.pop %v5485
  %v5742 = vtanh.pop %v5486
  %v5743 = vtanh.pop %v5487
  %v5744 = vtanh.pop %v5488
  %v5745 = vtanh.pop %v5489
  %v5746 = vtanh.pop %v5490
  %v5747 = vtanh.pop %v5491
  %v5748 = vtanh.pop %v5492
  %v5749 = vtanh.pop %v5493
  %v5750 = vtanh.pop %v5494
  %v5751 = vtanh.pop %v5495
  %v5752 = vtanh.pop %v5496
  %v5753 = vtanh.pop %v5497
  %v5754 = vtanh.pop %v5498
  %v5755 = vtanh.pop %v5499
  %v5756 = vtanh.pop %v5500
  %v5757 = vtanh.pop %v5501
  %v5758 = vtanh.pop %v5502
  %v5759 = vtanh.pop %v5503
  %v5760 = vtanh.pop %v5504
  %v5761 = vtanh.pop %v5505
  %v5762 = vtanh.pop %v5506
  %v5763 = vtanh.pop %v5507
  %v5764 = vtanh.pop %v5508
  %v5765 = vtanh.pop %v5509
  %v5766 = vtanh.pop %v5510
  %v5767 = vtanh.pop %v5511
  %v5768 = vtanh.pop %v5512
  %v5769 = vtanh.pop %v5513
  %v5770 = vtanh.pop %v5514
  %v5771 = vtanh.pop %v5515
  %v5772 = vtanh.pop %v5516
  %v5773 = vtanh.pop %v5517
  %v5774 = vtanh.pop %v5518
  %v5775 = vtanh.pop %v5519
  %v5776 = vtanh.pop %v5520
  %v5777 = vtanh.pop %v5521
  %v5778 = vtanh.pop %v5522
  %v5779 = vtanh.pop %v5523
  %v5780 = vtanh.pop %v5524
  %v5781 = vtanh.pop %v5525
  %v5782 = vtanh.pop %v5526
  %v5783 = vtanh.pop %v5527
  %v5784 = vtanh.pop %v5528
  %v5785 = vtanh.pop %v5529
  %v5786 = vtanh.pop %v5530
  %v5787 = vtanh.pop %v5531
  %v5788 = vtanh.pop %v5532
  %v5789 = vtanh.pop %v5533
  %v5790 = vtanh.pop %v5534
  %v5791 = vtanh.pop %v5535
  %v5792 = vtanh.pop %v5536
  %v5793 = vtanh.pop %v5537
  %v5794 = vtanh.pop %v5538
  %v5795 = vtanh.pop %v5539
  %v5796 = vtanh.pop %v5540
  %v5797 = vtanh.pop %v5541
  %v5798 = vtanh.pop %v5542
  %v5799 = vtanh.pop %v5543
  %v5800 = vtanh.pop %v5544
  %v5801 = vtanh.pop %v5545
  %v5802 = vtanh.pop %v5546
  %v5803 = vtanh.pop %v5547
  %v5804 = vtanh.pop %v5548
  %v5805 = vtanh.pop %v5549
  %v5806 = vtanh.pop %v5550
  %v5807 = vtanh.pop %v5551
  %v5808 = vtanh.pop %v5552
  %v5809 = vtanh.pop %v5553
  %v5810 = vtanh.pop %v5554
  %v5811 = vtanh.pop %v5555
  %v5812 = vtanh.pop %v5556
  %v5813 = vtanh.pop %v5557
  %v5814 = vtanh.pop %v5558
  %v5815 = vtanh.pop %v5559
  %v5816 = vtanh.pop %v5560
  %v5817 = vtanh.pop %v5561
  %v5818 = vtanh.pop %v5562
  %v5819 = vtanh.pop %v5563
  %v5820 = vtanh.pop %v5564
  %v5821 = vtanh.pop %v5565
  %v5822 = vtanh.pop %v5566
  %v5823 = vtanh.pop %v5567
  %v5824 = vtanh.pop %v5568
  %v5825 = vtanh.pop %v5569
  %v5826 = vtanh.pop %v5570
  %5827 = vst [vmem:[%s2] sm:$0xff] %v5571
  %5828 = vst [vmem:[%s2 + $0x8] sm:$0xff] %v5572
  %5829 = vst [vmem:[%s2 + $0x10] sm:$0xff] %v5573
  %5830 = vst [vmem:[%s2 + $0x18] sm:$0xff] %v5574
  %5831 = vst [vmem:[%s2 + $0x20] sm:$0xff] %v5575
  %5832 = vst [vmem:[%s2 + $0x28] sm:$0xff] %v5576
  %5833 = vst [vmem:[%s2 + $0x30] sm:$0xff] %v5577
  %5834 = vst [vmem:[%s2 + $0x38] sm:$0xff] %v5578
  %5835 = vst [vmem:[%s2 + $0x40] sm:$0xff] %v5579
  %5836 = vst [vmem:[%s2 + $0x48] sm:$0xff] %v5580
  %5837 = vst [vmem:[%s2 + $0x50] sm:$0xff] %v5581
  %5838 = vst [vmem:[%s2 + $0x58] sm:$0xff] %v5582
  %5839 = vst [vmem:[%s2 + $0x60] sm:$0xff] %v5583
  %5840 = vst [vmem:[%s2 + $0x68] sm:$0xff] %v5584
  %5841 = vst [vmem:[%s2 + $0x70] sm:$0xff] %v5585
  %5842 = vst [vmem:[%s2 + $0x78] sm:$0xff] %v5586
  %5843 = vst [vmem:[%s2 + $0x80] sm:$0xff] %v5587
  %5844 = vst [vmem:[%s2 + $0x88] sm:$0xff] %v5588
  %5845 = vst [vmem:[%s2 + $0x90] sm:$0xff] %v5589
  %5846 = vst [vmem:[%s2 + $0x98] sm:$0xff] %v5590
  %5847 = vst [vmem:[%s2 + $0xa0] sm:$0xff] %v5591
  %5848 = vst [vmem:[%s2 + $0xa8] sm:$0xff] %v5592
  %5849 = vst [vmem:[%s2 + $0xb0] sm:$0xff] %v5593
  %5850 = vst [vmem:[%s2 + $0xb8] sm:$0xff] %v5594
  %5851 = vst [vmem:[%s2 + $0xc0] sm:$0xff] %v5595
  %5852 = vst [vmem:[%s2 + $0xc8] sm:$0xff] %v5596
  %5853 = vst [vmem:[%s2 + $0xd0] sm:$0xff] %v5597
  %5854 = vst [vmem:[%s2 + $0xd8] sm:$0xff] %v5598
  %5855 = vst [vmem:[%s2 + $0xe0] sm:$0xff] %v5599
  %5856 = vst [vmem:[%s2 + $0xe8] sm:$0xff] %v5600
  %5857 = vst [vmem:[%s2 + $0xf0] sm:$0xff] %v5601
  %5858 = vst [vmem:[%s2 + $0xf8] sm:$0xff] %v5602
  %5859 = vst [vmem:[%s2 + $0x100] sm:$0xff] %v5603
  %5860 = vst [vmem:[%s2 + $0x108] sm:$0xff] %v5604
  %5861 = vst [vmem:[%s2 + $0x110] sm:$0xff] %v5605
  %5862 = vst [vmem:[%s2 + $0x118] sm:$0xff] %v5606
  %5863 = vst [vmem:[%s2 + $0x120] sm:$0xff] %v5607
  %5864 = vst [vmem:[%s2 + $0x128] sm:$0xff] %v5608
  %5865 = vst [vmem:[%s2 + $0x130] sm:$0xff] %v5609
  %5866 = vst [vmem:[%s2 + $0x138] sm:$0xff] %v5610
  %5867 = vst [vmem:[%s2 + $0x140] sm:$0xff] %v5611
  %5868 = vst [vmem:[%s2 + $0x148] sm:$0xff] %v5612
  %5869 = vst [vmem:[%s2 + $0x150] sm:$0xff] %v5613
  %5870 = vst [vmem:[%s2 + $0x158] sm:$0xff] %v5614
  %5871 = vst [vmem:[%s2 + $0x160] sm:$0xff] %v5615
  %5872 = vst [vmem:[%s2 + $0x168] sm:$0xff] %v5616
  %5873 = vst [vmem:[%s2 + $0x170] sm:$0xff] %v5617
  %5874 = vst [vmem:[%s2 + $0x178] sm:$0xff] %v5618
  %5875 = vst [vmem:[%s2 + $0x180] sm:$0xff] %v5619
  %5876 = vst [vmem:[%s2 + $0x188] sm:$0xff] %v5620
  %5877 = vst [vmem:[%s2 + $0x190] sm:$0xff] %v5621
  %5878 = vst [vmem:[%s2 + $0x198] sm:$0xff] %v5622
  %5879 = vst [vmem:[%s2 + $0x1a0] sm:$0xff] %v5623
  %5880 = vst [vmem:[%s2 + $0x1a8] sm:$0xff] %v5624
  %5881 = vst [vmem:[%s2 + $0x1b0] sm:$0xff] %v5625
  %5882 = vst [vmem:[%s2 + $0x1b8] sm:$0xff] %v5626
  %5883 = vst [vmem:[%s2 + $0x1c0] sm:$0xff] %v5627
  %5884 = vst [vmem:[%s2 + $0x1c8] sm:$0xff] %v5628
  %5885 = vst [vmem:[%s2 + $0x1d0] sm:$0xff] %v5629
  %5886 = vst [vmem:[%s2 + $0x1d8] sm:$0xff] %v5630
  %5887 = vst [vmem:[%s2 + $0x1e0] sm:$0xff] %v5631
  %5888 = vst [vmem:[%s2 + $0x1e8] sm:$0xff] %v5632
  %5889 = vst [vmem:[%s2 + $0x1f0] sm:$0xff] %v5633
  %5890 = vst [vmem:[%s2 + $0x1f8] sm:$0xff] %v5634
  %5891 = vst [vmem:[%s2 + $0x200] sm:$0xff] %v5635
  %5892 = vst [vmem:[%s2 + $0x208] sm:$0xff] %v5636
  %5893 = vst [vmem:[%s2 + $0x210] sm:$0xff] %v5637
  %5894 = vst [vmem:[%s2 + $0x218] sm:$0xff] %v5638
  %5895 = vst [vmem:[%s2 + $0x220] sm:$0xff] %v5639
  %5896 = vst [vmem:[%s2 + $0x228] sm:$0xff] %v5640
  %5897 = vst [vmem:[%s2 + $0x230] sm:$0xff] %v5641
  %5898 = vst [vmem:[%s2 + $0x238] sm:$0xff] %v5642
  %5899 = vst [vmem:[%s2 + $0x240] sm:$0xff] %v5643
  %5900 = vst [vmem:[%s2 + $0x248] sm:$0xff] %v5644
  %5901 = vst [vmem:[%s2 + $0x250] sm:$0xff] %v5645
  %5902 = vst [vmem:[%s2 + $0x258] sm:$0xff] %v5646
  %5903 = vst [vmem:[%s2 + $0x260] sm:$0xff] %v5647
  %5904 = vst [vmem:[%s2 + $0x268] sm:$0xff] %v5648
  %5905 = vst [vmem:[%s2 + $0x270] sm:$0xff] %v5649
  %5906 = vst [vmem:[%s2 + $0x278] sm:$0xff] %v5650
  %5907 = vst [vmem:[%s2 + $0x280] sm:$0xff] %v5651
  %5908 = vst [vmem:[%s2 + $0x288] sm:$0xff] %v5652
  %5909 = vst [vmem:[%s2 + $0x290] sm:$0xff] %v5653
  %5910 = vst [vmem:[%s2 + $0x298] sm:$0xff] %v5654
  %5911 = vst [vmem:[%s2 + $0x2a0] sm:$0xff] %v5655
  %5912 = vst [vmem:[%s2 + $0x2a8] sm:$0xff] %v5656
  %5913 = vst [vmem:[%s2 + $0x2b0] sm:$0xff] %v5657
  %5914 = vst [vmem:[%s2 + $0x2b8] sm:$0xff] %v5658
  %5915 = vst [vmem:[%s2 + $0x2c0] sm:$0xff] %v5659
  %5916 = vst [vmem:[%s2 + $0x2c8] sm:$0xff] %v5660
  %5917 = vst [vmem:[%s2 + $0x2d0] sm:$0xff] %v5661
  %5918 = vst [vmem:[%s2 + $0x2d8] sm:$0xff] %v5662
  %5919 = vst [vmem:[%s2 + $0x2e0] sm:$0xff] %v5663
  %5920 = vst [vmem:[%s2 + $0x2e8] sm:$0xff] %v5664
  %5921 = vst [vmem:[%s2 + $0x2f0] sm:$0xff] %v5665
  %5922 = vst [vmem:[%s2 + $0x2f8] sm:$0xff] %v5666
  %5923 = vst [vmem:[%s2 + $0x300] sm:$0xff] %v5667
  %5924 = vst [vmem:[%s2 + $0x308] sm:$0xff] %v5668
  %5925 = vst [vmem:[%s2 + $0x310] sm:$0xff] %v5669
  %5926 = vst [vmem:[%s2 + $0x318] sm:$0xff] %v5670
  %5927 = vst [vmem:[%s2 + $0x320] sm:$0xff] %v5671
  %5928 = vst [vmem:[%s2 + $0x328] sm:$0xff] %v5672
  %5929 = vst [vmem:[%s2 + $0x330] sm:$0xff] %v5673
  %5930 = vst [vmem:[%s2 + $0x338] sm:$0xff] %v5674
  %5931 = vst [vmem:[%s2 + $0x340] sm:$0xff] %v5675
  %5932 = vst [vmem:[%s2 + $0x348] sm:$0xff] %v5676
  %5933 = vst [vmem:[%s2 + $0x350] sm:$0xff] %v5677
  %5934 = vst [vmem:[%s2 + $0x358] sm:$0xff] %v5678
  %5935 = vst [vmem:[%s2 + $0x360] sm:$0xff] %v5679
  %5936 = vst [vmem:[%s2 + $0x368] sm:$0xff] %v5680
  %5937 = vst [vmem:[%s2 + $0x370] sm:$0xff] %v5681
  %5938 = vst [vmem:[%s2 + $0x378] sm:$0xff] %v5682
  %5939 = vst [vmem:[%s2 + $0x380] sm:$0xff] %v5683
  %5940 = vst [vmem:[%s2 + $0x388] sm:$0xff] %v5684
  %5941 = vst [vmem:[%s2 + $0x390] sm:$0xff] %v5685
  %5942 = vst [vmem:[%s2 + $0x398] sm:$0xff] %v5686
  %5943 = vst [vmem:[%s2 + $0x3a0] sm:$0xff] %v5687
  %5944 = vst [vmem:[%s2 + $0x3a8] sm:$0xff] %v5688
  %5945 = vst [vmem:[%s2 + $0x3b0] sm:$0xff] %v5689
  %5946 = vst [vmem:[%s2 + $0x3b8] sm:$0xff] %v5690
  %5947 = vst [vmem:[%s2 + $0x3c0] sm:$0xff] %v5691
  %5948 = vst [vmem:[%s2 + $0x3c8] sm:$0xff] %v5692
  %5949 = vst [vmem:[%s2 + $0x3d0] sm:$0xff] %v5693
  %5950 = vst [vmem:[%s2 + $0x3d8] sm:$0xff] %v5694
  %5951 = vst [vmem:[%s2 + $0x3e0] sm:$0xff] %v5695
  %5952 = vst [vmem:[%s2 + $0x3e8] sm:$0xff] %v5696
  %5953 = vst [vmem:[%s2 + $0x3f0] sm:$0xff] %v5697
  %5954 = vst [vmem:[%s2 + $0x3f8] sm:$0xff] %v5698
  %5955 = vst [vmem:[%s2 + $0x400] sm:$0xff] %v5699
  %5956 = vst [vmem:[%s2 + $0x408] sm:$0xff] %v5700
  %5957 = vst [vmem:[%s2 + $0x410] sm:$0xff] %v5701
  %5958 = vst [vmem:[%s2 + $0x418] sm:$0xff] %v5702
  %5959 = vst [vmem:[%s2 + $0x420] sm:$0xff] %v5703
  %5960 = vst [vmem:[%s2 + $0x428] sm:$0xff] %v5704
  %5961 = vst [vmem:[%s2 + $0x430] sm:$0xff] %v5705
  %5962 = vst [vmem:[%s2 + $0x438] sm:$0xff] %v5706
  %5963 = vst [vmem:[%s2 + $0x440] sm:$0xff] %v5707
  %5964 = vst [vmem:[%s2 + $0x448] sm:$0xff] %v5708
  %5965 = vst [vmem:[%s2 + $0x450] sm:$0xff] %v5709
  %5966 = vst [vmem:[%s2 + $0x458] sm:$0xff] %v5710
  %5967 = vst [vmem:[%s2 + $0x460] sm:$0xff] %v5711
  %5968 = vst [vmem:[%s2 + $0x468] sm:$0xff] %v5712
  %5969 = vst [vmem:[%s2 + $0x470] sm:$0xff] %v5713
  %5970 = vst [vmem:[%s2 + $0x478] sm:$0xff] %v5714
  %5971 = vst [vmem:[%s2 + $0x480] sm:$0xff] %v5715
  %5972 = vst [vmem:[%s2 + $0x488] sm:$0xff] %v5716
  %5973 = vst [vmem:[%s2 + $0x490] sm:$0xff] %v5717
  %5974 = vst [vmem:[%s2 + $0x498] sm:$0xff] %v5718
  %5975 = vst [vmem:[%s2 + $0x4a0] sm:$0xff] %v5719
  %5976 = vst [vmem:[%s2 + $0x4a8] sm:$0xff] %v5720
  %5977 = vst [vmem:[%s2 + $0x4b0] sm:$0xff] %v5721
  %5978 = vst [vmem:[%s2 + $0x4b8] sm:$0xff] %v5722
  %5979 = vst [vmem:[%s2 + $0x4c0] sm:$0xff] %v5723
  %5980 = vst [vmem:[%s2 + $0x4c8] sm:$0xff] %v5724
  %5981 = vst [vmem:[%s2 + $0x4d0] sm:$0xff] %v5725
  %5982 = vst [vmem:[%s2 + $0x4d8] sm:$0xff] %v5726
  %5983 = vst [vmem:[%s2 + $0x4e0] sm:$0xff] %v5727
  %5984 = vst [vmem:[%s2 + $0x4e8] sm:$0xff] %v5728
  %5985 = vst [vmem:[%s2 + $0x4f0] sm:$0xff] %v5729
  %5986 = vst [vmem:[%s2 + $0x4f8] sm:$0xff] %v5730
  %5987 = vst [vmem:[%s2 + $0x500] sm:$0xff] %v5731
  %5988 = vst [vmem:[%s2 + $0x508] sm:$0xff] %v5732
  %5989 = vst [vmem:[%s2 + $0x510] sm:$0xff] %v5733
  %5990 = vst [vmem:[%s2 + $0x518] sm:$0xff] %v5734
  %5991 = vst [vmem:[%s2 + $0x520] sm:$0xff] %v5735
  %5992 = vst [vmem:[%s2 + $0x528] sm:$0xff] %v5736
  %5993 = vst [vmem:[%s2 + $0x530] sm:$0xff] %v5737
  %5994 = vst [vmem:[%s2 + $0x538] sm:$0xff] %v5738
  %5995 = vst [vmem:[%s2 + $0x540] sm:$0xff] %v5739
  %5996 = vst [vmem:[%s2 + $0x548] sm:$0xff] %v5740
  %5997 = vst [vmem:[%s2 + $0x550] sm:$0xff] %v5741
  %5998 = vst [vmem:[%s2 + $0x558] sm:$0xff] %v5742
  %5999 = vst [vmem:[%s2 + $0x560] sm:$0xff] %v5743
  %6000 = vst [vmem:[%s2 + $0x568] sm:$0xff] %v5744
  %6001 = vst [vmem:[%s2 + $0x570] sm:$0xff] %v5745
  %6002 = vst [vmem:[%s2 + $0x578] sm:$0xff] %v5746
  %6003 = vst [vmem:[%s2 + $0x580] sm:$0xff] %v5747
  %6004 = vst [vmem:[%s2 + $0x588] sm:$0xff] %v5748
  %6005 = vst [vmem:[%s2 + $0x590] sm:$0xff] %v5749
  %6006 = vst [vmem:[%s2 + $0x598] sm:$0xff] %v5750
  %6007 = vst [vmem:[%s2 + $0x5a0] sm:$0xff] %v5751
  %6008 = vst [vmem:[%s2 + $0x5a8] sm:$0xff] %v5752
  %6009 = vst [vmem:[%s2 + $0x5b0] sm:$0xff] %v5753
  %6010 = vst [vmem:[%s2 + $0x5b8] sm:$0xff] %v5754
  %6011 = vst [vmem:[%s2 + $0x5c0] sm:$0xff] %v5755
  %6012 = vst [vmem:[%s2 + $0x5c8] sm:$0xff] %v5756
  %6013 = vst [vmem:[%s2 + $0x5d0] sm:$0xff] %v5757
  %6014 = vst [vmem:[%s2 + $0x5d8] sm:$0xff] %v5758
  %6015 = vst [vmem:[%s2 + $0x5e0] sm:$0xff] %v5759
  %6016 = vst [vmem:[%s2 + $0x5e8] sm:$0xff] %v5760
  %6017 = vst [vmem:[%s2 + $0x5f0] sm:$0xff] %v5761
  %6018 = vst [vmem:[%s2 + $0x5f8] sm:$0xff] %v5762
  %6019 = vst [vmem:[%s2 + $0x600] sm:$0xff] %v5763
  %6020 = vst [vmem:[%s2 + $0x608] sm:$0xff] %v5764
  %6021 = vst [vmem:[%s2 + $0x610] sm:$0xff] %v5765
  %6022 = vst [vmem:[%s2 + $0x618] sm:$0xff] %v5766
  %6023 = vst [vmem:[%s2 + $0x620] sm:$0xff] %v5767
  %6024 = vst [vmem:[%s2 + $0x628] sm:$0xff] %v5768
  %6025 = vst [vmem:[%s2 + $0x630] sm:$0xff] %v5769
  %6026 = vst [vmem:[%s2 + $0x638] sm:$0xff] %v5770
  %6027 = vst [vmem:[%s2 + $0x640] sm:$0xff] %v5771
  %6028 = vst [vmem:[%s2 + $0x648] sm:$0xff] %v5772
  %6029 = vst [vmem:[%s2 + $0x650] sm:$0xff] %v5773
  %6030 = vst [vmem:[%s2 + $0x658] sm:$0xff] %v5774
  %6031 = vst [vmem:[%s2 + $0x660] sm:$0xff] %v5775
  %6032 = vst [vmem:[%s2 + $0x668] sm:$0xff] %v5776
  %6033 = vst [vmem:[%s2 + $0x670] sm:$0xff] %v5777
  %6034 = vst [vmem:[%s2 + $0x678] sm:$0xff] %v5778
  %6035 = vst [vmem:[%s2 + $0x680] sm:$0xff] %v5779
  %6036 = vst [vmem:[%s2 + $0x688] sm:$0xff] %v5780
  %6037 = vst [vmem:[%s2 + $0x690] sm:$0xff] %v5781
  %6038 = vst [vmem:[%s2 + $0x698] sm:$0xff] %v5782
  %6039 = vst [vmem:[%s2 + $0x6a0] sm:$0xff] %v5783
  %6040 = vst [vmem:[%s2 + $0x6a8] sm:$0xff] %v5784
  %6041 = vst [vmem:[%s2 + $0x6b0] sm:$0xff] %v5785
  %6042 = vst [vmem:[%s2 + $0x6b8] sm:$0xff] %v5786
  %6043 = vst [vmem:[%s2 + $0x6c0] sm:$0xff] %v5787
  %6044 = vst [vmem:[%s2 + $0x6c8] sm:$0xff] %v5788
  %6045 = vst [vmem:[%s2 + $0x6d0] sm:$0xff] %v5789
  %6046 = vst [vmem:[%s2 + $0x6d8] sm:$0xff] %v5790
  %6047 = vst [vmem:[%s2 + $0x6e0] sm:$0xff] %v5791
  %6048 = vst [vmem:[%s2 + $0x6e8] sm:$0xff] %v5792
  %6049 = vst [vmem:[%s2 + $0x6f0] sm:$0xff] %v5793
  %6050 = vst [vmem:[%s2 + $0x6f8] sm:$0xff] %v5794
  %6051 = vst [vmem:[%s2 + $0x700] sm:$0xff] %v5795
  %6052 = vst [vmem:[%s2 + $0x708] sm:$0xff] %v5796
  %6053 = vst [vmem:[%s2 + $0x710] sm:$0xff] %v5797
  %6054 = vst [vmem:[%s2 + $0x718] sm:$0xff] %v5798
  %6055 = vst [vmem:[%s2 + $0x720] sm:$0xff] %v5799
  %6056 = vst [vmem:[%s2 + $0x728] sm:$0xff] %v5800
  %6057 = vst [vmem:[%s2 + $0x730] sm:$0xff] %v5801
  %6058 = vst [vmem:[%s2 + $0x738] sm:$0xff] %v5802
  %6059 = vst [vmem:[%s2 + $0x740] sm:$0xff] %v5803
  %6060 = vst [vmem:[%s2 + $0x748] sm:$0xff] %v5804
  %6061 = vst [vmem:[%s2 + $0x750] sm:$0xff] %v5805
  %6062 = vst [vmem:[%s2 + $0x758] sm:$0xff] %v5806
  %6063 = vst [vmem:[%s2 + $0x760] sm:$0xff] %v5807
  %6064 = vst [vmem:[%s2 + $0x768] sm:$0xff] %v5808
  %6065 = vst [vmem:[%s2 + $0x770] sm:$0xff] %v5809
  %6066 = vst [vmem:[%s2 + $0x778] sm:$0xff] %v5810
  %6067 = vst [vmem:[%s2 + $0x780] sm:$0xff] %v5811
  %6068 = vst [vmem:[%s2 + $0x788] sm:$0xff] %v5812
  %6069 = vst [vmem:[%s2 + $0x790] sm:$0xff] %v5813
  %6070 = vst [vmem:[%s2 + $0x798] sm:$0xff] %v5814
  %6071 = vst [vmem:[%s2 + $0x7a0] sm:$0xff] %v5815
  %6072 = vst [vmem:[%s2 + $0x7a8] sm:$0xff] %v5816
  %6073 = vst [vmem:[%s2 + $0x7b0] sm:$0xff] %v5817
  %6074 = vst [vmem:[%s2 + $0x7b8] sm:$0xff] %v5818
  %6075 = vst [vmem:[%s2 + $0x7c0] sm:$0xff] %v5819
  %6076 = vst [vmem:[%s2 + $0x7c8] sm:$0xff] %v5820
  %6077 = vst [vmem:[%s2 + $0x7d0] sm:$0xff] %v5821
  %6078 = vst [vmem:[%s2 + $0x7d8] sm:$0xff] %v5822
  %6079 = vst [vmem:[%s2 + $0x7e0] sm:$0xff] %v5823
  %6080 = vst [vmem:[%s2 + $0x7e8] sm:$0xff] %v5824
  %6081 = vst [vmem:[%s2 + $0x7f0] sm:$0xff] %v5825
  %6082 = vst [vmem:[%s2 + $0x7f8] sm:$0xff] %v5826
  // Predicated region
  $region10: #{vgg5_decoder_forward.7} parent=0 // pred_check
    _
  $region11: #{vgg5_decoder_forward.7} parent=0 // pred_check_branch
    %6084 = sbr.rel (0) target = $region13
  $region12: #{vgg5_decoder_forward.7} parent=0 // pred_region
    _
  $region13: #{vgg5_decoder_forward.7} parent=0 // pred_fallthru
    _
  // Predicated region
  $region14: #{vgg5_decoder_forward.7} parent=0 // pred_check
    _
  $region15: #{vgg5_decoder_forward.7} parent=0 // pred_check_branch
    %6086 = sbr.rel (0) target = $region17
  $region16: #{vgg5_decoder_forward.7} parent=0 // pred_region
    _
  $region17: #{vgg5_decoder_forward.7} parent=0 // pred_fallthru
    _

</llo_original>
